<compile_context>
chip_gen: v5e
topology: v5e:2x2
jax: 0.10.0
libtpu: 0.0.40
codegen_flags: <defaults>
</compile_context>

<pallas_src>
import functools

import jax
import jax.numpy as jnp
from jax.experimental import pallas as pl
from jax.experimental.pallas import tpu as pltpu


def _round_up(x, m):
    return (x + m - 1) // m * m


# ----------------------------------------------------------------------------
# Fused bidirectional GRU kernel: one grid step == TB time steps.
# ----------------------------------------------------------------------------
def bigru_kernel(x_f_ref, x_b_ref, len_ref, wih_ref, whh_ref, bgi_ref, bghn_ref,
                 out_f_ref, out_b_ref, hsum_ref,
                 hf_scr, hb_scr, gif_scr, gib_scr):
    """x_f_ref : (TB*Bp, Hp) bf16  embedded inputs, forward time block i
    x_b_ref : (TB*Bp, Hp) bf16  same array, reversed block (time block G-1-i)
    len_ref : (Bp, 1)      int32 sequence lengths (padded batch rows are 0)
    wih_ref : (2, Hp, 3Hp) bf16  [fwd, bwd] input->gate weights (pre-transposed)
    whh_ref : (2Hp, 6Hp)   bf16  block-diagonal [fwd | bwd] hidden->gate weights
    bgi_ref : (2, 1, 3Hp)  f32   b_ih with b_hh folded into the r/z gates
    bghn_ref: (2, 1, Hp)   f32   b_hh of the n gate (applied inside r*(...))
    out_f_ref: (TB*Bp, Hp) bf16  forward outputs, time block i (0 where padded)
    out_b_ref: (TB*Bp, Hp) bf16  backward outputs, time block G-1-i
    hsum_ref : (Bp, Hp)    f32   h_fwd_final + h_bwd_final (resident output)
    hf_scr, hb_scr: (Bp, Hp) f32     hidden-state carries across grid steps
    gif_scr, gib_scr: (TB*Bp, 3Hp) f32 hoisted input-projection results
    """
    i = pl.program_id(0)
    G = pl.num_programs(0)
    Bp, Hp = hf_scr.shape
    TB = x_f_ref.shape[0] // Bp

    @pl.when(i == 0)
    def _init():
        hf_scr[...] = jnp.zeros_like(hf_scr)
        hb_scr[...] = jnp.zeros_like(hb_scr)

    lens = len_ref[...]                       # (Bp, 1) int32
    t0_f = i * TB                             # first global time of fwd block
    t0_b = (G - 1 - i) * TB                   # first global time of bwd block

    # ---- Hoisted input projections: one big MXU matmul per direction per block
    # (off the serial recurrence path); gate biases folded in here, once.
    gif_scr[...] = (jnp.dot(x_f_ref[...], wih_ref[0],
                            preferred_element_type=jnp.float32) + bgi_ref[0])
    gib_scr[...] = (jnp.dot(x_b_ref[...], wih_ref[1],
                            preferred_element_type=jnp.float32) + bgi_ref[1])

    # ---- Loop-invariant broadcasts hoisted out of the unrolled recurrence.
    bghn_f = jnp.broadcast_to(bghn_ref[0], (Bp, Hp))
    bghn_b = jnp.broadcast_to(bghn_ref[1], (Bp, Hp))

    def gates(gi, gh, h, bghn):
        # PyTorch gate order [r, z, n]; Hp-aligned lane slices are free views.
        r = jax.nn.sigmoid(gi[:, 0:Hp] + gh[:, 0:Hp])
        z = jax.nn.sigmoid(gi[:, Hp:2 * Hp] + gh[:, Hp:2 * Hp])
        n = jnp.tanh(gi[:, 2 * Hp:3 * Hp] + r * (gh[:, 2 * Hp:3 * Hp] + bghn))
        return (1.0 - z) * n + z * h

    h_f = hf_scr[...]
    h_b = hb_scr[...]

    # Statically unrolled recurrence: ONE fused (Bp,2Hp)@(2Hp,6Hp) MXU matmul per
    # time step covers both directions (block-diagonal W_hh).
    for s in range(TB):
        sb = TB - 1 - s                       # backward local row (descending time)
        hcat = jnp.concatenate([h_f.astype(jnp.bfloat16),
                                h_b.astype(jnp.bfloat16)], axis=-1)   # (Bp, 2Hp)
        gh = jnp.dot(hcat, whh_ref[...], preferred_element_type=jnp.float32)

        h_f_new = gates(gif_scr[s * Bp:(s + 1) * Bp, :], gh[:, :3 * Hp], h_f, bghn_f)
        h_b_new = gates(gib_scr[sb * Bp:(sb + 1) * Bp, :], gh[:, 3 * Hp:], h_b, bghn_b)

        # pack_padded_sequence semantics: carry updates only on valid steps,
        # padded output positions are zero-filled.
        vf = (t0_f + s) < lens                # (Bp, 1) bool
        vb = (t0_b + sb) < lens
        h_f = jnp.where(vf, h_f_new, h_f)
        h_b = jnp.where(vb, h_b_new, h_b)
        out_f_ref[s * Bp:(s + 1) * Bp, :] = (
            jnp.where(vf, h_f, 0.0).astype(out_f_ref.dtype))
        out_b_ref[sb * Bp:(sb + 1) * Bp, :] = (
            jnp.where(vb, h_b, 0.0).astype(out_b_ref.dtype))

    hf_scr[...] = h_f
    hb_scr[...] = h_b

    # Final hidden (fwd + bwd) written once, on the last time block only.
    @pl.when(i == G - 1)
    def _finalize():
        hsum_ref[...] = (h_f + h_b).astype(hsum_ref.dtype)


def bigru_pallas(x, lengths, wih, whh, bgi, bghn, *, time_block):
    """x: (Tp, Bp, Hp) bf16; lengths: (Bp, 1) int32.  Returns (out_f, out_b, h_sum)."""
    Tp, Bp, Hp = x.shape
    TB = time_block
    G = Tp // TB
    x2 = x.reshape(Tp * Bp, Hp)               # lane-dense 2-D view (free in XLA)

    out_f, out_b, h_sum = pl.pallas_call(
        bigru_kernel,
        out_shape=(
            jax.ShapeDtypeStruct((Tp * Bp, Hp), jnp.bfloat16),
            jax.ShapeDtypeStruct((Tp * Bp, Hp), jnp.bfloat16),
            jax.ShapeDtypeStruct((Bp, Hp), jnp.float32),
        ),
        grid_spec=pltpu.PrefetchScalarGridSpec(
            num_scalar_prefetch=0,
            grid=(G,),
            in_specs=[
                pl.BlockSpec((TB * Bp, Hp), lambda i: (i, 0)),           # x fwd block
                pl.BlockSpec((TB * Bp, Hp), lambda i: (G - 1 - i, 0)),   # x bwd block
                pl.BlockSpec((Bp, 1), lambda i: (0, 0)),                 # lengths
                pl.BlockSpec((2, Hp, 3 * Hp), lambda i: (0, 0, 0)),      # W_ih^T
                pl.BlockSpec((2 * Hp, 6 * Hp), lambda i: (0, 0)),        # block-diag W_hh^T
                pl.BlockSpec((2, 1, 3 * Hp), lambda i: (0, 0, 0)),       # folded b_gi
                pl.BlockSpec((2, 1, Hp), lambda i: (0, 0, 0)),           # b_hh (n gate)
            ],
            out_specs=[
                pl.BlockSpec((TB * Bp, Hp), lambda i: (i, 0)),           # fwd outputs
                pl.BlockSpec((TB * Bp, Hp), lambda i: (G - 1 - i, 0)),   # bwd outputs
                pl.BlockSpec((Bp, Hp), lambda i: (0, 0)),                # h_fwd + h_bwd
            ],
            scratch_shapes=[
                pltpu.VMEM((Bp, Hp), jnp.float32),                       # h_fwd carry
                pltpu.VMEM((Bp, Hp), jnp.float32),                       # h_bwd carry
                pltpu.VMEM((TB * Bp, 3 * Hp), jnp.float32),              # gi fwd block
                pltpu.VMEM((TB * Bp, 3 * Hp), jnp.float32),              # gi bwd block
            ],
        ),
        compiler_params=pltpu.CompilerParams(
            dimension_semantics=("arbitrary",),          # sequential recurrence
            vmem_limit_bytes=48 * 1024 * 1024,           # < v7x 64 MiB, ample on v5e/v6e
        ),
    )(x2, x2, lengths, wih, whh, bgi, bghn)

    return out_f.reshape(Tp, Bp, Hp), out_b.reshape(Tp, Bp, Hp), h_sum


# ----------------------------------------------------------------------------
# Parameters: init (matches the PyTorch module) and one-time kernel-layout prep.
# ----------------------------------------------------------------------------
def init_params(key, vocab_size, hidden_size):
    H = hidden_size
    k = jax.random.split(key, 9)
    bound = 1.0 / jnp.sqrt(H)
    u = lambda kk, shape: jax.random.uniform(kk, shape, jnp.float32, -bound, bound)
    return {
        # nn.Embedding(vocab, H); weight.data.normal_(0, 0.1) in the module.
        "emb": 0.1 * jax.random.normal(k[0], (vocab_size, H), jnp.float32),
        # Bidirectional single-layer GRU, PyTorch param shapes (3H, H) / (3H,).
        "fwd": {"w_ih": u(k[1], (3 * H, H)), "w_hh": u(k[2], (3 * H, H)),
                "b_ih": u(k[3], (3 * H,)),   "b_hh": u(k[4], (3 * H,))},
        "bwd": {"w_ih": u(k[5], (3 * H, H)), "w_hh": u(k[6], (3 * H, H)),
                "b_ih": u(k[7], (3 * H,)),   "b_hh": u(k[8], (3 * H,))},
    }


def prepare_params(params, hidden_size):
    """One-time prep: per-gate transpose + zero-pad H->Hp (128-aligned gate
    boundaries), fold b_hh into b_ih for the r/z gates, build the block-diagonal
    [fwd | bwd] W_hh, bf16 matmul weights.  Zero padding keeps padded lanes zero."""
    H = hidden_size
    Hp = _round_up(max(H, 128), 128)

    def prep_dir(p):
        def pad_w(w):                                              # (3H, H) torch layout
            w3t = jnp.transpose(w.reshape(3, H, H), (0, 2, 1))     # (gate, in, out)
            wp = jnp.zeros((3, Hp, Hp), jnp.float32).at[:, :H, :H].set(w3t)
            return jnp.transpose(wp, (1, 0, 2)).reshape(Hp, 3 * Hp)  # (Hp, 3Hp)
        b_ih = p["b_ih"].reshape(3, H)
        b_hh = p["b_hh"].reshape(3, H)
        b_gi3 = b_ih.at[0:2].add(b_hh[0:2])                        # fold r/z biases
        b_gi = jnp.zeros((3, Hp), jnp.float32).at[:, :H].set(b_gi3).reshape(1, 3 * Hp)
        b_ghn = jnp.zeros((1, Hp), jnp.float32).at[0, :H].set(b_hh[2])
        return pad_w(p["w_ih"]), pad_w(p["w_hh"]), b_gi, b_ghn

    f = prep_dir(params["fwd"])
    b = prep_dir(params["bwd"])
    # Block-diagonal recurrent weights: [h_f | h_b] @ whh_cat -> [gh_f | gh_b].
    whh_cat = (jnp.zeros((2 * Hp, 6 * Hp), jnp.float32)
               .at[:Hp, :3 * Hp].set(f[1])
               .at[Hp:, 3 * Hp:].set(b[1]))
    return {
        "emb": jnp.pad(params["emb"], ((0, 0), (0, Hp - H))),       # (V, Hp) f32
        "wih": jnp.stack([f[0], b[0]]).astype(jnp.bfloat16),        # (2, Hp, 3Hp)
        "whh": whh_cat.astype(jnp.bfloat16),                        # (2Hp, 6Hp)
        "bgi": jnp.stack([f[2], b[2]]),                             # (2, 1, 3Hp) f32
        "bghn": jnp.stack([f[3], b[3]]),                            # (2, 1, Hp)  f32
    }


# ----------------------------------------------------------------------------
# EncoderRNN forward (JAX glue around the fused Pallas GRU kernel).
# ----------------------------------------------------------------------------
@functools.partial(jax.jit, static_argnames=("hidden_size", "time_block"))
def encoder_rnn_forward(prepped, input_seqs, input_lengths, *, hidden_size,
                        time_block=16):
    """input_seqs: (T, B) int32 token ids; input_lengths: (B,) int32.
    Returns (outputs (B, T, H), hidden (1, B, H)) matching EncoderRNN.forward."""
    T, B = input_seqs.shape
    H = hidden_size
    Bp = _round_up(B, 16)                            # bf16 packs 16 sublanes / vreg
    TB = max(8, min(time_block, _round_up(T, 8)))    # don't over-pad tiny sequences
    Tp = _round_up(T, TB)

    # Embedding lookup (glue); bf16 operands for the in-kernel MXU matmuls.
    # TODO(synk): nn.Dropout is treated as eval-mode identity (stateless inference).
    emb = jnp.take(prepped["emb"], input_seqs, axis=0)              # (T, B, Hp) f32
    x = jnp.pad(emb.astype(jnp.bfloat16),
                ((0, Tp - T), (0, Bp - B), (0, 0)))                 # (Tp, Bp, Hp)
    lens = jnp.pad(input_lengths.astype(jnp.int32), (0, Bp - B))[:, None]  # (Bp, 1)

    out_f, out_b, h_sum = bigru_pallas(
        x, lens, prepped["wih"], prepped["whh"], prepped["bgi"], prepped["bghn"],
        time_block=TB)

    # outputs[:, :, :H] + outputs[:, :, H:], then transpose(0, 1) -> (B, T, H).
    outputs = jnp.transpose(
        out_f[:T, :B, :H].astype(jnp.float32) + out_b[:T, :B, :H].astype(jnp.float32),
        (1, 0, 2))
    # hidden = hidden[0] + hidden[1]; unsqueeze(0) -> (1, B, H).
    hidden = h_sum[:B, :H][None, :, :]
    return outputs, hidden


if __name__ == "__main__":
    VOCAB, HIDDEN = 16, 32
    T, B = 8, 4

    key = jax.random.PRNGKey(0)
    k_param, k_tok = jax.random.split(key)

    params = init_params(k_param, VOCAB, HIDDEN)
    prepped = prepare_params(params, HIDDEN)

    # Deterministic example inputs: (T, B) token ids, per-batch lengths.
    input_seqs = jax.random.randint(k_tok, (T, B), 1, VOCAB, dtype=jnp.int32)
    input_lengths = jnp.array([8, 5, 3, 6], dtype=jnp.int32)
    # Zero out padded token positions (as a real padded batch would have).
    t_idx = jnp.arange(T, dtype=jnp.int32)[:, None]
    input_seqs = jnp.where(t_idx < input_lengths[None, :], input_seqs, 0)

    outputs, hidden = encoder_rnn_forward(prepped, input_seqs, input_lengths,
                                          hidden_size=HIDDEN)
    jax.block_until_ready((outputs, hidden))

    assert outputs.shape == (B, T, HIDDEN)
    assert hidden.shape == (1, B, HIDDEN)
    print("KERNEL_OK")
</pallas_src>

<mosaic_0001>
module attributes {stable_mosaic.version = 11 : i64} {
  func.func @bigru_kernel(%arg0: i32, %arg1: memref<128x128xbf16, #tpu.memory_space<vmem>>, %arg2: memref<128x128xbf16, #tpu.memory_space<vmem>>, %arg3: memref<16x1xi32, #tpu.memory_space<vmem>>, %arg4: memref<2x128x384xbf16, #tpu.memory_space<vmem>>, %arg5: memref<256x768xbf16, #tpu.memory_space<vmem>>, %arg6: memref<2x1x384xf32, #tpu.memory_space<vmem>>, %arg7: memref<2x1x128xf32, #tpu.memory_space<vmem>>, %arg8: memref<128x128xbf16, #tpu.memory_space<vmem>>, %arg9: memref<128x128xbf16, #tpu.memory_space<vmem>>, %arg10: memref<16x128xf32, #tpu.memory_space<vmem>>, %arg11: memref<16x128xf32, #tpu.memory_space<vmem>>, %arg12: memref<16x128xf32, #tpu.memory_space<vmem>>, %arg13: memref<128x384xf32, #tpu.memory_space<vmem>>, %arg14: memref<128x384xf32, #tpu.memory_space<vmem>>) attributes {dimension_semantics = [#tpu.dimension_semantics<arbitrary>], iteration_bounds = array<i64: 1>, scalar_prefetch = 0 : i64, scratch_operands = 4 : i64, tpu.core_type = #tpu.core_type<tc>, window_params = [{transform_indices = @transform_0, window_bounds = array<i64: 128, 128>}, {transform_indices = @transform_1, window_bounds = array<i64: 128, 128>}, {pipeline_mode = #tpu.pipeline_mode<synchronous>, transform_indices = @transform_2, window_bounds = array<i64: 16, 1>}, {pipeline_mode = #tpu.pipeline_mode<synchronous>, transform_indices = @transform_3, window_bounds = array<i64: 2, 128, 384>}, {pipeline_mode = #tpu.pipeline_mode<synchronous>, transform_indices = @transform_4, window_bounds = array<i64: 256, 768>}, {pipeline_mode = #tpu.pipeline_mode<synchronous>, transform_indices = @transform_5, window_bounds = array<i64: 2, 1, 384>}, {pipeline_mode = #tpu.pipeline_mode<synchronous>, transform_indices = @transform_6, window_bounds = array<i64: 2, 1, 128>}, {transform_indices = @transform_7, window_bounds = array<i64: 128, 128>}, {transform_indices = @transform_8, window_bounds = array<i64: 128, 128>}, {pipeline_mode = #tpu.pipeline_mode<synchronous>, transform_indices = @transform_9, window_bounds = array<i64: 16, 128>}]} {
    %c0_i32 = arith.constant 0 : i32
    %0 = arith.cmpi eq, %arg0, %c0_i32 : i32
    %1 = arith.extui %0 : i1 to i32
    %c0_i32_0 = arith.constant 0 : i32
    %2 = arith.cmpi ne, %1, %c0_i32_0 : i32
    scf.if %2 {
      %cst_194 = arith.constant 0.000000e+00 : f32
      %736 = vector.broadcast %cst_194 : f32 to vector<16x128xf32>
      %c0_195 = arith.constant 0 : index
      %c0_196 = arith.constant 0 : index
      %737 = vector.load %arg11[%c0_195, %c0_196] : memref<16x128xf32, #tpu.memory_space<vmem>>, vector<16x128xf32>
      tpu.vector_store %arg11[%c0_195, %c0_196], %736 {strides = array<i32>} : memref<16x128xf32, #tpu.memory_space<vmem>>, vector<16x128xf32>,
      %cst_197 = arith.constant 0.000000e+00 : f32
      %738 = vector.broadcast %cst_197 : f32 to vector<16x128xf32>
      %c0_198 = arith.constant 0 : index
      %c0_199 = arith.constant 0 : index
      %739 = vector.load %arg12[%c0_198, %c0_199] : memref<16x128xf32, #tpu.memory_space<vmem>>, vector<16x128xf32>
      tpu.vector_store %arg12[%c0_198, %c0_199], %738 {strides = array<i32>} : memref<16x128xf32, #tpu.memory_space<vmem>>, vector<16x128xf32>,
    } else {
    }
    %c0 = arith.constant 0 : index
    %c0_1 = arith.constant 0 : index
    %3 = vector.load %arg3[%c0, %c0_1] : memref<16x1xi32, #tpu.memory_space<vmem>>, vector<16x1xi32>
    %c8_i32 = arith.constant 8 : i32
    %4 = arith.muli %arg0, %c8_i32 : i32
    %c0_i32_2 = arith.constant 0 : i32
    %5 = arith.subi %c0_i32_2, %arg0 : i32
    %c8_i32_3 = arith.constant 8 : i32
    %6 = arith.muli %5, %c8_i32_3 : i32
    %c0_4 = arith.constant 0 : index
    %c0_5 = arith.constant 0 : index
    %7 = vector.load %arg1[%c0_4, %c0_5] : memref<128x128xbf16, #tpu.memory_space<vmem>>, vector<128x128xbf16>
    %c0_6 = arith.constant 0 : index
    %c0_7 = arith.constant 0 : index
    %c0_8 = arith.constant 0 : index
    %8 = vector.load %arg4[%c0_6, %c0_7, %c0_8] : memref<2x128x384xbf16, #tpu.memory_space<vmem>>, vector<1x128x384xbf16>
    %9 = vector.shape_cast %8 : vector<1x128x384xbf16> to vector<128x384xbf16>
    %cst = arith.constant dense<0.000000e+00> : vector<128x384xf32>
    %10 = tpu.matmul %7, %9, %cst {dimension_numbers = #tpu.dot_dimension_numbers<[1], [0], [0], [1], [0, 0, 1, 1], [], []>} : vector<128x128xbf16>, vector<128x384xbf16>, vector<128x384xf32> -> vector<128x384xf32>
    %c0_9 = arith.constant 0 : index
    %c0_10 = arith.constant 0 : index
    %c0_11 = arith.constant 0 : index
    %11 = vector.load %arg6[%c0_9, %c0_10, %c0_11] : memref<2x1x384xf32, #tpu.memory_space<vmem>>, vector<1x1x384xf32>
    %12 = vector.shape_cast %11 : vector<1x1x384xf32> to vector<1x384xf32>
    %13 = vector.broadcast %12 : vector<1x384xf32> to vector<128x384xf32>
    %14 = arith.addf %10, %13 : vector<128x384xf32>
    %c0_12 = arith.constant 0 : index
    %c0_13 = arith.constant 0 : index
    %15 = vector.load %arg13[%c0_12, %c0_13] : memref<128x384xf32, #tpu.memory_space<vmem>>, vector<128x384xf32>
    tpu.vector_store %arg13[%c0_12, %c0_13], %14 {strides = array<i32>} : memref<128x384xf32, #tpu.memory_space<vmem>>, vector<128x384xf32>,
    %c0_14 = arith.constant 0 : index
    %c0_15 = arith.constant 0 : index
    %16 = vector.load %arg2[%c0_14, %c0_15] : memref<128x128xbf16, #tpu.memory_space<vmem>>, vector<128x128xbf16>
    %c1 = arith.constant 1 : index
    %c0_16 = arith.constant 0 : index
    %c0_17 = arith.constant 0 : index
    %17 = vector.load %arg4[%c1, %c0_16, %c0_17] : memref<2x128x384xbf16, #tpu.memory_space<vmem>>, vector<1x128x384xbf16>
    %18 = vector.shape_cast %17 : vector<1x128x384xbf16> to vector<128x384xbf16>
    %cst_18 = arith.constant dense<0.000000e+00> : vector<128x384xf32>
    %19 = tpu.matmul %16, %18, %cst_18 {dimension_numbers = #tpu.dot_dimension_numbers<[1], [0], [0], [1], [0, 0, 1, 1], [], []>} : vector<128x128xbf16>, vector<128x384xbf16>, vector<128x384xf32> -> vector<128x384xf32>
    %c1_19 = arith.constant 1 : index
    %c0_20 = arith.constant 0 : index
    %c0_21 = arith.constant 0 : index
    %20 = vector.load %arg6[%c1_19, %c0_20, %c0_21] : memref<2x1x384xf32, #tpu.memory_space<vmem>>, vector<1x1x384xf32>
    %21 = vector.shape_cast %20 : vector<1x1x384xf32> to vector<1x384xf32>
    %22 = vector.broadcast %21 : vector<1x384xf32> to vector<128x384xf32>
    %23 = arith.addf %19, %22 : vector<128x384xf32>
    %c0_22 = arith.constant 0 : index
    %c0_23 = arith.constant 0 : index
    %24 = vector.load %arg14[%c0_22, %c0_23] : memref<128x384xf32, #tpu.memory_space<vmem>>, vector<128x384xf32>
    tpu.vector_store %arg14[%c0_22, %c0_23], %23 {strides = array<i32>} : memref<128x384xf32, #tpu.memory_space<vmem>>, vector<128x384xf32>,
    %c0_24 = arith.constant 0 : index
    %c0_25 = arith.constant 0 : index
    %c0_26 = arith.constant 0 : index
    %25 = vector.load %arg7[%c0_24, %c0_25, %c0_26] : memref<2x1x128xf32, #tpu.memory_space<vmem>>, vector<1x1x128xf32>
    %26 = vector.shape_cast %25 : vector<1x1x128xf32> to vector<1x128xf32>
    %27 = vector.shape_cast %26 : vector<1x128xf32> to vector<1x128xf32>
    %28 = vector.broadcast %27 : vector<1x128xf32> to vector<16x128xf32>
    %c1_27 = arith.constant 1 : index
    %c0_28 = arith.constant 0 : index
    %c0_29 = arith.constant 0 : index
    %29 = vector.load %arg7[%c1_27, %c0_28, %c0_29] : memref<2x1x128xf32, #tpu.memory_space<vmem>>, vector<1x1x128xf32>
    %30 = vector.shape_cast %29 : vector<1x1x128xf32> to vector<1x128xf32>
    %31 = vector.shape_cast %30 : vector<1x128xf32> to vector<1x128xf32>
    %32 = vector.broadcast %31 : vector<1x128xf32> to vector<16x128xf32>
    %c0_30 = arith.constant 0 : index
    %c0_31 = arith.constant 0 : index
    %33 = vector.load %arg11[%c0_30, %c0_31] : memref<16x128xf32, #tpu.memory_space<vmem>>, vector<16x128xf32>
    %c0_32 = arith.constant 0 : index
    %c0_33 = arith.constant 0 : index
    %34 = vector.load %arg12[%c0_32, %c0_33] : memref<16x128xf32, #tpu.memory_space<vmem>>, vector<16x128xf32>
    %35 = arith.truncf %33 : vector<16x128xf32> to vector<16x128xbf16>
    %36 = arith.truncf %34 : vector<16x128xf32> to vector<16x128xbf16>
    %37 = tpu.concatenate %35, %36 in 1 : vector<16x128xbf16>, vector<16x128xbf16> -> vector<16x256xbf16>
    %c0_34 = arith.constant 0 : index
    %c0_35 = arith.constant 0 : index
    %38 = vector.load %arg5[%c0_34, %c0_35] : memref<256x768xbf16, #tpu.memory_space<vmem>>, vector<256x768xbf16>
    %cst_36 = arith.constant dense<0.000000e+00> : vector<16x768xf32>
    %39 = tpu.matmul %37, %38, %cst_36 {dimension_numbers = #tpu.dot_dimension_numbers<[1], [0], [0], [1], [0, 0, 1, 1], [], []>} : vector<16x256xbf16>, vector<256x768xbf16>, vector<16x768xf32> -> vector<16x768xf32>
    %c0_37 = arith.constant 0 : index
    %c0_38 = arith.constant 0 : index
    %40 = vector.load %arg13[%c0_37, %c0_38] : memref<128x384xf32, #tpu.memory_space<vmem>>, vector<16x384xf32>
    %41 = vector.extract_strided_slice %39 {offsets = [0, 0], sizes = [16, 384], strides = [1, 1]} : vector<16x768xf32> to vector<16x384xf32>
    %42 = vector.extract_strided_slice %40 {offsets = [0, 0], sizes = [16, 128], strides = [1, 1]} : vector<16x384xf32> to vector<16x128xf32>
    %43 = vector.extract_strided_slice %41 {offsets = [0, 0], sizes = [16, 128], strides = [1, 1]} : vector<16x384xf32> to vector<16x128xf32>
    %44 = arith.addf %42, %43 : vector<16x128xf32>
    %45 = arith.negf %44 : vector<16x128xf32>
    %46 = math.exp %45 : vector<16x128xf32>
    %cst_39 = arith.constant 1.000000e+00 : f32
    %47 = vector.broadcast %cst_39 : f32 to vector<16x128xf32>
    %48 = arith.addf %47, %46 : vector<16x128xf32>
    %49 = arith.divf %47, %48 : vector<16x128xf32>
    %50 = vector.extract_strided_slice %40 {offsets = [0, 128], sizes = [16, 128], strides = [1, 1]} : vector<16x384xf32> to vector<16x128xf32>
    %51 = vector.extract_strided_slice %41 {offsets = [0, 128], sizes = [16, 128], strides = [1, 1]} : vector<16x384xf32> to vector<16x128xf32>
    %52 = arith.addf %50, %51 : vector<16x128xf32>
    %53 = arith.negf %52 : vector<16x128xf32>
    %54 = math.exp %53 : vector<16x128xf32>
    %cst_40 = arith.constant 1.000000e+00 : f32
    %55 = vector.broadcast %cst_40 : f32 to vector<16x128xf32>
    %56 = arith.addf %55, %54 : vector<16x128xf32>
    %57 = arith.divf %55, %56 : vector<16x128xf32>
    %58 = vector.extract_strided_slice %40 {offsets = [0, 256], sizes = [16, 128], strides = [1, 1]} : vector<16x384xf32> to vector<16x128xf32>
    %59 = vector.extract_strided_slice %41 {offsets = [0, 256], sizes = [16, 128], strides = [1, 1]} : vector<16x384xf32> to vector<16x128xf32>
    %60 = arith.addf %59, %28 : vector<16x128xf32>
    %61 = arith.mulf %49, %60 : vector<16x128xf32>
    %62 = arith.addf %58, %61 : vector<16x128xf32>
    %63 = math.tanh %62 : vector<16x128xf32>
    %cst_41 = arith.constant 1.000000e+00 : f32
    %64 = vector.broadcast %cst_41 : f32 to vector<16x128xf32>
    %65 = arith.subf %64, %57 : vector<16x128xf32>
    %66 = arith.mulf %65, %63 : vector<16x128xf32>
    %67 = arith.mulf %57, %33 : vector<16x128xf32>
    %68 = arith.addf %66, %67 : vector<16x128xf32>
    %c112 = arith.constant 112 : index
    %c0_42 = arith.constant 0 : index
    %69 = vector.load %arg14[%c112, %c0_42] : memref<128x384xf32, #tpu.memory_space<vmem>>, vector<16x384xf32>
    %70 = vector.extract_strided_slice %39 {offsets = [0, 384], sizes = [16, 384], strides = [1, 1]} : vector<16x768xf32> to vector<16x384xf32>
    %71 = vector.extract_strided_slice %69 {offsets = [0, 0], sizes = [16, 128], strides = [1, 1]} : vector<16x384xf32> to vector<16x128xf32>
    %72 = vector.extract_strided_slice %70 {offsets = [0, 0], sizes = [16, 128], strides = [1, 1]} : vector<16x384xf32> to vector<16x128xf32>
    %73 = arith.addf %71, %72 : vector<16x128xf32>
    %74 = arith.negf %73 : vector<16x128xf32>
    %75 = math.exp %74 : vector<16x128xf32>
    %cst_43 = arith.constant 1.000000e+00 : f32
    %76 = vector.broadcast %cst_43 : f32 to vector<16x128xf32>
    %77 = arith.addf %76, %75 : vector<16x128xf32>
    %78 = arith.divf %76, %77 : vector<16x128xf32>
    %79 = vector.extract_strided_slice %69 {offsets = [0, 128], sizes = [16, 128], strides = [1, 1]} : vector<16x384xf32> to vector<16x128xf32>
    %80 = vector.extract_strided_slice %70 {offsets = [0, 128], sizes = [16, 128], strides = [1, 1]} : vector<16x384xf32> to vector<16x128xf32>
    %81 = arith.addf %79, %80 : vector<16x128xf32>
    %82 = arith.negf %81 : vector<16x128xf32>
    %83 = math.exp %82 : vector<16x128xf32>
    %cst_44 = arith.constant 1.000000e+00 : f32
    %84 = vector.broadcast %cst_44 : f32 to vector<16x128xf32>
    %85 = arith.addf %84, %83 : vector<16x128xf32>
    %86 = arith.divf %84, %85 : vector<16x128xf32>
    %87 = vector.extract_strided_slice %69 {offsets = [0, 256], sizes = [16, 128], strides = [1, 1]} : vector<16x384xf32> to vector<16x128xf32>
    %88 = vector.extract_strided_slice %70 {offsets = [0, 256], sizes = [16, 128], strides = [1, 1]} : vector<16x384xf32> to vector<16x128xf32>
    %89 = arith.addf %88, %32 : vector<16x128xf32>
    %90 = arith.mulf %78, %89 : vector<16x128xf32>
    %91 = arith.addf %87, %90 : vector<16x128xf32>
    %92 = math.tanh %91 : vector<16x128xf32>
    %cst_45 = arith.constant 1.000000e+00 : f32
    %93 = vector.broadcast %cst_45 : f32 to vector<16x128xf32>
    %94 = arith.subf %93, %86 : vector<16x128xf32>
    %95 = arith.mulf %94, %92 : vector<16x128xf32>
    %96 = arith.mulf %86, %34 : vector<16x128xf32>
    %97 = arith.addf %95, %96 : vector<16x128xf32>
    %c0_i32_46 = arith.constant 0 : i32
    %98 = arith.addi %4, %c0_i32_46 : i32
    %99 = vector.broadcast %98 : i32 to vector<16x1xi32>
    %100 = arith.cmpi slt, %99, %3 : vector<16x1xi32>
    %c7_i32 = arith.constant 7 : i32
    %101 = arith.addi %6, %c7_i32 : i32
    %102 = vector.broadcast %101 : i32 to vector<16x1xi32>
    %103 = arith.cmpi slt, %102, %3 : vector<16x1xi32>
    %104 = vector.shape_cast %100 : vector<16x1xi1> to vector<16x1xi1>
    %105 = vector.broadcast %104 : vector<16x1xi1> to vector<16x128xi1>
    %106 = arith.select %105, %68, %33 : vector<16x128xi1>, vector<16x128xf32>
    %107 = vector.shape_cast %103 : vector<16x1xi1> to vector<16x1xi1>
    %108 = vector.broadcast %107 : vector<16x1xi1> to vector<16x128xi1>
    %109 = arith.select %108, %97, %34 : vector<16x128xi1>, vector<16x128xf32>
    %cst_47 = arith.constant 0.000000e+00 : f32
    %110 = vector.shape_cast %100 : vector<16x1xi1> to vector<16x1xi1>
    %111 = vector.broadcast %110 : vector<16x1xi1> to vector<16x128xi1>
    %112 = vector.broadcast %cst_47 : f32 to vector<16x128xf32>
    %113 = arith.select %111, %106, %112 : vector<16x128xi1>, vector<16x128xf32>
    %114 = arith.truncf %113 : vector<16x128xf32> to vector<16x128xbf16>
    %c0_48 = arith.constant 0 : index
    %c0_49 = arith.constant 0 : index
    %115 = vector.load %arg8[%c0_48, %c0_49] : memref<128x128xbf16, #tpu.memory_space<vmem>>, vector<16x128xbf16>
    tpu.vector_store %arg8[%c0_48, %c0_49], %114 {strides = array<i32>} : memref<128x128xbf16, #tpu.memory_space<vmem>>, vector<16x128xbf16>,
    %cst_50 = arith.constant 0.000000e+00 : f32
    %116 = vector.shape_cast %103 : vector<16x1xi1> to vector<16x1xi1>
    %117 = vector.broadcast %116 : vector<16x1xi1> to vector<16x128xi1>
    %118 = vector.broadcast %cst_50 : f32 to vector<16x128xf32>
    %119 = arith.select %117, %109, %118 : vector<16x128xi1>, vector<16x128xf32>
    %120 = arith.truncf %119 : vector<16x128xf32> to vector<16x128xbf16>
    %c112_51 = arith.constant 112 : index
    %c0_52 = arith.constant 0 : index
    %121 = vector.load %arg9[%c112_51, %c0_52] : memref<128x128xbf16, #tpu.memory_space<vmem>>, vector<16x128xbf16>
    tpu.vector_store %arg9[%c112_51, %c0_52], %120 {strides = array<i32>} : memref<128x128xbf16, #tpu.memory_space<vmem>>, vector<16x128xbf16>,
    %122 = arith.truncf %106 : vector<16x128xf32> to vector<16x128xbf16>
    %123 = arith.truncf %109 : vector<16x128xf32> to vector<16x128xbf16>
    %124 = tpu.concatenate %122, %123 in 1 : vector<16x128xbf16>, vector<16x128xbf16> -> vector<16x256xbf16>
    %c0_53 = arith.constant 0 : index
    %c0_54 = arith.constant 0 : index
    %125 = vector.load %arg5[%c0_53, %c0_54] : memref<256x768xbf16, #tpu.memory_space<vmem>>, vector<256x768xbf16>
    %cst_55 = arith.constant dense<0.000000e+00> : vector<16x768xf32>
    %126 = tpu.matmul %124, %125, %cst_55 {dimension_numbers = #tpu.dot_dimension_numbers<[1], [0], [0], [1], [0, 0, 1, 1], [], []>} : vector<16x256xbf16>, vector<256x768xbf16>, vector<16x768xf32> -> vector<16x768xf32>
    %c16 = arith.constant 16 : index
    %c0_56 = arith.constant 0 : index
    %127 = vector.load %arg13[%c16, %c0_56] : memref<128x384xf32, #tpu.memory_space<vmem>>, vector<16x384xf32>
    %128 = vector.extract_strided_slice %126 {offsets = [0, 0], sizes = [16, 384], strides = [1, 1]} : vector<16x768xf32> to vector<16x384xf32>
    %129 = vector.extract_strided_slice %127 {offsets = [0, 0], sizes = [16, 128], strides = [1, 1]} : vector<16x384xf32> to vector<16x128xf32>
    %130 = vector.extract_strided_slice %128 {offsets = [0, 0], sizes = [16, 128], strides = [1, 1]} : vector<16x384xf32> to vector<16x128xf32>
    %131 = arith.addf %129, %130 : vector<16x128xf32>
    %132 = arith.negf %131 : vector<16x128xf32>
    %133 = math.exp %132 : vector<16x128xf32>
    %cst_57 = arith.constant 1.000000e+00 : f32
    %134 = vector.broadcast %cst_57 : f32 to vector<16x128xf32>
    %135 = arith.addf %134, %133 : vector<16x128xf32>
    %136 = arith.divf %134, %135 : vector<16x128xf32>
    %137 = vector.extract_strided_slice %127 {offsets = [0, 128], sizes = [16, 128], strides = [1, 1]} : vector<16x384xf32> to vector<16x128xf32>
    %138 = vector.extract_strided_slice %128 {offsets = [0, 128], sizes = [16, 128], strides = [1, 1]} : vector<16x384xf32> to vector<16x128xf32>
    %139 = arith.addf %137, %138 : vector<16x128xf32>
    %140 = arith.negf %139 : vector<16x128xf32>
    %141 = math.exp %140 : vector<16x128xf32>
    %cst_58 = arith.constant 1.000000e+00 : f32
    %142 = vector.broadcast %cst_58 : f32 to vector<16x128xf32>
    %143 = arith.addf %142, %141 : vector<16x128xf32>
    %144 = arith.divf %142, %143 : vector<16x128xf32>
    %145 = vector.extract_strided_slice %127 {offsets = [0, 256], sizes = [16, 128], strides = [1, 1]} : vector<16x384xf32> to vector<16x128xf32>
    %146 = vector.extract_strided_slice %128 {offsets = [0, 256], sizes = [16, 128], strides = [1, 1]} : vector<16x384xf32> to vector<16x128xf32>
    %147 = arith.addf %146, %28 : vector<16x128xf32>
    %148 = arith.mulf %136, %147 : vector<16x128xf32>
    %149 = arith.addf %145, %148 : vector<16x128xf32>
    %150 = math.tanh %149 : vector<16x128xf32>
    %cst_59 = arith.constant 1.000000e+00 : f32
    %151 = vector.broadcast %cst_59 : f32 to vector<16x128xf32>
    %152 = arith.subf %151, %144 : vector<16x128xf32>
    %153 = arith.mulf %152, %150 : vector<16x128xf32>
    %154 = arith.mulf %144, %106 : vector<16x128xf32>
    %155 = arith.addf %153, %154 : vector<16x128xf32>
    %c96 = arith.constant 96 : index
    %c0_60 = arith.constant 0 : index
    %156 = vector.load %arg14[%c96, %c0_60] : memref<128x384xf32, #tpu.memory_space<vmem>>, vector<16x384xf32>
    %157 = vector.extract_strided_slice %126 {offsets = [0, 384], sizes = [16, 384], strides = [1, 1]} : vector<16x768xf32> to vector<16x384xf32>
    %158 = vector.extract_strided_slice %156 {offsets = [0, 0], sizes = [16, 128], strides = [1, 1]} : vector<16x384xf32> to vector<16x128xf32>
    %159 = vector.extract_strided_slice %157 {offsets = [0, 0], sizes = [16, 128], strides = [1, 1]} : vector<16x384xf32> to vector<16x128xf32>
    %160 = arith.addf %158, %159 : vector<16x128xf32>
    %161 = arith.negf %160 : vector<16x128xf32>
    %162 = math.exp %161 : vector<16x128xf32>
    %cst_61 = arith.constant 1.000000e+00 : f32
    %163 = vector.broadcast %cst_61 : f32 to vector<16x128xf32>
    %164 = arith.addf %163, %162 : vector<16x128xf32>
    %165 = arith.divf %163, %164 : vector<16x128xf32>
    %166 = vector.extract_strided_slice %156 {offsets = [0, 128], sizes = [16, 128], strides = [1, 1]} : vector<16x384xf32> to vector<16x128xf32>
    %167 = vector.extract_strided_slice %157 {offsets = [0, 128], sizes = [16, 128], strides = [1, 1]} : vector<16x384xf32> to vector<16x128xf32>
    %168 = arith.addf %166, %167 : vector<16x128xf32>
    %169 = arith.negf %168 : vector<16x128xf32>
    %170 = math.exp %169 : vector<16x128xf32>
    %cst_62 = arith.constant 1.000000e+00 : f32
    %171 = vector.broadcast %cst_62 : f32 to vector<16x128xf32>
    %172 = arith.addf %171, %170 : vector<16x128xf32>
    %173 = arith.divf %171, %172 : vector<16x128xf32>
    %174 = vector.extract_strided_slice %156 {offsets = [0, 256], sizes = [16, 128], strides = [1, 1]} : vector<16x384xf32> to vector<16x128xf32>
    %175 = vector.extract_strided_slice %157 {offsets = [0, 256], sizes = [16, 128], strides = [1, 1]} : vector<16x384xf32> to vector<16x128xf32>
    %176 = arith.addf %175, %32 : vector<16x128xf32>
    %177 = arith.mulf %165, %176 : vector<16x128xf32>
    %178 = arith.addf %174, %177 : vector<16x128xf32>
    %179 = math.tanh %178 : vector<16x128xf32>
    %cst_63 = arith.constant 1.000000e+00 : f32
    %180 = vector.broadcast %cst_63 : f32 to vector<16x128xf32>
    %181 = arith.subf %180, %173 : vector<16x128xf32>
    %182 = arith.mulf %181, %179 : vector<16x128xf32>
    %183 = arith.mulf %173, %109 : vector<16x128xf32>
    %184 = arith.addf %182, %183 : vector<16x128xf32>
    %c1_i32 = arith.constant 1 : i32
    %185 = arith.addi %4, %c1_i32 : i32
    %186 = vector.broadcast %185 : i32 to vector<16x1xi32>
    %187 = arith.cmpi slt, %186, %3 : vector<16x1xi32>
    %c6_i32 = arith.constant 6 : i32
    %188 = arith.addi %6, %c6_i32 : i32
    %189 = vector.broadcast %188 : i32 to vector<16x1xi32>
    %190 = arith.cmpi slt, %189, %3 : vector<16x1xi32>
    %191 = vector.shape_cast %187 : vector<16x1xi1> to vector<16x1xi1>
    %192 = vector.broadcast %191 : vector<16x1xi1> to vector<16x128xi1>
    %193 = arith.select %192, %155, %106 : vector<16x128xi1>, vector<16x128xf32>
    %194 = vector.shape_cast %190 : vector<16x1xi1> to vector<16x1xi1>
    %195 = vector.broadcast %194 : vector<16x1xi1> to vector<16x128xi1>
    %196 = arith.select %195, %184, %109 : vector<16x128xi1>, vector<16x128xf32>
    %cst_64 = arith.constant 0.000000e+00 : f32
    %197 = vector.shape_cast %187 : vector<16x1xi1> to vector<16x1xi1>
    %198 = vector.broadcast %197 : vector<16x1xi1> to vector<16x128xi1>
    %199 = vector.broadcast %cst_64 : f32 to vector<16x128xf32>
    %200 = arith.select %198, %193, %199 : vector<16x128xi1>, vector<16x128xf32>
    %201 = arith.truncf %200 : vector<16x128xf32> to vector<16x128xbf16>
    %c16_65 = arith.constant 16 : index
    %c0_66 = arith.constant 0 : index
    %202 = vector.load %arg8[%c16_65, %c0_66] : memref<128x128xbf16, #tpu.memory_space<vmem>>, vector<16x128xbf16>
    tpu.vector_store %arg8[%c16_65, %c0_66], %201 {strides = array<i32>} : memref<128x128xbf16, #tpu.memory_space<vmem>>, vector<16x128xbf16>,
    %cst_67 = arith.constant 0.000000e+00 : f32
    %203 = vector.shape_cast %190 : vector<16x1xi1> to vector<16x1xi1>
    %204 = vector.broadcast %203 : vector<16x1xi1> to vector<16x128xi1>
    %205 = vector.broadcast %cst_67 : f32 to vector<16x128xf32>
    %206 = arith.select %204, %196, %205 : vector<16x128xi1>, vector<16x128xf32>
    %207 = arith.truncf %206 : vector<16x128xf32> to vector<16x128xbf16>
    %c96_68 = arith.constant 96 : index
    %c0_69 = arith.constant 0 : index
    %208 = vector.load %arg9[%c96_68, %c0_69] : memref<128x128xbf16, #tpu.memory_space<vmem>>, vector<16x128xbf16>
    tpu.vector_store %arg9[%c96_68, %c0_69], %207 {strides = array<i32>} : memref<128x128xbf16, #tpu.memory_space<vmem>>, vector<16x128xbf16>,
    %209 = arith.truncf %193 : vector<16x128xf32> to vector<16x128xbf16>
    %210 = arith.truncf %196 : vector<16x128xf32> to vector<16x128xbf16>
    %211 = tpu.concatenate %209, %210 in 1 : vector<16x128xbf16>, vector<16x128xbf16> -> vector<16x256xbf16>
    %c0_70 = arith.constant 0 : index
    %c0_71 = arith.constant 0 : index
    %212 = vector.load %arg5[%c0_70, %c0_71] : memref<256x768xbf16, #tpu.memory_space<vmem>>, vector<256x768xbf16>
    %cst_72 = arith.constant dense<0.000000e+00> : vector<16x768xf32>
    %213 = tpu.matmul %211, %212, %cst_72 {dimension_numbers = #tpu.dot_dimension_numbers<[1], [0], [0], [1], [0, 0, 1, 1], [], []>} : vector<16x256xbf16>, vector<256x768xbf16>, vector<16x768xf32> -> vector<16x768xf32>
    %c32 = arith.constant 32 : index
    %c0_73 = arith.constant 0 : index
    %214 = vector.load %arg13[%c32, %c0_73] : memref<128x384xf32, #tpu.memory_space<vmem>>, vector<16x384xf32>
    %215 = vector.extract_strided_slice %213 {offsets = [0, 0], sizes = [16, 384], strides = [1, 1]} : vector<16x768xf32> to vector<16x384xf32>
    %216 = vector.extract_strided_slice %214 {offsets = [0, 0], sizes = [16, 128], strides = [1, 1]} : vector<16x384xf32> to vector<16x128xf32>
    %217 = vector.extract_strided_slice %215 {offsets = [0, 0], sizes = [16, 128], strides = [1, 1]} : vector<16x384xf32> to vector<16x128xf32>
    %218 = arith.addf %216, %217 : vector<16x128xf32>
    %219 = arith.negf %218 : vector<16x128xf32>
    %220 = math.exp %219 : vector<16x128xf32>
    %cst_74 = arith.constant 1.000000e+00 : f32
    %221 = vector.broadcast %cst_74 : f32 to vector<16x128xf32>
    %222 = arith.addf %221, %220 : vector<16x128xf32>
    %223 = arith.divf %221, %222 : vector<16x128xf32>
    %224 = vector.extract_strided_slice %214 {offsets = [0, 128], sizes = [16, 128], strides = [1, 1]} : vector<16x384xf32> to vector<16x128xf32>
    %225 = vector.extract_strided_slice %215 {offsets = [0, 128], sizes = [16, 128], strides = [1, 1]} : vector<16x384xf32> to vector<16x128xf32>
    %226 = arith.addf %224, %225 : vector<16x128xf32>
    %227 = arith.negf %226 : vector<16x128xf32>
    %228 = math.exp %227 : vector<16x128xf32>
    %cst_75 = arith.constant 1.000000e+00 : f32
    %229 = vector.broadcast %cst_75 : f32 to vector<16x128xf32>
    %230 = arith.addf %229, %228 : vector<16x128xf32>
    %231 = arith.divf %229, %230 : vector<16x128xf32>
    %232 = vector.extract_strided_slice %214 {offsets = [0, 256], sizes = [16, 128], strides = [1, 1]} : vector<16x384xf32> to vector<16x128xf32>
    %233 = vector.extract_strided_slice %215 {offsets = [0, 256], sizes = [16, 128], strides = [1, 1]} : vector<16x384xf32> to vector<16x128xf32>
    %234 = arith.addf %233, %28 : vector<16x128xf32>
    %235 = arith.mulf %223, %234 : vector<16x128xf32>
    %236 = arith.addf %232, %235 : vector<16x128xf32>
    %237 = math.tanh %236 : vector<16x128xf32>
    %cst_76 = arith.constant 1.000000e+00 : f32
    %238 = vector.broadcast %cst_76 : f32 to vector<16x128xf32>
    %239 = arith.subf %238, %231 : vector<16x128xf32>
    %240 = arith.mulf %239, %237 : vector<16x128xf32>
    %241 = arith.mulf %231, %193 : vector<16x128xf32>
    %242 = arith.addf %240, %241 : vector<16x128xf32>
    %c80 = arith.constant 80 : index
    %c0_77 = arith.constant 0 : index
    %243 = vector.load %arg14[%c80, %c0_77] : memref<128x384xf32, #tpu.memory_space<vmem>>, vector<16x384xf32>
    %244 = vector.extract_strided_slice %213 {offsets = [0, 384], sizes = [16, 384], strides = [1, 1]} : vector<16x768xf32> to vector<16x384xf32>
    %245 = vector.extract_strided_slice %243 {offsets = [0, 0], sizes = [16, 128], strides = [1, 1]} : vector<16x384xf32> to vector<16x128xf32>
    %246 = vector.extract_strided_slice %244 {offsets = [0, 0], sizes = [16, 128], strides = [1, 1]} : vector<16x384xf32> to vector<16x128xf32>
    %247 = arith.addf %245, %246 : vector<16x128xf32>
    %248 = arith.negf %247 : vector<16x128xf32>
    %249 = math.exp %248 : vector<16x128xf32>
    %cst_78 = arith.constant 1.000000e+00 : f32
    %250 = vector.broadcast %cst_78 : f32 to vector<16x128xf32>
    %251 = arith.addf %250, %249 : vector<16x128xf32>
    %252 = arith.divf %250, %251 : vector<16x128xf32>
    %253 = vector.extract_strided_slice %243 {offsets = [0, 128], sizes = [16, 128], strides = [1, 1]} : vector<16x384xf32> to vector<16x128xf32>
    %254 = vector.extract_strided_slice %244 {offsets = [0, 128], sizes = [16, 128], strides = [1, 1]} : vector<16x384xf32> to vector<16x128xf32>
    %255 = arith.addf %253, %254 : vector<16x128xf32>
    %256 = arith.negf %255 : vector<16x128xf32>
    %257 = math.exp %256 : vector<16x128xf32>
    %cst_79 = arith.constant 1.000000e+00 : f32
    %258 = vector.broadcast %cst_79 : f32 to vector<16x128xf32>
    %259 = arith.addf %258, %257 : vector<16x128xf32>
    %260 = arith.divf %258, %259 : vector<16x128xf32>
    %261 = vector.extract_strided_slice %243 {offsets = [0, 256], sizes = [16, 128], strides = [1, 1]} : vector<16x384xf32> to vector<16x128xf32>
    %262 = vector.extract_strided_slice %244 {offsets = [0, 256], sizes = [16, 128], strides = [1, 1]} : vector<16x384xf32> to vector<16x128xf32>
    %263 = arith.addf %262, %32 : vector<16x128xf32>
    %264 = arith.mulf %252, %263 : vector<16x128xf32>
    %265 = arith.addf %261, %264 : vector<16x128xf32>
    %266 = math.tanh %265 : vector<16x128xf32>
    %cst_80 = arith.constant 1.000000e+00 : f32
    %267 = vector.broadcast %cst_80 : f32 to vector<16x128xf32>
    %268 = arith.subf %267, %260 : vector<16x128xf32>
    %269 = arith.mulf %268, %266 : vector<16x128xf32>
    %270 = arith.mulf %260, %196 : vector<16x128xf32>
    %271 = arith.addf %269, %270 : vector<16x128xf32>
    %c2_i32 = arith.constant 2 : i32
    %272 = arith.addi %4, %c2_i32 : i32
    %273 = vector.broadcast %272 : i32 to vector<16x1xi32>
    %274 = arith.cmpi slt, %273, %3 : vector<16x1xi32>
    %c5_i32 = arith.constant 5 : i32
    %275 = arith.addi %6, %c5_i32 : i32
    %276 = vector.broadcast %275 : i32 to vector<16x1xi32>
    %277 = arith.cmpi slt, %276, %3 : vector<16x1xi32>
    %278 = vector.shape_cast %274 : vector<16x1xi1> to vector<16x1xi1>
    %279 = vector.broadcast %278 : vector<16x1xi1> to vector<16x128xi1>
    %280 = arith.select %279, %242, %193 : vector<16x128xi1>, vector<16x128xf32>
    %281 = vector.shape_cast %277 : vector<16x1xi1> to vector<16x1xi1>
    %282 = vector.broadcast %281 : vector<16x1xi1> to vector<16x128xi1>
    %283 = arith.select %282, %271, %196 : vector<16x128xi1>, vector<16x128xf32>
    %cst_81 = arith.constant 0.000000e+00 : f32
    %284 = vector.shape_cast %274 : vector<16x1xi1> to vector<16x1xi1>
    %285 = vector.broadcast %284 : vector<16x1xi1> to vector<16x128xi1>
    %286 = vector.broadcast %cst_81 : f32 to vector<16x128xf32>
    %287 = arith.select %285, %280, %286 : vector<16x128xi1>, vector<16x128xf32>
    %288 = arith.truncf %287 : vector<16x128xf32> to vector<16x128xbf16>
    %c32_82 = arith.constant 32 : index
    %c0_83 = arith.constant 0 : index
    %289 = vector.load %arg8[%c32_82, %c0_83] : memref<128x128xbf16, #tpu.memory_space<vmem>>, vector<16x128xbf16>
    tpu.vector_store %arg8[%c32_82, %c0_83], %288 {strides = array<i32>} : memref<128x128xbf16, #tpu.memory_space<vmem>>, vector<16x128xbf16>,
    %cst_84 = arith.constant 0.000000e+00 : f32
    %290 = vector.shape_cast %277 : vector<16x1xi1> to vector<16x1xi1>
    %291 = vector.broadcast %290 : vector<16x1xi1> to vector<16x128xi1>
    %292 = vector.broadcast %cst_84 : f32 to vector<16x128xf32>
    %293 = arith.select %291, %283, %292 : vector<16x128xi1>, vector<16x128xf32>
    %294 = arith.truncf %293 : vector<16x128xf32> to vector<16x128xbf16>
    %c80_85 = arith.constant 80 : index
    %c0_86 = arith.constant 0 : index
    %295 = vector.load %arg9[%c80_85, %c0_86] : memref<128x128xbf16, #tpu.memory_space<vmem>>, vector<16x128xbf16>
    tpu.vector_store %arg9[%c80_85, %c0_86], %294 {strides = array<i32>} : memref<128x128xbf16, #tpu.memory_space<vmem>>, vector<16x128xbf16>,
    %296 = arith.truncf %280 : vector<16x128xf32> to vector<16x128xbf16>
    %297 = arith.truncf %283 : vector<16x128xf32> to vector<16x128xbf16>
    %298 = tpu.concatenate %296, %297 in 1 : vector<16x128xbf16>, vector<16x128xbf16> -> vector<16x256xbf16>
    %c0_87 = arith.constant 0 : index
    %c0_88 = arith.constant 0 : index
    %299 = vector.load %arg5[%c0_87, %c0_88] : memref<256x768xbf16, #tpu.memory_space<vmem>>, vector<256x768xbf16>
    %cst_89 = arith.constant dense<0.000000e+00> : vector<16x768xf32>
    %300 = tpu.matmul %298, %299, %cst_89 {dimension_numbers = #tpu.dot_dimension_numbers<[1], [0], [0], [1], [0, 0, 1, 1], [], []>} : vector<16x256xbf16>, vector<256x768xbf16>, vector<16x768xf32> -> vector<16x768xf32>
    %c48 = arith.constant 48 : index
    %c0_90 = arith.constant 0 : index
    %301 = vector.load %arg13[%c48, %c0_90] : memref<128x384xf32, #tpu.memory_space<vmem>>, vector<16x384xf32>
    %302 = vector.extract_strided_slice %300 {offsets = [0, 0], sizes = [16, 384], strides = [1, 1]} : vector<16x768xf32> to vector<16x384xf32>
    %303 = vector.extract_strided_slice %301 {offsets = [0, 0], sizes = [16, 128], strides = [1, 1]} : vector<16x384xf32> to vector<16x128xf32>
    %304 = vector.extract_strided_slice %302 {offsets = [0, 0], sizes = [16, 128], strides = [1, 1]} : vector<16x384xf32> to vector<16x128xf32>
    %305 = arith.addf %303, %304 : vector<16x128xf32>
    %306 = arith.negf %305 : vector<16x128xf32>
    %307 = math.exp %306 : vector<16x128xf32>
    %cst_91 = arith.constant 1.000000e+00 : f32
    %308 = vector.broadcast %cst_91 : f32 to vector<16x128xf32>
    %309 = arith.addf %308, %307 : vector<16x128xf32>
    %310 = arith.divf %308, %309 : vector<16x128xf32>
    %311 = vector.extract_strided_slice %301 {offsets = [0, 128], sizes = [16, 128], strides = [1, 1]} : vector<16x384xf32> to vector<16x128xf32>
    %312 = vector.extract_strided_slice %302 {offsets = [0, 128], sizes = [16, 128], strides = [1, 1]} : vector<16x384xf32> to vector<16x128xf32>
    %313 = arith.addf %311, %312 : vector<16x128xf32>
    %314 = arith.negf %313 : vector<16x128xf32>
    %315 = math.exp %314 : vector<16x128xf32>
    %cst_92 = arith.constant 1.000000e+00 : f32
    %316 = vector.broadcast %cst_92 : f32 to vector<16x128xf32>
    %317 = arith.addf %316, %315 : vector<16x128xf32>
    %318 = arith.divf %316, %317 : vector<16x128xf32>
    %319 = vector.extract_strided_slice %301 {offsets = [0, 256], sizes = [16, 128], strides = [1, 1]} : vector<16x384xf32> to vector<16x128xf32>
    %320 = vector.extract_strided_slice %302 {offsets = [0, 256], sizes = [16, 128], strides = [1, 1]} : vector<16x384xf32> to vector<16x128xf32>
    %321 = arith.addf %320, %28 : vector<16x128xf32>
    %322 = arith.mulf %310, %321 : vector<16x128xf32>
    %323 = arith.addf %319, %322 : vector<16x128xf32>
    %324 = math.tanh %323 : vector<16x128xf32>
    %cst_93 = arith.constant 1.000000e+00 : f32
    %325 = vector.broadcast %cst_93 : f32 to vector<16x128xf32>
    %326 = arith.subf %325, %318 : vector<16x128xf32>
    %327 = arith.mulf %326, %324 : vector<16x128xf32>
    %328 = arith.mulf %318, %280 : vector<16x128xf32>
    %329 = arith.addf %327, %328 : vector<16x128xf32>
    %c64 = arith.constant 64 : index
    %c0_94 = arith.constant 0 : index
    %330 = vector.load %arg14[%c64, %c0_94] : memref<128x384xf32, #tpu.memory_space<vmem>>, vector<16x384xf32>
    %331 = vector.extract_strided_slice %300 {offsets = [0, 384], sizes = [16, 384], strides = [1, 1]} : vector<16x768xf32> to vector<16x384xf32>
    %332 = vector.extract_strided_slice %330 {offsets = [0, 0], sizes = [16, 128], strides = [1, 1]} : vector<16x384xf32> to vector<16x128xf32>
    %333 = vector.extract_strided_slice %331 {offsets = [0, 0], sizes = [16, 128], strides = [1, 1]} : vector<16x384xf32> to vector<16x128xf32>
    %334 = arith.addf %332, %333 : vector<16x128xf32>
    %335 = arith.negf %334 : vector<16x128xf32>
    %336 = math.exp %335 : vector<16x128xf32>
    %cst_95 = arith.constant 1.000000e+00 : f32
    %337 = vector.broadcast %cst_95 : f32 to vector<16x128xf32>
    %338 = arith.addf %337, %336 : vector<16x128xf32>
    %339 = arith.divf %337, %338 : vector<16x128xf32>
    %340 = vector.extract_strided_slice %330 {offsets = [0, 128], sizes = [16, 128], strides = [1, 1]} : vector<16x384xf32> to vector<16x128xf32>
    %341 = vector.extract_strided_slice %331 {offsets = [0, 128], sizes = [16, 128], strides = [1, 1]} : vector<16x384xf32> to vector<16x128xf32>
    %342 = arith.addf %340, %341 : vector<16x128xf32>
    %343 = arith.negf %342 : vector<16x128xf32>
    %344 = math.exp %343 : vector<16x128xf32>
    %cst_96 = arith.constant 1.000000e+00 : f32
    %345 = vector.broadcast %cst_96 : f32 to vector<16x128xf32>
    %346 = arith.addf %345, %344 : vector<16x128xf32>
    %347 = arith.divf %345, %346 : vector<16x128xf32>
    %348 = vector.extract_strided_slice %330 {offsets = [0, 256], sizes = [16, 128], strides = [1, 1]} : vector<16x384xf32> to vector<16x128xf32>
    %349 = vector.extract_strided_slice %331 {offsets = [0, 256], sizes = [16, 128], strides = [1, 1]} : vector<16x384xf32> to vector<16x128xf32>
    %350 = arith.addf %349, %32 : vector<16x128xf32>
    %351 = arith.mulf %339, %350 : vector<16x128xf32>
    %352 = arith.addf %348, %351 : vector<16x128xf32>
    %353 = math.tanh %352 : vector<16x128xf32>
    %cst_97 = arith.constant 1.000000e+00 : f32
    %354 = vector.broadcast %cst_97 : f32 to vector<16x128xf32>
    %355 = arith.subf %354, %347 : vector<16x128xf32>
    %356 = arith.mulf %355, %353 : vector<16x128xf32>
    %357 = arith.mulf %347, %283 : vector<16x128xf32>
    %358 = arith.addf %356, %357 : vector<16x128xf32>
    %c3_i32 = arith.constant 3 : i32
    %359 = arith.addi %4, %c3_i32 : i32
    %360 = vector.broadcast %359 : i32 to vector<16x1xi32>
    %361 = arith.cmpi slt, %360, %3 : vector<16x1xi32>
    %c4_i32 = arith.constant 4 : i32
    %362 = arith.addi %6, %c4_i32 : i32
    %363 = vector.broadcast %362 : i32 to vector<16x1xi32>
    %364 = arith.cmpi slt, %363, %3 : vector<16x1xi32>
    %365 = vector.shape_cast %361 : vector<16x1xi1> to vector<16x1xi1>
    %366 = vector.broadcast %365 : vector<16x1xi1> to vector<16x128xi1>
    %367 = arith.select %366, %329, %280 : vector<16x128xi1>, vector<16x128xf32>
    %368 = vector.shape_cast %364 : vector<16x1xi1> to vector<16x1xi1>
    %369 = vector.broadcast %368 : vector<16x1xi1> to vector<16x128xi1>
    %370 = arith.select %369, %358, %283 : vector<16x128xi1>, vector<16x128xf32>
    %cst_98 = arith.constant 0.000000e+00 : f32
    %371 = vector.shape_cast %361 : vector<16x1xi1> to vector<16x1xi1>
    %372 = vector.broadcast %371 : vector<16x1xi1> to vector<16x128xi1>
    %373 = vector.broadcast %cst_98 : f32 to vector<16x128xf32>
    %374 = arith.select %372, %367, %373 : vector<16x128xi1>, vector<16x128xf32>
    %375 = arith.truncf %374 : vector<16x128xf32> to vector<16x128xbf16>
    %c48_99 = arith.constant 48 : index
    %c0_100 = arith.constant 0 : index
    %376 = vector.load %arg8[%c48_99, %c0_100] : memref<128x128xbf16, #tpu.memory_space<vmem>>, vector<16x128xbf16>
    tpu.vector_store %arg8[%c48_99, %c0_100], %375 {strides = array<i32>} : memref<128x128xbf16, #tpu.memory_space<vmem>>, vector<16x128xbf16>,
    %cst_101 = arith.constant 0.000000e+00 : f32
    %377 = vector.shape_cast %364 : vector<16x1xi1> to vector<16x1xi1>
    %378 = vector.broadcast %377 : vector<16x1xi1> to vector<16x128xi1>
    %379 = vector.broadcast %cst_101 : f32 to vector<16x128xf32>
    %380 = arith.select %378, %370, %379 : vector<16x128xi1>, vector<16x128xf32>
    %381 = arith.truncf %380 : vector<16x128xf32> to vector<16x128xbf16>
    %c64_102 = arith.constant 64 : index
    %c0_103 = arith.constant 0 : index
    %382 = vector.load %arg9[%c64_102, %c0_103] : memref<128x128xbf16, #tpu.memory_space<vmem>>, vector<16x128xbf16>
    tpu.vector_store %arg9[%c64_102, %c0_103], %381 {strides = array<i32>} : memref<128x128xbf16, #tpu.memory_space<vmem>>, vector<16x128xbf16>,
    %383 = arith.truncf %367 : vector<16x128xf32> to vector<16x128xbf16>
    %384 = arith.truncf %370 : vector<16x128xf32> to vector<16x128xbf16>
    %385 = tpu.concatenate %383, %384 in 1 : vector<16x128xbf16>, vector<16x128xbf16> -> vector<16x256xbf16>
    %c0_104 = arith.constant 0 : index
    %c0_105 = arith.constant 0 : index
    %386 = vector.load %arg5[%c0_104, %c0_105] : memref<256x768xbf16, #tpu.memory_space<vmem>>, vector<256x768xbf16>
    %cst_106 = arith.constant dense<0.000000e+00> : vector<16x768xf32>
    %387 = tpu.matmul %385, %386, %cst_106 {dimension_numbers = #tpu.dot_dimension_numbers<[1], [0], [0], [1], [0, 0, 1, 1], [], []>} : vector<16x256xbf16>, vector<256x768xbf16>, vector<16x768xf32> -> vector<16x768xf32>
    %c64_107 = arith.constant 64 : index
    %c0_108 = arith.constant 0 : index
    %388 = vector.load %arg13[%c64_107, %c0_108] : memref<128x384xf32, #tpu.memory_space<vmem>>, vector<16x384xf32>
    %389 = vector.extract_strided_slice %387 {offsets = [0, 0], sizes = [16, 384], strides = [1, 1]} : vector<16x768xf32> to vector<16x384xf32>
    %390 = vector.extract_strided_slice %388 {offsets = [0, 0], sizes = [16, 128], strides = [1, 1]} : vector<16x384xf32> to vector<16x128xf32>
    %391 = vector.extract_strided_slice %389 {offsets = [0, 0], sizes = [16, 128], strides = [1, 1]} : vector<16x384xf32> to vector<16x128xf32>
    %392 = arith.addf %390, %391 : vector<16x128xf32>
    %393 = arith.negf %392 : vector<16x128xf32>
    %394 = math.exp %393 : vector<16x128xf32>
    %cst_109 = arith.constant 1.000000e+00 : f32
    %395 = vector.broadcast %cst_109 : f32 to vector<16x128xf32>
    %396 = arith.addf %395, %394 : vector<16x128xf32>
    %397 = arith.divf %395, %396 : vector<16x128xf32>
    %398 = vector.extract_strided_slice %388 {offsets = [0, 128], sizes = [16, 128], strides = [1, 1]} : vector<16x384xf32> to vector<16x128xf32>
    %399 = vector.extract_strided_slice %389 {offsets = [0, 128], sizes = [16, 128], strides = [1, 1]} : vector<16x384xf32> to vector<16x128xf32>
    %400 = arith.addf %398, %399 : vector<16x128xf32>
    %401 = arith.negf %400 : vector<16x128xf32>
    %402 = math.exp %401 : vector<16x128xf32>
    %cst_110 = arith.constant 1.000000e+00 : f32
    %403 = vector.broadcast %cst_110 : f32 to vector<16x128xf32>
    %404 = arith.addf %403, %402 : vector<16x128xf32>
    %405 = arith.divf %403, %404 : vector<16x128xf32>
    %406 = vector.extract_strided_slice %388 {offsets = [0, 256], sizes = [16, 128], strides = [1, 1]} : vector<16x384xf32> to vector<16x128xf32>
    %407 = vector.extract_strided_slice %389 {offsets = [0, 256], sizes = [16, 128], strides = [1, 1]} : vector<16x384xf32> to vector<16x128xf32>
    %408 = arith.addf %407, %28 : vector<16x128xf32>
    %409 = arith.mulf %397, %408 : vector<16x128xf32>
    %410 = arith.addf %406, %409 : vector<16x128xf32>
    %411 = math.tanh %410 : vector<16x128xf32>
    %cst_111 = arith.constant 1.000000e+00 : f32
    %412 = vector.broadcast %cst_111 : f32 to vector<16x128xf32>
    %413 = arith.subf %412, %405 : vector<16x128xf32>
    %414 = arith.mulf %413, %411 : vector<16x128xf32>
    %415 = arith.mulf %405, %367 : vector<16x128xf32>
    %416 = arith.addf %414, %415 : vector<16x128xf32>
    %c48_112 = arith.constant 48 : index
    %c0_113 = arith.constant 0 : index
    %417 = vector.load %arg14[%c48_112, %c0_113] : memref<128x384xf32, #tpu.memory_space<vmem>>, vector<16x384xf32>
    %418 = vector.extract_strided_slice %387 {offsets = [0, 384], sizes = [16, 384], strides = [1, 1]} : vector<16x768xf32> to vector<16x384xf32>
    %419 = vector.extract_strided_slice %417 {offsets = [0, 0], sizes = [16, 128], strides = [1, 1]} : vector<16x384xf32> to vector<16x128xf32>
    %420 = vector.extract_strided_slice %418 {offsets = [0, 0], sizes = [16, 128], strides = [1, 1]} : vector<16x384xf32> to vector<16x128xf32>
    %421 = arith.addf %419, %420 : vector<16x128xf32>
    %422 = arith.negf %421 : vector<16x128xf32>
    %423 = math.exp %422 : vector<16x128xf32>
    %cst_114 = arith.constant 1.000000e+00 : f32
    %424 = vector.broadcast %cst_114 : f32 to vector<16x128xf32>
    %425 = arith.addf %424, %423 : vector<16x128xf32>
    %426 = arith.divf %424, %425 : vector<16x128xf32>
    %427 = vector.extract_strided_slice %417 {offsets = [0, 128], sizes = [16, 128], strides = [1, 1]} : vector<16x384xf32> to vector<16x128xf32>
    %428 = vector.extract_strided_slice %418 {offsets = [0, 128], sizes = [16, 128], strides = [1, 1]} : vector<16x384xf32> to vector<16x128xf32>
    %429 = arith.addf %427, %428 : vector<16x128xf32>
    %430 = arith.negf %429 : vector<16x128xf32>
    %431 = math.exp %430 : vector<16x128xf32>
    %cst_115 = arith.constant 1.000000e+00 : f32
    %432 = vector.broadcast %cst_115 : f32 to vector<16x128xf32>
    %433 = arith.addf %432, %431 : vector<16x128xf32>
    %434 = arith.divf %432, %433 : vector<16x128xf32>
    %435 = vector.extract_strided_slice %417 {offsets = [0, 256], sizes = [16, 128], strides = [1, 1]} : vector<16x384xf32> to vector<16x128xf32>
    %436 = vector.extract_strided_slice %418 {offsets = [0, 256], sizes = [16, 128], strides = [1, 1]} : vector<16x384xf32> to vector<16x128xf32>
    %437 = arith.addf %436, %32 : vector<16x128xf32>
    %438 = arith.mulf %426, %437 : vector<16x128xf32>
    %439 = arith.addf %435, %438 : vector<16x128xf32>
    %440 = math.tanh %439 : vector<16x128xf32>
    %cst_116 = arith.constant 1.000000e+00 : f32
    %441 = vector.broadcast %cst_116 : f32 to vector<16x128xf32>
    %442 = arith.subf %441, %434 : vector<16x128xf32>
    %443 = arith.mulf %442, %440 : vector<16x128xf32>
    %444 = arith.mulf %434, %370 : vector<16x128xf32>
    %445 = arith.addf %443, %444 : vector<16x128xf32>
    %c4_i32_117 = arith.constant 4 : i32
    %446 = arith.addi %4, %c4_i32_117 : i32
    %447 = vector.broadcast %446 : i32 to vector<16x1xi32>
    %448 = arith.cmpi slt, %447, %3 : vector<16x1xi32>
    %c3_i32_118 = arith.constant 3 : i32
    %449 = arith.addi %6, %c3_i32_118 : i32
    %450 = vector.broadcast %449 : i32 to vector<16x1xi32>
    %451 = arith.cmpi slt, %450, %3 : vector<16x1xi32>
    %452 = vector.shape_cast %448 : vector<16x1xi1> to vector<16x1xi1>
    %453 = vector.broadcast %452 : vector<16x1xi1> to vector<16x128xi1>
    %454 = arith.select %453, %416, %367 : vector<16x128xi1>, vector<16x128xf32>
    %455 = vector.shape_cast %451 : vector<16x1xi1> to vector<16x1xi1>
    %456 = vector.broadcast %455 : vector<16x1xi1> to vector<16x128xi1>
    %457 = arith.select %456, %445, %370 : vector<16x128xi1>, vector<16x128xf32>
    %cst_119 = arith.constant 0.000000e+00 : f32
    %458 = vector.shape_cast %448 : vector<16x1xi1> to vector<16x1xi1>
    %459 = vector.broadcast %458 : vector<16x1xi1> to vector<16x128xi1>
    %460 = vector.broadcast %cst_119 : f32 to vector<16x128xf32>
    %461 = arith.select %459, %454, %460 : vector<16x128xi1>, vector<16x128xf32>
    %462 = arith.truncf %461 : vector<16x128xf32> to vector<16x128xbf16>
    %c64_120 = arith.constant 64 : index
    %c0_121 = arith.constant 0 : index
    %463 = vector.load %arg8[%c64_120, %c0_121] : memref<128x128xbf16, #tpu.memory_space<vmem>>, vector<16x128xbf16>
    tpu.vector_store %arg8[%c64_120, %c0_121], %462 {strides = array<i32>} : memref<128x128xbf16, #tpu.memory_space<vmem>>, vector<16x128xbf16>,
    %cst_122 = arith.constant 0.000000e+00 : f32
    %464 = vector.shape_cast %451 : vector<16x1xi1> to vector<16x1xi1>
    %465 = vector.broadcast %464 : vector<16x1xi1> to vector<16x128xi1>
    %466 = vector.broadcast %cst_122 : f32 to vector<16x128xf32>
    %467 = arith.select %465, %457, %466 : vector<16x128xi1>, vector<16x128xf32>
    %468 = arith.truncf %467 : vector<16x128xf32> to vector<16x128xbf16>
    %c48_123 = arith.constant 48 : index
    %c0_124 = arith.constant 0 : index
    %469 = vector.load %arg9[%c48_123, %c0_124] : memref<128x128xbf16, #tpu.memory_space<vmem>>, vector<16x128xbf16>
    tpu.vector_store %arg9[%c48_123, %c0_124], %468 {strides = array<i32>} : memref<128x128xbf16, #tpu.memory_space<vmem>>, vector<16x128xbf16>,
    %470 = arith.truncf %454 : vector<16x128xf32> to vector<16x128xbf16>
    %471 = arith.truncf %457 : vector<16x128xf32> to vector<16x128xbf16>
    %472 = tpu.concatenate %470, %471 in 1 : vector<16x128xbf16>, vector<16x128xbf16> -> vector<16x256xbf16>
    %c0_125 = arith.constant 0 : index
    %c0_126 = arith.constant 0 : index
    %473 = vector.load %arg5[%c0_125, %c0_126] : memref<256x768xbf16, #tpu.memory_space<vmem>>, vector<256x768xbf16>
    %cst_127 = arith.constant dense<0.000000e+00> : vector<16x768xf32>
    %474 = tpu.matmul %472, %473, %cst_127 {dimension_numbers = #tpu.dot_dimension_numbers<[1], [0], [0], [1], [0, 0, 1, 1], [], []>} : vector<16x256xbf16>, vector<256x768xbf16>, vector<16x768xf32> -> vector<16x768xf32>
    %c80_128 = arith.constant 80 : index
    %c0_129 = arith.constant 0 : index
    %475 = vector.load %arg13[%c80_128, %c0_129] : memref<128x384xf32, #tpu.memory_space<vmem>>, vector<16x384xf32>
    %476 = vector.extract_strided_slice %474 {offsets = [0, 0], sizes = [16, 384], strides = [1, 1]} : vector<16x768xf32> to vector<16x384xf32>
    %477 = vector.extract_strided_slice %475 {offsets = [0, 0], sizes = [16, 128], strides = [1, 1]} : vector<16x384xf32> to vector<16x128xf32>
    %478 = vector.extract_strided_slice %476 {offsets = [0, 0], sizes = [16, 128], strides = [1, 1]} : vector<16x384xf32> to vector<16x128xf32>
    %479 = arith.addf %477, %478 : vector<16x128xf32>
    %480 = arith.negf %479 : vector<16x128xf32>
    %481 = math.exp %480 : vector<16x128xf32>
    %cst_130 = arith.constant 1.000000e+00 : f32
    %482 = vector.broadcast %cst_130 : f32 to vector<16x128xf32>
    %483 = arith.addf %482, %481 : vector<16x128xf32>
    %484 = arith.divf %482, %483 : vector<16x128xf32>
    %485 = vector.extract_strided_slice %475 {offsets = [0, 128], sizes = [16, 128], strides = [1, 1]} : vector<16x384xf32> to vector<16x128xf32>
    %486 = vector.extract_strided_slice %476 {offsets = [0, 128], sizes = [16, 128], strides = [1, 1]} : vector<16x384xf32> to vector<16x128xf32>
    %487 = arith.addf %485, %486 : vector<16x128xf32>
    %488 = arith.negf %487 : vector<16x128xf32>
    %489 = math.exp %488 : vector<16x128xf32>
    %cst_131 = arith.constant 1.000000e+00 : f32
    %490 = vector.broadcast %cst_131 : f32 to vector<16x128xf32>
    %491 = arith.addf %490, %489 : vector<16x128xf32>
    %492 = arith.divf %490, %491 : vector<16x128xf32>
    %493 = vector.extract_strided_slice %475 {offsets = [0, 256], sizes = [16, 128], strides = [1, 1]} : vector<16x384xf32> to vector<16x128xf32>
    %494 = vector.extract_strided_slice %476 {offsets = [0, 256], sizes = [16, 128], strides = [1, 1]} : vector<16x384xf32> to vector<16x128xf32>
    %495 = arith.addf %494, %28 : vector<16x128xf32>
    %496 = arith.mulf %484, %495 : vector<16x128xf32>
    %497 = arith.addf %493, %496 : vector<16x128xf32>
    %498 = math.tanh %497 : vector<16x128xf32>
    %cst_132 = arith.constant 1.000000e+00 : f32
    %499 = vector.broadcast %cst_132 : f32 to vector<16x128xf32>
    %500 = arith.subf %499, %492 : vector<16x128xf32>
    %501 = arith.mulf %500, %498 : vector<16x128xf32>
    %502 = arith.mulf %492, %454 : vector<16x128xf32>
    %503 = arith.addf %501, %502 : vector<16x128xf32>
    %c32_133 = arith.constant 32 : index
    %c0_134 = arith.constant 0 : index
    %504 = vector.load %arg14[%c32_133, %c0_134] : memref<128x384xf32, #tpu.memory_space<vmem>>, vector<16x384xf32>
    %505 = vector.extract_strided_slice %474 {offsets = [0, 384], sizes = [16, 384], strides = [1, 1]} : vector<16x768xf32> to vector<16x384xf32>
    %506 = vector.extract_strided_slice %504 {offsets = [0, 0], sizes = [16, 128], strides = [1, 1]} : vector<16x384xf32> to vector<16x128xf32>
    %507 = vector.extract_strided_slice %505 {offsets = [0, 0], sizes = [16, 128], strides = [1, 1]} : vector<16x384xf32> to vector<16x128xf32>
    %508 = arith.addf %506, %507 : vector<16x128xf32>
    %509 = arith.negf %508 : vector<16x128xf32>
    %510 = math.exp %509 : vector<16x128xf32>
    %cst_135 = arith.constant 1.000000e+00 : f32
    %511 = vector.broadcast %cst_135 : f32 to vector<16x128xf32>
    %512 = arith.addf %511, %510 : vector<16x128xf32>
    %513 = arith.divf %511, %512 : vector<16x128xf32>
    %514 = vector.extract_strided_slice %504 {offsets = [0, 128], sizes = [16, 128], strides = [1, 1]} : vector<16x384xf32> to vector<16x128xf32>
    %515 = vector.extract_strided_slice %505 {offsets = [0, 128], sizes = [16, 128], strides = [1, 1]} : vector<16x384xf32> to vector<16x128xf32>
    %516 = arith.addf %514, %515 : vector<16x128xf32>
    %517 = arith.negf %516 : vector<16x128xf32>
    %518 = math.exp %517 : vector<16x128xf32>
    %cst_136 = arith.constant 1.000000e+00 : f32
    %519 = vector.broadcast %cst_136 : f32 to vector<16x128xf32>
    %520 = arith.addf %519, %518 : vector<16x128xf32>
    %521 = arith.divf %519, %520 : vector<16x128xf32>
    %522 = vector.extract_strided_slice %504 {offsets = [0, 256], sizes = [16, 128], strides = [1, 1]} : vector<16x384xf32> to vector<16x128xf32>
    %523 = vector.extract_strided_slice %505 {offsets = [0, 256], sizes = [16, 128], strides = [1, 1]} : vector<16x384xf32> to vector<16x128xf32>
    %524 = arith.addf %523, %32 : vector<16x128xf32>
    %525 = arith.mulf %513, %524 : vector<16x128xf32>
    %526 = arith.addf %522, %525 : vector<16x128xf32>
    %527 = math.tanh %526 : vector<16x128xf32>
    %cst_137 = arith.constant 1.000000e+00 : f32
    %528 = vector.broadcast %cst_137 : f32 to vector<16x128xf32>
    %529 = arith.subf %528, %521 : vector<16x128xf32>
    %530 = arith.mulf %529, %527 : vector<16x128xf32>
    %531 = arith.mulf %521, %457 : vector<16x128xf32>
    %532 = arith.addf %530, %531 : vector<16x128xf32>
    %c5_i32_138 = arith.constant 5 : i32
    %533 = arith.addi %4, %c5_i32_138 : i32
    %534 = vector.broadcast %533 : i32 to vector<16x1xi32>
    %535 = arith.cmpi slt, %534, %3 : vector<16x1xi32>
    %c2_i32_139 = arith.constant 2 : i32
    %536 = arith.addi %6, %c2_i32_139 : i32
    %537 = vector.broadcast %536 : i32 to vector<16x1xi32>
    %538 = arith.cmpi slt, %537, %3 : vector<16x1xi32>
    %539 = vector.shape_cast %535 : vector<16x1xi1> to vector<16x1xi1>
    %540 = vector.broadcast %539 : vector<16x1xi1> to vector<16x128xi1>
    %541 = arith.select %540, %503, %454 : vector<16x128xi1>, vector<16x128xf32>
    %542 = vector.shape_cast %538 : vector<16x1xi1> to vector<16x1xi1>
    %543 = vector.broadcast %542 : vector<16x1xi1> to vector<16x128xi1>
    %544 = arith.select %543, %532, %457 : vector<16x128xi1>, vector<16x128xf32>
    %cst_140 = arith.constant 0.000000e+00 : f32
    %545 = vector.shape_cast %535 : vector<16x1xi1> to vector<16x1xi1>
    %546 = vector.broadcast %545 : vector<16x1xi1> to vector<16x128xi1>
    %547 = vector.broadcast %cst_140 : f32 to vector<16x128xf32>
    %548 = arith.select %546, %541, %547 : vector<16x128xi1>, vector<16x128xf32>
    %549 = arith.truncf %548 : vector<16x128xf32> to vector<16x128xbf16>
    %c80_141 = arith.constant 80 : index
    %c0_142 = arith.constant 0 : index
    %550 = vector.load %arg8[%c80_141, %c0_142] : memref<128x128xbf16, #tpu.memory_space<vmem>>, vector<16x128xbf16>
    tpu.vector_store %arg8[%c80_141, %c0_142], %549 {strides = array<i32>} : memref<128x128xbf16, #tpu.memory_space<vmem>>, vector<16x128xbf16>,
    %cst_143 = arith.constant 0.000000e+00 : f32
    %551 = vector.shape_cast %538 : vector<16x1xi1> to vector<16x1xi1>
    %552 = vector.broadcast %551 : vector<16x1xi1> to vector<16x128xi1>
    %553 = vector.broadcast %cst_143 : f32 to vector<16x128xf32>
    %554 = arith.select %552, %544, %553 : vector<16x128xi1>, vector<16x128xf32>
    %555 = arith.truncf %554 : vector<16x128xf32> to vector<16x128xbf16>
    %c32_144 = arith.constant 32 : index
    %c0_145 = arith.constant 0 : index
    %556 = vector.load %arg9[%c32_144, %c0_145] : memref<128x128xbf16, #tpu.memory_space<vmem>>, vector<16x128xbf16>
    tpu.vector_store %arg9[%c32_144, %c0_145], %555 {strides = array<i32>} : memref<128x128xbf16, #tpu.memory_space<vmem>>, vector<16x128xbf16>,
    %557 = arith.truncf %541 : vector<16x128xf32> to vector<16x128xbf16>
    %558 = arith.truncf %544 : vector<16x128xf32> to vector<16x128xbf16>
    %559 = tpu.concatenate %557, %558 in 1 : vector<16x128xbf16>, vector<16x128xbf16> -> vector<16x256xbf16>
    %c0_146 = arith.constant 0 : index
    %c0_147 = arith.constant 0 : index
    %560 = vector.load %arg5[%c0_146, %c0_147] : memref<256x768xbf16, #tpu.memory_space<vmem>>, vector<256x768xbf16>
    %cst_148 = arith.constant dense<0.000000e+00> : vector<16x768xf32>
    %561 = tpu.matmul %559, %560, %cst_148 {dimension_numbers = #tpu.dot_dimension_numbers<[1], [0], [0], [1], [0, 0, 1, 1], [], []>} : vector<16x256xbf16>, vector<256x768xbf16>, vector<16x768xf32> -> vector<16x768xf32>
    %c96_149 = arith.constant 96 : index
    %c0_150 = arith.constant 0 : index
    %562 = vector.load %arg13[%c96_149, %c0_150] : memref<128x384xf32, #tpu.memory_space<vmem>>, vector<16x384xf32>
    %563 = vector.extract_strided_slice %561 {offsets = [0, 0], sizes = [16, 384], strides = [1, 1]} : vector<16x768xf32> to vector<16x384xf32>
    %564 = vector.extract_strided_slice %562 {offsets = [0, 0], sizes = [16, 128], strides = [1, 1]} : vector<16x384xf32> to vector<16x128xf32>
    %565 = vector.extract_strided_slice %563 {offsets = [0, 0], sizes = [16, 128], strides = [1, 1]} : vector<16x384xf32> to vector<16x128xf32>
    %566 = arith.addf %564, %565 : vector<16x128xf32>
    %567 = arith.negf %566 : vector<16x128xf32>
    %568 = math.exp %567 : vector<16x128xf32>
    %cst_151 = arith.constant 1.000000e+00 : f32
    %569 = vector.broadcast %cst_151 : f32 to vector<16x128xf32>
    %570 = arith.addf %569, %568 : vector<16x128xf32>
    %571 = arith.divf %569, %570 : vector<16x128xf32>
    %572 = vector.extract_strided_slice %562 {offsets = [0, 128], sizes = [16, 128], strides = [1, 1]} : vector<16x384xf32> to vector<16x128xf32>
    %573 = vector.extract_strided_slice %563 {offsets = [0, 128], sizes = [16, 128], strides = [1, 1]} : vector<16x384xf32> to vector<16x128xf32>
    %574 = arith.addf %572, %573 : vector<16x128xf32>
    %575 = arith.negf %574 : vector<16x128xf32>
    %576 = math.exp %575 : vector<16x128xf32>
    %cst_152 = arith.constant 1.000000e+00 : f32
    %577 = vector.broadcast %cst_152 : f32 to vector<16x128xf32>
    %578 = arith.addf %577, %576 : vector<16x128xf32>
    %579 = arith.divf %577, %578 : vector<16x128xf32>
    %580 = vector.extract_strided_slice %562 {offsets = [0, 256], sizes = [16, 128], strides = [1, 1]} : vector<16x384xf32> to vector<16x128xf32>
    %581 = vector.extract_strided_slice %563 {offsets = [0, 256], sizes = [16, 128], strides = [1, 1]} : vector<16x384xf32> to vector<16x128xf32>
    %582 = arith.addf %581, %28 : vector<16x128xf32>
    %583 = arith.mulf %571, %582 : vector<16x128xf32>
    %584 = arith.addf %580, %583 : vector<16x128xf32>
    %585 = math.tanh %584 : vector<16x128xf32>
    %cst_153 = arith.constant 1.000000e+00 : f32
    %586 = vector.broadcast %cst_153 : f32 to vector<16x128xf32>
    %587 = arith.subf %586, %579 : vector<16x128xf32>
    %588 = arith.mulf %587, %585 : vector<16x128xf32>
    %589 = arith.mulf %579, %541 : vector<16x128xf32>
    %590 = arith.addf %588, %589 : vector<16x128xf32>
    %c16_154 = arith.constant 16 : index
    %c0_155 = arith.constant 0 : index
    %591 = vector.load %arg14[%c16_154, %c0_155] : memref<128x384xf32, #tpu.memory_space<vmem>>, vector<16x384xf32>
    %592 = vector.extract_strided_slice %561 {offsets = [0, 384], sizes = [16, 384], strides = [1, 1]} : vector<16x768xf32> to vector<16x384xf32>
    %593 = vector.extract_strided_slice %591 {offsets = [0, 0], sizes = [16, 128], strides = [1, 1]} : vector<16x384xf32> to vector<16x128xf32>
    %594 = vector.extract_strided_slice %592 {offsets = [0, 0], sizes = [16, 128], strides = [1, 1]} : vector<16x384xf32> to vector<16x128xf32>
    %595 = arith.addf %593, %594 : vector<16x128xf32>
    %596 = arith.negf %595 : vector<16x128xf32>
    %597 = math.exp %596 : vector<16x128xf32>
    %cst_156 = arith.constant 1.000000e+00 : f32
    %598 = vector.broadcast %cst_156 : f32 to vector<16x128xf32>
    %599 = arith.addf %598, %597 : vector<16x128xf32>
    %600 = arith.divf %598, %599 : vector<16x128xf32>
    %601 = vector.extract_strided_slice %591 {offsets = [0, 128], sizes = [16, 128], strides = [1, 1]} : vector<16x384xf32> to vector<16x128xf32>
    %602 = vector.extract_strided_slice %592 {offsets = [0, 128], sizes = [16, 128], strides = [1, 1]} : vector<16x384xf32> to vector<16x128xf32>
    %603 = arith.addf %601, %602 : vector<16x128xf32>
    %604 = arith.negf %603 : vector<16x128xf32>
    %605 = math.exp %604 : vector<16x128xf32>
    %cst_157 = arith.constant 1.000000e+00 : f32
    %606 = vector.broadcast %cst_157 : f32 to vector<16x128xf32>
    %607 = arith.addf %606, %605 : vector<16x128xf32>
    %608 = arith.divf %606, %607 : vector<16x128xf32>
    %609 = vector.extract_strided_slice %591 {offsets = [0, 256], sizes = [16, 128], strides = [1, 1]} : vector<16x384xf32> to vector<16x128xf32>
    %610 = vector.extract_strided_slice %592 {offsets = [0, 256], sizes = [16, 128], strides = [1, 1]} : vector<16x384xf32> to vector<16x128xf32>
    %611 = arith.addf %610, %32 : vector<16x128xf32>
    %612 = arith.mulf %600, %611 : vector<16x128xf32>
    %613 = arith.addf %609, %612 : vector<16x128xf32>
    %614 = math.tanh %613 : vector<16x128xf32>
    %cst_158 = arith.constant 1.000000e+00 : f32
    %615 = vector.broadcast %cst_158 : f32 to vector<16x128xf32>
    %616 = arith.subf %615, %608 : vector<16x128xf32>
    %617 = arith.mulf %616, %614 : vector<16x128xf32>
    %618 = arith.mulf %608, %544 : vector<16x128xf32>
    %619 = arith.addf %617, %618 : vector<16x128xf32>
    %c6_i32_159 = arith.constant 6 : i32
    %620 = arith.addi %4, %c6_i32_159 : i32
    %621 = vector.broadcast %620 : i32 to vector<16x1xi32>
    %622 = arith.cmpi slt, %621, %3 : vector<16x1xi32>
    %c1_i32_160 = arith.constant 1 : i32
    %623 = arith.addi %6, %c1_i32_160 : i32
    %624 = vector.broadcast %623 : i32 to vector<16x1xi32>
    %625 = arith.cmpi slt, %624, %3 : vector<16x1xi32>
    %626 = vector.shape_cast %622 : vector<16x1xi1> to vector<16x1xi1>
    %627 = vector.broadcast %626 : vector<16x1xi1> to vector<16x128xi1>
    %628 = arith.select %627, %590, %541 : vector<16x128xi1>, vector<16x128xf32>
    %629 = vector.shape_cast %625 : vector<16x1xi1> to vector<16x1xi1>
    %630 = vector.broadcast %629 : vector<16x1xi1> to vector<16x128xi1>
    %631 = arith.select %630, %619, %544 : vector<16x128xi1>, vector<16x128xf32>
    %cst_161 = arith.constant 0.000000e+00 : f32
    %632 = vector.shape_cast %622 : vector<16x1xi1> to vector<16x1xi1>
    %633 = vector.broadcast %632 : vector<16x1xi1> to vector<16x128xi1>
    %634 = vector.broadcast %cst_161 : f32 to vector<16x128xf32>
    %635 = arith.select %633, %628, %634 : vector<16x128xi1>, vector<16x128xf32>
    %636 = arith.truncf %635 : vector<16x128xf32> to vector<16x128xbf16>
    %c96_162 = arith.constant 96 : index
    %c0_163 = arith.constant 0 : index
    %637 = vector.load %arg8[%c96_162, %c0_163] : memref<128x128xbf16, #tpu.memory_space<vmem>>, vector<16x128xbf16>
    tpu.vector_store %arg8[%c96_162, %c0_163], %636 {strides = array<i32>} : memref<128x128xbf16, #tpu.memory_space<vmem>>, vector<16x128xbf16>,
    %cst_164 = arith.constant 0.000000e+00 : f32
    %638 = vector.shape_cast %625 : vector<16x1xi1> to vector<16x1xi1>
    %639 = vector.broadcast %638 : vector<16x1xi1> to vector<16x128xi1>
    %640 = vector.broadcast %cst_164 : f32 to vector<16x128xf32>
    %641 = arith.select %639, %631, %640 : vector<16x128xi1>, vector<16x128xf32>
    %642 = arith.truncf %641 : vector<16x128xf32> to vector<16x128xbf16>
    %c16_165 = arith.constant 16 : index
    %c0_166 = arith.constant 0 : index
    %643 = vector.load %arg9[%c16_165, %c0_166] : memref<128x128xbf16, #tpu.memory_space<vmem>>, vector<16x128xbf16>
    tpu.vector_store %arg9[%c16_165, %c0_166], %642 {strides = array<i32>} : memref<128x128xbf16, #tpu.memory_space<vmem>>, vector<16x128xbf16>,
    %644 = arith.truncf %628 : vector<16x128xf32> to vector<16x128xbf16>
    %645 = arith.truncf %631 : vector<16x128xf32> to vector<16x128xbf16>
    %646 = tpu.concatenate %644, %645 in 1 : vector<16x128xbf16>, vector<16x128xbf16> -> vector<16x256xbf16>
    %c0_167 = arith.constant 0 : index
    %c0_168 = arith.constant 0 : index
    %647 = vector.load %arg5[%c0_167, %c0_168] : memref<256x768xbf16, #tpu.memory_space<vmem>>, vector<256x768xbf16>
    %cst_169 = arith.constant dense<0.000000e+00> : vector<16x768xf32>
    %648 = tpu.matmul %646, %647, %cst_169 {dimension_numbers = #tpu.dot_dimension_numbers<[1], [0], [0], [1], [0, 0, 1, 1], [], []>} : vector<16x256xbf16>, vector<256x768xbf16>, vector<16x768xf32> -> vector<16x768xf32>
    %c112_170 = arith.constant 112 : index
    %c0_171 = arith.constant 0 : index
    %649 = vector.load %arg13[%c112_170, %c0_171] : memref<128x384xf32, #tpu.memory_space<vmem>>, vector<16x384xf32>
    %650 = vector.extract_strided_slice %648 {offsets = [0, 0], sizes = [16, 384], strides = [1, 1]} : vector<16x768xf32> to vector<16x384xf32>
    %651 = vector.extract_strided_slice %649 {offsets = [0, 0], sizes = [16, 128], strides = [1, 1]} : vector<16x384xf32> to vector<16x128xf32>
    %652 = vector.extract_strided_slice %650 {offsets = [0, 0], sizes = [16, 128], strides = [1, 1]} : vector<16x384xf32> to vector<16x128xf32>
    %653 = arith.addf %651, %652 : vector<16x128xf32>
    %654 = arith.negf %653 : vector<16x128xf32>
    %655 = math.exp %654 : vector<16x128xf32>
    %cst_172 = arith.constant 1.000000e+00 : f32
    %656 = vector.broadcast %cst_172 : f32 to vector<16x128xf32>
    %657 = arith.addf %656, %655 : vector<16x128xf32>
    %658 = arith.divf %656, %657 : vector<16x128xf32>
    %659 = vector.extract_strided_slice %649 {offsets = [0, 128], sizes = [16, 128], strides = [1, 1]} : vector<16x384xf32> to vector<16x128xf32>
    %660 = vector.extract_strided_slice %650 {offsets = [0, 128], sizes = [16, 128], strides = [1, 1]} : vector<16x384xf32> to vector<16x128xf32>
    %661 = arith.addf %659, %660 : vector<16x128xf32>
    %662 = arith.negf %661 : vector<16x128xf32>
    %663 = math.exp %662 : vector<16x128xf32>
    %cst_173 = arith.constant 1.000000e+00 : f32
    %664 = vector.broadcast %cst_173 : f32 to vector<16x128xf32>
    %665 = arith.addf %664, %663 : vector<16x128xf32>
    %666 = arith.divf %664, %665 : vector<16x128xf32>
    %667 = vector.extract_strided_slice %649 {offsets = [0, 256], sizes = [16, 128], strides = [1, 1]} : vector<16x384xf32> to vector<16x128xf32>
    %668 = vector.extract_strided_slice %650 {offsets = [0, 256], sizes = [16, 128], strides = [1, 1]} : vector<16x384xf32> to vector<16x128xf32>
    %669 = arith.addf %668, %28 : vector<16x128xf32>
    %670 = arith.mulf %658, %669 : vector<16x128xf32>
    %671 = arith.addf %667, %670 : vector<16x128xf32>
    %672 = math.tanh %671 : vector<16x128xf32>
    %cst_174 = arith.constant 1.000000e+00 : f32
    %673 = vector.broadcast %cst_174 : f32 to vector<16x128xf32>
    %674 = arith.subf %673, %666 : vector<16x128xf32>
    %675 = arith.mulf %674, %672 : vector<16x128xf32>
    %676 = arith.mulf %666, %628 : vector<16x128xf32>
    %677 = arith.addf %675, %676 : vector<16x128xf32>
    %c0_175 = arith.constant 0 : index
    %c0_176 = arith.constant 0 : index
    %678 = vector.load %arg14[%c0_175, %c0_176] : memref<128x384xf32, #tpu.memory_space<vmem>>, vector<16x384xf32>
    %679 = vector.extract_strided_slice %648 {offsets = [0, 384], sizes = [16, 384], strides = [1, 1]} : vector<16x768xf32> to vector<16x384xf32>
    %680 = vector.extract_strided_slice %678 {offsets = [0, 0], sizes = [16, 128], strides = [1, 1]} : vector<16x384xf32> to vector<16x128xf32>
    %681 = vector.extract_strided_slice %679 {offsets = [0, 0], sizes = [16, 128], strides = [1, 1]} : vector<16x384xf32> to vector<16x128xf32>
    %682 = arith.addf %680, %681 : vector<16x128xf32>
    %683 = arith.negf %682 : vector<16x128xf32>
    %684 = math.exp %683 : vector<16x128xf32>
    %cst_177 = arith.constant 1.000000e+00 : f32
    %685 = vector.broadcast %cst_177 : f32 to vector<16x128xf32>
    %686 = arith.addf %685, %684 : vector<16x128xf32>
    %687 = arith.divf %685, %686 : vector<16x128xf32>
    %688 = vector.extract_strided_slice %678 {offsets = [0, 128], sizes = [16, 128], strides = [1, 1]} : vector<16x384xf32> to vector<16x128xf32>
    %689 = vector.extract_strided_slice %679 {offsets = [0, 128], sizes = [16, 128], strides = [1, 1]} : vector<16x384xf32> to vector<16x128xf32>
    %690 = arith.addf %688, %689 : vector<16x128xf32>
    %691 = arith.negf %690 : vector<16x128xf32>
    %692 = math.exp %691 : vector<16x128xf32>
    %cst_178 = arith.constant 1.000000e+00 : f32
    %693 = vector.broadcast %cst_178 : f32 to vector<16x128xf32>
    %694 = arith.addf %693, %692 : vector<16x128xf32>
    %695 = arith.divf %693, %694 : vector<16x128xf32>
    %696 = vector.extract_strided_slice %678 {offsets = [0, 256], sizes = [16, 128], strides = [1, 1]} : vector<16x384xf32> to vector<16x128xf32>
    %697 = vector.extract_strided_slice %679 {offsets = [0, 256], sizes = [16, 128], strides = [1, 1]} : vector<16x384xf32> to vector<16x128xf32>
    %698 = arith.addf %697, %32 : vector<16x128xf32>
    %699 = arith.mulf %687, %698 : vector<16x128xf32>
    %700 = arith.addf %696, %699 : vector<16x128xf32>
    %701 = math.tanh %700 : vector<16x128xf32>
    %cst_179 = arith.constant 1.000000e+00 : f32
    %702 = vector.broadcast %cst_179 : f32 to vector<16x128xf32>
    %703 = arith.subf %702, %695 : vector<16x128xf32>
    %704 = arith.mulf %703, %701 : vector<16x128xf32>
    %705 = arith.mulf %695, %631 : vector<16x128xf32>
    %706 = arith.addf %704, %705 : vector<16x128xf32>
    %c7_i32_180 = arith.constant 7 : i32
    %707 = arith.addi %4, %c7_i32_180 : i32
    %708 = vector.broadcast %707 : i32 to vector<16x1xi32>
    %709 = arith.cmpi slt, %708, %3 : vector<16x1xi32>
    %c0_i32_181 = arith.constant 0 : i32
    %710 = arith.addi %6, %c0_i32_181 : i32
    %711 = vector.broadcast %710 : i32 to vector<16x1xi32>
    %712 = arith.cmpi slt, %711, %3 : vector<16x1xi32>
    %713 = vector.shape_cast %709 : vector<16x1xi1> to vector<16x1xi1>
    %714 = vector.broadcast %713 : vector<16x1xi1> to vector<16x128xi1>
    %715 = arith.select %714, %677, %628 : vector<16x128xi1>, vector<16x128xf32>
    %716 = vector.shape_cast %712 : vector<16x1xi1> to vector<16x1xi1>
    %717 = vector.broadcast %716 : vector<16x1xi1> to vector<16x128xi1>
    %718 = arith.select %717, %706, %631 : vector<16x128xi1>, vector<16x128xf32>
    %cst_182 = arith.constant 0.000000e+00 : f32
    %719 = vector.shape_cast %709 : vector<16x1xi1> to vector<16x1xi1>
    %720 = vector.broadcast %719 : vector<16x1xi1> to vector<16x128xi1>
    %721 = vector.broadcast %cst_182 : f32 to vector<16x128xf32>
    %722 = arith.select %720, %715, %721 : vector<16x128xi1>, vector<16x128xf32>
    %723 = arith.truncf %722 : vector<16x128xf32> to vector<16x128xbf16>
    %c112_183 = arith.constant 112 : index
    %c0_184 = arith.constant 0 : index
    %724 = vector.load %arg8[%c112_183, %c0_184] : memref<128x128xbf16, #tpu.memory_space<vmem>>, vector<16x128xbf16>
    tpu.vector_store %arg8[%c112_183, %c0_184], %723 {strides = array<i32>} : memref<128x128xbf16, #tpu.memory_space<vmem>>, vector<16x128xbf16>,
    %cst_185 = arith.constant 0.000000e+00 : f32
    %725 = vector.shape_cast %712 : vector<16x1xi1> to vector<16x1xi1>
    %726 = vector.broadcast %725 : vector<16x1xi1> to vector<16x128xi1>
    %727 = vector.broadcast %cst_185 : f32 to vector<16x128xf32>
    %728 = arith.select %726, %718, %727 : vector<16x128xi1>, vector<16x128xf32>
    %729 = arith.truncf %728 : vector<16x128xf32> to vector<16x128xbf16>
    %c0_186 = arith.constant 0 : index
    %c0_187 = arith.constant 0 : index
    %730 = vector.load %arg9[%c0_186, %c0_187] : memref<128x128xbf16, #tpu.memory_space<vmem>>, vector<16x128xbf16>
    tpu.vector_store %arg9[%c0_186, %c0_187], %729 {strides = array<i32>} : memref<128x128xbf16, #tpu.memory_space<vmem>>, vector<16x128xbf16>,
    %c0_188 = arith.constant 0 : index
    %c0_189 = arith.constant 0 : index
    %731 = vector.load %arg11[%c0_188, %c0_189] : memref<16x128xf32, #tpu.memory_space<vmem>>, vector<16x128xf32>
    tpu.vector_store %arg11[%c0_188, %c0_189], %715 {strides = array<i32>} : memref<16x128xf32, #tpu.memory_space<vmem>>, vector<16x128xf32>,
    %c0_190 = arith.constant 0 : index
    %c0_191 = arith.constant 0 : index
    %732 = vector.load %arg12[%c0_190, %c0_191] : memref<16x128xf32, #tpu.memory_space<vmem>>, vector<16x128xf32>
    tpu.vector_store %arg12[%c0_190, %c0_191], %718 {strides = array<i32>} : memref<16x128xf32, #tpu.memory_space<vmem>>, vector<16x128xf32>,
    %c0_i32_192 = arith.constant 0 : i32
    %733 = arith.cmpi eq, %arg0, %c0_i32_192 : i32
    %734 = arith.extui %733 : i1 to i32
    %c0_i32_193 = arith.constant 0 : i32
    %735 = arith.cmpi ne, %734, %c0_i32_193 : i32
    scf.if %735 {
      %736 = arith.addf %715, %718 : vector<16x128xf32>
      %c0_194 = arith.constant 0 : index
      %c0_195 = arith.constant 0 : index
      %737 = vector.load %arg10[%c0_194, %c0_195] : memref<16x128xf32, #tpu.memory_space<vmem>>, vector<16x128xf32>
      tpu.vector_store %arg10[%c0_194, %c0_195], %736 {strides = array<i32>} : memref<16x128xf32, #tpu.memory_space<vmem>>, vector<16x128xf32>,
    } else {
    }
    return
  }
  func.func @transform_0(%arg0: i32) -> (i32, i32) {
    %c0_i32 = arith.constant 0 : i32
    %c0_i32_0 = arith.constant 0 : i32
    return %arg0, %c0_i32 : i32, i32
  }
  func.func @transform_1(%arg0: i32) -> (i32, i32) {
    %c0_i32 = arith.constant 0 : i32
    %0 = arith.subi %c0_i32, %arg0 : i32
    %c0_i32_0 = arith.constant 0 : i32
    %c0_i32_1 = arith.constant 0 : i32
    return %0, %c0_i32_0 : i32, i32
  }
  func.func @transform_2(%arg0: i32) -> (i32, i32) {
    %c0_i32 = arith.constant 0 : i32
    %c0_i32_0 = arith.constant 0 : i32
    %c0_i32_1 = arith.constant 0 : i32
    return %c0_i32, %c0_i32_0 : i32, i32
  }
  func.func @transform_3(%arg0: i32) -> (i32, i32, i32) {
    %c0_i32 = arith.constant 0 : i32
    %c0_i32_0 = arith.constant 0 : i32
    %c0_i32_1 = arith.constant 0 : i32
    %c0_i32_2 = arith.constant 0 : i32
    return %c0_i32, %c0_i32_0, %c0_i32_1 : i32, i32, i32
  }
  func.func @transform_4(%arg0: i32) -> (i32, i32) {
    %c0_i32 = arith.constant 0 : i32
    %c0_i32_0 = arith.constant 0 : i32
    %c0_i32_1 = arith.constant 0 : i32
    return %c0_i32, %c0_i32_0 : i32, i32
  }
  func.func @transform_5(%arg0: i32) -> (i32, i32, i32) {
    %c0_i32 = arith.constant 0 : i32
    %c0_i32_0 = arith.constant 0 : i32
    %c0_i32_1 = arith.constant 0 : i32
    %c0_i32_2 = arith.constant 0 : i32
    return %c0_i32, %c0_i32_0, %c0_i32_1 : i32, i32, i32
  }
  func.func @transform_6(%arg0: i32) -> (i32, i32, i32) {
    %c0_i32 = arith.constant 0 : i32
    %c0_i32_0 = arith.constant 0 : i32
    %c0_i32_1 = arith.constant 0 : i32
    %c0_i32_2 = arith.constant 0 : i32
    return %c0_i32, %c0_i32_0, %c0_i32_1 : i32, i32, i32
  }
  func.func @transform_7(%arg0: i32) -> (i32, i32) {
    %c0_i32 = arith.constant 0 : i32
    %c0_i32_0 = arith.constant 0 : i32
    return %arg0, %c0_i32 : i32, i32
  }
  func.func @transform_8(%arg0: i32) -> (i32, i32) {
    %c0_i32 = arith.constant 0 : i32
    %0 = arith.subi %c0_i32, %arg0 : i32
    %c0_i32_0 = arith.constant 0 : i32
    %c0_i32_1 = arith.constant 0 : i32
    return %0, %c0_i32_0 : i32, i32
  }
  func.func @transform_9(%arg0: i32) -> (i32, i32) {
    %c0_i32 = arith.constant 0 : i32
    %c0_i32_0 = arith.constant 0 : i32
    %c0_i32_1 = arith.constant 0 : i32
    return %c0_i32, %c0_i32_0 : i32, i32
  }
}

</mosaic_0001>

<llo_original>
// kernel: encoder_rnn_forward.1
$region0: #{encoder_rnn_forward.1}
  #allocation0 [shape = 'u32[]', space=smem, size = 0x4, offset = 0x4, fixed_abs, tag = 'smem constant byte address 0x4 - core index']
  #allocation1 [shape = 'u32[72,128]{1,0:T(1,128)}', space=vmem, size = 0x9000, scoped, tag = 'internal scratch']
  #allocation2 [shape = 'f32[16,128]{1,0:T(8,128)}', space=vmem, size = 0x2000, scoped, tag = 'scratch operand']
  #allocation3 [shape = 'f32[16,128]{1,0:T(8,128)}', space=vmem, size = 0x2000, scoped, tag = 'scratch operand']
  #allocation4 [shape = 'f32[128,384]{1,0:T(8,128)}', space=vmem, size = 0x30000, scoped, tag = 'scratch operand']
  #allocation5 [shape = 'f32[128,384]{1,0:T(8,128)}', space=vmem, size = 0x30000, scoped, tag = 'scratch operand']
  %s0 = inlined_call_operand.vmem [shape: bf16[128,128], index: 0, kind: input, shape index: {}, may-alias: {0,1}]
  %s1 = inlined_call_operand.vmem [shape: bf16[128,128], index: 1, kind: input, shape index: {}, may-alias: {0,1}]
  %s2 = inlined_call_operand.vmem [shape: s32[16,1], index: 2, kind: input, shape index: {}]
  %s3 = inlined_call_operand.hbm [shape: bf16[2,128,384], index: 3, kind: input, shape index: {}]
  %s4 = inlined_call_operand.hbm [shape: bf16[256,768], index: 4, kind: input, shape index: {}]
  %s5 = inlined_call_operand.vmem [shape: f32[2,1,384], index: 5, kind: input, shape index: {}]
  %s6 = inlined_call_operand.vmem [shape: f32[2,1,128], index: 6, kind: input, shape index: {}]
  %s7 = inlined_call_operand.vmem [shape: bf16[128,128], index: 7, kind: output, shape index: {0}]
  %s8 = inlined_call_operand.vmem [shape: bf16[128,128], index: 8, kind: output, shape index: {1}]
  %s9 = inlined_call_operand.vmem [shape: f32[16,128], index: 9, kind: output, shape index: {2}]
  %10 = xla_tuple %s7, %s8, %s9
  %s11 = sld [smem:[#allocation0]]
  $region70: #{encoder_rnn_forward.1} parent=0
    _
  %s13 = ssub.s32 1, %s11
  %s14 = scalar_select 0, %s13, %s11
  $region1: #{encoder_rnn_forward.1} parent=0
    #allocation6 [shape = 'u8[196608]{0}', space=vmem, size = 0x30000, scoped, tag = 'input window, operand 3, single buffered']
    #allocation7 [shape = 's32[1]{0}', space=sflag, size = 0x4, scoped, tag = 'scoped memory for encoder_rnn_forward.1']
    #allocation8 [shape = 'u8[393216]{0}', space=vmem, size = 0x60000, scoped, tag = 'input window, operand 4, single buffered']
    #allocation9 [shape = 's32[1]{0}', space=sflag, size = 0x4, scoped, tag = 'scoped memory for encoder_rnn_forward.1']
    %15 = vsyncpa [#allocation7], 0
    %16 = vsyncpa [#allocation9], 0
    // Predicated region
    $region2: #{encoder_rnn_forward.1} parent=1 // pred_check
      _
    $region3: #{encoder_rnn_forward.1} parent=1 // pred_check_branch
      %18 = sbr.rel (0) target = $region5
    $region4: #{encoder_rnn_forward.1} parent=1 // pred_region
      _
    $region5: #{encoder_rnn_forward.1} parent=1 // pred_fallthru
      _
    // Predicated region
    $region6: #{encoder_rnn_forward.1} parent=1 // pred_check
      _
    $region7: #{encoder_rnn_forward.1} parent=1 // pred_check_branch
      %20 = sbr.rel (0) target = $region9
    $region8: #{encoder_rnn_forward.1} parent=1 // pred_region
      %s21 = ssub.s32 0, 0
      %s22 = smul.u32 16, %s21
      %p23 = scmp.lt.s32.totalorder %s22, 15
      %s24 = scalar_select %p23, %s22, 15
      %s25 = smul.addr %s24, 4
      %s26 = scalar_lea.vmem %s1, %s25
      %s27 = ssub.s32 0, 0
      %s28 = smul.u32 16, %s27
    $region9: #{encoder_rnn_forward.1} parent=1 // pred_fallthru
      _
    // Predicated region
    $region10: #{encoder_rnn_forward.1} parent=1 // pred_check
      _
    $region11: #{encoder_rnn_forward.1} parent=1 // pred_check_branch
      %30 = sbr.rel (0) target = $region13
    $region12: #{encoder_rnn_forward.1} parent=1 // pred_region
      _
    $region13: #{encoder_rnn_forward.1} parent=1 // pred_fallthru
      _
    // Predicated region
    $region14: #{encoder_rnn_forward.1} parent=1 // pred_check
      _
    $region15: #{encoder_rnn_forward.1} parent=1 // pred_check_branch
      %32 = sbr.rel (0) target = $region17
    $region16: #{encoder_rnn_forward.1} parent=1 // pred_region
      %34 = vsyncadd [#allocation7], 0
      %s35 = sshll.u32 %s3, 4
      %s36 = int_to_ptr.hbm [resolvable:$true] %s35
      %s37 = sshll.u32 [#allocation6], 4
      %s38 = int_to_ptr.vmem [resolvable:$true] %s37
      %43 = dma.hbm_to_vmem [thread:$0]  %s36, 6144, %s38, [#allocation7], 192, 192, 12
    $region17: #{encoder_rnn_forward.1} parent=1 // pred_fallthru
      _
    // Predicated region
    $region18: #{encoder_rnn_forward.1} parent=1 // pred_check
      _
    $region19: #{encoder_rnn_forward.1} parent=1 // pred_check_branch
      %45 = sbr.rel (0) target = $region21
    $region20: #{encoder_rnn_forward.1} parent=1 // pred_region
      %47 = vsyncadd [#allocation9], 0
      %s48 = sshll.u32 %s4, 4
      %s49 = int_to_ptr.hbm [resolvable:$true] %s48
      %s50 = sshll.u32 [#allocation8], 4
      %s51 = int_to_ptr.vmem [resolvable:$true] %s50
      %56 = dma.hbm_to_vmem [thread:$0]  %s49, 12288, %s51, [#allocation9], 384, 384, 24
    $region21: #{encoder_rnn_forward.1} parent=1 // pred_fallthru
      _
    // Predicated region
    $region22: #{encoder_rnn_forward.1} parent=1 // pred_check
      _
    $region23: #{encoder_rnn_forward.1} parent=1 // pred_check_branch
      %58 = sbr.rel (0) target = $region25
    $region24: #{encoder_rnn_forward.1} parent=1 // pred_region
      _
    $region25: #{encoder_rnn_forward.1} parent=1 // pred_fallthru
      _
    // Predicated region
    $region26: #{encoder_rnn_forward.1} parent=1 // pred_check
      _
    $region27: #{encoder_rnn_forward.1} parent=1 // pred_check_branch
      %60 = sbr.rel (0) target = $region29
    $region28: #{encoder_rnn_forward.1} parent=1 // pred_region
      _
    $region29: #{encoder_rnn_forward.1} parent=1 // pred_fallthru
      _
    // Predicated region
    $region30: #{encoder_rnn_forward.1} parent=1 // pred_check
      _
    $region31: #{encoder_rnn_forward.1} parent=1 // pred_check_branch
      %62 = sbr.rel (0) target = $region33
    $region32: #{encoder_rnn_forward.1} parent=1 // pred_region
      %64 = dma.done [#allocation7], 6144
    $region33: #{encoder_rnn_forward.1} parent=1 // pred_fallthru
      _
    // Predicated region
    $region34: #{encoder_rnn_forward.1} parent=1 // pred_check
      _
    $region35: #{encoder_rnn_forward.1} parent=1 // pred_check_branch
      %66 = sbr.rel (0) target = $region37
    $region36: #{encoder_rnn_forward.1} parent=1 // pred_region
      %68 = dma.done [#allocation9], 12288
    $region37: #{encoder_rnn_forward.1} parent=1 // pred_fallthru
      _
    %s69 = ssub.s32 0, 0
    %s70 = smul.u32 16, %s69
    %p71 = scmp.lt.s32.totalorder %s70, 15
    %s72 = scalar_select %p71, %s70, 15
    %s73 = smul.addr %s72, 4
    %s74 = scalar_lea.vmem %s1, %s73
    %s75 = ssub.s32 0, 0
    %s76 = smul.u32 16, %s75
    %p77 = scmp.lt.s32.totalorder %s76, 15
    %s78 = scalar_select %p77, %s76, 15
    %s79 = smul.addr %s78, 4
    %s80 = scalar_lea.vmem %s8, %s79
    %s81 = ssub.s32 0, 0
    %s82 = smul.u32 16, %s81
    %p83 = scmp.lt.s32.totalorder %s82, 15
    %s84 = scalar_select %p83, %s82, 15
    %s85 = smul.addr %s84, 4
    %s86 = scalar_lea.vmem %s1, %s85
    %s87 = ssub.s32 0, 0
    %s88 = smul.u32 16, %s87
    %s89 = ssub.s32 0, 0
    %s90 = smul.u32 16, %s89
    %p91 = scmp.lt.s32.totalorder %s90, 15
    %s92 = scalar_select %p91, %s90, 15
    %s93 = smul.addr %s92, 4
    %s94 = scalar_lea.vmem %s8, %s93
    %s95 = ssub.s32 0, 0
    %s96 = smul.u32 16, %s95
    %p97 = scmp.eq.s32.totalorder 0, 0
    // Predicated region
    $region38: #{encoder_rnn_forward.1} parent=1 // pred_check
      %p98 = pneg %p97
    $region39: #{encoder_rnn_forward.1} parent=1 // pred_check_branch
      %100 = sbr.rel (%p98) target = $region41
    $region40: #{encoder_rnn_forward.1} parent=1 // pred_region
      %101 = vst [vmem:[#allocation2] sm:$0xff] 0.0
      %102 = vst [vmem:[#allocation2 + $0x8] sm:$0xff] 0.0
      %103 = vst [vmem:[#allocation3] sm:$0xff] 0.0
      %104 = vst [vmem:[#allocation3 + $0x8] sm:$0xff] 0.0
    $region41: #{encoder_rnn_forward.1} parent=1 // pred_fallthru
      _
    %v105 = vld [vmem:[%s2] sm:$0xff]
    %v106 = vld [vmem:[%s2 + $0x8] sm:$0xff]
    %s107 = smul.u32 0, 8
    %s108 = ssub.s32 0, 0
    %s109 = smul.u32 %s108, 8
    %v110 = vld [vmem:[%s0] sm:$0xf]
    %v111 = vld [vmem:[%s0 + $0x4] sm:$0xf]
    %v112 = vld [vmem:[%s0 + $0x8] sm:$0xf]
    %v113 = vld [vmem:[%s0 + $0xc] sm:$0xf]
    %v114 = vld [vmem:[%s0 + $0x10] sm:$0xf]
    %v115 = vld [vmem:[%s0 + $0x14] sm:$0xf]
    %v116 = vld [vmem:[%s0 + $0x18] sm:$0xf]
    %v117 = vld [vmem:[%s0 + $0x1c] sm:$0xf]
    %v118 = vld [vmem:[%s0 + $0x20] sm:$0xf]
    %v119 = vld [vmem:[%s0 + $0x24] sm:$0xf]
    %v120 = vld [vmem:[%s0 + $0x28] sm:$0xf]
    %v121 = vld [vmem:[%s0 + $0x2c] sm:$0xf]
    %v122 = vld [vmem:[%s0 + $0x30] sm:$0xf]
    %v123 = vld [vmem:[%s0 + $0x34] sm:$0xf]
    %v124 = vld [vmem:[%s0 + $0x38] sm:$0xf]
    %v125 = vld [vmem:[%s0 + $0x3c] sm:$0xf]
    %v126 = vld [vmem:[#allocation6] sm:$0xff]
    %v127 = vld [vmem:[#allocation6 + $0x8] sm:$0xf]
    %v128 = vld [vmem:[#allocation6 + $0xc] sm:$0xff]
    %v129 = vld [vmem:[#allocation6 + $0x14] sm:$0xf]
    %v130 = vld [vmem:[#allocation6 + $0x18] sm:$0xff]
    %v131 = vld [vmem:[#allocation6 + $0x20] sm:$0xf]
    %v132 = vld [vmem:[#allocation6 + $0x24] sm:$0xff]
    %v133 = vld [vmem:[#allocation6 + $0x2c] sm:$0xf]
    %v134 = vld [vmem:[#allocation6 + $0x30] sm:$0xff]
    %v135 = vld [vmem:[#allocation6 + $0x38] sm:$0xf]
    %v136 = vld [vmem:[#allocation6 + $0x3c] sm:$0xff]
    %v137 = vld [vmem:[#allocation6 + $0x44] sm:$0xf]
    %v138 = vld [vmem:[#allocation6 + $0x48] sm:$0xff]
    %v139 = vld [vmem:[#allocation6 + $0x50] sm:$0xf]
    %v140 = vld [vmem:[#allocation6 + $0x54] sm:$0xff]
    %v141 = vld [vmem:[#allocation6 + $0x5c] sm:$0xf]
    %v142 = vld [vmem:[#allocation6 + $0x60] sm:$0xff]
    %v143 = vld [vmem:[#allocation6 + $0x68] sm:$0xf]
    %v144 = vld [vmem:[#allocation6 + $0x6c] sm:$0xff]
    %v145 = vld [vmem:[#allocation6 + $0x74] sm:$0xf]
    %v146 = vld [vmem:[#allocation6 + $0x78] sm:$0xff]
    %v147 = vld [vmem:[#allocation6 + $0x80] sm:$0xf]
    %v148 = vld [vmem:[#allocation6 + $0x84] sm:$0xff]
    %v149 = vld [vmem:[#allocation6 + $0x8c] sm:$0xf]
    %v150 = vld [vmem:[#allocation6 + $0x90] sm:$0xff]
    %v151 = vld [vmem:[#allocation6 + $0x98] sm:$0xf]
    %v152 = vld [vmem:[#allocation6 + $0x9c] sm:$0xff]
    %v153 = vld [vmem:[#allocation6 + $0xa4] sm:$0xf]
    %v154 = vld [vmem:[#allocation6 + $0xa8] sm:$0xff]
    %v155 = vld [vmem:[#allocation6 + $0xb0] sm:$0xf]
    %v156 = vld [vmem:[#allocation6 + $0xb4] sm:$0xff]
    %v157 = vld [vmem:[#allocation6 + $0xbc] sm:$0xf]
    %v158 = vld [vmem:[%s5] sm:$0x7]
    %v160 = vperm.slane %v158, 0
    %v161 = vperm.slane %v158, 1
    %v162 = vperm.slane %v158, 2
    %v182 = vunpack.c.l.b16 %v110
    %v183 = vunpack.c.l.b16 %v111
    %v184 = vunpack.c.l.b16 %v112
    %v185 = vunpack.c.l.b16 %v113
    %v186 = vunpack.c.l.b16 %v114
    %v187 = vunpack.c.l.b16 %v115
    %v188 = vunpack.c.l.b16 %v116
    %v189 = vunpack.c.l.b16 %v117
    %v190 = vunpack.c.l.b16 %v118
    %v191 = vunpack.c.l.b16 %v119
    %v192 = vunpack.c.l.b16 %v120
    %v193 = vunpack.c.l.b16 %v121
    %v194 = vunpack.c.l.b16 %v122
    %v195 = vunpack.c.l.b16 %v123
    %v196 = vunpack.c.l.b16 %v124
    %v197 = vunpack.c.l.b16 %v125
    %v198 = vpack.c.b16 %v183, %v182
    %v199 = vpack.c.b16 %v185, %v184
    %v200 = vpack.c.b16 %v187, %v186
    %v201 = vpack.c.b16 %v189, %v188
    %v202 = vpack.c.b16 %v191, %v190
    %v203 = vpack.c.b16 %v193, %v192
    %v204 = vpack.c.b16 %v195, %v194
    %v205 = vpack.c.b16 %v197, %v196
    %v246 = vunpack.c.l.b16 %v126
    %v247 = vunpack.c.h.b16 %v126
    %v248 = vunpack.c.l.b16 %v127
    %v249 = vunpack.c.l.b16 %v128
    %v250 = vunpack.c.h.b16 %v128
    %v251 = vunpack.c.l.b16 %v129
    %v252 = vunpack.c.l.b16 %v130
    %v253 = vunpack.c.h.b16 %v130
    %v254 = vunpack.c.l.b16 %v131
    %v255 = vunpack.c.l.b16 %v132
    %v256 = vunpack.c.h.b16 %v132
    %v257 = vunpack.c.l.b16 %v133
    %v258 = vunpack.c.l.b16 %v134
    %v259 = vunpack.c.h.b16 %v134
    %v260 = vunpack.c.l.b16 %v135
    %v261 = vunpack.c.l.b16 %v136
    %v262 = vunpack.c.h.b16 %v136
    %v263 = vunpack.c.l.b16 %v137
    %v264 = vunpack.c.l.b16 %v138
    %v265 = vunpack.c.h.b16 %v138
    %v266 = vunpack.c.l.b16 %v139
    %v267 = vunpack.c.l.b16 %v140
    %v268 = vunpack.c.h.b16 %v140
    %v269 = vunpack.c.l.b16 %v141
    %v270 = vunpack.c.l.b16 %v142
    %v271 = vunpack.c.h.b16 %v142
    %v272 = vunpack.c.l.b16 %v143
    %v273 = vunpack.c.l.b16 %v144
    %v274 = vunpack.c.h.b16 %v144
    %v275 = vunpack.c.l.b16 %v145
    %v276 = vunpack.c.l.b16 %v146
    %v277 = vunpack.c.h.b16 %v146
    %v278 = vunpack.c.l.b16 %v147
    %v279 = vunpack.c.l.b16 %v148
    %v280 = vunpack.c.h.b16 %v148
    %v281 = vunpack.c.l.b16 %v149
    %v282 = vunpack.c.l.b16 %v150
    %v283 = vunpack.c.h.b16 %v150
    %v284 = vunpack.c.l.b16 %v151
    %v285 = vunpack.c.l.b16 %v152
    %v286 = vunpack.c.h.b16 %v152
    %v287 = vunpack.c.l.b16 %v153
    %v288 = vunpack.c.l.b16 %v154
    %v289 = vunpack.c.h.b16 %v154
    %v290 = vunpack.c.l.b16 %v155
    %v291 = vunpack.c.l.b16 %v156
    %v292 = vunpack.c.h.b16 %v156
    %v293 = vunpack.c.l.b16 %v157
    %v294 = vpack.c.b16 %v249, %v246
    %v295 = vpack.c.b16 %v250, %v247
    %v296 = vpack.c.b16 %v251, %v248
    %v297 = vpack.c.b16 %v255, %v252
    %v298 = vpack.c.b16 %v256, %v253
    %v299 = vpack.c.b16 %v257, %v254
    %v300 = vpack.c.b16 %v261, %v258
    %v301 = vpack.c.b16 %v262, %v259
    %v302 = vpack.c.b16 %v263, %v260
    %v303 = vpack.c.b16 %v267, %v264
    %v304 = vpack.c.b16 %v268, %v265
    %v305 = vpack.c.b16 %v269, %v266
    %v306 = vpack.c.b16 %v273, %v270
    %v307 = vpack.c.b16 %v274, %v271
    %v308 = vpack.c.b16 %v275, %v272
    %v309 = vpack.c.b16 %v279, %v276
    %v310 = vpack.c.b16 %v280, %v277
    %v311 = vpack.c.b16 %v281, %v278
    %v312 = vpack.c.b16 %v285, %v282
    %v313 = vpack.c.b16 %v286, %v283
    %v314 = vpack.c.b16 %v287, %v284
    %v315 = vpack.c.b16 %v291, %v288
    %v316 = vpack.c.b16 %v292, %v289
    %v317 = vpack.c.b16 %v293, %v290
    %342 = vmatpush.bf16.msra.mxu0 %v315
    %343 = vmatpush.bf16.msra.mxu0 %v312
    %344 = vmatpush.bf16.msra.mxu0 %v309
    %345 = vmatpush.bf16.msra.mxu0 %v306
    %346 = vmatpush.bf16.msra.mxu0 %v303
    %347 = vmatpush.bf16.msra.mxu0 %v300
    %348 = vmatpush.bf16.msra.mxu0 %v297
    %349 = vmatpush.bf16.msra.mxu0 %v294
    %350 = vmatmul.bf16.gmra.mxu0 %v198
    %v351 = vpop.f32.mrf.mxu0
    %v352 = vadd.f32 %v160, %v351
    %v353 = vpop.f32.mrf.mxu0
    %v354 = vadd.f32 %v160, %v353
    %355 = vmatmul.bf16.gmra.mxu0 %v199
    %v356 = vpop.f32.mrf.mxu0
    %v357 = vadd.f32 %v160, %v356
    %v358 = vpop.f32.mrf.mxu0
    %v359 = vadd.f32 %v160, %v358
    %360 = vmatmul.bf16.gmra.mxu0 %v200
    %v361 = vpop.f32.mrf.mxu0
    %v362 = vadd.f32 %v160, %v361
    %v363 = vpop.f32.mrf.mxu0
    %v364 = vadd.f32 %v160, %v363
    %365 = vmatmul.bf16.gmra.mxu0 %v201
    %v366 = vpop.f32.mrf.mxu0
    %v367 = vadd.f32 %v160, %v366
    %v368 = vpop.f32.mrf.mxu0
    %v369 = vadd.f32 %v160, %v368
    %370 = vmatmul.bf16.gmra.mxu0 %v202
    %v371 = vpop.f32.mrf.mxu0
    %v372 = vadd.f32 %v160, %v371
    %v373 = vpop.f32.mrf.mxu0
    %v374 = vadd.f32 %v160, %v373
    %375 = vmatmul.bf16.gmra.mxu0 %v203
    %v376 = vpop.f32.mrf.mxu0
    %v377 = vadd.f32 %v160, %v376
    %v378 = vpop.f32.mrf.mxu0
    %v379 = vadd.f32 %v160, %v378
    %380 = vmatmul.bf16.gmra.mxu0 %v204
    %v381 = vpop.f32.mrf.mxu0
    %v382 = vadd.f32 %v160, %v381
    %v383 = vpop.f32.mrf.mxu0
    %v384 = vadd.f32 %v160, %v383
    %385 = vmatmul.bf16.gmra.mxu0 %v205
    %v386 = vpop.f32.mrf.mxu0
    %v387 = vadd.f32 %v160, %v386
    %v388 = vpop.f32.mrf.mxu0
    %v389 = vadd.f32 %v160, %v388
    %390 = vdwg.mxu0
    %391 = vmatpush.bf16.msra.mxu0 %v316
    %392 = vmatpush.bf16.msra.mxu0 %v313
    %393 = vmatpush.bf16.msra.mxu0 %v310
    %394 = vmatpush.bf16.msra.mxu0 %v307
    %395 = vmatpush.bf16.msra.mxu0 %v304
    %396 = vmatpush.bf16.msra.mxu0 %v301
    %397 = vmatpush.bf16.msra.mxu0 %v298
    %398 = vmatpush.bf16.msra.mxu0 %v295
    %399 = vmatmul.bf16.gmra.mxu0 %v198
    %v400 = vpop.f32.mrf.mxu0
    %v401 = vadd.f32 %v161, %v400
    %v402 = vpop.f32.mrf.mxu0
    %v403 = vadd.f32 %v161, %v402
    %404 = vmatmul.bf16.gmra.mxu0 %v199
    %v405 = vpop.f32.mrf.mxu0
    %v406 = vadd.f32 %v161, %v405
    %v407 = vpop.f32.mrf.mxu0
    %v408 = vadd.f32 %v161, %v407
    %409 = vmatmul.bf16.gmra.mxu0 %v200
    %v410 = vpop.f32.mrf.mxu0
    %v411 = vadd.f32 %v161, %v410
    %v412 = vpop.f32.mrf.mxu0
    %v413 = vadd.f32 %v161, %v412
    %414 = vmatmul.bf16.gmra.mxu0 %v201
    %v415 = vpop.f32.mrf.mxu0
    %v416 = vadd.f32 %v161, %v415
    %v417 = vpop.f32.mrf.mxu0
    %v418 = vadd.f32 %v161, %v417
    %419 = vmatmul.bf16.gmra.mxu0 %v202
    %v420 = vpop.f32.mrf.mxu0
    %v421 = vadd.f32 %v161, %v420
    %v422 = vpop.f32.mrf.mxu0
    %v423 = vadd.f32 %v161, %v422
    %424 = vmatmul.bf16.gmra.mxu0 %v203
    %v425 = vpop.f32.mrf.mxu0
    %v426 = vadd.f32 %v161, %v425
    %v427 = vpop.f32.mrf.mxu0
    %v428 = vadd.f32 %v161, %v427
    %429 = vmatmul.bf16.gmra.mxu0 %v204
    %v430 = vpop.f32.mrf.mxu0
    %v431 = vadd.f32 %v161, %v430
    %v432 = vpop.f32.mrf.mxu0
    %v433 = vadd.f32 %v161, %v432
    %434 = vmatmul.bf16.gmra.mxu0 %v205
    %v435 = vpop.f32.mrf.mxu0
    %v436 = vadd.f32 %v161, %v435
    %v437 = vpop.f32.mrf.mxu0
    %v438 = vadd.f32 %v161, %v437
    %439 = vdwg.mxu0
    %440 = vmatpush.bf16.msra.mxu0 %v317
    %441 = vmatpush.bf16.msra.mxu0 %v314
    %442 = vmatpush.bf16.msra.mxu0 %v311
    %443 = vmatpush.bf16.msra.mxu0 %v308
    %444 = vmatpush.bf16.msra.mxu0 %v305
    %445 = vmatpush.bf16.msra.mxu0 %v302
    %446 = vmatpush.bf16.msra.mxu0 %v299
    %447 = vmatpush.bf16.msra.mxu0 %v296
    %448 = vmatmul.bf16.gmra.mxu0 %v198
    %v449 = vpop.f32.mrf.mxu0
    %v450 = vadd.f32 %v162, %v449
    %v451 = vpop.f32.mrf.mxu0
    %v452 = vadd.f32 %v162, %v451
    %453 = vmatmul.bf16.gmra.mxu0 %v199
    %v454 = vpop.f32.mrf.mxu0
    %v455 = vadd.f32 %v162, %v454
    %v456 = vpop.f32.mrf.mxu0
    %v457 = vadd.f32 %v162, %v456
    %458 = vmatmul.bf16.gmra.mxu0 %v200
    %v459 = vpop.f32.mrf.mxu0
    %v460 = vadd.f32 %v162, %v459
    %v461 = vpop.f32.mrf.mxu0
    %v462 = vadd.f32 %v162, %v461
    %463 = vmatmul.bf16.gmra.mxu0 %v201
    %v464 = vpop.f32.mrf.mxu0
    %v465 = vadd.f32 %v162, %v464
    %v466 = vpop.f32.mrf.mxu0
    %v467 = vadd.f32 %v162, %v466
    %468 = vmatmul.bf16.gmra.mxu0 %v202
    %v469 = vpop.f32.mrf.mxu0
    %v470 = vadd.f32 %v162, %v469
    %v471 = vpop.f32.mrf.mxu0
    %v472 = vadd.f32 %v162, %v471
    %473 = vmatmul.bf16.gmra.mxu0 %v203
    %v474 = vpop.f32.mrf.mxu0
    %v475 = vadd.f32 %v162, %v474
    %v476 = vpop.f32.mrf.mxu0
    %v477 = vadd.f32 %v162, %v476
    %478 = vmatmul.bf16.gmra.mxu0 %v204
    %v479 = vpop.f32.mrf.mxu0
    %v480 = vadd.f32 %v162, %v479
    %v481 = vpop.f32.mrf.mxu0
    %v482 = vadd.f32 %v162, %v481
    %483 = vmatmul.bf16.gmra.mxu0 %v205
    %v484 = vpop.f32.mrf.mxu0
    %v485 = vadd.f32 %v162, %v484
    %v486 = vpop.f32.mrf.mxu0
    %v487 = vadd.f32 %v162, %v486
    %488 = vdwg.mxu0
    %489 = vst [vmem:[#allocation4] sm:$0xff] %v352
    %490 = vst [vmem:[#allocation4 + $0x8] sm:$0xff] %v401
    %491 = vst [vmem:[#allocation4 + $0x10] sm:$0xff] %v450
    %492 = vst [vmem:[#allocation4 + $0x18] sm:$0xff] %v354
    %493 = vst [vmem:[#allocation4 + $0x20] sm:$0xff] %v403
    %494 = vst [vmem:[#allocation4 + $0x28] sm:$0xff] %v452
    %495 = vst [vmem:[#allocation4 + $0x30] sm:$0xff] %v357
    %496 = vst [vmem:[#allocation4 + $0x38] sm:$0xff] %v406
    %497 = vst [vmem:[#allocation4 + $0x40] sm:$0xff] %v455
    %498 = vst [vmem:[#allocation4 + $0x48] sm:$0xff] %v359
    %499 = vst [vmem:[#allocation4 + $0x50] sm:$0xff] %v408
    %500 = vst [vmem:[#allocation4 + $0x58] sm:$0xff] %v457
    %501 = vst [vmem:[#allocation4 + $0x60] sm:$0xff] %v362
    %502 = vst [vmem:[#allocation4 + $0x68] sm:$0xff] %v411
    %503 = vst [vmem:[#allocation4 + $0x70] sm:$0xff] %v460
    %504 = vst [vmem:[#allocation4 + $0x78] sm:$0xff] %v364
    %505 = vst [vmem:[#allocation4 + $0x80] sm:$0xff] %v413
    %506 = vst [vmem:[#allocation4 + $0x88] sm:$0xff] %v462
    %507 = vst [vmem:[#allocation4 + $0x90] sm:$0xff] %v367
    %508 = vst [vmem:[#allocation4 + $0x98] sm:$0xff] %v416
    %509 = vst [vmem:[#allocation4 + $0xa0] sm:$0xff] %v465
    %510 = vst [vmem:[#allocation4 + $0xa8] sm:$0xff] %v369
    %511 = vst [vmem:[#allocation4 + $0xb0] sm:$0xff] %v418
    %512 = vst [vmem:[#allocation4 + $0xb8] sm:$0xff] %v467
    %513 = vst [vmem:[#allocation4 + $0xc0] sm:$0xff] %v372
    %514 = vst [vmem:[#allocation4 + $0xc8] sm:$0xff] %v421
    %515 = vst [vmem:[#allocation4 + $0xd0] sm:$0xff] %v470
    %516 = vst [vmem:[#allocation4 + $0xd8] sm:$0xff] %v374
    %517 = vst [vmem:[#allocation4 + $0xe0] sm:$0xff] %v423
    %518 = vst [vmem:[#allocation4 + $0xe8] sm:$0xff] %v472
    %519 = vst [vmem:[#allocation4 + $0xf0] sm:$0xff] %v377
    %520 = vst [vmem:[#allocation4 + $0xf8] sm:$0xff] %v426
    %521 = vst [vmem:[#allocation4 + $0x100] sm:$0xff] %v475
    %522 = vst [vmem:[#allocation4 + $0x108] sm:$0xff] %v379
    %523 = vst [vmem:[#allocation4 + $0x110] sm:$0xff] %v428
    %524 = vst [vmem:[#allocation4 + $0x118] sm:$0xff] %v477
    %525 = vst [vmem:[#allocation4 + $0x120] sm:$0xff] %v382
    %526 = vst [vmem:[#allocation4 + $0x128] sm:$0xff] %v431
    %527 = vst [vmem:[#allocation4 + $0x130] sm:$0xff] %v480
    %528 = vst [vmem:[#allocation4 + $0x138] sm:$0xff] %v384
    %529 = vst [vmem:[#allocation4 + $0x140] sm:$0xff] %v433
    %530 = vst [vmem:[#allocation4 + $0x148] sm:$0xff] %v482
    %531 = vst [vmem:[#allocation4 + $0x150] sm:$0xff] %v387
    %532 = vst [vmem:[#allocation4 + $0x158] sm:$0xff] %v436
    %533 = vst [vmem:[#allocation4 + $0x160] sm:$0xff] %v485
    %534 = vst [vmem:[#allocation4 + $0x168] sm:$0xff] %v389
    %535 = vst [vmem:[#allocation4 + $0x170] sm:$0xff] %v438
    %536 = vst [vmem:[#allocation4 + $0x178] sm:$0xff] %v487
    %v537 = vld [vmem:[%s86] sm:$0xf]
    %v538 = vld [vmem:[%s86 + $0x4] sm:$0xf]
    %v539 = vld [vmem:[%s86 + $0x8] sm:$0xf]
    %v540 = vld [vmem:[%s86 + $0xc] sm:$0xf]
    %v541 = vld [vmem:[%s86 + $0x10] sm:$0xf]
    %v542 = vld [vmem:[%s86 + $0x14] sm:$0xf]
    %v543 = vld [vmem:[%s86 + $0x18] sm:$0xf]
    %v544 = vld [vmem:[%s86 + $0x1c] sm:$0xf]
    %v545 = vld [vmem:[%s86 + $0x20] sm:$0xf]
    %v546 = vld [vmem:[%s86 + $0x24] sm:$0xf]
    %v547 = vld [vmem:[%s86 + $0x28] sm:$0xf]
    %v548 = vld [vmem:[%s86 + $0x2c] sm:$0xf]
    %v549 = vld [vmem:[%s86 + $0x30] sm:$0xf]
    %v550 = vld [vmem:[%s86 + $0x34] sm:$0xf]
    %v551 = vld [vmem:[%s86 + $0x38] sm:$0xf]
    %v552 = vld [vmem:[%s86 + $0x3c] sm:$0xf]
    %s553 = scalar_lea.vmem [#allocation6], 192
    %v554 = vld [vmem:[%s553] sm:$0xff]
    %v555 = vld [vmem:[%s553 + $0x8] sm:$0xf]
    %v556 = vld [vmem:[%s553 + $0xc] sm:$0xff]
    %v557 = vld [vmem:[%s553 + $0x14] sm:$0xf]
    %v558 = vld [vmem:[%s553 + $0x18] sm:$0xff]
    %v559 = vld [vmem:[%s553 + $0x20] sm:$0xf]
    %v560 = vld [vmem:[%s553 + $0x24] sm:$0xff]
    %v561 = vld [vmem:[%s553 + $0x2c] sm:$0xf]
    %v562 = vld [vmem:[%s553 + $0x30] sm:$0xff]
    %v563 = vld [vmem:[%s553 + $0x38] sm:$0xf]
    %v564 = vld [vmem:[%s553 + $0x3c] sm:$0xff]
    %v565 = vld [vmem:[%s553 + $0x44] sm:$0xf]
    %v566 = vld [vmem:[%s553 + $0x48] sm:$0xff]
    %v567 = vld [vmem:[%s553 + $0x50] sm:$0xf]
    %v568 = vld [vmem:[%s553 + $0x54] sm:$0xff]
    %v569 = vld [vmem:[%s553 + $0x5c] sm:$0xf]
    %v570 = vld [vmem:[%s553 + $0x60] sm:$0xff]
    %v571 = vld [vmem:[%s553 + $0x68] sm:$0xf]
    %v572 = vld [vmem:[%s553 + $0x6c] sm:$0xff]
    %v573 = vld [vmem:[%s553 + $0x74] sm:$0xf]
    %v574 = vld [vmem:[%s553 + $0x78] sm:$0xff]
    %v575 = vld [vmem:[%s553 + $0x80] sm:$0xf]
    %v576 = vld [vmem:[%s553 + $0x84] sm:$0xff]
    %v577 = vld [vmem:[%s553 + $0x8c] sm:$0xf]
    %v578 = vld [vmem:[%s553 + $0x90] sm:$0xff]
    %v579 = vld [vmem:[%s553 + $0x98] sm:$0xf]
    %v580 = vld [vmem:[%s553 + $0x9c] sm:$0xff]
    %v581 = vld [vmem:[%s553 + $0xa4] sm:$0xf]
    %v582 = vld [vmem:[%s553 + $0xa8] sm:$0xff]
    %v583 = vld [vmem:[%s553 + $0xb0] sm:$0xf]
    %v584 = vld [vmem:[%s553 + $0xb4] sm:$0xff]
    %v585 = vld [vmem:[%s553 + $0xbc] sm:$0xf]
    %s586 = scalar_lea.vmem %s5, 3
    %v587 = vld [vmem:[%s586] sm:$0x7]
    %v589 = vperm.slane %v587, 0
    %v590 = vperm.slane %v587, 1
    %v591 = vperm.slane %v587, 2
    %v611 = vunpack.c.l.b16 %v537
    %v612 = vunpack.c.l.b16 %v538
    %v613 = vunpack.c.l.b16 %v539
    %v614 = vunpack.c.l.b16 %v540
    %v615 = vunpack.c.l.b16 %v541
    %v616 = vunpack.c.l.b16 %v542
    %v617 = vunpack.c.l.b16 %v543
    %v618 = vunpack.c.l.b16 %v544
    %v619 = vunpack.c.l.b16 %v545
    %v620 = vunpack.c.l.b16 %v546
    %v621 = vunpack.c.l.b16 %v547
    %v622 = vunpack.c.l.b16 %v548
    %v623 = vunpack.c.l.b16 %v549
    %v624 = vunpack.c.l.b16 %v550
    %v625 = vunpack.c.l.b16 %v551
    %v626 = vunpack.c.l.b16 %v552
    %v627 = vpack.c.b16 %v612, %v611
    %v628 = vpack.c.b16 %v614, %v613
    %v629 = vpack.c.b16 %v616, %v615
    %v630 = vpack.c.b16 %v618, %v617
    %v631 = vpack.c.b16 %v620, %v619
    %v632 = vpack.c.b16 %v622, %v621
    %v633 = vpack.c.b16 %v624, %v623
    %v634 = vpack.c.b16 %v626, %v625
    %v675 = vunpack.c.l.b16 %v554
    %v676 = vunpack.c.h.b16 %v554
    %v677 = vunpack.c.l.b16 %v555
    %v678 = vunpack.c.l.b16 %v556
    %v679 = vunpack.c.h.b16 %v556
    %v680 = vunpack.c.l.b16 %v557
    %v681 = vunpack.c.l.b16 %v558
    %v682 = vunpack.c.h.b16 %v558
    %v683 = vunpack.c.l.b16 %v559
    %v684 = vunpack.c.l.b16 %v560
    %v685 = vunpack.c.h.b16 %v560
    %v686 = vunpack.c.l.b16 %v561
    %v687 = vunpack.c.l.b16 %v562
    %v688 = vunpack.c.h.b16 %v562
    %v689 = vunpack.c.l.b16 %v563
    %v690 = vunpack.c.l.b16 %v564
    %v691 = vunpack.c.h.b16 %v564
    %v692 = vunpack.c.l.b16 %v565
    %v693 = vunpack.c.l.b16 %v566
    %v694 = vunpack.c.h.b16 %v566
    %v695 = vunpack.c.l.b16 %v567
    %v696 = vunpack.c.l.b16 %v568
    %v697 = vunpack.c.h.b16 %v568
    %v698 = vunpack.c.l.b16 %v569
    %v699 = vunpack.c.l.b16 %v570
    %v700 = vunpack.c.h.b16 %v570
    %v701 = vunpack.c.l.b16 %v571
    %v702 = vunpack.c.l.b16 %v572
    %v703 = vunpack.c.h.b16 %v572
    %v704 = vunpack.c.l.b16 %v573
    %v705 = vunpack.c.l.b16 %v574
    %v706 = vunpack.c.h.b16 %v574
    %v707 = vunpack.c.l.b16 %v575
    %v708 = vunpack.c.l.b16 %v576
    %v709 = vunpack.c.h.b16 %v576
    %v710 = vunpack.c.l.b16 %v577
    %v711 = vunpack.c.l.b16 %v578
    %v712 = vunpack.c.h.b16 %v578
    %v713 = vunpack.c.l.b16 %v579
    %v714 = vunpack.c.l.b16 %v580
    %v715 = vunpack.c.h.b16 %v580
    %v716 = vunpack.c.l.b16 %v581
    %v717 = vunpack.c.l.b16 %v582
    %v718 = vunpack.c.h.b16 %v582
    %v719 = vunpack.c.l.b16 %v583
    %v720 = vunpack.c.l.b16 %v584
    %v721 = vunpack.c.h.b16 %v584
    %v722 = vunpack.c.l.b16 %v585
    %v723 = vpack.c.b16 %v678, %v675
    %v724 = vpack.c.b16 %v679, %v676
    %v725 = vpack.c.b16 %v680, %v677
    %v726 = vpack.c.b16 %v684, %v681
    %v727 = vpack.c.b16 %v685, %v682
    %v728 = vpack.c.b16 %v686, %v683
    %v729 = vpack.c.b16 %v690, %v687
    %v730 = vpack.c.b16 %v691, %v688
    %v731 = vpack.c.b16 %v692, %v689
    %v732 = vpack.c.b16 %v696, %v693
    %v733 = vpack.c.b16 %v697, %v694
    %v734 = vpack.c.b16 %v698, %v695
    %v735 = vpack.c.b16 %v702, %v699
    %v736 = vpack.c.b16 %v703, %v700
    %v737 = vpack.c.b16 %v704, %v701
    %v738 = vpack.c.b16 %v708, %v705
    %v739 = vpack.c.b16 %v709, %v706
    %v740 = vpack.c.b16 %v710, %v707
    %v741 = vpack.c.b16 %v714, %v711
    %v742 = vpack.c.b16 %v715, %v712
    %v743 = vpack.c.b16 %v716, %v713
    %v744 = vpack.c.b16 %v720, %v717
    %v745 = vpack.c.b16 %v721, %v718
    %v746 = vpack.c.b16 %v722, %v719
    %771 = vmatpush.bf16.msra.mxu0 %v744
    %772 = vmatpush.bf16.msra.mxu0 %v741
    %773 = vmatpush.bf16.msra.mxu0 %v738
    %774 = vmatpush.bf16.msra.mxu0 %v735
    %775 = vmatpush.bf16.msra.mxu0 %v732
    %776 = vmatpush.bf16.msra.mxu0 %v729
    %777 = vmatpush.bf16.msra.mxu0 %v726
    %778 = vmatpush.bf16.msra.mxu0 %v723
    %779 = vmatmul.bf16.gmra.mxu0 %v627
    %v780 = vpop.f32.mrf.mxu0
    %v781 = vadd.f32 %v589, %v780
    %v782 = vpop.f32.mrf.mxu0
    %v783 = vadd.f32 %v589, %v782
    %784 = vmatmul.bf16.gmra.mxu0 %v628
    %v785 = vpop.f32.mrf.mxu0
    %v786 = vadd.f32 %v589, %v785
    %v787 = vpop.f32.mrf.mxu0
    %v788 = vadd.f32 %v589, %v787
    %789 = vmatmul.bf16.gmra.mxu0 %v629
    %v790 = vpop.f32.mrf.mxu0
    %v791 = vadd.f32 %v589, %v790
    %v792 = vpop.f32.mrf.mxu0
    %v793 = vadd.f32 %v589, %v792
    %794 = vmatmul.bf16.gmra.mxu0 %v630
    %v795 = vpop.f32.mrf.mxu0
    %v796 = vadd.f32 %v589, %v795
    %v797 = vpop.f32.mrf.mxu0
    %v798 = vadd.f32 %v589, %v797
    %799 = vmatmul.bf16.gmra.mxu0 %v631
    %v800 = vpop.f32.mrf.mxu0
    %v801 = vadd.f32 %v589, %v800
    %v802 = vpop.f32.mrf.mxu0
    %v803 = vadd.f32 %v589, %v802
    %804 = vmatmul.bf16.gmra.mxu0 %v632
    %v805 = vpop.f32.mrf.mxu0
    %v806 = vadd.f32 %v589, %v805
    %v807 = vpop.f32.mrf.mxu0
    %v808 = vadd.f32 %v589, %v807
    %809 = vmatmul.bf16.gmra.mxu0 %v633
    %v810 = vpop.f32.mrf.mxu0
    %v811 = vadd.f32 %v589, %v810
    %v812 = vpop.f32.mrf.mxu0
    %v813 = vadd.f32 %v589, %v812
    %814 = vmatmul.bf16.gmra.mxu0 %v634
    %v815 = vpop.f32.mrf.mxu0
    %v816 = vadd.f32 %v589, %v815
    %v817 = vpop.f32.mrf.mxu0
    %v818 = vadd.f32 %v589, %v817
    %819 = vdwg.mxu0
    %820 = vmatpush.bf16.msra.mxu0 %v745
    %821 = vmatpush.bf16.msra.mxu0 %v742
    %822 = vmatpush.bf16.msra.mxu0 %v739
    %823 = vmatpush.bf16.msra.mxu0 %v736
    %824 = vmatpush.bf16.msra.mxu0 %v733
    %825 = vmatpush.bf16.msra.mxu0 %v730
    %826 = vmatpush.bf16.msra.mxu0 %v727
    %827 = vmatpush.bf16.msra.mxu0 %v724
    %828 = vmatmul.bf16.gmra.mxu0 %v627
    %v829 = vpop.f32.mrf.mxu0
    %v830 = vadd.f32 %v590, %v829
    %v831 = vpop.f32.mrf.mxu0
    %v832 = vadd.f32 %v590, %v831
    %833 = vmatmul.bf16.gmra.mxu0 %v628
    %v834 = vpop.f32.mrf.mxu0
    %v835 = vadd.f32 %v590, %v834
    %v836 = vpop.f32.mrf.mxu0
    %v837 = vadd.f32 %v590, %v836
    %838 = vmatmul.bf16.gmra.mxu0 %v629
    %v839 = vpop.f32.mrf.mxu0
    %v840 = vadd.f32 %v590, %v839
    %v841 = vpop.f32.mrf.mxu0
    %v842 = vadd.f32 %v590, %v841
    %843 = vmatmul.bf16.gmra.mxu0 %v630
    %v844 = vpop.f32.mrf.mxu0
    %v845 = vadd.f32 %v590, %v844
    %v846 = vpop.f32.mrf.mxu0
    %v847 = vadd.f32 %v590, %v846
    %848 = vmatmul.bf16.gmra.mxu0 %v631
    %v849 = vpop.f32.mrf.mxu0
    %v850 = vadd.f32 %v590, %v849
    %v851 = vpop.f32.mrf.mxu0
    %v852 = vadd.f32 %v590, %v851
    %853 = vmatmul.bf16.gmra.mxu0 %v632
    %v854 = vpop.f32.mrf.mxu0
    %v855 = vadd.f32 %v590, %v854
    %v856 = vpop.f32.mrf.mxu0
    %v857 = vadd.f32 %v590, %v856
    %858 = vmatmul.bf16.gmra.mxu0 %v633
    %v859 = vpop.f32.mrf.mxu0
    %v860 = vadd.f32 %v590, %v859
    %v861 = vpop.f32.mrf.mxu0
    %v862 = vadd.f32 %v590, %v861
    %863 = vmatmul.bf16.gmra.mxu0 %v634
    %v864 = vpop.f32.mrf.mxu0
    %v865 = vadd.f32 %v590, %v864
    %v866 = vpop.f32.mrf.mxu0
    %v867 = vadd.f32 %v590, %v866
    %868 = vdwg.mxu0
    %869 = vmatpush.bf16.msra.mxu0 %v746
    %870 = vmatpush.bf16.msra.mxu0 %v743
    %871 = vmatpush.bf16.msra.mxu0 %v740
    %872 = vmatpush.bf16.msra.mxu0 %v737
    %873 = vmatpush.bf16.msra.mxu0 %v734
    %874 = vmatpush.bf16.msra.mxu0 %v731
    %875 = vmatpush.bf16.msra.mxu0 %v728
    %876 = vmatpush.bf16.msra.mxu0 %v725
    %877 = vmatmul.bf16.gmra.mxu0 %v627
    %v878 = vpop.f32.mrf.mxu0
    %v879 = vadd.f32 %v591, %v878
    %v880 = vpop.f32.mrf.mxu0
    %v881 = vadd.f32 %v591, %v880
    %882 = vmatmul.bf16.gmra.mxu0 %v628
    %v883 = vpop.f32.mrf.mxu0
    %v884 = vadd.f32 %v591, %v883
    %v885 = vpop.f32.mrf.mxu0
    %v886 = vadd.f32 %v591, %v885
    %887 = vmatmul.bf16.gmra.mxu0 %v629
    %v888 = vpop.f32.mrf.mxu0
    %v889 = vadd.f32 %v591, %v888
    %v890 = vpop.f32.mrf.mxu0
    %v891 = vadd.f32 %v591, %v890
    %892 = vmatmul.bf16.gmra.mxu0 %v630
    %v893 = vpop.f32.mrf.mxu0
    %v894 = vadd.f32 %v591, %v893
    %v895 = vpop.f32.mrf.mxu0
    %v896 = vadd.f32 %v591, %v895
    %897 = vmatmul.bf16.gmra.mxu0 %v631
    %v898 = vpop.f32.mrf.mxu0
    %v899 = vadd.f32 %v591, %v898
    %v900 = vpop.f32.mrf.mxu0
    %v901 = vadd.f32 %v591, %v900
    %902 = vmatmul.bf16.gmra.mxu0 %v632
    %v903 = vpop.f32.mrf.mxu0
    %v904 = vadd.f32 %v591, %v903
    %v905 = vpop.f32.mrf.mxu0
    %v906 = vadd.f32 %v591, %v905
    %907 = vmatmul.bf16.gmra.mxu0 %v633
    %v908 = vpop.f32.mrf.mxu0
    %v909 = vadd.f32 %v591, %v908
    %v910 = vpop.f32.mrf.mxu0
    %v911 = vadd.f32 %v591, %v910
    %912 = vmatmul.bf16.gmra.mxu0 %v634
    %v913 = vpop.f32.mrf.mxu0
    %v914 = vadd.f32 %v591, %v913
    %v915 = vpop.f32.mrf.mxu0
    %v916 = vadd.f32 %v591, %v915
    %917 = vdwg.mxu0
    %918 = vst [vmem:[#allocation5] sm:$0xff] %v781
    %919 = vst [vmem:[#allocation5 + $0x8] sm:$0xff] %v830
    %920 = vst [vmem:[#allocation5 + $0x10] sm:$0xff] %v879
    %921 = vst [vmem:[#allocation5 + $0x18] sm:$0xff] %v783
    %922 = vst [vmem:[#allocation5 + $0x20] sm:$0xff] %v832
    %923 = vst [vmem:[#allocation5 + $0x28] sm:$0xff] %v881
    %924 = vst [vmem:[#allocation5 + $0x30] sm:$0xff] %v786
    %925 = vst [vmem:[#allocation5 + $0x38] sm:$0xff] %v835
    %926 = vst [vmem:[#allocation5 + $0x40] sm:$0xff] %v884
    %927 = vst [vmem:[#allocation5 + $0x48] sm:$0xff] %v788
    %928 = vst [vmem:[#allocation5 + $0x50] sm:$0xff] %v837
    %929 = vst [vmem:[#allocation5 + $0x58] sm:$0xff] %v886
    %930 = vst [vmem:[#allocation5 + $0x60] sm:$0xff] %v791
    %931 = vst [vmem:[#allocation5 + $0x68] sm:$0xff] %v840
    %932 = vst [vmem:[#allocation5 + $0x70] sm:$0xff] %v889
    %933 = vst [vmem:[#allocation5 + $0x78] sm:$0xff] %v793
    %934 = vst [vmem:[#allocation5 + $0x80] sm:$0xff] %v842
    %935 = vst [vmem:[#allocation5 + $0x88] sm:$0xff] %v891
    %936 = vst [vmem:[#allocation5 + $0x90] sm:$0xff] %v796
    %937 = vst [vmem:[#allocation5 + $0x98] sm:$0xff] %v845
    %938 = vst [vmem:[#allocation5 + $0xa0] sm:$0xff] %v894
    %939 = vst [vmem:[#allocation5 + $0xa8] sm:$0xff] %v798
    %940 = vst [vmem:[#allocation5 + $0xb0] sm:$0xff] %v847
    %941 = vst [vmem:[#allocation5 + $0xb8] sm:$0xff] %v896
    %942 = vst [vmem:[#allocation5 + $0xc0] sm:$0xff] %v801
    %943 = vst [vmem:[#allocation5 + $0xc8] sm:$0xff] %v850
    %944 = vst [vmem:[#allocation5 + $0xd0] sm:$0xff] %v899
    %945 = vst [vmem:[#allocation5 + $0xd8] sm:$0xff] %v803
    %946 = vst [vmem:[#allocation5 + $0xe0] sm:$0xff] %v852
    %947 = vst [vmem:[#allocation5 + $0xe8] sm:$0xff] %v901
    %948 = vst [vmem:[#allocation5 + $0xf0] sm:$0xff] %v806
    %949 = vst [vmem:[#allocation5 + $0xf8] sm:$0xff] %v855
    %950 = vst [vmem:[#allocation5 + $0x100] sm:$0xff] %v904
    %951 = vst [vmem:[#allocation5 + $0x108] sm:$0xff] %v808
    %952 = vst [vmem:[#allocation5 + $0x110] sm:$0xff] %v857
    %953 = vst [vmem:[#allocation5 + $0x118] sm:$0xff] %v906
    %954 = vst [vmem:[#allocation5 + $0x120] sm:$0xff] %v811
    %955 = vst [vmem:[#allocation5 + $0x128] sm:$0xff] %v860
    %956 = vst [vmem:[#allocation5 + $0x130] sm:$0xff] %v909
    %957 = vst [vmem:[#allocation5 + $0x138] sm:$0xff] %v813
    %958 = vst [vmem:[#allocation5 + $0x140] sm:$0xff] %v862
    %959 = vst [vmem:[#allocation5 + $0x148] sm:$0xff] %v911
    %960 = vst [vmem:[#allocation5 + $0x150] sm:$0xff] %v816
    %961 = vst [vmem:[#allocation5 + $0x158] sm:$0xff] %v865
    %962 = vst [vmem:[#allocation5 + $0x160] sm:$0xff] %v914
    %963 = vst [vmem:[#allocation5 + $0x168] sm:$0xff] %v818
    %964 = vst [vmem:[#allocation5 + $0x170] sm:$0xff] %v867
    %965 = vst [vmem:[#allocation5 + $0x178] sm:$0xff] %v916
    %v966 = vld [vmem:[%s6] sm:$0x1]
    %v968 = vperm.slane %v966, 0
    %s970 = scalar_lea.vmem %s6, 1
    %v971 = vld [vmem:[%s970] sm:$0x1]
    %v973 = vperm.slane %v971, 0
    %v975 = vld [vmem:[#allocation2] sm:$0xff]
    %v976 = vld [vmem:[#allocation2 + $0x8] sm:$0xff]
    %v977 = vld [vmem:[#allocation3] sm:$0xff]
    %v978 = vld [vmem:[#allocation3 + $0x8] sm:$0xff]
    %v979 = vpack.c.bf16 %v975, %v975
    %v980 = vpack.c.bf16 %v976, %v976
    %v981 = vpack.c.bf16 %v977, %v977
    %v982 = vpack.c.bf16 %v978, %v978
    %v985 = vunpack.c.l.b16 %v979
    %v986 = vunpack.c.l.b16 %v980
    %v987 = vpack.c.b16 %v986, %v985
    %v991 = vunpack.c.l.b16 %v981
    %v992 = vunpack.c.l.b16 %v982
    %v993 = vpack.c.b16 %v992, %v991
    %v995 = vld [vmem:[#allocation8] sm:$0xff]
    %v996 = vld [vmem:[#allocation8 + $0x8] sm:$0xff]
    %v997 = vld [vmem:[#allocation8 + $0x10] sm:$0xff]
    %v998 = vld [vmem:[#allocation8 + $0x18] sm:$0xff]
    %v999 = vld [vmem:[#allocation8 + $0x20] sm:$0xff]
    %v1000 = vld [vmem:[#allocation8 + $0x28] sm:$0xff]
    %v1001 = vld [vmem:[#allocation8 + $0x30] sm:$0xff]
    %v1002 = vld [vmem:[#allocation8 + $0x38] sm:$0xff]
    %v1003 = vld [vmem:[#allocation8 + $0x40] sm:$0xff]
    %v1004 = vld [vmem:[#allocation8 + $0x48] sm:$0xff]
    %v1005 = vld [vmem:[#allocation8 + $0x50] sm:$0xff]
    %v1006 = vld [vmem:[#allocation8 + $0x58] sm:$0xff]
    %v1007 = vld [vmem:[#allocation8 + $0x60] sm:$0xff]
    %v1008 = vld [vmem:[#allocation8 + $0x68] sm:$0xff]
    %v1009 = vld [vmem:[#allocation8 + $0x70] sm:$0xff]
    %v1010 = vld [vmem:[#allocation8 + $0x78] sm:$0xff]
    %v1011 = vld [vmem:[#allocation8 + $0x80] sm:$0xff]
    %v1012 = vld [vmem:[#allocation8 + $0x88] sm:$0xff]
    %v1013 = vld [vmem:[#allocation8 + $0x90] sm:$0xff]
    %v1014 = vld [vmem:[#allocation8 + $0x98] sm:$0xff]
    %v1015 = vld [vmem:[#allocation8 + $0xa0] sm:$0xff]
    %v1016 = vld [vmem:[#allocation8 + $0xa8] sm:$0xff]
    %v1017 = vld [vmem:[#allocation8 + $0xb0] sm:$0xff]
    %v1018 = vld [vmem:[#allocation8 + $0xb8] sm:$0xff]
    %v1019 = vld [vmem:[#allocation8 + $0xc0] sm:$0xff]
    %v1020 = vld [vmem:[#allocation8 + $0xc8] sm:$0xff]
    %v1021 = vld [vmem:[#allocation8 + $0xd0] sm:$0xff]
    %v1022 = vld [vmem:[#allocation8 + $0xd8] sm:$0xff]
    %v1023 = vld [vmem:[#allocation8 + $0xe0] sm:$0xff]
    %v1024 = vld [vmem:[#allocation8 + $0xe8] sm:$0xff]
    %v1025 = vld [vmem:[#allocation8 + $0xf0] sm:$0xff]
    %v1026 = vld [vmem:[#allocation8 + $0xf8] sm:$0xff]
    %v1027 = vld [vmem:[#allocation8 + $0x100] sm:$0xff]
    %v1028 = vld [vmem:[#allocation8 + $0x108] sm:$0xff]
    %v1029 = vld [vmem:[#allocation8 + $0x110] sm:$0xff]
    %v1030 = vld [vmem:[#allocation8 + $0x118] sm:$0xff]
    %v1031 = vld [vmem:[#allocation8 + $0x120] sm:$0xff]
    %v1032 = vld [vmem:[#allocation8 + $0x128] sm:$0xff]
    %v1033 = vld [vmem:[#allocation8 + $0x130] sm:$0xff]
    %v1034 = vld [vmem:[#allocation8 + $0x138] sm:$0xff]
    %v1035 = vld [vmem:[#allocation8 + $0x140] sm:$0xff]
    %v1036 = vld [vmem:[#allocation8 + $0x148] sm:$0xff]
    %v1037 = vld [vmem:[#allocation8 + $0x150] sm:$0xff]
    %v1038 = vld [vmem:[#allocation8 + $0x158] sm:$0xff]
    %v1039 = vld [vmem:[#allocation8 + $0x160] sm:$0xff]
    %v1040 = vld [vmem:[#allocation8 + $0x168] sm:$0xff]
    %v1041 = vld [vmem:[#allocation8 + $0x170] sm:$0xff]
    %v1042 = vld [vmem:[#allocation8 + $0x178] sm:$0xff]
    %v1043 = vld [vmem:[#allocation8 + $0x180] sm:$0xff]
    %v1044 = vld [vmem:[#allocation8 + $0x188] sm:$0xff]
    %v1045 = vld [vmem:[#allocation8 + $0x190] sm:$0xff]
    %v1046 = vld [vmem:[#allocation8 + $0x198] sm:$0xff]
    %v1047 = vld [vmem:[#allocation8 + $0x1a0] sm:$0xff]
    %v1048 = vld [vmem:[#allocation8 + $0x1a8] sm:$0xff]
    %v1049 = vld [vmem:[#allocation8 + $0x1b0] sm:$0xff]
    %v1050 = vld [vmem:[#allocation8 + $0x1b8] sm:$0xff]
    %v1051 = vld [vmem:[#allocation8 + $0x1c0] sm:$0xff]
    %v1052 = vld [vmem:[#allocation8 + $0x1c8] sm:$0xff]
    %v1053 = vld [vmem:[#allocation8 + $0x1d0] sm:$0xff]
    %v1054 = vld [vmem:[#allocation8 + $0x1d8] sm:$0xff]
    %v1055 = vld [vmem:[#allocation8 + $0x1e0] sm:$0xff]
    %v1056 = vld [vmem:[#allocation8 + $0x1e8] sm:$0xff]
    %v1057 = vld [vmem:[#allocation8 + $0x1f0] sm:$0xff]
    %v1058 = vld [vmem:[#allocation8 + $0x1f8] sm:$0xff]
    %v1059 = vld [vmem:[#allocation8 + $0x200] sm:$0xff]
    %v1060 = vld [vmem:[#allocation8 + $0x208] sm:$0xff]
    %v1061 = vld [vmem:[#allocation8 + $0x210] sm:$0xff]
    %v1062 = vld [vmem:[#allocation8 + $0x218] sm:$0xff]
    %v1063 = vld [vmem:[#allocation8 + $0x220] sm:$0xff]
    %v1064 = vld [vmem:[#allocation8 + $0x228] sm:$0xff]
    %v1065 = vld [vmem:[#allocation8 + $0x230] sm:$0xff]
    %v1066 = vld [vmem:[#allocation8 + $0x238] sm:$0xff]
    %v1067 = vld [vmem:[#allocation8 + $0x240] sm:$0xff]
    %v1068 = vld [vmem:[#allocation8 + $0x248] sm:$0xff]
    %v1069 = vld [vmem:[#allocation8 + $0x250] sm:$0xff]
    %v1070 = vld [vmem:[#allocation8 + $0x258] sm:$0xff]
    %v1071 = vld [vmem:[#allocation8 + $0x260] sm:$0xff]
    %v1072 = vld [vmem:[#allocation8 + $0x268] sm:$0xff]
    %v1073 = vld [vmem:[#allocation8 + $0x270] sm:$0xff]
    %v1074 = vld [vmem:[#allocation8 + $0x278] sm:$0xff]
    %v1075 = vld [vmem:[#allocation8 + $0x280] sm:$0xff]
    %v1076 = vld [vmem:[#allocation8 + $0x288] sm:$0xff]
    %v1077 = vld [vmem:[#allocation8 + $0x290] sm:$0xff]
    %v1078 = vld [vmem:[#allocation8 + $0x298] sm:$0xff]
    %v1079 = vld [vmem:[#allocation8 + $0x2a0] sm:$0xff]
    %v1080 = vld [vmem:[#allocation8 + $0x2a8] sm:$0xff]
    %v1081 = vld [vmem:[#allocation8 + $0x2b0] sm:$0xff]
    %v1082 = vld [vmem:[#allocation8 + $0x2b8] sm:$0xff]
    %v1083 = vld [vmem:[#allocation8 + $0x2c0] sm:$0xff]
    %v1084 = vld [vmem:[#allocation8 + $0x2c8] sm:$0xff]
    %v1085 = vld [vmem:[#allocation8 + $0x2d0] sm:$0xff]
    %v1086 = vld [vmem:[#allocation8 + $0x2d8] sm:$0xff]
    %v1087 = vld [vmem:[#allocation8 + $0x2e0] sm:$0xff]
    %v1088 = vld [vmem:[#allocation8 + $0x2e8] sm:$0xff]
    %v1089 = vld [vmem:[#allocation8 + $0x2f0] sm:$0xff]
    %v1090 = vld [vmem:[#allocation8 + $0x2f8] sm:$0xff]
    %v1187 = vunpack.c.l.b16 %v995
    %v1188 = vunpack.c.h.b16 %v995
    %v1189 = vunpack.c.l.b16 %v996
    %v1190 = vunpack.c.h.b16 %v996
    %v1191 = vunpack.c.l.b16 %v997
    %v1192 = vunpack.c.h.b16 %v997
    %v1193 = vunpack.c.l.b16 %v998
    %v1194 = vunpack.c.h.b16 %v998
    %v1195 = vunpack.c.l.b16 %v999
    %v1196 = vunpack.c.h.b16 %v999
    %v1197 = vunpack.c.l.b16 %v1000
    %v1198 = vunpack.c.h.b16 %v1000
    %v1199 = vunpack.c.l.b16 %v1001
    %v1200 = vunpack.c.h.b16 %v1001
    %v1201 = vunpack.c.l.b16 %v1002
    %v1202 = vunpack.c.h.b16 %v1002
    %v1203 = vunpack.c.l.b16 %v1003
    %v1204 = vunpack.c.h.b16 %v1003
    %v1205 = vunpack.c.l.b16 %v1004
    %v1206 = vunpack.c.h.b16 %v1004
    %v1207 = vunpack.c.l.b16 %v1005
    %v1208 = vunpack.c.h.b16 %v1005
    %v1209 = vunpack.c.l.b16 %v1006
    %v1210 = vunpack.c.h.b16 %v1006
    %v1211 = vunpack.c.l.b16 %v1007
    %v1212 = vunpack.c.h.b16 %v1007
    %v1213 = vunpack.c.l.b16 %v1008
    %v1214 = vunpack.c.h.b16 %v1008
    %v1215 = vunpack.c.l.b16 %v1009
    %v1216 = vunpack.c.h.b16 %v1009
    %v1217 = vunpack.c.l.b16 %v1010
    %v1218 = vunpack.c.h.b16 %v1010
    %v1219 = vunpack.c.l.b16 %v1011
    %v1220 = vunpack.c.h.b16 %v1011
    %v1221 = vunpack.c.l.b16 %v1012
    %v1222 = vunpack.c.h.b16 %v1012
    %v1223 = vunpack.c.l.b16 %v1013
    %v1224 = vunpack.c.h.b16 %v1013
    %v1225 = vunpack.c.l.b16 %v1014
    %v1226 = vunpack.c.h.b16 %v1014
    %v1227 = vunpack.c.l.b16 %v1015
    %v1228 = vunpack.c.h.b16 %v1015
    %v1229 = vunpack.c.l.b16 %v1016
    %v1230 = vunpack.c.h.b16 %v1016
    %v1231 = vunpack.c.l.b16 %v1017
    %v1232 = vunpack.c.h.b16 %v1017
    %v1233 = vunpack.c.l.b16 %v1018
    %v1234 = vunpack.c.h.b16 %v1018
    %v1235 = vunpack.c.l.b16 %v1019
    %v1236 = vunpack.c.h.b16 %v1019
    %v1237 = vunpack.c.l.b16 %v1020
    %v1238 = vunpack.c.h.b16 %v1020
    %v1239 = vunpack.c.l.b16 %v1021
    %v1240 = vunpack.c.h.b16 %v1021
    %v1241 = vunpack.c.l.b16 %v1022
    %v1242 = vunpack.c.h.b16 %v1022
    %v1243 = vunpack.c.l.b16 %v1023
    %v1244 = vunpack.c.h.b16 %v1023
    %v1245 = vunpack.c.l.b16 %v1024
    %v1246 = vunpack.c.h.b16 %v1024
    %v1247 = vunpack.c.l.b16 %v1025
    %v1248 = vunpack.c.h.b16 %v1025
    %v1249 = vunpack.c.l.b16 %v1026
    %v1250 = vunpack.c.h.b16 %v1026
    %v1251 = vunpack.c.l.b16 %v1027
    %v1252 = vunpack.c.h.b16 %v1027
    %v1253 = vunpack.c.l.b16 %v1028
    %v1254 = vunpack.c.h.b16 %v1028
    %v1255 = vunpack.c.l.b16 %v1029
    %v1256 = vunpack.c.h.b16 %v1029
    %v1257 = vunpack.c.l.b16 %v1030
    %v1258 = vunpack.c.h.b16 %v1030
    %v1259 = vunpack.c.l.b16 %v1031
    %v1260 = vunpack.c.h.b16 %v1031
    %v1261 = vunpack.c.l.b16 %v1032
    %v1262 = vunpack.c.h.b16 %v1032
    %v1263 = vunpack.c.l.b16 %v1033
    %v1264 = vunpack.c.h.b16 %v1033
    %v1265 = vunpack.c.l.b16 %v1034
    %v1266 = vunpack.c.h.b16 %v1034
    %v1267 = vunpack.c.l.b16 %v1035
    %v1268 = vunpack.c.h.b16 %v1035
    %v1269 = vunpack.c.l.b16 %v1036
    %v1270 = vunpack.c.h.b16 %v1036
    %v1271 = vunpack.c.l.b16 %v1037
    %v1272 = vunpack.c.h.b16 %v1037
    %v1273 = vunpack.c.l.b16 %v1038
    %v1274 = vunpack.c.h.b16 %v1038
    %v1275 = vunpack.c.l.b16 %v1039
    %v1276 = vunpack.c.h.b16 %v1039
    %v1277 = vunpack.c.l.b16 %v1040
    %v1278 = vunpack.c.h.b16 %v1040
    %v1279 = vunpack.c.l.b16 %v1041
    %v1280 = vunpack.c.h.b16 %v1041
    %v1281 = vunpack.c.l.b16 %v1042
    %v1282 = vunpack.c.h.b16 %v1042
    %v1283 = vunpack.c.l.b16 %v1043
    %v1284 = vunpack.c.h.b16 %v1043
    %v1285 = vunpack.c.l.b16 %v1044
    %v1286 = vunpack.c.h.b16 %v1044
    %v1287 = vunpack.c.l.b16 %v1045
    %v1288 = vunpack.c.h.b16 %v1045
    %v1289 = vunpack.c.l.b16 %v1046
    %v1290 = vunpack.c.h.b16 %v1046
    %v1291 = vunpack.c.l.b16 %v1047
    %v1292 = vunpack.c.h.b16 %v1047
    %v1293 = vunpack.c.l.b16 %v1048
    %v1294 = vunpack.c.h.b16 %v1048
    %v1295 = vunpack.c.l.b16 %v1049
    %v1296 = vunpack.c.h.b16 %v1049
    %v1297 = vunpack.c.l.b16 %v1050
    %v1298 = vunpack.c.h.b16 %v1050
    %v1299 = vunpack.c.l.b16 %v1051
    %v1300 = vunpack.c.h.b16 %v1051
    %v1301 = vunpack.c.l.b16 %v1052
    %v1302 = vunpack.c.h.b16 %v1052
    %v1303 = vunpack.c.l.b16 %v1053
    %v1304 = vunpack.c.h.b16 %v1053
    %v1305 = vunpack.c.l.b16 %v1054
    %v1306 = vunpack.c.h.b16 %v1054
    %v1307 = vunpack.c.l.b16 %v1055
    %v1308 = vunpack.c.h.b16 %v1055
    %v1309 = vunpack.c.l.b16 %v1056
    %v1310 = vunpack.c.h.b16 %v1056
    %v1311 = vunpack.c.l.b16 %v1057
    %v1312 = vunpack.c.h.b16 %v1057
    %v1313 = vunpack.c.l.b16 %v1058
    %v1314 = vunpack.c.h.b16 %v1058
    %v1315 = vunpack.c.l.b16 %v1059
    %v1316 = vunpack.c.h.b16 %v1059
    %v1317 = vunpack.c.l.b16 %v1060
    %v1318 = vunpack.c.h.b16 %v1060
    %v1319 = vunpack.c.l.b16 %v1061
    %v1320 = vunpack.c.h.b16 %v1061
    %v1321 = vunpack.c.l.b16 %v1062
    %v1322 = vunpack.c.h.b16 %v1062
    %v1323 = vunpack.c.l.b16 %v1063
    %v1324 = vunpack.c.h.b16 %v1063
    %v1325 = vunpack.c.l.b16 %v1064
    %v1326 = vunpack.c.h.b16 %v1064
    %v1327 = vunpack.c.l.b16 %v1065
    %v1328 = vunpack.c.h.b16 %v1065
    %v1329 = vunpack.c.l.b16 %v1066
    %v1330 = vunpack.c.h.b16 %v1066
    %v1331 = vunpack.c.l.b16 %v1067
    %v1332 = vunpack.c.h.b16 %v1067
    %v1333 = vunpack.c.l.b16 %v1068
    %v1334 = vunpack.c.h.b16 %v1068
    %v1335 = vunpack.c.l.b16 %v1069
    %v1336 = vunpack.c.h.b16 %v1069
    %v1337 = vunpack.c.l.b16 %v1070
    %v1338 = vunpack.c.h.b16 %v1070
    %v1339 = vunpack.c.l.b16 %v1071
    %v1340 = vunpack.c.h.b16 %v1071
    %v1341 = vunpack.c.l.b16 %v1072
    %v1342 = vunpack.c.h.b16 %v1072
    %v1343 = vunpack.c.l.b16 %v1073
    %v1344 = vunpack.c.h.b16 %v1073
    %v1345 = vunpack.c.l.b16 %v1074
    %v1346 = vunpack.c.h.b16 %v1074
    %v1347 = vunpack.c.l.b16 %v1075
    %v1348 = vunpack.c.h.b16 %v1075
    %v1349 = vunpack.c.l.b16 %v1076
    %v1350 = vunpack.c.h.b16 %v1076
    %v1351 = vunpack.c.l.b16 %v1077
    %v1352 = vunpack.c.h.b16 %v1077
    %v1353 = vunpack.c.l.b16 %v1078
    %v1354 = vunpack.c.h.b16 %v1078
    %v1355 = vunpack.c.l.b16 %v1079
    %v1356 = vunpack.c.h.b16 %v1079
    %v1357 = vunpack.c.l.b16 %v1080
    %v1358 = vunpack.c.h.b16 %v1080
    %v1359 = vunpack.c.l.b16 %v1081
    %v1360 = vunpack.c.h.b16 %v1081
    %v1361 = vunpack.c.l.b16 %v1082
    %v1362 = vunpack.c.h.b16 %v1082
    %v1363 = vunpack.c.l.b16 %v1083
    %v1364 = vunpack.c.h.b16 %v1083
    %v1365 = vunpack.c.l.b16 %v1084
    %v1366 = vunpack.c.h.b16 %v1084
    %v1367 = vunpack.c.l.b16 %v1085
    %v1368 = vunpack.c.h.b16 %v1085
    %v1369 = vunpack.c.l.b16 %v1086
    %v1370 = vunpack.c.h.b16 %v1086
    %v1371 = vunpack.c.l.b16 %v1087
    %v1372 = vunpack.c.h.b16 %v1087
    %v1373 = vunpack.c.l.b16 %v1088
    %v1374 = vunpack.c.h.b16 %v1088
    %v1375 = vunpack.c.l.b16 %v1089
    %v1376 = vunpack.c.h.b16 %v1089
    %v1377 = vunpack.c.l.b16 %v1090
    %v1378 = vunpack.c.h.b16 %v1090
    %v1379 = vpack.c.b16 %v1193, %v1187
    %v1380 = vpack.c.b16 %v1194, %v1188
    %v1381 = vpack.c.b16 %v1195, %v1189
    %v1382 = vpack.c.b16 %v1196, %v1190
    %v1383 = vpack.c.b16 %v1197, %v1191
    %v1384 = vpack.c.b16 %v1198, %v1192
    %v1385 = vpack.c.b16 %v1205, %v1199
    %v1386 = vpack.c.b16 %v1206, %v1200
    %v1387 = vpack.c.b16 %v1207, %v1201
    %v1388 = vpack.c.b16 %v1208, %v1202
    %v1389 = vpack.c.b16 %v1209, %v1203
    %v1390 = vpack.c.b16 %v1210, %v1204
    %v1391 = vpack.c.b16 %v1217, %v1211
    %v1392 = vpack.c.b16 %v1218, %v1212
    %v1393 = vpack.c.b16 %v1219, %v1213
    %v1394 = vpack.c.b16 %v1220, %v1214
    %v1395 = vpack.c.b16 %v1221, %v1215
    %v1396 = vpack.c.b16 %v1222, %v1216
    %v1397 = vpack.c.b16 %v1229, %v1223
    %v1398 = vpack.c.b16 %v1230, %v1224
    %v1399 = vpack.c.b16 %v1231, %v1225
    %v1400 = vpack.c.b16 %v1232, %v1226
    %v1401 = vpack.c.b16 %v1233, %v1227
    %v1402 = vpack.c.b16 %v1234, %v1228
    %v1403 = vpack.c.b16 %v1241, %v1235
    %v1404 = vpack.c.b16 %v1242, %v1236
    %v1405 = vpack.c.b16 %v1243, %v1237
    %v1406 = vpack.c.b16 %v1244, %v1238
    %v1407 = vpack.c.b16 %v1245, %v1239
    %v1408 = vpack.c.b16 %v1246, %v1240
    %v1409 = vpack.c.b16 %v1253, %v1247
    %v1410 = vpack.c.b16 %v1254, %v1248
    %v1411 = vpack.c.b16 %v1255, %v1249
    %v1412 = vpack.c.b16 %v1256, %v1250
    %v1413 = vpack.c.b16 %v1257, %v1251
    %v1414 = vpack.c.b16 %v1258, %v1252
    %v1415 = vpack.c.b16 %v1265, %v1259
    %v1416 = vpack.c.b16 %v1266, %v1260
    %v1417 = vpack.c.b16 %v1267, %v1261
    %v1418 = vpack.c.b16 %v1268, %v1262
    %v1419 = vpack.c.b16 %v1269, %v1263
    %v1420 = vpack.c.b16 %v1270, %v1264
    %v1421 = vpack.c.b16 %v1277, %v1271
    %v1422 = vpack.c.b16 %v1278, %v1272
    %v1423 = vpack.c.b16 %v1279, %v1273
    %v1424 = vpack.c.b16 %v1280, %v1274
    %v1425 = vpack.c.b16 %v1281, %v1275
    %v1426 = vpack.c.b16 %v1282, %v1276
    %v1427 = vpack.c.b16 %v1289, %v1283
    %v1428 = vpack.c.b16 %v1290, %v1284
    %v1429 = vpack.c.b16 %v1291, %v1285
    %v1430 = vpack.c.b16 %v1292, %v1286
    %v1431 = vpack.c.b16 %v1293, %v1287
    %v1432 = vpack.c.b16 %v1294, %v1288
    %v1433 = vpack.c.b16 %v1301, %v1295
    %v1434 = vpack.c.b16 %v1302, %v1296
    %v1435 = vpack.c.b16 %v1303, %v1297
    %v1436 = vpack.c.b16 %v1304, %v1298
    %v1437 = vpack.c.b16 %v1305, %v1299
    %v1438 = vpack.c.b16 %v1306, %v1300
    %v1439 = vpack.c.b16 %v1313, %v1307
    %v1440 = vpack.c.b16 %v1314, %v1308
    %v1441 = vpack.c.b16 %v1315, %v1309
    %v1442 = vpack.c.b16 %v1316, %v1310
    %v1443 = vpack.c.b16 %v1317, %v1311
    %v1444 = vpack.c.b16 %v1318, %v1312
    %v1445 = vpack.c.b16 %v1325, %v1319
    %v1446 = vpack.c.b16 %v1326, %v1320
    %v1447 = vpack.c.b16 %v1327, %v1321
    %v1448 = vpack.c.b16 %v1328, %v1322
    %v1449 = vpack.c.b16 %v1329, %v1323
    %v1450 = vpack.c.b16 %v1330, %v1324
    %v1451 = vpack.c.b16 %v1337, %v1331
    %v1452 = vpack.c.b16 %v1338, %v1332
    %v1453 = vpack.c.b16 %v1339, %v1333
    %v1454 = vpack.c.b16 %v1340, %v1334
    %v1455 = vpack.c.b16 %v1341, %v1335
    %v1456 = vpack.c.b16 %v1342, %v1336
    %v1457 = vpack.c.b16 %v1349, %v1343
    %v1458 = vpack.c.b16 %v1350, %v1344
    %v1459 = vpack.c.b16 %v1351, %v1345
    %v1460 = vpack.c.b16 %v1352, %v1346
    %v1461 = vpack.c.b16 %v1353, %v1347
    %v1462 = vpack.c.b16 %v1354, %v1348
    %v1463 = vpack.c.b16 %v1361, %v1355
    %v1464 = vpack.c.b16 %v1362, %v1356
    %v1465 = vpack.c.b16 %v1363, %v1357
    %v1466 = vpack.c.b16 %v1364, %v1358
    %v1467 = vpack.c.b16 %v1365, %v1359
    %v1468 = vpack.c.b16 %v1366, %v1360
    %v1469 = vpack.c.b16 %v1373, %v1367
    %v1470 = vpack.c.b16 %v1374, %v1368
    %v1471 = vpack.c.b16 %v1375, %v1369
    %v1472 = vpack.c.b16 %v1376, %v1370
    %v1473 = vpack.c.b16 %v1377, %v1371
    %v1474 = vpack.c.b16 %v1378, %v1372
    %1571 = vmatpush.bf16.msra.mxu0 %v1421
    %1572 = vmatpush.bf16.msra.mxu0 %v1415
    %1573 = vmatpush.bf16.msra.mxu0 %v1409
    %1574 = vmatpush.bf16.msra.mxu0 %v1403
    %1575 = vmatpush.bf16.msra.mxu0 %v1397
    %1576 = vmatpush.bf16.msra.mxu0 %v1391
    %1577 = vmatpush.bf16.msra.mxu0 %v1385
    %1578 = vmatpush.bf16.msra.mxu0 %v1379
    %1579 = vmatmul.bf16.gmra.mxu0 %v987
    %v1580 = vpop.f32.mrf.mxu0
    %v1581 = vadd.f32 0.0, %v1580
    %v1582 = vpop.f32.mrf.mxu0
    %v1583 = vadd.f32 0.0, %v1582
    %1584 = vdwg.mxu0
    %1585 = vmatpush.bf16.msra.mxu0 %v1469
    %1586 = vmatpush.bf16.msra.mxu0 %v1463
    %1587 = vmatpush.bf16.msra.mxu0 %v1457
    %1588 = vmatpush.bf16.msra.mxu0 %v1451
    %1589 = vmatpush.bf16.msra.mxu0 %v1445
    %1590 = vmatpush.bf16.msra.mxu0 %v1439
    %1591 = vmatpush.bf16.msra.mxu0 %v1433
    %1592 = vmatpush.bf16.msra.mxu0 %v1427
    %1593 = vmatmul.bf16.gmra.mxu0 %v993
    %v1594 = vpop.f32.mrf.mxu0
    %v1595 = vadd.f32 %v1581, %v1594
    %v1596 = vpop.f32.mrf.mxu0
    %v1597 = vadd.f32 %v1583, %v1596
    %1598 = vdwg.mxu0
    %1599 = vmatpush.bf16.msra.mxu0 %v1422
    %1600 = vmatpush.bf16.msra.mxu0 %v1416
    %1601 = vmatpush.bf16.msra.mxu0 %v1410
    %1602 = vmatpush.bf16.msra.mxu0 %v1404
    %1603 = vmatpush.bf16.msra.mxu0 %v1398
    %1604 = vmatpush.bf16.msra.mxu0 %v1392
    %1605 = vmatpush.bf16.msra.mxu0 %v1386
    %1606 = vmatpush.bf16.msra.mxu0 %v1380
    %1607 = vmatmul.bf16.gmra.mxu0 %v987
    %v1608 = vpop.f32.mrf.mxu0
    %v1609 = vadd.f32 0.0, %v1608
    %v1610 = vpop.f32.mrf.mxu0
    %v1611 = vadd.f32 0.0, %v1610
    %1612 = vdwg.mxu0
    %1613 = vmatpush.bf16.msra.mxu0 %v1470
    %1614 = vmatpush.bf16.msra.mxu0 %v1464
    %1615 = vmatpush.bf16.msra.mxu0 %v1458
    %1616 = vmatpush.bf16.msra.mxu0 %v1452
    %1617 = vmatpush.bf16.msra.mxu0 %v1446
    %1618 = vmatpush.bf16.msra.mxu0 %v1440
    %1619 = vmatpush.bf16.msra.mxu0 %v1434
    %1620 = vmatpush.bf16.msra.mxu0 %v1428
    %1621 = vmatmul.bf16.gmra.mxu0 %v993
    %v1622 = vpop.f32.mrf.mxu0
    %v1623 = vadd.f32 %v1609, %v1622
    %v1624 = vpop.f32.mrf.mxu0
    %v1625 = vadd.f32 %v1611, %v1624
    %1626 = vdwg.mxu0
    %1627 = vmatpush.bf16.msra.mxu0 %v1423
    %1628 = vmatpush.bf16.msra.mxu0 %v1417
    %1629 = vmatpush.bf16.msra.mxu0 %v1411
    %1630 = vmatpush.bf16.msra.mxu0 %v1405
    %1631 = vmatpush.bf16.msra.mxu0 %v1399
    %1632 = vmatpush.bf16.msra.mxu0 %v1393
    %1633 = vmatpush.bf16.msra.mxu0 %v1387
    %1634 = vmatpush.bf16.msra.mxu0 %v1381
    %1635 = vmatmul.bf16.gmra.mxu0 %v987
    %v1636 = vpop.f32.mrf.mxu0
    %v1637 = vadd.f32 0.0, %v1636
    %v1638 = vpop.f32.mrf.mxu0
    %v1639 = vadd.f32 0.0, %v1638
    %1640 = vdwg.mxu0
    %1641 = vmatpush.bf16.msra.mxu0 %v1471
    %1642 = vmatpush.bf16.msra.mxu0 %v1465
    %1643 = vmatpush.bf16.msra.mxu0 %v1459
    %1644 = vmatpush.bf16.msra.mxu0 %v1453
    %1645 = vmatpush.bf16.msra.mxu0 %v1447
    %1646 = vmatpush.bf16.msra.mxu0 %v1441
    %1647 = vmatpush.bf16.msra.mxu0 %v1435
    %1648 = vmatpush.bf16.msra.mxu0 %v1429
    %1649 = vmatmul.bf16.gmra.mxu0 %v993
    %v1650 = vpop.f32.mrf.mxu0
    %v1651 = vadd.f32 %v1637, %v1650
    %v1652 = vpop.f32.mrf.mxu0
    %v1653 = vadd.f32 %v1639, %v1652
    %1654 = vdwg.mxu0
    %1655 = vmatpush.bf16.msra.mxu0 %v1424
    %1656 = vmatpush.bf16.msra.mxu0 %v1418
    %1657 = vmatpush.bf16.msra.mxu0 %v1412
    %1658 = vmatpush.bf16.msra.mxu0 %v1406
    %1659 = vmatpush.bf16.msra.mxu0 %v1400
    %1660 = vmatpush.bf16.msra.mxu0 %v1394
    %1661 = vmatpush.bf16.msra.mxu0 %v1388
    %1662 = vmatpush.bf16.msra.mxu0 %v1382
    %1663 = vmatmul.bf16.gmra.mxu0 %v987
    %v1664 = vpop.f32.mrf.mxu0
    %v1665 = vadd.f32 0.0, %v1664
    %v1666 = vpop.f32.mrf.mxu0
    %v1667 = vadd.f32 0.0, %v1666
    %1668 = vdwg.mxu0
    %1669 = vmatpush.bf16.msra.mxu0 %v1472
    %1670 = vmatpush.bf16.msra.mxu0 %v1466
    %1671 = vmatpush.bf16.msra.mxu0 %v1460
    %1672 = vmatpush.bf16.msra.mxu0 %v1454
    %1673 = vmatpush.bf16.msra.mxu0 %v1448
    %1674 = vmatpush.bf16.msra.mxu0 %v1442
    %1675 = vmatpush.bf16.msra.mxu0 %v1436
    %1676 = vmatpush.bf16.msra.mxu0 %v1430
    %1677 = vmatmul.bf16.gmra.mxu0 %v993
    %v1678 = vpop.f32.mrf.mxu0
    %v1679 = vadd.f32 %v1665, %v1678
    %v1680 = vpop.f32.mrf.mxu0
    %v1681 = vadd.f32 %v1667, %v1680
    %1682 = vdwg.mxu0
    %1683 = vmatpush.bf16.msra.mxu0 %v1425
    %1684 = vmatpush.bf16.msra.mxu0 %v1419
    %1685 = vmatpush.bf16.msra.mxu0 %v1413
    %1686 = vmatpush.bf16.msra.mxu0 %v1407
    %1687 = vmatpush.bf16.msra.mxu0 %v1401
    %1688 = vmatpush.bf16.msra.mxu0 %v1395
    %1689 = vmatpush.bf16.msra.mxu0 %v1389
    %1690 = vmatpush.bf16.msra.mxu0 %v1383
    %1691 = vmatmul.bf16.gmra.mxu0 %v987
    %v1692 = vpop.f32.mrf.mxu0
    %v1693 = vadd.f32 0.0, %v1692
    %v1694 = vpop.f32.mrf.mxu0
    %v1695 = vadd.f32 0.0, %v1694
    %1696 = vdwg.mxu0
    %1697 = vmatpush.bf16.msra.mxu0 %v1473
    %1698 = vmatpush.bf16.msra.mxu0 %v1467
    %1699 = vmatpush.bf16.msra.mxu0 %v1461
    %1700 = vmatpush.bf16.msra.mxu0 %v1455
    %1701 = vmatpush.bf16.msra.mxu0 %v1449
    %1702 = vmatpush.bf16.msra.mxu0 %v1443
    %1703 = vmatpush.bf16.msra.mxu0 %v1437
    %1704 = vmatpush.bf16.msra.mxu0 %v1431
    %1705 = vmatmul.bf16.gmra.mxu0 %v993
    %v1706 = vpop.f32.mrf.mxu0
    %v1707 = vadd.f32 %v1693, %v1706
    %v1708 = vpop.f32.mrf.mxu0
    %v1709 = vadd.f32 %v1695, %v1708
    %1710 = vdwg.mxu0
    %1711 = vmatpush.bf16.msra.mxu0 %v1426
    %1712 = vmatpush.bf16.msra.mxu0 %v1420
    %1713 = vmatpush.bf16.msra.mxu0 %v1414
    %1714 = vmatpush.bf16.msra.mxu0 %v1408
    %1715 = vmatpush.bf16.msra.mxu0 %v1402
    %1716 = vmatpush.bf16.msra.mxu0 %v1396
    %1717 = vmatpush.bf16.msra.mxu0 %v1390
    %1718 = vmatpush.bf16.msra.mxu0 %v1384
    %1719 = vmatmul.bf16.gmra.mxu0 %v987
    %v1720 = vpop.f32.mrf.mxu0
    %v1721 = vadd.f32 0.0, %v1720
    %v1722 = vpop.f32.mrf.mxu0
    %v1723 = vadd.f32 0.0, %v1722
    %1724 = vdwg.mxu0
    %1725 = vmatpush.bf16.msra.mxu0 %v1474
    %1726 = vmatpush.bf16.msra.mxu0 %v1468
    %1727 = vmatpush.bf16.msra.mxu0 %v1462
    %1728 = vmatpush.bf16.msra.mxu0 %v1456
    %1729 = vmatpush.bf16.msra.mxu0 %v1450
    %1730 = vmatpush.bf16.msra.mxu0 %v1444
    %1731 = vmatpush.bf16.msra.mxu0 %v1438
    %1732 = vmatpush.bf16.msra.mxu0 %v1432
    %1733 = vmatmul.bf16.gmra.mxu0 %v993
    %v1734 = vpop.f32.mrf.mxu0
    %v1735 = vadd.f32 %v1721, %v1734
    %v1736 = vpop.f32.mrf.mxu0
    %v1737 = vadd.f32 %v1723, %v1736
    %1738 = vdwg.mxu0
    %v1739 = vld [vmem:[#allocation4] sm:$0xff]
    %v1740 = vld [vmem:[#allocation4 + $0x8] sm:$0xff]
    %v1741 = vld [vmem:[#allocation4 + $0x10] sm:$0xff]
    %v1742 = vld [vmem:[#allocation4 + $0x18] sm:$0xff]
    %v1743 = vld [vmem:[#allocation4 + $0x20] sm:$0xff]
    %v1744 = vld [vmem:[#allocation4 + $0x28] sm:$0xff]
    %v1745 = vadd.f32 %v1739, %v1595
    %v1746 = vadd.f32 %v1742, %v1597
    %v1747 = vxor.u32 %v1745, 2147483648
    %v1748 = vxor.u32 %v1746, 2147483648
    %v1749 = vmul.f32 %v1747, 1.442695
    %v1750 = vpow.pop %v1749
    %v1751 = vmul.f32 %v1748, 1.442695
    %v1752 = vpow.pop %v1751
    %v1753 = vadd.f32 %v1750, 1.0
    %v1754 = vadd.f32 %v1752, 1.0
    %v1755 = vrcp.pop %v1753
    %v1756 = vmul.f32 %v1753, %v1755
    %v1757 = vsub.f32 1.0, %v1756
    %v1758 = vmul.f32 %v1755, %v1757
    %v1759 = vadd.f32 %v1755, %v1758
    %vm1760 = vweird.f32 %v1753
    %vm1761 = vweird.f32 %v1755
    %vm1762 = vmor %vm1760, %vm1761
    %v1763 = vsel %vm1762, %v1755, %v1759
    %v1764 = vand.u32 2147483647, %v1753
    %vm1765 = vcmp.eq.f32.partialorder %v1764, 8.507059e+37
    %v1766 = vand.u32 %v1753, 2147483648
    %v1767 = vor.u32 1.1754944e-38, %v1766
    %v1768 = vsel %vm1765, %v1767, %v1763
    %v1769 = vmul.f32 1.0, %v1768
    %v1770 = vrcp.pop %v1754
    %v1771 = vmul.f32 %v1754, %v1770
    %v1772 = vsub.f32 1.0, %v1771
    %v1773 = vmul.f32 %v1770, %v1772
    %v1774 = vadd.f32 %v1770, %v1773
    %vm1775 = vweird.f32 %v1754
    %vm1776 = vweird.f32 %v1770
    %vm1777 = vmor %vm1775, %vm1776
    %v1778 = vsel %vm1777, %v1770, %v1774
    %v1779 = vand.u32 2147483647, %v1754
    %vm1780 = vcmp.eq.f32.partialorder %v1779, 8.507059e+37
    %v1781 = vand.u32 %v1754, 2147483648
    %v1782 = vor.u32 1.1754944e-38, %v1781
    %v1783 = vsel %vm1780, %v1782, %v1778
    %v1784 = vmul.f32 1.0, %v1783
    %v1785 = vadd.f32 %v1740, %v1623
    %v1786 = vadd.f32 %v1743, %v1625
    %v1787 = vxor.u32 %v1785, 2147483648
    %v1788 = vxor.u32 %v1786, 2147483648
    %v1789 = vmul.f32 %v1787, 1.442695
    %v1790 = vpow.pop %v1789
    %v1791 = vmul.f32 %v1788, 1.442695
    %v1792 = vpow.pop %v1791
    %v1793 = vadd.f32 %v1790, 1.0
    %v1794 = vadd.f32 %v1792, 1.0
    %v1795 = vrcp.pop %v1793
    %v1796 = vmul.f32 %v1793, %v1795
    %v1797 = vsub.f32 1.0, %v1796
    %v1798 = vmul.f32 %v1795, %v1797
    %v1799 = vadd.f32 %v1795, %v1798
    %vm1800 = vweird.f32 %v1793
    %vm1801 = vweird.f32 %v1795
    %vm1802 = vmor %vm1800, %vm1801
    %v1803 = vsel %vm1802, %v1795, %v1799
    %v1804 = vand.u32 2147483647, %v1793
    %vm1805 = vcmp.eq.f32.partialorder %v1804, 8.507059e+37
    %v1806 = vand.u32 %v1793, 2147483648
    %v1807 = vor.u32 1.1754944e-38, %v1806
    %v1808 = vsel %vm1805, %v1807, %v1803
    %v1809 = vmul.f32 1.0, %v1808
    %v1810 = vrcp.pop %v1794
    %v1811 = vmul.f32 %v1794, %v1810
    %v1812 = vsub.f32 1.0, %v1811
    %v1813 = vmul.f32 %v1810, %v1812
    %v1814 = vadd.f32 %v1810, %v1813
    %vm1815 = vweird.f32 %v1794
    %vm1816 = vweird.f32 %v1810
    %vm1817 = vmor %vm1815, %vm1816
    %v1818 = vsel %vm1817, %v1810, %v1814
    %v1819 = vand.u32 2147483647, %v1794
    %vm1820 = vcmp.eq.f32.partialorder %v1819, 8.507059e+37
    %v1821 = vand.u32 %v1794, 2147483648
    %v1822 = vor.u32 1.1754944e-38, %v1821
    %v1823 = vsel %vm1820, %v1822, %v1818
    %v1824 = vmul.f32 1.0, %v1823
    %v1825 = vadd.f32 %v1651, %v968
    %v1826 = vadd.f32 %v1653, %v968
    %v1827 = vmul.f32 %v1769, %v1825
    %v1828 = vmul.f32 %v1784, %v1826
    %v1829 = vadd.f32 %v1741, %v1827
    %v1830 = vadd.f32 %v1744, %v1828
    %v1831 = vtanh.pop %v1829
    %v1832 = vtanh.pop %v1830
    %v1833 = vsub.f32 1.0, %v1809
    %v1834 = vsub.f32 1.0, %v1824
    %v1835 = vmul.f32 %v1833, %v1831
    %v1836 = vmul.f32 %v1834, %v1832
    %v1837 = vmul.f32 %v1809, %v975
    %v1838 = vmul.f32 %v1824, %v976
    %v1839 = vadd.f32 %v1835, %v1837
    %v1840 = vadd.f32 %v1836, %v1838
    %v1841 = vld [vmem:[#allocation5 + $0x150] sm:$0xff]
    %v1842 = vld [vmem:[#allocation5 + $0x158] sm:$0xff]
    %v1843 = vld [vmem:[#allocation5 + $0x160] sm:$0xff]
    %v1844 = vld [vmem:[#allocation5 + $0x168] sm:$0xff]
    %v1845 = vld [vmem:[#allocation5 + $0x170] sm:$0xff]
    %v1846 = vld [vmem:[#allocation5 + $0x178] sm:$0xff]
    %v1847 = vadd.f32 %v1841, %v1679
    %v1848 = vadd.f32 %v1844, %v1681
    %v1849 = vxor.u32 %v1847, 2147483648
    %v1850 = vxor.u32 %v1848, 2147483648
    %v1851 = vmul.f32 %v1849, 1.442695
    %v1852 = vpow.pop %v1851
    %v1853 = vmul.f32 %v1850, 1.442695
    %v1854 = vpow.pop %v1853
    %v1855 = vadd.f32 %v1852, 1.0
    %v1856 = vadd.f32 %v1854, 1.0
    %v1857 = vrcp.pop %v1855
    %v1858 = vmul.f32 %v1855, %v1857
    %v1859 = vsub.f32 1.0, %v1858
    %v1860 = vmul.f32 %v1857, %v1859
    %v1861 = vadd.f32 %v1857, %v1860
    %vm1862 = vweird.f32 %v1855
    %vm1863 = vweird.f32 %v1857
    %vm1864 = vmor %vm1862, %vm1863
    %v1865 = vsel %vm1864, %v1857, %v1861
    %v1866 = vand.u32 2147483647, %v1855
    %vm1867 = vcmp.eq.f32.partialorder %v1866, 8.507059e+37
    %v1868 = vand.u32 %v1855, 2147483648
    %v1869 = vor.u32 1.1754944e-38, %v1868
    %v1870 = vsel %vm1867, %v1869, %v1865
    %v1871 = vmul.f32 1.0, %v1870
    %v1872 = vrcp.pop %v1856
    %v1873 = vmul.f32 %v1856, %v1872
    %v1874 = vsub.f32 1.0, %v1873
    %v1875 = vmul.f32 %v1872, %v1874
    %v1876 = vadd.f32 %v1872, %v1875
    %vm1877 = vweird.f32 %v1856
    %vm1878 = vweird.f32 %v1872
    %vm1879 = vmor %vm1877, %vm1878
    %v1880 = vsel %vm1879, %v1872, %v1876
    %v1881 = vand.u32 2147483647, %v1856
    %vm1882 = vcmp.eq.f32.partialorder %v1881, 8.507059e+37
    %v1883 = vand.u32 %v1856, 2147483648
    %v1884 = vor.u32 1.1754944e-38, %v1883
    %v1885 = vsel %vm1882, %v1884, %v1880
    %v1886 = vmul.f32 1.0, %v1885
    %v1887 = vadd.f32 %v1842, %v1707
    %v1888 = vadd.f32 %v1845, %v1709
    %v1889 = vxor.u32 %v1887, 2147483648
    %v1890 = vxor.u32 %v1888, 2147483648
    %v1891 = vmul.f32 %v1889, 1.442695
    %v1892 = vpow.pop %v1891
    %v1893 = vmul.f32 %v1890, 1.442695
    %v1894 = vpow.pop %v1893
    %v1895 = vadd.f32 %v1892, 1.0
    %v1896 = vadd.f32 %v1894, 1.0
    %v1897 = vrcp.pop %v1895
    %v1898 = vmul.f32 %v1895, %v1897
    %v1899 = vsub.f32 1.0, %v1898
    %v1900 = vmul.f32 %v1897, %v1899
    %v1901 = vadd.f32 %v1897, %v1900
    %vm1902 = vweird.f32 %v1895
    %vm1903 = vweird.f32 %v1897
    %vm1904 = vmor %vm1902, %vm1903
    %v1905 = vsel %vm1904, %v1897, %v1901
    %v1906 = vand.u32 2147483647, %v1895
    %vm1907 = vcmp.eq.f32.partialorder %v1906, 8.507059e+37
    %v1908 = vand.u32 %v1895, 2147483648
    %v1909 = vor.u32 1.1754944e-38, %v1908
    %v1910 = vsel %vm1907, %v1909, %v1905
    %v1911 = vmul.f32 1.0, %v1910
    %v1912 = vrcp.pop %v1896
    %v1913 = vmul.f32 %v1896, %v1912
    %v1914 = vsub.f32 1.0, %v1913
    %v1915 = vmul.f32 %v1912, %v1914
    %v1916 = vadd.f32 %v1912, %v1915
    %vm1917 = vweird.f32 %v1896
    %vm1918 = vweird.f32 %v1912
    %vm1919 = vmor %vm1917, %vm1918
    %v1920 = vsel %vm1919, %v1912, %v1916
    %v1921 = vand.u32 2147483647, %v1896
    %vm1922 = vcmp.eq.f32.partialorder %v1921, 8.507059e+37
    %v1923 = vand.u32 %v1896, 2147483648
    %v1924 = vor.u32 1.1754944e-38, %v1923
    %v1925 = vsel %vm1922, %v1924, %v1920
    %v1926 = vmul.f32 1.0, %v1925
    %v1927 = vadd.f32 %v1735, %v973
    %v1928 = vadd.f32 %v1737, %v973
    %v1929 = vmul.f32 %v1871, %v1927
    %v1930 = vmul.f32 %v1886, %v1928
    %v1931 = vadd.f32 %v1843, %v1929
    %v1932 = vadd.f32 %v1846, %v1930
    %v1933 = vtanh.pop %v1931
    %v1934 = vtanh.pop %v1932
    %v1935 = vsub.f32 1.0, %v1911
    %v1936 = vsub.f32 1.0, %v1926
    %v1937 = vmul.f32 %v1935, %v1933
    %v1938 = vmul.f32 %v1936, %v1934
    %v1939 = vmul.f32 %v1911, %v977
    %v1940 = vmul.f32 %v1926, %v978
    %v1941 = vadd.f32 %v1937, %v1939
    %v1942 = vadd.f32 %v1938, %v1940
    %v1943 = vstv %s107
    %vm1944 = vcmp.lt.s32.totalorder %v1943, %v105
    %vm1945 = vcmp.lt.s32.totalorder %v1943, %v106
    %s1946 = sadd.s32 %s109, 7
    %v1947 = vstv %s1946
    %vm1948 = vcmp.lt.s32.totalorder %v1947, %v105
    %vm1949 = vcmp.lt.s32.totalorder %v1947, %v106
    %v1950 = vsel %vm1944, 1, 0
    %v1951 = vsel %vm1945, 1, 0
    %1952 = vset.pattern.permute.xlu0 0
    %1953 = vperm.xlu0 %1952, %v1950
    %v1954 = vpop.permute.xlu0 %1953
    %1955 = vset.pattern.permute.xlu0 0
    %1956 = vperm.xlu0 %1955, %v1951
    %v1957 = vpop.permute.xlu0 %1956
    %vm1958 = vcmp.eq.s32.totalorder %v1954, 1
    %vm1959 = vcmp.eq.s32.totalorder %v1957, 1
    %v1960 = vsel %vm1958, %v1839, %v975
    %v1961 = vsel %vm1959, %v1840, %v976
    %v1962 = vsel %vm1948, 1, 0
    %v1963 = vsel %vm1949, 1, 0
    %1964 = vset.pattern.permute.xlu0 0
    %1965 = vperm.xlu0 %1964, %v1962
    %v1966 = vpop.permute.xlu0 %1965
    %1967 = vset.pattern.permute.xlu0 0
    %1968 = vperm.xlu0 %1967, %v1963
    %v1969 = vpop.permute.xlu0 %1968
    %vm1970 = vcmp.eq.s32.totalorder %v1966, 1
    %vm1971 = vcmp.eq.s32.totalorder %v1969, 1
    %v1972 = vsel %vm1970, %v1941, %v977
    %v1973 = vsel %vm1971, %v1942, %v978
    %v1974 = vsel %vm1958, %v1839, 0.0
    %v1975 = vsel %vm1959, %v1840, 0.0
    %v1976 = vpack.c.bf16 %v1974, %v1974
    %v1977 = vpack.c.bf16 %v1975, %v1975
    %1978 = vst [vmem:[%s7] sm:$0xf] %v1976
    %1979 = vst [vmem:[%s7 + $0x4] sm:$0xf] %v1977
    %v1980 = vsel %vm1970, %v1941, 0.0
    %v1981 = vsel %vm1971, %v1942, 0.0
    %v1982 = vpack.c.bf16 %v1980, %v1980
    %v1983 = vpack.c.bf16 %v1981, %v1981
    %1984 = vst [vmem:[%s94 + $0x38] sm:$0xf] %v1982
    %1985 = vst [vmem:[%s94 + $0x3c] sm:$0xf] %v1983
    %v1986 = vpack.c.bf16 %v1960, %v1960
    %v1987 = vpack.c.bf16 %v1961, %v1961
    %v1988 = vpack.c.bf16 %v1972, %v1972
    %v1989 = vpack.c.bf16 %v1973, %v1973
    %v1992 = vunpack.c.l.b16 %v1986
    %v1993 = vunpack.c.l.b16 %v1987
    %v1994 = vpack.c.b16 %v1993, %v1992
    %v1998 = vunpack.c.l.b16 %v1988
    %v1999 = vunpack.c.l.b16 %v1989
    %v2000 = vpack.c.b16 %v1999, %v1998
    %v2002 = vld [vmem:[#allocation8] sm:$0xff]
    %v2003 = vld [vmem:[#allocation8 + $0x8] sm:$0xff]
    %v2004 = vld [vmem:[#allocation8 + $0x10] sm:$0xff]
    %v2005 = vld [vmem:[#allocation8 + $0x18] sm:$0xff]
    %v2006 = vld [vmem:[#allocation8 + $0x20] sm:$0xff]
    %v2007 = vld [vmem:[#allocation8 + $0x28] sm:$0xff]
    %v2008 = vld [vmem:[#allocation8 + $0x30] sm:$0xff]
    %v2009 = vld [vmem:[#allocation8 + $0x38] sm:$0xff]
    %v2010 = vld [vmem:[#allocation8 + $0x40] sm:$0xff]
    %v2011 = vld [vmem:[#allocation8 + $0x48] sm:$0xff]
    %v2012 = vld [vmem:[#allocation8 + $0x50] sm:$0xff]
    %v2013 = vld [vmem:[#allocation8 + $0x58] sm:$0xff]
    %v2014 = vld [vmem:[#allocation8 + $0x60] sm:$0xff]
    %v2015 = vld [vmem:[#allocation8 + $0x68] sm:$0xff]
    %v2016 = vld [vmem:[#allocation8 + $0x70] sm:$0xff]
    %v2017 = vld [vmem:[#allocation8 + $0x78] sm:$0xff]
    %v2018 = vld [vmem:[#allocation8 + $0x80] sm:$0xff]
    %v2019 = vld [vmem:[#allocation8 + $0x88] sm:$0xff]
    %v2020 = vld [vmem:[#allocation8 + $0x90] sm:$0xff]
    %v2021 = vld [vmem:[#allocation8 + $0x98] sm:$0xff]
    %v2022 = vld [vmem:[#allocation8 + $0xa0] sm:$0xff]
    %v2023 = vld [vmem:[#allocation8 + $0xa8] sm:$0xff]
    %v2024 = vld [vmem:[#allocation8 + $0xb0] sm:$0xff]
    %v2025 = vld [vmem:[#allocation8 + $0xb8] sm:$0xff]
    %v2026 = vld [vmem:[#allocation8 + $0xc0] sm:$0xff]
    %v2027 = vld [vmem:[#allocation8 + $0xc8] sm:$0xff]
    %v2028 = vld [vmem:[#allocation8 + $0xd0] sm:$0xff]
    %v2029 = vld [vmem:[#allocation8 + $0xd8] sm:$0xff]
    %v2030 = vld [vmem:[#allocation8 + $0xe0] sm:$0xff]
    %v2031 = vld [vmem:[#allocation8 + $0xe8] sm:$0xff]
    %v2032 = vld [vmem:[#allocation8 + $0xf0] sm:$0xff]
    %v2033 = vld [vmem:[#allocation8 + $0xf8] sm:$0xff]
    %v2034 = vld [vmem:[#allocation8 + $0x100] sm:$0xff]
    %v2035 = vld [vmem:[#allocation8 + $0x108] sm:$0xff]
    %v2036 = vld [vmem:[#allocation8 + $0x110] sm:$0xff]
    %v2037 = vld [vmem:[#allocation8 + $0x118] sm:$0xff]
    %v2038 = vld [vmem:[#allocation8 + $0x120] sm:$0xff]
    %v2039 = vld [vmem:[#allocation8 + $0x128] sm:$0xff]
    %v2040 = vld [vmem:[#allocation8 + $0x130] sm:$0xff]
    %v2041 = vld [vmem:[#allocation8 + $0x138] sm:$0xff]
    %v2042 = vld [vmem:[#allocation8 + $0x140] sm:$0xff]
    %v2043 = vld [vmem:[#allocation8 + $0x148] sm:$0xff]
    %v2044 = vld [vmem:[#allocation8 + $0x150] sm:$0xff]
    %v2045 = vld [vmem:[#allocation8 + $0x158] sm:$0xff]
    %v2046 = vld [vmem:[#allocation8 + $0x160] sm:$0xff]
    %v2047 = vld [vmem:[#allocation8 + $0x168] sm:$0xff]
    %v2048 = vld [vmem:[#allocation8 + $0x170] sm:$0xff]
    %v2049 = vld [vmem:[#allocation8 + $0x178] sm:$0xff]
    %v2050 = vld [vmem:[#allocation8 + $0x180] sm:$0xff]
    %v2051 = vld [vmem:[#allocation8 + $0x188] sm:$0xff]
    %v2052 = vld [vmem:[#allocation8 + $0x190] sm:$0xff]
    %v2053 = vld [vmem:[#allocation8 + $0x198] sm:$0xff]
    %v2054 = vld [vmem:[#allocation8 + $0x1a0] sm:$0xff]
    %v2055 = vld [vmem:[#allocation8 + $0x1a8] sm:$0xff]
    %v2056 = vld [vmem:[#allocation8 + $0x1b0] sm:$0xff]
    %v2057 = vld [vmem:[#allocation8 + $0x1b8] sm:$0xff]
    %v2058 = vld [vmem:[#allocation8 + $0x1c0] sm:$0xff]
    %v2059 = vld [vmem:[#allocation8 + $0x1c8] sm:$0xff]
    %v2060 = vld [vmem:[#allocation8 + $0x1d0] sm:$0xff]
    %v2061 = vld [vmem:[#allocation8 + $0x1d8] sm:$0xff]
    %v2062 = vld [vmem:[#allocation8 + $0x1e0] sm:$0xff]
    %v2063 = vld [vmem:[#allocation8 + $0x1e8] sm:$0xff]
    %v2064 = vld [vmem:[#allocation8 + $0x1f0] sm:$0xff]
    %v2065 = vld [vmem:[#allocation8 + $0x1f8] sm:$0xff]
    %v2066 = vld [vmem:[#allocation8 + $0x200] sm:$0xff]
    %v2067 = vld [vmem:[#allocation8 + $0x208] sm:$0xff]
    %v2068 = vld [vmem:[#allocation8 + $0x210] sm:$0xff]
    %v2069 = vld [vmem:[#allocation8 + $0x218] sm:$0xff]
    %v2070 = vld [vmem:[#allocation8 + $0x220] sm:$0xff]
    %v2071 = vld [vmem:[#allocation8 + $0x228] sm:$0xff]
    %v2072 = vld [vmem:[#allocation8 + $0x230] sm:$0xff]
    %v2073 = vld [vmem:[#allocation8 + $0x238] sm:$0xff]
    %v2074 = vld [vmem:[#allocation8 + $0x240] sm:$0xff]
    %v2075 = vld [vmem:[#allocation8 + $0x248] sm:$0xff]
    %v2076 = vld [vmem:[#allocation8 + $0x250] sm:$0xff]
    %v2077 = vld [vmem:[#allocation8 + $0x258] sm:$0xff]
    %v2078 = vld [vmem:[#allocation8 + $0x260] sm:$0xff]
    %v2079 = vld [vmem:[#allocation8 + $0x268] sm:$0xff]
    %v2080 = vld [vmem:[#allocation8 + $0x270] sm:$0xff]
    %v2081 = vld [vmem:[#allocation8 + $0x278] sm:$0xff]
    %v2082 = vld [vmem:[#allocation8 + $0x280] sm:$0xff]
    %v2083 = vld [vmem:[#allocation8 + $0x288] sm:$0xff]
    %v2084 = vld [vmem:[#allocation8 + $0x290] sm:$0xff]
    %v2085 = vld [vmem:[#allocation8 + $0x298] sm:$0xff]
    %v2086 = vld [vmem:[#allocation8 + $0x2a0] sm:$0xff]
    %v2087 = vld [vmem:[#allocation8 + $0x2a8] sm:$0xff]
    %v2088 = vld [vmem:[#allocation8 + $0x2b0] sm:$0xff]
    %v2089 = vld [vmem:[#allocation8 + $0x2b8] sm:$0xff]
    %v2090 = vld [vmem:[#allocation8 + $0x2c0] sm:$0xff]
    %v2091 = vld [vmem:[#allocation8 + $0x2c8] sm:$0xff]
    %v2092 = vld [vmem:[#allocation8 + $0x2d0] sm:$0xff]
    %v2093 = vld [vmem:[#allocation8 + $0x2d8] sm:$0xff]
    %v2094 = vld [vmem:[#allocation8 + $0x2e0] sm:$0xff]
    %v2095 = vld [vmem:[#allocation8 + $0x2e8] sm:$0xff]
    %v2096 = vld [vmem:[#allocation8 + $0x2f0] sm:$0xff]
    %v2097 = vld [vmem:[#allocation8 + $0x2f8] sm:$0xff]
    %v2194 = vunpack.c.l.b16 %v2002
    %v2195 = vunpack.c.h.b16 %v2002
    %v2196 = vunpack.c.l.b16 %v2003
    %v2197 = vunpack.c.h.b16 %v2003
    %v2198 = vunpack.c.l.b16 %v2004
    %v2199 = vunpack.c.h.b16 %v2004
    %v2200 = vunpack.c.l.b16 %v2005
    %v2201 = vunpack.c.h.b16 %v2005
    %v2202 = vunpack.c.l.b16 %v2006
    %v2203 = vunpack.c.h.b16 %v2006
    %v2204 = vunpack.c.l.b16 %v2007
    %v2205 = vunpack.c.h.b16 %v2007
    %v2206 = vunpack.c.l.b16 %v2008
    %v2207 = vunpack.c.h.b16 %v2008
    %v2208 = vunpack.c.l.b16 %v2009
    %v2209 = vunpack.c.h.b16 %v2009
    %v2210 = vunpack.c.l.b16 %v2010
    %v2211 = vunpack.c.h.b16 %v2010
    %v2212 = vunpack.c.l.b16 %v2011
    %v2213 = vunpack.c.h.b16 %v2011
    %v2214 = vunpack.c.l.b16 %v2012
    %v2215 = vunpack.c.h.b16 %v2012
    %v2216 = vunpack.c.l.b16 %v2013
    %v2217 = vunpack.c.h.b16 %v2013
    %v2218 = vunpack.c.l.b16 %v2014
    %v2219 = vunpack.c.h.b16 %v2014
    %v2220 = vunpack.c.l.b16 %v2015
    %v2221 = vunpack.c.h.b16 %v2015
    %v2222 = vunpack.c.l.b16 %v2016
    %v2223 = vunpack.c.h.b16 %v2016
    %v2224 = vunpack.c.l.b16 %v2017
    %v2225 = vunpack.c.h.b16 %v2017
    %v2226 = vunpack.c.l.b16 %v2018
    %v2227 = vunpack.c.h.b16 %v2018
    %v2228 = vunpack.c.l.b16 %v2019
    %v2229 = vunpack.c.h.b16 %v2019
    %v2230 = vunpack.c.l.b16 %v2020
    %v2231 = vunpack.c.h.b16 %v2020
    %v2232 = vunpack.c.l.b16 %v2021
    %v2233 = vunpack.c.h.b16 %v2021
    %v2234 = vunpack.c.l.b16 %v2022
    %v2235 = vunpack.c.h.b16 %v2022
    %v2236 = vunpack.c.l.b16 %v2023
    %v2237 = vunpack.c.h.b16 %v2023
    %v2238 = vunpack.c.l.b16 %v2024
    %v2239 = vunpack.c.h.b16 %v2024
    %v2240 = vunpack.c.l.b16 %v2025
    %v2241 = vunpack.c.h.b16 %v2025
    %v2242 = vunpack.c.l.b16 %v2026
    %v2243 = vunpack.c.h.b16 %v2026
    %v2244 = vunpack.c.l.b16 %v2027
    %v2245 = vunpack.c.h.b16 %v2027
    %v2246 = vunpack.c.l.b16 %v2028
    %v2247 = vunpack.c.h.b16 %v2028
    %v2248 = vunpack.c.l.b16 %v2029
    %v2249 = vunpack.c.h.b16 %v2029
    %v2250 = vunpack.c.l.b16 %v2030
    %v2251 = vunpack.c.h.b16 %v2030
    %v2252 = vunpack.c.l.b16 %v2031
    %v2253 = vunpack.c.h.b16 %v2031
    %v2254 = vunpack.c.l.b16 %v2032
    %v2255 = vunpack.c.h.b16 %v2032
    %v2256 = vunpack.c.l.b16 %v2033
    %v2257 = vunpack.c.h.b16 %v2033
    %v2258 = vunpack.c.l.b16 %v2034
    %v2259 = vunpack.c.h.b16 %v2034
    %v2260 = vunpack.c.l.b16 %v2035
    %v2261 = vunpack.c.h.b16 %v2035
    %v2262 = vunpack.c.l.b16 %v2036
    %v2263 = vunpack.c.h.b16 %v2036
    %v2264 = vunpack.c.l.b16 %v2037
    %v2265 = vunpack.c.h.b16 %v2037
    %v2266 = vunpack.c.l.b16 %v2038
    %v2267 = vunpack.c.h.b16 %v2038
    %v2268 = vunpack.c.l.b16 %v2039
    %v2269 = vunpack.c.h.b16 %v2039
    %v2270 = vunpack.c.l.b16 %v2040
    %v2271 = vunpack.c.h.b16 %v2040
    %v2272 = vunpack.c.l.b16 %v2041
    %v2273 = vunpack.c.h.b16 %v2041
    %v2274 = vunpack.c.l.b16 %v2042
    %v2275 = vunpack.c.h.b16 %v2042
    %v2276 = vunpack.c.l.b16 %v2043
    %v2277 = vunpack.c.h.b16 %v2043
    %v2278 = vunpack.c.l.b16 %v2044
    %v2279 = vunpack.c.h.b16 %v2044
    %v2280 = vunpack.c.l.b16 %v2045
    %v2281 = vunpack.c.h.b16 %v2045
    %v2282 = vunpack.c.l.b16 %v2046
    %v2283 = vunpack.c.h.b16 %v2046
    %v2284 = vunpack.c.l.b16 %v2047
    %v2285 = vunpack.c.h.b16 %v2047
    %v2286 = vunpack.c.l.b16 %v2048
    %v2287 = vunpack.c.h.b16 %v2048
    %v2288 = vunpack.c.l.b16 %v2049
    %v2289 = vunpack.c.h.b16 %v2049
    %v2290 = vunpack.c.l.b16 %v2050
    %v2291 = vunpack.c.h.b16 %v2050
    %v2292 = vunpack.c.l.b16 %v2051
    %v2293 = vunpack.c.h.b16 %v2051
    %v2294 = vunpack.c.l.b16 %v2052
    %v2295 = vunpack.c.h.b16 %v2052
    %v2296 = vunpack.c.l.b16 %v2053
    %v2297 = vunpack.c.h.b16 %v2053
    %v2298 = vunpack.c.l.b16 %v2054
    %v2299 = vunpack.c.h.b16 %v2054
    %v2300 = vunpack.c.l.b16 %v2055
    %v2301 = vunpack.c.h.b16 %v2055
    %v2302 = vunpack.c.l.b16 %v2056
    %v2303 = vunpack.c.h.b16 %v2056
    %v2304 = vunpack.c.l.b16 %v2057
    %v2305 = vunpack.c.h.b16 %v2057
    %v2306 = vunpack.c.l.b16 %v2058
    %v2307 = vunpack.c.h.b16 %v2058
    %v2308 = vunpack.c.l.b16 %v2059
    %v2309 = vunpack.c.h.b16 %v2059
    %v2310 = vunpack.c.l.b16 %v2060
    %v2311 = vunpack.c.h.b16 %v2060
    %v2312 = vunpack.c.l.b16 %v2061
    %v2313 = vunpack.c.h.b16 %v2061
    %v2314 = vunpack.c.l.b16 %v2062
    %v2315 = vunpack.c.h.b16 %v2062
    %v2316 = vunpack.c.l.b16 %v2063
    %v2317 = vunpack.c.h.b16 %v2063
    %v2318 = vunpack.c.l.b16 %v2064
    %v2319 = vunpack.c.h.b16 %v2064
    %v2320 = vunpack.c.l.b16 %v2065
    %v2321 = vunpack.c.h.b16 %v2065
    %v2322 = vunpack.c.l.b16 %v2066
    %v2323 = vunpack.c.h.b16 %v2066
    %v2324 = vunpack.c.l.b16 %v2067
    %v2325 = vunpack.c.h.b16 %v2067
    %v2326 = vunpack.c.l.b16 %v2068
    %v2327 = vunpack.c.h.b16 %v2068
    %v2328 = vunpack.c.l.b16 %v2069
    %v2329 = vunpack.c.h.b16 %v2069
    %v2330 = vunpack.c.l.b16 %v2070
    %v2331 = vunpack.c.h.b16 %v2070
    %v2332 = vunpack.c.l.b16 %v2071
    %v2333 = vunpack.c.h.b16 %v2071
    %v2334 = vunpack.c.l.b16 %v2072
    %v2335 = vunpack.c.h.b16 %v2072
    %v2336 = vunpack.c.l.b16 %v2073
    %v2337 = vunpack.c.h.b16 %v2073
    %v2338 = vunpack.c.l.b16 %v2074
    %v2339 = vunpack.c.h.b16 %v2074
    %v2340 = vunpack.c.l.b16 %v2075
    %v2341 = vunpack.c.h.b16 %v2075
    %v2342 = vunpack.c.l.b16 %v2076
    %v2343 = vunpack.c.h.b16 %v2076
    %v2344 = vunpack.c.l.b16 %v2077
    %v2345 = vunpack.c.h.b16 %v2077
    %v2346 = vunpack.c.l.b16 %v2078
    %v2347 = vunpack.c.h.b16 %v2078
    %v2348 = vunpack.c.l.b16 %v2079
    %v2349 = vunpack.c.h.b16 %v2079
    %v2350 = vunpack.c.l.b16 %v2080
    %v2351 = vunpack.c.h.b16 %v2080
    %v2352 = vunpack.c.l.b16 %v2081
    %v2353 = vunpack.c.h.b16 %v2081
    %v2354 = vunpack.c.l.b16 %v2082
    %v2355 = vunpack.c.h.b16 %v2082
    %v2356 = vunpack.c.l.b16 %v2083
    %v2357 = vunpack.c.h.b16 %v2083
    %v2358 = vunpack.c.l.b16 %v2084
    %v2359 = vunpack.c.h.b16 %v2084
    %v2360 = vunpack.c.l.b16 %v2085
    %v2361 = vunpack.c.h.b16 %v2085
    %v2362 = vunpack.c.l.b16 %v2086
    %v2363 = vunpack.c.h.b16 %v2086
    %v2364 = vunpack.c.l.b16 %v2087
    %v2365 = vunpack.c.h.b16 %v2087
    %v2366 = vunpack.c.l.b16 %v2088
    %v2367 = vunpack.c.h.b16 %v2088
    %v2368 = vunpack.c.l.b16 %v2089
    %v2369 = vunpack.c.h.b16 %v2089
    %v2370 = vunpack.c.l.b16 %v2090
    %v2371 = vunpack.c.h.b16 %v2090
    %v2372 = vunpack.c.l.b16 %v2091
    %v2373 = vunpack.c.h.b16 %v2091
    %v2374 = vunpack.c.l.b16 %v2092
    %v2375 = vunpack.c.h.b16 %v2092
    %v2376 = vunpack.c.l.b16 %v2093
    %v2377 = vunpack.c.h.b16 %v2093
    %v2378 = vunpack.c.l.b16 %v2094
    %v2379 = vunpack.c.h.b16 %v2094
    %v2380 = vunpack.c.l.b16 %v2095
    %v2381 = vunpack.c.h.b16 %v2095
    %v2382 = vunpack.c.l.b16 %v2096
    %v2383 = vunpack.c.h.b16 %v2096
    %v2384 = vunpack.c.l.b16 %v2097
    %v2385 = vunpack.c.h.b16 %v2097
    %v2386 = vpack.c.b16 %v2200, %v2194
    %v2387 = vpack.c.b16 %v2201, %v2195
    %v2388 = vpack.c.b16 %v2202, %v2196
    %v2389 = vpack.c.b16 %v2203, %v2197
    %v2390 = vpack.c.b16 %v2204, %v2198
    %v2391 = vpack.c.b16 %v2205, %v2199
    %v2392 = vpack.c.b16 %v2212, %v2206
    %v2393 = vpack.c.b16 %v2213, %v2207
    %v2394 = vpack.c.b16 %v2214, %v2208
    %v2395 = vpack.c.b16 %v2215, %v2209
    %v2396 = vpack.c.b16 %v2216, %v2210
    %v2397 = vpack.c.b16 %v2217, %v2211
    %v2398 = vpack.c.b16 %v2224, %v2218
    %v2399 = vpack.c.b16 %v2225, %v2219
    %v2400 = vpack.c.b16 %v2226, %v2220
    %v2401 = vpack.c.b16 %v2227, %v2221
    %v2402 = vpack.c.b16 %v2228, %v2222
    %v2403 = vpack.c.b16 %v2229, %v2223
    %v2404 = vpack.c.b16 %v2236, %v2230
    %v2405 = vpack.c.b16 %v2237, %v2231
    %v2406 = vpack.c.b16 %v2238, %v2232
    %v2407 = vpack.c.b16 %v2239, %v2233
    %v2408 = vpack.c.b16 %v2240, %v2234
    %v2409 = vpack.c.b16 %v2241, %v2235
    %v2410 = vpack.c.b16 %v2248, %v2242
    %v2411 = vpack.c.b16 %v2249, %v2243
    %v2412 = vpack.c.b16 %v2250, %v2244
    %v2413 = vpack.c.b16 %v2251, %v2245
    %v2414 = vpack.c.b16 %v2252, %v2246
    %v2415 = vpack.c.b16 %v2253, %v2247
    %v2416 = vpack.c.b16 %v2260, %v2254
    %v2417 = vpack.c.b16 %v2261, %v2255
    %v2418 = vpack.c.b16 %v2262, %v2256
    %v2419 = vpack.c.b16 %v2263, %v2257
    %v2420 = vpack.c.b16 %v2264, %v2258
    %v2421 = vpack.c.b16 %v2265, %v2259
    %v2422 = vpack.c.b16 %v2272, %v2266
    %v2423 = vpack.c.b16 %v2273, %v2267
    %v2424 = vpack.c.b16 %v2274, %v2268
    %v2425 = vpack.c.b16 %v2275, %v2269
    %v2426 = vpack.c.b16 %v2276, %v2270
    %v2427 = vpack.c.b16 %v2277, %v2271
    %v2428 = vpack.c.b16 %v2284, %v2278
    %v2429 = vpack.c.b16 %v2285, %v2279
    %v2430 = vpack.c.b16 %v2286, %v2280
    %v2431 = vpack.c.b16 %v2287, %v2281
    %v2432 = vpack.c.b16 %v2288, %v2282
    %v2433 = vpack.c.b16 %v2289, %v2283
    %v2434 = vpack.c.b16 %v2296, %v2290
    %v2435 = vpack.c.b16 %v2297, %v2291
    %v2436 = vpack.c.b16 %v2298, %v2292
    %v2437 = vpack.c.b16 %v2299, %v2293
    %v2438 = vpack.c.b16 %v2300, %v2294
    %v2439 = vpack.c.b16 %v2301, %v2295
    %v2440 = vpack.c.b16 %v2308, %v2302
    %v2441 = vpack.c.b16 %v2309, %v2303
    %v2442 = vpack.c.b16 %v2310, %v2304
    %v2443 = vpack.c.b16 %v2311, %v2305
    %v2444 = vpack.c.b16 %v2312, %v2306
    %v2445 = vpack.c.b16 %v2313, %v2307
    %v2446 = vpack.c.b16 %v2320, %v2314
    %v2447 = vpack.c.b16 %v2321, %v2315
    %v2448 = vpack.c.b16 %v2322, %v2316
    %v2449 = vpack.c.b16 %v2323, %v2317
    %v2450 = vpack.c.b16 %v2324, %v2318
    %v2451 = vpack.c.b16 %v2325, %v2319
    %v2452 = vpack.c.b16 %v2332, %v2326
    %v2453 = vpack.c.b16 %v2333, %v2327
    %v2454 = vpack.c.b16 %v2334, %v2328
    %v2455 = vpack.c.b16 %v2335, %v2329
    %v2456 = vpack.c.b16 %v2336, %v2330
    %v2457 = vpack.c.b16 %v2337, %v2331
    %v2458 = vpack.c.b16 %v2344, %v2338
    %v2459 = vpack.c.b16 %v2345, %v2339
    %v2460 = vpack.c.b16 %v2346, %v2340
    %v2461 = vpack.c.b16 %v2347, %v2341
    %v2462 = vpack.c.b16 %v2348, %v2342
    %v2463 = vpack.c.b16 %v2349, %v2343
    %v2464 = vpack.c.b16 %v2356, %v2350
    %v2465 = vpack.c.b16 %v2357, %v2351
    %v2466 = vpack.c.b16 %v2358, %v2352
    %v2467 = vpack.c.b16 %v2359, %v2353
    %v2468 = vpack.c.b16 %v2360, %v2354
    %v2469 = vpack.c.b16 %v2361, %v2355
    %v2470 = vpack.c.b16 %v2368, %v2362
    %v2471 = vpack.c.b16 %v2369, %v2363
    %v2472 = vpack.c.b16 %v2370, %v2364
    %v2473 = vpack.c.b16 %v2371, %v2365
    %v2474 = vpack.c.b16 %v2372, %v2366
    %v2475 = vpack.c.b16 %v2373, %v2367
    %v2476 = vpack.c.b16 %v2380, %v2374
    %v2477 = vpack.c.b16 %v2381, %v2375
    %v2478 = vpack.c.b16 %v2382, %v2376
    %v2479 = vpack.c.b16 %v2383, %v2377
    %v2480 = vpack.c.b16 %v2384, %v2378
    %v2481 = vpack.c.b16 %v2385, %v2379
    %2578 = vmatpush.bf16.msra.mxu0 %v2428
    %2579 = vmatpush.bf16.msra.mxu0 %v2422
    %2580 = vmatpush.bf16.msra.mxu0 %v2416
    %2581 = vmatpush.bf16.msra.mxu0 %v2410
    %2582 = vmatpush.bf16.msra.mxu0 %v2404
    %2583 = vmatpush.bf16.msra.mxu0 %v2398
    %2584 = vmatpush.bf16.msra.mxu0 %v2392
    %2585 = vmatpush.bf16.msra.mxu0 %v2386
    %2586 = vmatmul.bf16.gmra.mxu0 %v1994
    %v2587 = vpop.f32.mrf.mxu0
    %v2588 = vadd.f32 0.0, %v2587
    %v2589 = vpop.f32.mrf.mxu0
    %v2590 = vadd.f32 0.0, %v2589
    %2591 = vdwg.mxu0
    %2592 = vmatpush.bf16.msra.mxu0 %v2476
    %2593 = vmatpush.bf16.msra.mxu0 %v2470
    %2594 = vmatpush.bf16.msra.mxu0 %v2464
    %2595 = vmatpush.bf16.msra.mxu0 %v2458
    %2596 = vmatpush.bf16.msra.mxu0 %v2452
    %2597 = vmatpush.bf16.msra.mxu0 %v2446
    %2598 = vmatpush.bf16.msra.mxu0 %v2440
    %2599 = vmatpush.bf16.msra.mxu0 %v2434
    %2600 = vmatmul.bf16.gmra.mxu0 %v2000
    %v2601 = vpop.f32.mrf.mxu0
    %v2602 = vadd.f32 %v2588, %v2601
    %v2603 = vpop.f32.mrf.mxu0
    %v2604 = vadd.f32 %v2590, %v2603
    %2605 = vdwg.mxu0
    %2606 = vmatpush.bf16.msra.mxu0 %v2429
    %2607 = vmatpush.bf16.msra.mxu0 %v2423
    %2608 = vmatpush.bf16.msra.mxu0 %v2417
    %2609 = vmatpush.bf16.msra.mxu0 %v2411
    %2610 = vmatpush.bf16.msra.mxu0 %v2405
    %2611 = vmatpush.bf16.msra.mxu0 %v2399
    %2612 = vmatpush.bf16.msra.mxu0 %v2393
    %2613 = vmatpush.bf16.msra.mxu0 %v2387
    %2614 = vmatmul.bf16.gmra.mxu0 %v1994
    %v2615 = vpop.f32.mrf.mxu0
    %v2616 = vadd.f32 0.0, %v2615
    %v2617 = vpop.f32.mrf.mxu0
    %v2618 = vadd.f32 0.0, %v2617
    %2619 = vdwg.mxu0
    %2620 = vmatpush.bf16.msra.mxu0 %v2477
    %2621 = vmatpush.bf16.msra.mxu0 %v2471
    %2622 = vmatpush.bf16.msra.mxu0 %v2465
    %2623 = vmatpush.bf16.msra.mxu0 %v2459
    %2624 = vmatpush.bf16.msra.mxu0 %v2453
    %2625 = vmatpush.bf16.msra.mxu0 %v2447
    %2626 = vmatpush.bf16.msra.mxu0 %v2441
    %2627 = vmatpush.bf16.msra.mxu0 %v2435
    %2628 = vmatmul.bf16.gmra.mxu0 %v2000
    %v2629 = vpop.f32.mrf.mxu0
    %v2630 = vadd.f32 %v2616, %v2629
    %v2631 = vpop.f32.mrf.mxu0
    %v2632 = vadd.f32 %v2618, %v2631
    %2633 = vdwg.mxu0
    %2634 = vmatpush.bf16.msra.mxu0 %v2430
    %2635 = vmatpush.bf16.msra.mxu0 %v2424
    %2636 = vmatpush.bf16.msra.mxu0 %v2418
    %2637 = vmatpush.bf16.msra.mxu0 %v2412
    %2638 = vmatpush.bf16.msra.mxu0 %v2406
    %2639 = vmatpush.bf16.msra.mxu0 %v2400
    %2640 = vmatpush.bf16.msra.mxu0 %v2394
    %2641 = vmatpush.bf16.msra.mxu0 %v2388
    %2642 = vmatmul.bf16.gmra.mxu0 %v1994
    %v2643 = vpop.f32.mrf.mxu0
    %v2644 = vadd.f32 0.0, %v2643
    %v2645 = vpop.f32.mrf.mxu0
    %v2646 = vadd.f32 0.0, %v2645
    %2647 = vdwg.mxu0
    %2648 = vmatpush.bf16.msra.mxu0 %v2478
    %2649 = vmatpush.bf16.msra.mxu0 %v2472
    %2650 = vmatpush.bf16.msra.mxu0 %v2466
    %2651 = vmatpush.bf16.msra.mxu0 %v2460
    %2652 = vmatpush.bf16.msra.mxu0 %v2454
    %2653 = vmatpush.bf16.msra.mxu0 %v2448
    %2654 = vmatpush.bf16.msra.mxu0 %v2442
    %2655 = vmatpush.bf16.msra.mxu0 %v2436
    %2656 = vmatmul.bf16.gmra.mxu0 %v2000
    %v2657 = vpop.f32.mrf.mxu0
    %v2658 = vadd.f32 %v2644, %v2657
    %v2659 = vpop.f32.mrf.mxu0
    %v2660 = vadd.f32 %v2646, %v2659
    %2661 = vdwg.mxu0
    %2662 = vmatpush.bf16.msra.mxu0 %v2431
    %2663 = vmatpush.bf16.msra.mxu0 %v2425
    %2664 = vmatpush.bf16.msra.mxu0 %v2419
    %2665 = vmatpush.bf16.msra.mxu0 %v2413
    %2666 = vmatpush.bf16.msra.mxu0 %v2407
    %2667 = vmatpush.bf16.msra.mxu0 %v2401
    %2668 = vmatpush.bf16.msra.mxu0 %v2395
    %2669 = vmatpush.bf16.msra.mxu0 %v2389
    %2670 = vmatmul.bf16.gmra.mxu0 %v1994
    %v2671 = vpop.f32.mrf.mxu0
    %v2672 = vadd.f32 0.0, %v2671
    %v2673 = vpop.f32.mrf.mxu0
    %v2674 = vadd.f32 0.0, %v2673
    %2675 = vdwg.mxu0
    %2676 = vmatpush.bf16.msra.mxu0 %v2479
    %2677 = vmatpush.bf16.msra.mxu0 %v2473
    %2678 = vmatpush.bf16.msra.mxu0 %v2467
    %2679 = vmatpush.bf16.msra.mxu0 %v2461
    %2680 = vmatpush.bf16.msra.mxu0 %v2455
    %2681 = vmatpush.bf16.msra.mxu0 %v2449
    %2682 = vmatpush.bf16.msra.mxu0 %v2443
    %2683 = vmatpush.bf16.msra.mxu0 %v2437
    %2684 = vmatmul.bf16.gmra.mxu0 %v2000
    %v2685 = vpop.f32.mrf.mxu0
    %v2686 = vadd.f32 %v2672, %v2685
    %v2687 = vpop.f32.mrf.mxu0
    %v2688 = vadd.f32 %v2674, %v2687
    %2689 = vdwg.mxu0
    %2690 = vmatpush.bf16.msra.mxu0 %v2432
    %2691 = vmatpush.bf16.msra.mxu0 %v2426
    %2692 = vmatpush.bf16.msra.mxu0 %v2420
    %2693 = vmatpush.bf16.msra.mxu0 %v2414
    %2694 = vmatpush.bf16.msra.mxu0 %v2408
    %2695 = vmatpush.bf16.msra.mxu0 %v2402
    %2696 = vmatpush.bf16.msra.mxu0 %v2396
    %2697 = vmatpush.bf16.msra.mxu0 %v2390
    %2698 = vmatmul.bf16.gmra.mxu0 %v1994
    %v2699 = vpop.f32.mrf.mxu0
    %v2700 = vadd.f32 0.0, %v2699
    %v2701 = vpop.f32.mrf.mxu0
    %v2702 = vadd.f32 0.0, %v2701
    %2703 = vdwg.mxu0
    %2704 = vmatpush.bf16.msra.mxu0 %v2480
    %2705 = vmatpush.bf16.msra.mxu0 %v2474
    %2706 = vmatpush.bf16.msra.mxu0 %v2468
    %2707 = vmatpush.bf16.msra.mxu0 %v2462
    %2708 = vmatpush.bf16.msra.mxu0 %v2456
    %2709 = vmatpush.bf16.msra.mxu0 %v2450
    %2710 = vmatpush.bf16.msra.mxu0 %v2444
    %2711 = vmatpush.bf16.msra.mxu0 %v2438
    %2712 = vmatmul.bf16.gmra.mxu0 %v2000
    %v2713 = vpop.f32.mrf.mxu0
    %v2714 = vadd.f32 %v2700, %v2713
    %v2715 = vpop.f32.mrf.mxu0
    %v2716 = vadd.f32 %v2702, %v2715
    %2717 = vdwg.mxu0
    %2718 = vmatpush.bf16.msra.mxu0 %v2433
    %2719 = vmatpush.bf16.msra.mxu0 %v2427
    %2720 = vmatpush.bf16.msra.mxu0 %v2421
    %2721 = vmatpush.bf16.msra.mxu0 %v2415
    %2722 = vmatpush.bf16.msra.mxu0 %v2409
    %2723 = vmatpush.bf16.msra.mxu0 %v2403
    %2724 = vmatpush.bf16.msra.mxu0 %v2397
    %2725 = vmatpush.bf16.msra.mxu0 %v2391
    %2726 = vmatmul.bf16.gmra.mxu0 %v1994
    %v2727 = vpop.f32.mrf.mxu0
    %v2728 = vadd.f32 0.0, %v2727
    %v2729 = vpop.f32.mrf.mxu0
    %v2730 = vadd.f32 0.0, %v2729
    %2731 = vdwg.mxu0
    %2732 = vmatpush.bf16.msra.mxu0 %v2481
    %2733 = vmatpush.bf16.msra.mxu0 %v2475
    %2734 = vmatpush.bf16.msra.mxu0 %v2469
    %2735 = vmatpush.bf16.msra.mxu0 %v2463
    %2736 = vmatpush.bf16.msra.mxu0 %v2457
    %2737 = vmatpush.bf16.msra.mxu0 %v2451
    %2738 = vmatpush.bf16.msra.mxu0 %v2445
    %2739 = vmatpush.bf16.msra.mxu0 %v2439
    %2740 = vmatmul.bf16.gmra.mxu0 %v2000
    %v2741 = vpop.f32.mrf.mxu0
    %v2742 = vadd.f32 %v2728, %v2741
    %v2743 = vpop.f32.mrf.mxu0
    %v2744 = vadd.f32 %v2730, %v2743
    %2745 = vdwg.mxu0
    %v2746 = vld [vmem:[#allocation4 + $0x30] sm:$0xff]
    %v2747 = vld [vmem:[#allocation4 + $0x38] sm:$0xff]
    %v2748 = vld [vmem:[#allocation4 + $0x40] sm:$0xff]
    %v2749 = vld [vmem:[#allocation4 + $0x48] sm:$0xff]
    %v2750 = vld [vmem:[#allocation4 + $0x50] sm:$0xff]
    %v2751 = vld [vmem:[#allocation4 + $0x58] sm:$0xff]
    %v2752 = vadd.f32 %v2746, %v2602
    %v2753 = vadd.f32 %v2749, %v2604
    %v2754 = vxor.u32 %v2752, 2147483648
    %v2755 = vxor.u32 %v2753, 2147483648
    %v2756 = vmul.f32 %v2754, 1.442695
    %v2757 = vpow.pop %v2756
    %v2758 = vmul.f32 %v2755, 1.442695
    %v2759 = vpow.pop %v2758
    %v2760 = vadd.f32 %v2757, 1.0
    %v2761 = vadd.f32 %v2759, 1.0
    %v2762 = vrcp.pop %v2760
    %v2763 = vmul.f32 %v2760, %v2762
    %v2764 = vsub.f32 1.0, %v2763
    %v2765 = vmul.f32 %v2762, %v2764
    %v2766 = vadd.f32 %v2762, %v2765
    %vm2767 = vweird.f32 %v2760
    %vm2768 = vweird.f32 %v2762
    %vm2769 = vmor %vm2767, %vm2768
    %v2770 = vsel %vm2769, %v2762, %v2766
    %v2771 = vand.u32 2147483647, %v2760
    %vm2772 = vcmp.eq.f32.partialorder %v2771, 8.507059e+37
    %v2773 = vand.u32 %v2760, 2147483648
    %v2774 = vor.u32 1.1754944e-38, %v2773
    %v2775 = vsel %vm2772, %v2774, %v2770
    %v2776 = vmul.f32 1.0, %v2775
    %v2777 = vrcp.pop %v2761
    %v2778 = vmul.f32 %v2761, %v2777
    %v2779 = vsub.f32 1.0, %v2778
    %v2780 = vmul.f32 %v2777, %v2779
    %v2781 = vadd.f32 %v2777, %v2780
    %vm2782 = vweird.f32 %v2761
    %vm2783 = vweird.f32 %v2777
    %vm2784 = vmor %vm2782, %vm2783
    %v2785 = vsel %vm2784, %v2777, %v2781
    %v2786 = vand.u32 2147483647, %v2761
    %vm2787 = vcmp.eq.f32.partialorder %v2786, 8.507059e+37
    %v2788 = vand.u32 %v2761, 2147483648
    %v2789 = vor.u32 1.1754944e-38, %v2788
    %v2790 = vsel %vm2787, %v2789, %v2785
    %v2791 = vmul.f32 1.0, %v2790
    %v2792 = vadd.f32 %v2747, %v2630
    %v2793 = vadd.f32 %v2750, %v2632
    %v2794 = vxor.u32 %v2792, 2147483648
    %v2795 = vxor.u32 %v2793, 2147483648
    %v2796 = vmul.f32 %v2794, 1.442695
    %v2797 = vpow.pop %v2796
    %v2798 = vmul.f32 %v2795, 1.442695
    %v2799 = vpow.pop %v2798
    %v2800 = vadd.f32 %v2797, 1.0
    %v2801 = vadd.f32 %v2799, 1.0
    %v2802 = vrcp.pop %v2800
    %v2803 = vmul.f32 %v2800, %v2802
    %v2804 = vsub.f32 1.0, %v2803
    %v2805 = vmul.f32 %v2802, %v2804
    %v2806 = vadd.f32 %v2802, %v2805
    %vm2807 = vweird.f32 %v2800
    %vm2808 = vweird.f32 %v2802
    %vm2809 = vmor %vm2807, %vm2808
    %v2810 = vsel %vm2809, %v2802, %v2806
    %v2811 = vand.u32 2147483647, %v2800
    %vm2812 = vcmp.eq.f32.partialorder %v2811, 8.507059e+37
    %v2813 = vand.u32 %v2800, 2147483648
    %v2814 = vor.u32 1.1754944e-38, %v2813
    %v2815 = vsel %vm2812, %v2814, %v2810
    %v2816 = vmul.f32 1.0, %v2815
    %v2817 = vrcp.pop %v2801
    %v2818 = vmul.f32 %v2801, %v2817
    %v2819 = vsub.f32 1.0, %v2818
    %v2820 = vmul.f32 %v2817, %v2819
    %v2821 = vadd.f32 %v2817, %v2820
    %vm2822 = vweird.f32 %v2801
    %vm2823 = vweird.f32 %v2817
    %vm2824 = vmor %vm2822, %vm2823
    %v2825 = vsel %vm2824, %v2817, %v2821
    %v2826 = vand.u32 2147483647, %v2801
    %vm2827 = vcmp.eq.f32.partialorder %v2826, 8.507059e+37
    %v2828 = vand.u32 %v2801, 2147483648
    %v2829 = vor.u32 1.1754944e-38, %v2828
    %v2830 = vsel %vm2827, %v2829, %v2825
    %v2831 = vmul.f32 1.0, %v2830
    %v2832 = vadd.f32 %v2658, %v968
    %v2833 = vadd.f32 %v2660, %v968
    %v2834 = vmul.f32 %v2776, %v2832
    %v2835 = vmul.f32 %v2791, %v2833
    %v2836 = vadd.f32 %v2748, %v2834
    %v2837 = vadd.f32 %v2751, %v2835
    %v2838 = vtanh.pop %v2836
    %v2839 = vtanh.pop %v2837
    %v2840 = vsub.f32 1.0, %v2816
    %v2841 = vsub.f32 1.0, %v2831
    %v2842 = vmul.f32 %v2840, %v2838
    %v2843 = vmul.f32 %v2841, %v2839
    %v2844 = vmul.f32 %v2816, %v1960
    %v2845 = vmul.f32 %v2831, %v1961
    %v2846 = vadd.f32 %v2842, %v2844
    %v2847 = vadd.f32 %v2843, %v2845
    %v2848 = vld [vmem:[#allocation5 + $0x120] sm:$0xff]
    %v2849 = vld [vmem:[#allocation5 + $0x128] sm:$0xff]
    %v2850 = vld [vmem:[#allocation5 + $0x130] sm:$0xff]
    %v2851 = vld [vmem:[#allocation5 + $0x138] sm:$0xff]
    %v2852 = vld [vmem:[#allocation5 + $0x140] sm:$0xff]
    %v2853 = vld [vmem:[#allocation5 + $0x148] sm:$0xff]
    %v2854 = vadd.f32 %v2848, %v2686
    %v2855 = vadd.f32 %v2851, %v2688
    %v2856 = vxor.u32 %v2854, 2147483648
    %v2857 = vxor.u32 %v2855, 2147483648
    %v2858 = vmul.f32 %v2856, 1.442695
    %v2859 = vpow.pop %v2858
    %v2860 = vmul.f32 %v2857, 1.442695
    %v2861 = vpow.pop %v2860
    %v2862 = vadd.f32 %v2859, 1.0
    %v2863 = vadd.f32 %v2861, 1.0
    %v2864 = vrcp.pop %v2862
    %v2865 = vmul.f32 %v2862, %v2864
    %v2866 = vsub.f32 1.0, %v2865
    %v2867 = vmul.f32 %v2864, %v2866
    %v2868 = vadd.f32 %v2864, %v2867
    %vm2869 = vweird.f32 %v2862
    %vm2870 = vweird.f32 %v2864
    %vm2871 = vmor %vm2869, %vm2870
    %v2872 = vsel %vm2871, %v2864, %v2868
    %v2873 = vand.u32 2147483647, %v2862
    %vm2874 = vcmp.eq.f32.partialorder %v2873, 8.507059e+37
    %v2875 = vand.u32 %v2862, 2147483648
    %v2876 = vor.u32 1.1754944e-38, %v2875
    %v2877 = vsel %vm2874, %v2876, %v2872
    %v2878 = vmul.f32 1.0, %v2877
    %v2879 = vrcp.pop %v2863
    %v2880 = vmul.f32 %v2863, %v2879
    %v2881 = vsub.f32 1.0, %v2880
    %v2882 = vmul.f32 %v2879, %v2881
    %v2883 = vadd.f32 %v2879, %v2882
    %vm2884 = vweird.f32 %v2863
    %vm2885 = vweird.f32 %v2879
    %vm2886 = vmor %vm2884, %vm2885
    %v2887 = vsel %vm2886, %v2879, %v2883
    %v2888 = vand.u32 2147483647, %v2863
    %vm2889 = vcmp.eq.f32.partialorder %v2888, 8.507059e+37
    %v2890 = vand.u32 %v2863, 2147483648
    %v2891 = vor.u32 1.1754944e-38, %v2890
    %v2892 = vsel %vm2889, %v2891, %v2887
    %v2893 = vmul.f32 1.0, %v2892
    %v2894 = vadd.f32 %v2849, %v2714
    %v2895 = vadd.f32 %v2852, %v2716
    %v2896 = vxor.u32 %v2894, 2147483648
    %v2897 = vxor.u32 %v2895, 2147483648
    %v2898 = vmul.f32 %v2896, 1.442695
    %v2899 = vpow.pop %v2898
    %v2900 = vmul.f32 %v2897, 1.442695
    %v2901 = vpow.pop %v2900
    %v2902 = vadd.f32 %v2899, 1.0
    %v2903 = vadd.f32 %v2901, 1.0
    %v2904 = vrcp.pop %v2902
    %v2905 = vmul.f32 %v2902, %v2904
    %v2906 = vsub.f32 1.0, %v2905
    %v2907 = vmul.f32 %v2904, %v2906
    %v2908 = vadd.f32 %v2904, %v2907
    %vm2909 = vweird.f32 %v2902
    %vm2910 = vweird.f32 %v2904
    %vm2911 = vmor %vm2909, %vm2910
    %v2912 = vsel %vm2911, %v2904, %v2908
    %v2913 = vand.u32 2147483647, %v2902
    %vm2914 = vcmp.eq.f32.partialorder %v2913, 8.507059e+37
    %v2915 = vand.u32 %v2902, 2147483648
    %v2916 = vor.u32 1.1754944e-38, %v2915
    %v2917 = vsel %vm2914, %v2916, %v2912
    %v2918 = vmul.f32 1.0, %v2917
    %v2919 = vrcp.pop %v2903
    %v2920 = vmul.f32 %v2903, %v2919
    %v2921 = vsub.f32 1.0, %v2920
    %v2922 = vmul.f32 %v2919, %v2921
    %v2923 = vadd.f32 %v2919, %v2922
    %vm2924 = vweird.f32 %v2903
    %vm2925 = vweird.f32 %v2919
    %vm2926 = vmor %vm2924, %vm2925
    %v2927 = vsel %vm2926, %v2919, %v2923
    %v2928 = vand.u32 2147483647, %v2903
    %vm2929 = vcmp.eq.f32.partialorder %v2928, 8.507059e+37
    %v2930 = vand.u32 %v2903, 2147483648
    %v2931 = vor.u32 1.1754944e-38, %v2930
    %v2932 = vsel %vm2929, %v2931, %v2927
    %v2933 = vmul.f32 1.0, %v2932
    %v2934 = vadd.f32 %v2742, %v973
    %v2935 = vadd.f32 %v2744, %v973
    %v2936 = vmul.f32 %v2878, %v2934
    %v2937 = vmul.f32 %v2893, %v2935
    %v2938 = vadd.f32 %v2850, %v2936
    %v2939 = vadd.f32 %v2853, %v2937
    %v2940 = vtanh.pop %v2938
    %v2941 = vtanh.pop %v2939
    %v2942 = vsub.f32 1.0, %v2918
    %v2943 = vsub.f32 1.0, %v2933
    %v2944 = vmul.f32 %v2942, %v2940
    %v2945 = vmul.f32 %v2943, %v2941
    %v2946 = vmul.f32 %v2918, %v1972
    %v2947 = vmul.f32 %v2933, %v1973
    %v2948 = vadd.f32 %v2944, %v2946
    %v2949 = vadd.f32 %v2945, %v2947
    %s2950 = sadd.s32 %s107, 1
    %v2951 = vstv %s2950
    %vm2952 = vcmp.lt.s32.totalorder %v2951, %v105
    %vm2953 = vcmp.lt.s32.totalorder %v2951, %v106
    %s2954 = sadd.s32 %s109, 6
    %v2955 = vstv %s2954
    %vm2956 = vcmp.lt.s32.totalorder %v2955, %v105
    %vm2957 = vcmp.lt.s32.totalorder %v2955, %v106
    %v2958 = vsel %vm2952, 1, 0
    %v2959 = vsel %vm2953, 1, 0
    %2960 = vset.pattern.permute.xlu0 0
    %2961 = vperm.xlu0 %2960, %v2958
    %v2962 = vpop.permute.xlu0 %2961
    %2963 = vset.pattern.permute.xlu0 0
    %2964 = vperm.xlu0 %2963, %v2959
    %v2965 = vpop.permute.xlu0 %2964
    %vm2966 = vcmp.eq.s32.totalorder %v2962, 1
    %vm2967 = vcmp.eq.s32.totalorder %v2965, 1
    %v2968 = vsel %vm2966, %v2846, %v1960
    %v2969 = vsel %vm2967, %v2847, %v1961
    %v2970 = vsel %vm2956, 1, 0
    %v2971 = vsel %vm2957, 1, 0
    %2972 = vset.pattern.permute.xlu0 0
    %2973 = vperm.xlu0 %2972, %v2970
    %v2974 = vpop.permute.xlu0 %2973
    %2975 = vset.pattern.permute.xlu0 0
    %2976 = vperm.xlu0 %2975, %v2971
    %v2977 = vpop.permute.xlu0 %2976
    %vm2978 = vcmp.eq.s32.totalorder %v2974, 1
    %vm2979 = vcmp.eq.s32.totalorder %v2977, 1
    %v2980 = vsel %vm2978, %v2948, %v1972
    %v2981 = vsel %vm2979, %v2949, %v1973
    %v2982 = vsel %vm2966, %v2846, 0.0
    %v2983 = vsel %vm2967, %v2847, 0.0
    %v2984 = vpack.c.bf16 %v2982, %v2982
    %v2985 = vpack.c.bf16 %v2983, %v2983
    %2986 = vst [vmem:[%s7 + $0x8] sm:$0xf] %v2984
    %2987 = vst [vmem:[%s7 + $0xc] sm:$0xf] %v2985
    %v2988 = vsel %vm2978, %v2948, 0.0
    %v2989 = vsel %vm2979, %v2949, 0.0
    %v2990 = vpack.c.bf16 %v2988, %v2988
    %v2991 = vpack.c.bf16 %v2989, %v2989
    %2992 = vst [vmem:[%s94 + $0x30] sm:$0xf] %v2990
    %2993 = vst [vmem:[%s94 + $0x34] sm:$0xf] %v2991
    %v2994 = vpack.c.bf16 %v2968, %v2968
    %v2995 = vpack.c.bf16 %v2969, %v2969
    %v2996 = vpack.c.bf16 %v2980, %v2980
    %v2997 = vpack.c.bf16 %v2981, %v2981
    %v3000 = vunpack.c.l.b16 %v2994
    %v3001 = vunpack.c.l.b16 %v2995
    %v3002 = vpack.c.b16 %v3001, %v3000
    %v3006 = vunpack.c.l.b16 %v2996
    %v3007 = vunpack.c.l.b16 %v2997
    %v3008 = vpack.c.b16 %v3007, %v3006
    %v3010 = vld [vmem:[#allocation8] sm:$0xff]
    %v3011 = vld [vmem:[#allocation8 + $0x8] sm:$0xff]
    %v3012 = vld [vmem:[#allocation8 + $0x10] sm:$0xff]
    %v3013 = vld [vmem:[#allocation8 + $0x18] sm:$0xff]
    %v3014 = vld [vmem:[#allocation8 + $0x20] sm:$0xff]
    %v3015 = vld [vmem:[#allocation8 + $0x28] sm:$0xff]
    %v3016 = vld [vmem:[#allocation8 + $0x30] sm:$0xff]
    %v3017 = vld [vmem:[#allocation8 + $0x38] sm:$0xff]
    %v3018 = vld [vmem:[#allocation8 + $0x40] sm:$0xff]
    %v3019 = vld [vmem:[#allocation8 + $0x48] sm:$0xff]
    %v3020 = vld [vmem:[#allocation8 + $0x50] sm:$0xff]
    %v3021 = vld [vmem:[#allocation8 + $0x58] sm:$0xff]
    %v3022 = vld [vmem:[#allocation8 + $0x60] sm:$0xff]
    %v3023 = vld [vmem:[#allocation8 + $0x68] sm:$0xff]
    %v3024 = vld [vmem:[#allocation8 + $0x70] sm:$0xff]
    %v3025 = vld [vmem:[#allocation8 + $0x78] sm:$0xff]
    %v3026 = vld [vmem:[#allocation8 + $0x80] sm:$0xff]
    %v3027 = vld [vmem:[#allocation8 + $0x88] sm:$0xff]
    %v3028 = vld [vmem:[#allocation8 + $0x90] sm:$0xff]
    %v3029 = vld [vmem:[#allocation8 + $0x98] sm:$0xff]
    %v3030 = vld [vmem:[#allocation8 + $0xa0] sm:$0xff]
    %v3031 = vld [vmem:[#allocation8 + $0xa8] sm:$0xff]
    %v3032 = vld [vmem:[#allocation8 + $0xb0] sm:$0xff]
    %v3033 = vld [vmem:[#allocation8 + $0xb8] sm:$0xff]
    %v3034 = vld [vmem:[#allocation8 + $0xc0] sm:$0xff]
    %v3035 = vld [vmem:[#allocation8 + $0xc8] sm:$0xff]
    %v3036 = vld [vmem:[#allocation8 + $0xd0] sm:$0xff]
    %v3037 = vld [vmem:[#allocation8 + $0xd8] sm:$0xff]
    %v3038 = vld [vmem:[#allocation8 + $0xe0] sm:$0xff]
    %v3039 = vld [vmem:[#allocation8 + $0xe8] sm:$0xff]
    %v3040 = vld [vmem:[#allocation8 + $0xf0] sm:$0xff]
    %v3041 = vld [vmem:[#allocation8 + $0xf8] sm:$0xff]
    %v3042 = vld [vmem:[#allocation8 + $0x100] sm:$0xff]
    %v3043 = vld [vmem:[#allocation8 + $0x108] sm:$0xff]
    %v3044 = vld [vmem:[#allocation8 + $0x110] sm:$0xff]
    %v3045 = vld [vmem:[#allocation8 + $0x118] sm:$0xff]
    %v3046 = vld [vmem:[#allocation8 + $0x120] sm:$0xff]
    %v3047 = vld [vmem:[#allocation8 + $0x128] sm:$0xff]
    %v3048 = vld [vmem:[#allocation8 + $0x130] sm:$0xff]
    %v3049 = vld [vmem:[#allocation8 + $0x138] sm:$0xff]
    %v3050 = vld [vmem:[#allocation8 + $0x140] sm:$0xff]
    %v3051 = vld [vmem:[#allocation8 + $0x148] sm:$0xff]
    %v3052 = vld [vmem:[#allocation8 + $0x150] sm:$0xff]
    %v3053 = vld [vmem:[#allocation8 + $0x158] sm:$0xff]
    %v3054 = vld [vmem:[#allocation8 + $0x160] sm:$0xff]
    %v3055 = vld [vmem:[#allocation8 + $0x168] sm:$0xff]
    %v3056 = vld [vmem:[#allocation8 + $0x170] sm:$0xff]
    %v3057 = vld [vmem:[#allocation8 + $0x178] sm:$0xff]
    %v3058 = vld [vmem:[#allocation8 + $0x180] sm:$0xff]
    %v3059 = vld [vmem:[#allocation8 + $0x188] sm:$0xff]
    %v3060 = vld [vmem:[#allocation8 + $0x190] sm:$0xff]
    %v3061 = vld [vmem:[#allocation8 + $0x198] sm:$0xff]
    %v3062 = vld [vmem:[#allocation8 + $0x1a0] sm:$0xff]
    %v3063 = vld [vmem:[#allocation8 + $0x1a8] sm:$0xff]
    %v3064 = vld [vmem:[#allocation8 + $0x1b0] sm:$0xff]
    %v3065 = vld [vmem:[#allocation8 + $0x1b8] sm:$0xff]
    %v3066 = vld [vmem:[#allocation8 + $0x1c0] sm:$0xff]
    %v3067 = vld [vmem:[#allocation8 + $0x1c8] sm:$0xff]
    %v3068 = vld [vmem:[#allocation8 + $0x1d0] sm:$0xff]
    %v3069 = vld [vmem:[#allocation8 + $0x1d8] sm:$0xff]
    %v3070 = vld [vmem:[#allocation8 + $0x1e0] sm:$0xff]
    %v3071 = vld [vmem:[#allocation8 + $0x1e8] sm:$0xff]
    %v3072 = vld [vmem:[#allocation8 + $0x1f0] sm:$0xff]
    %v3073 = vld [vmem:[#allocation8 + $0x1f8] sm:$0xff]
    %v3074 = vld [vmem:[#allocation8 + $0x200] sm:$0xff]
    %v3075 = vld [vmem:[#allocation8 + $0x208] sm:$0xff]
    %v3076 = vld [vmem:[#allocation8 + $0x210] sm:$0xff]
    %v3077 = vld [vmem:[#allocation8 + $0x218] sm:$0xff]
    %v3078 = vld [vmem:[#allocation8 + $0x220] sm:$0xff]
    %v3079 = vld [vmem:[#allocation8 + $0x228] sm:$0xff]
    %v3080 = vld [vmem:[#allocation8 + $0x230] sm:$0xff]
    %v3081 = vld [vmem:[#allocation8 + $0x238] sm:$0xff]
    %v3082 = vld [vmem:[#allocation8 + $0x240] sm:$0xff]
    %v3083 = vld [vmem:[#allocation8 + $0x248] sm:$0xff]
    %v3084 = vld [vmem:[#allocation8 + $0x250] sm:$0xff]
    %v3085 = vld [vmem:[#allocation8 + $0x258] sm:$0xff]
    %v3086 = vld [vmem:[#allocation8 + $0x260] sm:$0xff]
    %v3087 = vld [vmem:[#allocation8 + $0x268] sm:$0xff]
    %v3088 = vld [vmem:[#allocation8 + $0x270] sm:$0xff]
    %v3089 = vld [vmem:[#allocation8 + $0x278] sm:$0xff]
    %v3090 = vld [vmem:[#allocation8 + $0x280] sm:$0xff]
    %v3091 = vld [vmem:[#allocation8 + $0x288] sm:$0xff]
    %v3092 = vld [vmem:[#allocation8 + $0x290] sm:$0xff]
    %v3093 = vld [vmem:[#allocation8 + $0x298] sm:$0xff]
    %v3094 = vld [vmem:[#allocation8 + $0x2a0] sm:$0xff]
    %v3095 = vld [vmem:[#allocation8 + $0x2a8] sm:$0xff]
    %v3096 = vld [vmem:[#allocation8 + $0x2b0] sm:$0xff]
    %v3097 = vld [vmem:[#allocation8 + $0x2b8] sm:$0xff]
    %v3098 = vld [vmem:[#allocation8 + $0x2c0] sm:$0xff]
    %v3099 = vld [vmem:[#allocation8 + $0x2c8] sm:$0xff]
    %v3100 = vld [vmem:[#allocation8 + $0x2d0] sm:$0xff]
    %v3101 = vld [vmem:[#allocation8 + $0x2d8] sm:$0xff]
    %v3102 = vld [vmem:[#allocation8 + $0x2e0] sm:$0xff]
    %v3103 = vld [vmem:[#allocation8 + $0x2e8] sm:$0xff]
    %v3104 = vld [vmem:[#allocation8 + $0x2f0] sm:$0xff]
    %v3105 = vld [vmem:[#allocation8 + $0x2f8] sm:$0xff]
    %v3202 = vunpack.c.l.b16 %v3010
    %v3203 = vunpack.c.h.b16 %v3010
    %v3204 = vunpack.c.l.b16 %v3011
    %v3205 = vunpack.c.h.b16 %v3011
    %v3206 = vunpack.c.l.b16 %v3012
    %v3207 = vunpack.c.h.b16 %v3012
    %v3208 = vunpack.c.l.b16 %v3013
    %v3209 = vunpack.c.h.b16 %v3013
    %v3210 = vunpack.c.l.b16 %v3014
    %v3211 = vunpack.c.h.b16 %v3014
    %v3212 = vunpack.c.l.b16 %v3015
    %v3213 = vunpack.c.h.b16 %v3015
    %v3214 = vunpack.c.l.b16 %v3016
    %v3215 = vunpack.c.h.b16 %v3016
    %v3216 = vunpack.c.l.b16 %v3017
    %v3217 = vunpack.c.h.b16 %v3017
    %v3218 = vunpack.c.l.b16 %v3018
    %v3219 = vunpack.c.h.b16 %v3018
    %v3220 = vunpack.c.l.b16 %v3019
    %v3221 = vunpack.c.h.b16 %v3019
    %v3222 = vunpack.c.l.b16 %v3020
    %v3223 = vunpack.c.h.b16 %v3020
    %v3224 = vunpack.c.l.b16 %v3021
    %v3225 = vunpack.c.h.b16 %v3021
    %v3226 = vunpack.c.l.b16 %v3022
    %v3227 = vunpack.c.h.b16 %v3022
    %v3228 = vunpack.c.l.b16 %v3023
    %v3229 = vunpack.c.h.b16 %v3023
    %v3230 = vunpack.c.l.b16 %v3024
    %v3231 = vunpack.c.h.b16 %v3024
    %v3232 = vunpack.c.l.b16 %v3025
    %v3233 = vunpack.c.h.b16 %v3025
    %v3234 = vunpack.c.l.b16 %v3026
    %v3235 = vunpack.c.h.b16 %v3026
    %v3236 = vunpack.c.l.b16 %v3027
    %v3237 = vunpack.c.h.b16 %v3027
    %v3238 = vunpack.c.l.b16 %v3028
    %v3239 = vunpack.c.h.b16 %v3028
    %v3240 = vunpack.c.l.b16 %v3029
    %v3241 = vunpack.c.h.b16 %v3029
    %v3242 = vunpack.c.l.b16 %v3030
    %v3243 = vunpack.c.h.b16 %v3030
    %v3244 = vunpack.c.l.b16 %v3031
    %v3245 = vunpack.c.h.b16 %v3031
    %v3246 = vunpack.c.l.b16 %v3032
    %v3247 = vunpack.c.h.b16 %v3032
    %v3248 = vunpack.c.l.b16 %v3033
    %v3249 = vunpack.c.h.b16 %v3033
    %v3250 = vunpack.c.l.b16 %v3034
    %v3251 = vunpack.c.h.b16 %v3034
    %v3252 = vunpack.c.l.b16 %v3035
    %v3253 = vunpack.c.h.b16 %v3035
    %v3254 = vunpack.c.l.b16 %v3036
    %v3255 = vunpack.c.h.b16 %v3036
    %v3256 = vunpack.c.l.b16 %v3037
    %v3257 = vunpack.c.h.b16 %v3037
    %v3258 = vunpack.c.l.b16 %v3038
    %v3259 = vunpack.c.h.b16 %v3038
    %v3260 = vunpack.c.l.b16 %v3039
    %v3261 = vunpack.c.h.b16 %v3039
    %v3262 = vunpack.c.l.b16 %v3040
    %v3263 = vunpack.c.h.b16 %v3040
    %v3264 = vunpack.c.l.b16 %v3041
    %v3265 = vunpack.c.h.b16 %v3041
    %v3266 = vunpack.c.l.b16 %v3042
    %v3267 = vunpack.c.h.b16 %v3042
    %v3268 = vunpack.c.l.b16 %v3043
    %v3269 = vunpack.c.h.b16 %v3043
    %v3270 = vunpack.c.l.b16 %v3044
    %v3271 = vunpack.c.h.b16 %v3044
    %v3272 = vunpack.c.l.b16 %v3045
    %v3273 = vunpack.c.h.b16 %v3045
    %v3274 = vunpack.c.l.b16 %v3046
    %v3275 = vunpack.c.h.b16 %v3046
    %v3276 = vunpack.c.l.b16 %v3047
    %v3277 = vunpack.c.h.b16 %v3047
    %v3278 = vunpack.c.l.b16 %v3048
    %v3279 = vunpack.c.h.b16 %v3048
    %v3280 = vunpack.c.l.b16 %v3049
    %v3281 = vunpack.c.h.b16 %v3049
    %v3282 = vunpack.c.l.b16 %v3050
    %v3283 = vunpack.c.h.b16 %v3050
    %v3284 = vunpack.c.l.b16 %v3051
    %v3285 = vunpack.c.h.b16 %v3051
    %v3286 = vunpack.c.l.b16 %v3052
    %v3287 = vunpack.c.h.b16 %v3052
    %v3288 = vunpack.c.l.b16 %v3053
    %v3289 = vunpack.c.h.b16 %v3053
    %v3290 = vunpack.c.l.b16 %v3054
    %v3291 = vunpack.c.h.b16 %v3054
    %v3292 = vunpack.c.l.b16 %v3055
    %v3293 = vunpack.c.h.b16 %v3055
    %v3294 = vunpack.c.l.b16 %v3056
    %v3295 = vunpack.c.h.b16 %v3056
    %v3296 = vunpack.c.l.b16 %v3057
    %v3297 = vunpack.c.h.b16 %v3057
    %v3298 = vunpack.c.l.b16 %v3058
    %v3299 = vunpack.c.h.b16 %v3058
    %v3300 = vunpack.c.l.b16 %v3059
    %v3301 = vunpack.c.h.b16 %v3059
    %v3302 = vunpack.c.l.b16 %v3060
    %v3303 = vunpack.c.h.b16 %v3060
    %v3304 = vunpack.c.l.b16 %v3061
    %v3305 = vunpack.c.h.b16 %v3061
    %v3306 = vunpack.c.l.b16 %v3062
    %v3307 = vunpack.c.h.b16 %v3062
    %v3308 = vunpack.c.l.b16 %v3063
    %v3309 = vunpack.c.h.b16 %v3063
    %v3310 = vunpack.c.l.b16 %v3064
    %v3311 = vunpack.c.h.b16 %v3064
    %v3312 = vunpack.c.l.b16 %v3065
    %v3313 = vunpack.c.h.b16 %v3065
    %v3314 = vunpack.c.l.b16 %v3066
    %v3315 = vunpack.c.h.b16 %v3066
    %v3316 = vunpack.c.l.b16 %v3067
    %v3317 = vunpack.c.h.b16 %v3067
    %v3318 = vunpack.c.l.b16 %v3068
    %v3319 = vunpack.c.h.b16 %v3068
    %v3320 = vunpack.c.l.b16 %v3069
    %v3321 = vunpack.c.h.b16 %v3069
    %v3322 = vunpack.c.l.b16 %v3070
    %v3323 = vunpack.c.h.b16 %v3070
    %v3324 = vunpack.c.l.b16 %v3071
    %v3325 = vunpack.c.h.b16 %v3071
    %v3326 = vunpack.c.l.b16 %v3072
    %v3327 = vunpack.c.h.b16 %v3072
    %v3328 = vunpack.c.l.b16 %v3073
    %v3329 = vunpack.c.h.b16 %v3073
    %v3330 = vunpack.c.l.b16 %v3074
    %v3331 = vunpack.c.h.b16 %v3074
    %v3332 = vunpack.c.l.b16 %v3075
    %v3333 = vunpack.c.h.b16 %v3075
    %v3334 = vunpack.c.l.b16 %v3076
    %v3335 = vunpack.c.h.b16 %v3076
    %v3336 = vunpack.c.l.b16 %v3077
    %v3337 = vunpack.c.h.b16 %v3077
    %v3338 = vunpack.c.l.b16 %v3078
    %v3339 = vunpack.c.h.b16 %v3078
    %v3340 = vunpack.c.l.b16 %v3079
    %v3341 = vunpack.c.h.b16 %v3079
    %v3342 = vunpack.c.l.b16 %v3080
    %v3343 = vunpack.c.h.b16 %v3080
    %v3344 = vunpack.c.l.b16 %v3081
    %v3345 = vunpack.c.h.b16 %v3081
    %v3346 = vunpack.c.l.b16 %v3082
    %v3347 = vunpack.c.h.b16 %v3082
    %v3348 = vunpack.c.l.b16 %v3083
    %v3349 = vunpack.c.h.b16 %v3083
    %v3350 = vunpack.c.l.b16 %v3084
    %v3351 = vunpack.c.h.b16 %v3084
    %v3352 = vunpack.c.l.b16 %v3085
    %v3353 = vunpack.c.h.b16 %v3085
    %v3354 = vunpack.c.l.b16 %v3086
    %v3355 = vunpack.c.h.b16 %v3086
    %v3356 = vunpack.c.l.b16 %v3087
    %v3357 = vunpack.c.h.b16 %v3087
    %v3358 = vunpack.c.l.b16 %v3088
    %v3359 = vunpack.c.h.b16 %v3088
    %v3360 = vunpack.c.l.b16 %v3089
    %v3361 = vunpack.c.h.b16 %v3089
    %v3362 = vunpack.c.l.b16 %v3090
    %v3363 = vunpack.c.h.b16 %v3090
    %v3364 = vunpack.c.l.b16 %v3091
    %v3365 = vunpack.c.h.b16 %v3091
    %v3366 = vunpack.c.l.b16 %v3092
    %v3367 = vunpack.c.h.b16 %v3092
    %v3368 = vunpack.c.l.b16 %v3093
    %v3369 = vunpack.c.h.b16 %v3093
    %v3370 = vunpack.c.l.b16 %v3094
    %v3371 = vunpack.c.h.b16 %v3094
    %v3372 = vunpack.c.l.b16 %v3095
    %v3373 = vunpack.c.h.b16 %v3095
    %v3374 = vunpack.c.l.b16 %v3096
    %v3375 = vunpack.c.h.b16 %v3096
    %v3376 = vunpack.c.l.b16 %v3097
    %v3377 = vunpack.c.h.b16 %v3097
    %v3378 = vunpack.c.l.b16 %v3098
    %v3379 = vunpack.c.h.b16 %v3098
    %v3380 = vunpack.c.l.b16 %v3099
    %v3381 = vunpack.c.h.b16 %v3099
    %v3382 = vunpack.c.l.b16 %v3100
    %v3383 = vunpack.c.h.b16 %v3100
    %v3384 = vunpack.c.l.b16 %v3101
    %v3385 = vunpack.c.h.b16 %v3101
    %v3386 = vunpack.c.l.b16 %v3102
    %v3387 = vunpack.c.h.b16 %v3102
    %v3388 = vunpack.c.l.b16 %v3103
    %v3389 = vunpack.c.h.b16 %v3103
    %v3390 = vunpack.c.l.b16 %v3104
    %v3391 = vunpack.c.h.b16 %v3104
    %v3392 = vunpack.c.l.b16 %v3105
    %v3393 = vunpack.c.h.b16 %v3105
    %v3394 = vpack.c.b16 %v3208, %v3202
    %v3395 = vpack.c.b16 %v3209, %v3203
    %v3396 = vpack.c.b16 %v3210, %v3204
    %v3397 = vpack.c.b16 %v3211, %v3205
    %v3398 = vpack.c.b16 %v3212, %v3206
    %v3399 = vpack.c.b16 %v3213, %v3207
    %v3400 = vpack.c.b16 %v3220, %v3214
    %v3401 = vpack.c.b16 %v3221, %v3215
    %v3402 = vpack.c.b16 %v3222, %v3216
    %v3403 = vpack.c.b16 %v3223, %v3217
    %v3404 = vpack.c.b16 %v3224, %v3218
    %v3405 = vpack.c.b16 %v3225, %v3219
    %v3406 = vpack.c.b16 %v3232, %v3226
    %v3407 = vpack.c.b16 %v3233, %v3227
    %v3408 = vpack.c.b16 %v3234, %v3228
    %v3409 = vpack.c.b16 %v3235, %v3229
    %v3410 = vpack.c.b16 %v3236, %v3230
    %v3411 = vpack.c.b16 %v3237, %v3231
    %v3412 = vpack.c.b16 %v3244, %v3238
    %v3413 = vpack.c.b16 %v3245, %v3239
    %v3414 = vpack.c.b16 %v3246, %v3240
    %v3415 = vpack.c.b16 %v3247, %v3241
    %v3416 = vpack.c.b16 %v3248, %v3242
    %v3417 = vpack.c.b16 %v3249, %v3243
    %v3418 = vpack.c.b16 %v3256, %v3250
    %v3419 = vpack.c.b16 %v3257, %v3251
    %v3420 = vpack.c.b16 %v3258, %v3252
    %v3421 = vpack.c.b16 %v3259, %v3253
    %v3422 = vpack.c.b16 %v3260, %v3254
    %v3423 = vpack.c.b16 %v3261, %v3255
    %v3424 = vpack.c.b16 %v3268, %v3262
    %v3425 = vpack.c.b16 %v3269, %v3263
    %v3426 = vpack.c.b16 %v3270, %v3264
    %v3427 = vpack.c.b16 %v3271, %v3265
    %v3428 = vpack.c.b16 %v3272, %v3266
    %v3429 = vpack.c.b16 %v3273, %v3267
    %v3430 = vpack.c.b16 %v3280, %v3274
    %v3431 = vpack.c.b16 %v3281, %v3275
    %v3432 = vpack.c.b16 %v3282, %v3276
    %v3433 = vpack.c.b16 %v3283, %v3277
    %v3434 = vpack.c.b16 %v3284, %v3278
    %v3435 = vpack.c.b16 %v3285, %v3279
    %v3436 = vpack.c.b16 %v3292, %v3286
    %v3437 = vpack.c.b16 %v3293, %v3287
    %v3438 = vpack.c.b16 %v3294, %v3288
    %v3439 = vpack.c.b16 %v3295, %v3289
    %v3440 = vpack.c.b16 %v3296, %v3290
    %v3441 = vpack.c.b16 %v3297, %v3291
    %v3442 = vpack.c.b16 %v3304, %v3298
    %v3443 = vpack.c.b16 %v3305, %v3299
    %v3444 = vpack.c.b16 %v3306, %v3300
    %v3445 = vpack.c.b16 %v3307, %v3301
    %v3446 = vpack.c.b16 %v3308, %v3302
    %v3447 = vpack.c.b16 %v3309, %v3303
    %v3448 = vpack.c.b16 %v3316, %v3310
    %v3449 = vpack.c.b16 %v3317, %v3311
    %v3450 = vpack.c.b16 %v3318, %v3312
    %v3451 = vpack.c.b16 %v3319, %v3313
    %v3452 = vpack.c.b16 %v3320, %v3314
    %v3453 = vpack.c.b16 %v3321, %v3315
    %v3454 = vpack.c.b16 %v3328, %v3322
    %v3455 = vpack.c.b16 %v3329, %v3323
    %v3456 = vpack.c.b16 %v3330, %v3324
    %v3457 = vpack.c.b16 %v3331, %v3325
    %v3458 = vpack.c.b16 %v3332, %v3326
    %v3459 = vpack.c.b16 %v3333, %v3327
    %v3460 = vpack.c.b16 %v3340, %v3334
    %v3461 = vpack.c.b16 %v3341, %v3335
    %v3462 = vpack.c.b16 %v3342, %v3336
    %v3463 = vpack.c.b16 %v3343, %v3337
    %v3464 = vpack.c.b16 %v3344, %v3338
    %v3465 = vpack.c.b16 %v3345, %v3339
    %v3466 = vpack.c.b16 %v3352, %v3346
    %v3467 = vpack.c.b16 %v3353, %v3347
    %v3468 = vpack.c.b16 %v3354, %v3348
    %v3469 = vpack.c.b16 %v3355, %v3349
    %v3470 = vpack.c.b16 %v3356, %v3350
    %v3471 = vpack.c.b16 %v3357, %v3351
    %v3472 = vpack.c.b16 %v3364, %v3358
    %v3473 = vpack.c.b16 %v3365, %v3359
    %v3474 = vpack.c.b16 %v3366, %v3360
    %v3475 = vpack.c.b16 %v3367, %v3361
    %v3476 = vpack.c.b16 %v3368, %v3362
    %v3477 = vpack.c.b16 %v3369, %v3363
    %v3478 = vpack.c.b16 %v3376, %v3370
    %v3479 = vpack.c.b16 %v3377, %v3371
    %v3480 = vpack.c.b16 %v3378, %v3372
    %v3481 = vpack.c.b16 %v3379, %v3373
    %v3482 = vpack.c.b16 %v3380, %v3374
    %v3483 = vpack.c.b16 %v3381, %v3375
    %v3484 = vpack.c.b16 %v3388, %v3382
    %v3485 = vpack.c.b16 %v3389, %v3383
    %v3486 = vpack.c.b16 %v3390, %v3384
    %v3487 = vpack.c.b16 %v3391, %v3385
    %v3488 = vpack.c.b16 %v3392, %v3386
    %v3489 = vpack.c.b16 %v3393, %v3387
    %3586 = vmatpush.bf16.msra.mxu0 %v3436
    %3587 = vmatpush.bf16.msra.mxu0 %v3430
    %3588 = vmatpush.bf16.msra.mxu0 %v3424
    %3589 = vmatpush.bf16.msra.mxu0 %v3418
    %3590 = vmatpush.bf16.msra.mxu0 %v3412
    %3591 = vmatpush.bf16.msra.mxu0 %v3406
    %3592 = vmatpush.bf16.msra.mxu0 %v3400
    %3593 = vmatpush.bf16.msra.mxu0 %v3394
    %3594 = vmatmul.bf16.gmra.mxu0 %v3002
    %v3595 = vpop.f32.mrf.mxu0
    %v3596 = vadd.f32 0.0, %v3595
    %v3597 = vpop.f32.mrf.mxu0
    %v3598 = vadd.f32 0.0, %v3597
    %3599 = vdwg.mxu0
    %3600 = vmatpush.bf16.msra.mxu0 %v3484
    %3601 = vmatpush.bf16.msra.mxu0 %v3478
    %3602 = vmatpush.bf16.msra.mxu0 %v3472
    %3603 = vmatpush.bf16.msra.mxu0 %v3466
    %3604 = vmatpush.bf16.msra.mxu0 %v3460
    %3605 = vmatpush.bf16.msra.mxu0 %v3454
    %3606 = vmatpush.bf16.msra.mxu0 %v3448
    %3607 = vmatpush.bf16.msra.mxu0 %v3442
    %3608 = vmatmul.bf16.gmra.mxu0 %v3008
    %v3609 = vpop.f32.mrf.mxu0
    %v3610 = vadd.f32 %v3596, %v3609
    %v3611 = vpop.f32.mrf.mxu0
    %v3612 = vadd.f32 %v3598, %v3611
    %3613 = vdwg.mxu0
    %3614 = vmatpush.bf16.msra.mxu0 %v3437
    %3615 = vmatpush.bf16.msra.mxu0 %v3431
    %3616 = vmatpush.bf16.msra.mxu0 %v3425
    %3617 = vmatpush.bf16.msra.mxu0 %v3419
    %3618 = vmatpush.bf16.msra.mxu0 %v3413
    %3619 = vmatpush.bf16.msra.mxu0 %v3407
    %3620 = vmatpush.bf16.msra.mxu0 %v3401
    %3621 = vmatpush.bf16.msra.mxu0 %v3395
    %3622 = vmatmul.bf16.gmra.mxu0 %v3002
    %v3623 = vpop.f32.mrf.mxu0
    %v3624 = vadd.f32 0.0, %v3623
    %v3625 = vpop.f32.mrf.mxu0
    %v3626 = vadd.f32 0.0, %v3625
    %3627 = vdwg.mxu0
    %3628 = vmatpush.bf16.msra.mxu0 %v3485
    %3629 = vmatpush.bf16.msra.mxu0 %v3479
    %3630 = vmatpush.bf16.msra.mxu0 %v3473
    %3631 = vmatpush.bf16.msra.mxu0 %v3467
    %3632 = vmatpush.bf16.msra.mxu0 %v3461
    %3633 = vmatpush.bf16.msra.mxu0 %v3455
    %3634 = vmatpush.bf16.msra.mxu0 %v3449
    %3635 = vmatpush.bf16.msra.mxu0 %v3443
    %3636 = vmatmul.bf16.gmra.mxu0 %v3008
    %v3637 = vpop.f32.mrf.mxu0
    %v3638 = vadd.f32 %v3624, %v3637
    %v3639 = vpop.f32.mrf.mxu0
    %v3640 = vadd.f32 %v3626, %v3639
    %3641 = vdwg.mxu0
    %3642 = vmatpush.bf16.msra.mxu0 %v3438
    %3643 = vmatpush.bf16.msra.mxu0 %v3432
    %3644 = vmatpush.bf16.msra.mxu0 %v3426
    %3645 = vmatpush.bf16.msra.mxu0 %v3420
    %3646 = vmatpush.bf16.msra.mxu0 %v3414
    %3647 = vmatpush.bf16.msra.mxu0 %v3408
    %3648 = vmatpush.bf16.msra.mxu0 %v3402
    %3649 = vmatpush.bf16.msra.mxu0 %v3396
    %3650 = vmatmul.bf16.gmra.mxu0 %v3002
    %v3651 = vpop.f32.mrf.mxu0
    %v3652 = vadd.f32 0.0, %v3651
    %v3653 = vpop.f32.mrf.mxu0
    %v3654 = vadd.f32 0.0, %v3653
    %3655 = vdwg.mxu0
    %3656 = vmatpush.bf16.msra.mxu0 %v3486
    %3657 = vmatpush.bf16.msra.mxu0 %v3480
    %3658 = vmatpush.bf16.msra.mxu0 %v3474
    %3659 = vmatpush.bf16.msra.mxu0 %v3468
    %3660 = vmatpush.bf16.msra.mxu0 %v3462
    %3661 = vmatpush.bf16.msra.mxu0 %v3456
    %3662 = vmatpush.bf16.msra.mxu0 %v3450
    %3663 = vmatpush.bf16.msra.mxu0 %v3444
    %3664 = vmatmul.bf16.gmra.mxu0 %v3008
    %v3665 = vpop.f32.mrf.mxu0
    %v3666 = vadd.f32 %v3652, %v3665
    %v3667 = vpop.f32.mrf.mxu0
    %v3668 = vadd.f32 %v3654, %v3667
    %3669 = vdwg.mxu0
    %3670 = vmatpush.bf16.msra.mxu0 %v3439
    %3671 = vmatpush.bf16.msra.mxu0 %v3433
    %3672 = vmatpush.bf16.msra.mxu0 %v3427
    %3673 = vmatpush.bf16.msra.mxu0 %v3421
    %3674 = vmatpush.bf16.msra.mxu0 %v3415
    %3675 = vmatpush.bf16.msra.mxu0 %v3409
    %3676 = vmatpush.bf16.msra.mxu0 %v3403
    %3677 = vmatpush.bf16.msra.mxu0 %v3397
    %3678 = vmatmul.bf16.gmra.mxu0 %v3002
    %v3679 = vpop.f32.mrf.mxu0
    %v3680 = vadd.f32 0.0, %v3679
    %v3681 = vpop.f32.mrf.mxu0
    %v3682 = vadd.f32 0.0, %v3681
    %3683 = vdwg.mxu0
    %3684 = vmatpush.bf16.msra.mxu0 %v3487
    %3685 = vmatpush.bf16.msra.mxu0 %v3481
    %3686 = vmatpush.bf16.msra.mxu0 %v3475
    %3687 = vmatpush.bf16.msra.mxu0 %v3469
    %3688 = vmatpush.bf16.msra.mxu0 %v3463
    %3689 = vmatpush.bf16.msra.mxu0 %v3457
    %3690 = vmatpush.bf16.msra.mxu0 %v3451
    %3691 = vmatpush.bf16.msra.mxu0 %v3445
    %3692 = vmatmul.bf16.gmra.mxu0 %v3008
    %v3693 = vpop.f32.mrf.mxu0
    %v3694 = vadd.f32 %v3680, %v3693
    %v3695 = vpop.f32.mrf.mxu0
    %v3696 = vadd.f32 %v3682, %v3695
    %3697 = vdwg.mxu0
    %3698 = vmatpush.bf16.msra.mxu0 %v3440
    %3699 = vmatpush.bf16.msra.mxu0 %v3434
    %3700 = vmatpush.bf16.msra.mxu0 %v3428
    %3701 = vmatpush.bf16.msra.mxu0 %v3422
    %3702 = vmatpush.bf16.msra.mxu0 %v3416
    %3703 = vmatpush.bf16.msra.mxu0 %v3410
    %3704 = vmatpush.bf16.msra.mxu0 %v3404
    %3705 = vmatpush.bf16.msra.mxu0 %v3398
    %3706 = vmatmul.bf16.gmra.mxu0 %v3002
    %v3707 = vpop.f32.mrf.mxu0
    %v3708 = vadd.f32 0.0, %v3707
    %v3709 = vpop.f32.mrf.mxu0
    %v3710 = vadd.f32 0.0, %v3709
    %3711 = vdwg.mxu0
    %3712 = vmatpush.bf16.msra.mxu0 %v3488
    %3713 = vmatpush.bf16.msra.mxu0 %v3482
    %3714 = vmatpush.bf16.msra.mxu0 %v3476
    %3715 = vmatpush.bf16.msra.mxu0 %v3470
    %3716 = vmatpush.bf16.msra.mxu0 %v3464
    %3717 = vmatpush.bf16.msra.mxu0 %v3458
    %3718 = vmatpush.bf16.msra.mxu0 %v3452
    %3719 = vmatpush.bf16.msra.mxu0 %v3446
    %3720 = vmatmul.bf16.gmra.mxu0 %v3008
    %v3721 = vpop.f32.mrf.mxu0
    %v3722 = vadd.f32 %v3708, %v3721
    %v3723 = vpop.f32.mrf.mxu0
    %v3724 = vadd.f32 %v3710, %v3723
    %3725 = vdwg.mxu0
    %3726 = vmatpush.bf16.msra.mxu0 %v3441
    %3727 = vmatpush.bf16.msra.mxu0 %v3435
    %3728 = vmatpush.bf16.msra.mxu0 %v3429
    %3729 = vmatpush.bf16.msra.mxu0 %v3423
    %3730 = vmatpush.bf16.msra.mxu0 %v3417
    %3731 = vmatpush.bf16.msra.mxu0 %v3411
    %3732 = vmatpush.bf16.msra.mxu0 %v3405
    %3733 = vmatpush.bf16.msra.mxu0 %v3399
    %3734 = vmatmul.bf16.gmra.mxu0 %v3002
    %v3735 = vpop.f32.mrf.mxu0
    %v3736 = vadd.f32 0.0, %v3735
    %v3737 = vpop.f32.mrf.mxu0
    %v3738 = vadd.f32 0.0, %v3737
    %3739 = vdwg.mxu0
    %3740 = vmatpush.bf16.msra.mxu0 %v3489
    %3741 = vmatpush.bf16.msra.mxu0 %v3483
    %3742 = vmatpush.bf16.msra.mxu0 %v3477
    %3743 = vmatpush.bf16.msra.mxu0 %v3471
    %3744 = vmatpush.bf16.msra.mxu0 %v3465
    %3745 = vmatpush.bf16.msra.mxu0 %v3459
    %3746 = vmatpush.bf16.msra.mxu0 %v3453
    %3747 = vmatpush.bf16.msra.mxu0 %v3447
    %3748 = vmatmul.bf16.gmra.mxu0 %v3008
    %v3749 = vpop.f32.mrf.mxu0
    %v3750 = vadd.f32 %v3736, %v3749
    %v3751 = vpop.f32.mrf.mxu0
    %v3752 = vadd.f32 %v3738, %v3751
    %3753 = vdwg.mxu0
    %v3754 = vld [vmem:[#allocation4 + $0x60] sm:$0xff]
    %v3755 = vld [vmem:[#allocation4 + $0x68] sm:$0xff]
    %v3756 = vld [vmem:[#allocation4 + $0x70] sm:$0xff]
    %v3757 = vld [vmem:[#allocation4 + $0x78] sm:$0xff]
    %v3758 = vld [vmem:[#allocation4 + $0x80] sm:$0xff]
    %v3759 = vld [vmem:[#allocation4 + $0x88] sm:$0xff]
    %v3760 = vadd.f32 %v3754, %v3610
    %v3761 = vadd.f32 %v3757, %v3612
    %v3762 = vxor.u32 %v3760, 2147483648
    %v3763 = vxor.u32 %v3761, 2147483648
    %v3764 = vmul.f32 %v3762, 1.442695
    %v3765 = vpow.pop %v3764
    %v3766 = vmul.f32 %v3763, 1.442695
    %v3767 = vpow.pop %v3766
    %v3768 = vadd.f32 %v3765, 1.0
    %v3769 = vadd.f32 %v3767, 1.0
    %v3770 = vrcp.pop %v3768
    %v3771 = vmul.f32 %v3768, %v3770
    %v3772 = vsub.f32 1.0, %v3771
    %v3773 = vmul.f32 %v3770, %v3772
    %v3774 = vadd.f32 %v3770, %v3773
    %vm3775 = vweird.f32 %v3768
    %vm3776 = vweird.f32 %v3770
    %vm3777 = vmor %vm3775, %vm3776
    %v3778 = vsel %vm3777, %v3770, %v3774
    %v3779 = vand.u32 2147483647, %v3768
    %vm3780 = vcmp.eq.f32.partialorder %v3779, 8.507059e+37
    %v3781 = vand.u32 %v3768, 2147483648
    %v3782 = vor.u32 1.1754944e-38, %v3781
    %v3783 = vsel %vm3780, %v3782, %v3778
    %v3784 = vmul.f32 1.0, %v3783
    %v3785 = vrcp.pop %v3769
    %v3786 = vmul.f32 %v3769, %v3785
    %v3787 = vsub.f32 1.0, %v3786
    %v3788 = vmul.f32 %v3785, %v3787
    %v3789 = vadd.f32 %v3785, %v3788
    %vm3790 = vweird.f32 %v3769
    %vm3791 = vweird.f32 %v3785
    %vm3792 = vmor %vm3790, %vm3791
    %v3793 = vsel %vm3792, %v3785, %v3789
    %v3794 = vand.u32 2147483647, %v3769
    %vm3795 = vcmp.eq.f32.partialorder %v3794, 8.507059e+37
    %v3796 = vand.u32 %v3769, 2147483648
    %v3797 = vor.u32 1.1754944e-38, %v3796
    %v3798 = vsel %vm3795, %v3797, %v3793
    %v3799 = vmul.f32 1.0, %v3798
    %v3800 = vadd.f32 %v3755, %v3638
    %v3801 = vadd.f32 %v3758, %v3640
    %v3802 = vxor.u32 %v3800, 2147483648
    %v3803 = vxor.u32 %v3801, 2147483648
    %v3804 = vmul.f32 %v3802, 1.442695
    %v3805 = vpow.pop %v3804
    %v3806 = vmul.f32 %v3803, 1.442695
    %v3807 = vpow.pop %v3806
    %v3808 = vadd.f32 %v3805, 1.0
    %v3809 = vadd.f32 %v3807, 1.0
    %v3810 = vrcp.pop %v3808
    %v3811 = vmul.f32 %v3808, %v3810
    %v3812 = vsub.f32 1.0, %v3811
    %v3813 = vmul.f32 %v3810, %v3812
    %v3814 = vadd.f32 %v3810, %v3813
    %vm3815 = vweird.f32 %v3808
    %vm3816 = vweird.f32 %v3810
    %vm3817 = vmor %vm3815, %vm3816
    %v3818 = vsel %vm3817, %v3810, %v3814
    %v3819 = vand.u32 2147483647, %v3808
    %vm3820 = vcmp.eq.f32.partialorder %v3819, 8.507059e+37
    %v3821 = vand.u32 %v3808, 2147483648
    %v3822 = vor.u32 1.1754944e-38, %v3821
    %v3823 = vsel %vm3820, %v3822, %v3818
    %v3824 = vmul.f32 1.0, %v3823
    %v3825 = vrcp.pop %v3809
    %v3826 = vmul.f32 %v3809, %v3825
    %v3827 = vsub.f32 1.0, %v3826
    %v3828 = vmul.f32 %v3825, %v3827
    %v3829 = vadd.f32 %v3825, %v3828
    %vm3830 = vweird.f32 %v3809
    %vm3831 = vweird.f32 %v3825
    %vm3832 = vmor %vm3830, %vm3831
    %v3833 = vsel %vm3832, %v3825, %v3829
    %v3834 = vand.u32 2147483647, %v3809
    %vm3835 = vcmp.eq.f32.partialorder %v3834, 8.507059e+37
    %v3836 = vand.u32 %v3809, 2147483648
    %v3837 = vor.u32 1.1754944e-38, %v3836
    %v3838 = vsel %vm3835, %v3837, %v3833
    %v3839 = vmul.f32 1.0, %v3838
    %v3840 = vadd.f32 %v3666, %v968
    %v3841 = vadd.f32 %v3668, %v968
    %v3842 = vmul.f32 %v3784, %v3840
    %v3843 = vmul.f32 %v3799, %v3841
    %v3844 = vadd.f32 %v3756, %v3842
    %v3845 = vadd.f32 %v3759, %v3843
    %v3846 = vtanh.pop %v3844
    %v3847 = vtanh.pop %v3845
    %v3848 = vsub.f32 1.0, %v3824
    %v3849 = vsub.f32 1.0, %v3839
    %v3850 = vmul.f32 %v3848, %v3846
    %v3851 = vmul.f32 %v3849, %v3847
    %v3852 = vmul.f32 %v3824, %v2968
    %v3853 = vmul.f32 %v3839, %v2969
    %v3854 = vadd.f32 %v3850, %v3852
    %v3855 = vadd.f32 %v3851, %v3853
    %v3856 = vld [vmem:[#allocation5 + $0xf0] sm:$0xff]
    %v3857 = vld [vmem:[#allocation5 + $0xf8] sm:$0xff]
    %v3858 = vld [vmem:[#allocation5 + $0x100] sm:$0xff]
    %v3859 = vld [vmem:[#allocation5 + $0x108] sm:$0xff]
    %v3860 = vld [vmem:[#allocation5 + $0x110] sm:$0xff]
    %v3861 = vld [vmem:[#allocation5 + $0x118] sm:$0xff]
    %v3862 = vadd.f32 %v3856, %v3694
    %v3863 = vadd.f32 %v3859, %v3696
    %v3864 = vxor.u32 %v3862, 2147483648
    %v3865 = vxor.u32 %v3863, 2147483648
    %v3866 = vmul.f32 %v3864, 1.442695
    %v3867 = vpow.pop %v3866
    %v3868 = vmul.f32 %v3865, 1.442695
    %v3869 = vpow.pop %v3868
    %v3870 = vadd.f32 %v3867, 1.0
    %v3871 = vadd.f32 %v3869, 1.0
    %v3872 = vrcp.pop %v3870
    %v3873 = vmul.f32 %v3870, %v3872
    %v3874 = vsub.f32 1.0, %v3873
    %v3875 = vmul.f32 %v3872, %v3874
    %v3876 = vadd.f32 %v3872, %v3875
    %vm3877 = vweird.f32 %v3870
    %vm3878 = vweird.f32 %v3872
    %vm3879 = vmor %vm3877, %vm3878
    %v3880 = vsel %vm3879, %v3872, %v3876
    %v3881 = vand.u32 2147483647, %v3870
    %vm3882 = vcmp.eq.f32.partialorder %v3881, 8.507059e+37
    %v3883 = vand.u32 %v3870, 2147483648
    %v3884 = vor.u32 1.1754944e-38, %v3883
    %v3885 = vsel %vm3882, %v3884, %v3880
    %v3886 = vmul.f32 1.0, %v3885
    %v3887 = vrcp.pop %v3871
    %v3888 = vmul.f32 %v3871, %v3887
    %v3889 = vsub.f32 1.0, %v3888
    %v3890 = vmul.f32 %v3887, %v3889
    %v3891 = vadd.f32 %v3887, %v3890
    %vm3892 = vweird.f32 %v3871
    %vm3893 = vweird.f32 %v3887
    %vm3894 = vmor %vm3892, %vm3893
    %v3895 = vsel %vm3894, %v3887, %v3891
    %v3896 = vand.u32 2147483647, %v3871
    %vm3897 = vcmp.eq.f32.partialorder %v3896, 8.507059e+37
    %v3898 = vand.u32 %v3871, 2147483648
    %v3899 = vor.u32 1.1754944e-38, %v3898
    %v3900 = vsel %vm3897, %v3899, %v3895
    %v3901 = vmul.f32 1.0, %v3900
    %v3902 = vadd.f32 %v3857, %v3722
    %v3903 = vadd.f32 %v3860, %v3724
    %v3904 = vxor.u32 %v3902, 2147483648
    %v3905 = vxor.u32 %v3903, 2147483648
    %v3906 = vmul.f32 %v3904, 1.442695
    %v3907 = vpow.pop %v3906
    %v3908 = vmul.f32 %v3905, 1.442695
    %v3909 = vpow.pop %v3908
    %v3910 = vadd.f32 %v3907, 1.0
    %v3911 = vadd.f32 %v3909, 1.0
    %v3912 = vrcp.pop %v3910
    %v3913 = vmul.f32 %v3910, %v3912
    %v3914 = vsub.f32 1.0, %v3913
    %v3915 = vmul.f32 %v3912, %v3914
    %v3916 = vadd.f32 %v3912, %v3915
    %vm3917 = vweird.f32 %v3910
    %vm3918 = vweird.f32 %v3912
    %vm3919 = vmor %vm3917, %vm3918
    %v3920 = vsel %vm3919, %v3912, %v3916
    %v3921 = vand.u32 2147483647, %v3910
    %vm3922 = vcmp.eq.f32.partialorder %v3921, 8.507059e+37
    %v3923 = vand.u32 %v3910, 2147483648
    %v3924 = vor.u32 1.1754944e-38, %v3923
    %v3925 = vsel %vm3922, %v3924, %v3920
    %v3926 = vmul.f32 1.0, %v3925
    %v3927 = vrcp.pop %v3911
    %v3928 = vmul.f32 %v3911, %v3927
    %v3929 = vsub.f32 1.0, %v3928
    %v3930 = vmul.f32 %v3927, %v3929
    %v3931 = vadd.f32 %v3927, %v3930
    %vm3932 = vweird.f32 %v3911
    %vm3933 = vweird.f32 %v3927
    %vm3934 = vmor %vm3932, %vm3933
    %v3935 = vsel %vm3934, %v3927, %v3931
    %v3936 = vand.u32 2147483647, %v3911
    %vm3937 = vcmp.eq.f32.partialorder %v3936, 8.507059e+37
    %v3938 = vand.u32 %v3911, 2147483648
    %v3939 = vor.u32 1.1754944e-38, %v3938
    %v3940 = vsel %vm3937, %v3939, %v3935
    %v3941 = vmul.f32 1.0, %v3940
    %v3942 = vadd.f32 %v3750, %v973
    %v3943 = vadd.f32 %v3752, %v973
    %v3944 = vmul.f32 %v3886, %v3942
    %v3945 = vmul.f32 %v3901, %v3943
    %v3946 = vadd.f32 %v3858, %v3944
    %v3947 = vadd.f32 %v3861, %v3945
    %v3948 = vtanh.pop %v3946
    %v3949 = vtanh.pop %v3947
    %v3950 = vsub.f32 1.0, %v3926
    %v3951 = vsub.f32 1.0, %v3941
    %v3952 = vmul.f32 %v3950, %v3948
    %v3953 = vmul.f32 %v3951, %v3949
    %v3954 = vmul.f32 %v3926, %v2980
    %v3955 = vmul.f32 %v3941, %v2981
    %v3956 = vadd.f32 %v3952, %v3954
    %v3957 = vadd.f32 %v3953, %v3955
    %s3958 = sadd.s32 %s107, 2
    %v3959 = vstv %s3958
    %vm3960 = vcmp.lt.s32.totalorder %v3959, %v105
    %vm3961 = vcmp.lt.s32.totalorder %v3959, %v106
    %s3962 = sadd.s32 %s109, 5
    %v3963 = vstv %s3962
    %vm3964 = vcmp.lt.s32.totalorder %v3963, %v105
    %vm3965 = vcmp.lt.s32.totalorder %v3963, %v106
    %v3966 = vsel %vm3960, 1, 0
    %v3967 = vsel %vm3961, 1, 0
    %3968 = vset.pattern.permute.xlu0 0
    %3969 = vperm.xlu0 %3968, %v3966
    %v3970 = vpop.permute.xlu0 %3969
    %3971 = vset.pattern.permute.xlu0 0
    %3972 = vperm.xlu0 %3971, %v3967
    %v3973 = vpop.permute.xlu0 %3972
    %vm3974 = vcmp.eq.s32.totalorder %v3970, 1
    %vm3975 = vcmp.eq.s32.totalorder %v3973, 1
    %v3976 = vsel %vm3974, %v3854, %v2968
    %v3977 = vsel %vm3975, %v3855, %v2969
    %v3978 = vsel %vm3964, 1, 0
    %v3979 = vsel %vm3965, 1, 0
    %3980 = vset.pattern.permute.xlu0 0
    %3981 = vperm.xlu0 %3980, %v3978
    %v3982 = vpop.permute.xlu0 %3981
    %3983 = vset.pattern.permute.xlu0 0
    %3984 = vperm.xlu0 %3983, %v3979
    %v3985 = vpop.permute.xlu0 %3984
    %vm3986 = vcmp.eq.s32.totalorder %v3982, 1
    %vm3987 = vcmp.eq.s32.totalorder %v3985, 1
    %v3988 = vsel %vm3986, %v3956, %v2980
    %v3989 = vsel %vm3987, %v3957, %v2981
    %v3990 = vsel %vm3974, %v3854, 0.0
    %v3991 = vsel %vm3975, %v3855, 0.0
    %v3992 = vpack.c.bf16 %v3990, %v3990
    %v3993 = vpack.c.bf16 %v3991, %v3991
    %3994 = vst [vmem:[%s7 + $0x10] sm:$0xf] %v3992
    %3995 = vst [vmem:[%s7 + $0x14] sm:$0xf] %v3993
    %v3996 = vsel %vm3986, %v3956, 0.0
    %v3997 = vsel %vm3987, %v3957, 0.0
    %v3998 = vpack.c.bf16 %v3996, %v3996
    %v3999 = vpack.c.bf16 %v3997, %v3997
    %4000 = vst [vmem:[%s94 + $0x28] sm:$0xf] %v3998
    %4001 = vst [vmem:[%s94 + $0x2c] sm:$0xf] %v3999
    %v4002 = vpack.c.bf16 %v3976, %v3976
    %v4003 = vpack.c.bf16 %v3977, %v3977
    %v4004 = vpack.c.bf16 %v3988, %v3988
    %v4005 = vpack.c.bf16 %v3989, %v3989
    %v4008 = vunpack.c.l.b16 %v4002
    %v4009 = vunpack.c.l.b16 %v4003
    %v4010 = vpack.c.b16 %v4009, %v4008
    %v4014 = vunpack.c.l.b16 %v4004
    %v4015 = vunpack.c.l.b16 %v4005
    %v4016 = vpack.c.b16 %v4015, %v4014
    %v4018 = vld [vmem:[#allocation8] sm:$0xff]
    %v4019 = vld [vmem:[#allocation8 + $0x8] sm:$0xff]
    %v4020 = vld [vmem:[#allocation8 + $0x10] sm:$0xff]
    %v4021 = vld [vmem:[#allocation8 + $0x18] sm:$0xff]
    %v4022 = vld [vmem:[#allocation8 + $0x20] sm:$0xff]
    %v4023 = vld [vmem:[#allocation8 + $0x28] sm:$0xff]
    %v4024 = vld [vmem:[#allocation8 + $0x30] sm:$0xff]
    %v4025 = vld [vmem:[#allocation8 + $0x38] sm:$0xff]
    %v4026 = vld [vmem:[#allocation8 + $0x40] sm:$0xff]
    %v4027 = vld [vmem:[#allocation8 + $0x48] sm:$0xff]
    %v4028 = vld [vmem:[#allocation8 + $0x50] sm:$0xff]
    %v4029 = vld [vmem:[#allocation8 + $0x58] sm:$0xff]
    %v4030 = vld [vmem:[#allocation8 + $0x60] sm:$0xff]
    %v4031 = vld [vmem:[#allocation8 + $0x68] sm:$0xff]
    %v4032 = vld [vmem:[#allocation8 + $0x70] sm:$0xff]
    %v4033 = vld [vmem:[#allocation8 + $0x78] sm:$0xff]
    %v4034 = vld [vmem:[#allocation8 + $0x80] sm:$0xff]
    %v4035 = vld [vmem:[#allocation8 + $0x88] sm:$0xff]
    %v4036 = vld [vmem:[#allocation8 + $0x90] sm:$0xff]
    %v4037 = vld [vmem:[#allocation8 + $0x98] sm:$0xff]
    %v4038 = vld [vmem:[#allocation8 + $0xa0] sm:$0xff]
    %v4039 = vld [vmem:[#allocation8 + $0xa8] sm:$0xff]
    %v4040 = vld [vmem:[#allocation8 + $0xb0] sm:$0xff]
    %v4041 = vld [vmem:[#allocation8 + $0xb8] sm:$0xff]
    %v4042 = vld [vmem:[#allocation8 + $0xc0] sm:$0xff]
    %v4043 = vld [vmem:[#allocation8 + $0xc8] sm:$0xff]
    %v4044 = vld [vmem:[#allocation8 + $0xd0] sm:$0xff]
    %v4045 = vld [vmem:[#allocation8 + $0xd8] sm:$0xff]
    %v4046 = vld [vmem:[#allocation8 + $0xe0] sm:$0xff]
    %v4047 = vld [vmem:[#allocation8 + $0xe8] sm:$0xff]
    %v4048 = vld [vmem:[#allocation8 + $0xf0] sm:$0xff]
    %v4049 = vld [vmem:[#allocation8 + $0xf8] sm:$0xff]
    %v4050 = vld [vmem:[#allocation8 + $0x100] sm:$0xff]
    %v4051 = vld [vmem:[#allocation8 + $0x108] sm:$0xff]
    %v4052 = vld [vmem:[#allocation8 + $0x110] sm:$0xff]
    %v4053 = vld [vmem:[#allocation8 + $0x118] sm:$0xff]
    %v4054 = vld [vmem:[#allocation8 + $0x120] sm:$0xff]
    %v4055 = vld [vmem:[#allocation8 + $0x128] sm:$0xff]
    %v4056 = vld [vmem:[#allocation8 + $0x130] sm:$0xff]
    %v4057 = vld [vmem:[#allocation8 + $0x138] sm:$0xff]
    %v4058 = vld [vmem:[#allocation8 + $0x140] sm:$0xff]
    %v4059 = vld [vmem:[#allocation8 + $0x148] sm:$0xff]
    %v4060 = vld [vmem:[#allocation8 + $0x150] sm:$0xff]
    %v4061 = vld [vmem:[#allocation8 + $0x158] sm:$0xff]
    %v4062 = vld [vmem:[#allocation8 + $0x160] sm:$0xff]
    %v4063 = vld [vmem:[#allocation8 + $0x168] sm:$0xff]
    %v4064 = vld [vmem:[#allocation8 + $0x170] sm:$0xff]
    %v4065 = vld [vmem:[#allocation8 + $0x178] sm:$0xff]
    %v4066 = vld [vmem:[#allocation8 + $0x180] sm:$0xff]
    %v4067 = vld [vmem:[#allocation8 + $0x188] sm:$0xff]
    %v4068 = vld [vmem:[#allocation8 + $0x190] sm:$0xff]
    %v4069 = vld [vmem:[#allocation8 + $0x198] sm:$0xff]
    %v4070 = vld [vmem:[#allocation8 + $0x1a0] sm:$0xff]
    %v4071 = vld [vmem:[#allocation8 + $0x1a8] sm:$0xff]
    %v4072 = vld [vmem:[#allocation8 + $0x1b0] sm:$0xff]
    %v4073 = vld [vmem:[#allocation8 + $0x1b8] sm:$0xff]
    %v4074 = vld [vmem:[#allocation8 + $0x1c0] sm:$0xff]
    %v4075 = vld [vmem:[#allocation8 + $0x1c8] sm:$0xff]
    %v4076 = vld [vmem:[#allocation8 + $0x1d0] sm:$0xff]
    %v4077 = vld [vmem:[#allocation8 + $0x1d8] sm:$0xff]
    %v4078 = vld [vmem:[#allocation8 + $0x1e0] sm:$0xff]
    %v4079 = vld [vmem:[#allocation8 + $0x1e8] sm:$0xff]
    %v4080 = vld [vmem:[#allocation8 + $0x1f0] sm:$0xff]
    %v4081 = vld [vmem:[#allocation8 + $0x1f8] sm:$0xff]
    %v4082 = vld [vmem:[#allocation8 + $0x200] sm:$0xff]
    %v4083 = vld [vmem:[#allocation8 + $0x208] sm:$0xff]
    %v4084 = vld [vmem:[#allocation8 + $0x210] sm:$0xff]
    %v4085 = vld [vmem:[#allocation8 + $0x218] sm:$0xff]
    %v4086 = vld [vmem:[#allocation8 + $0x220] sm:$0xff]
    %v4087 = vld [vmem:[#allocation8 + $0x228] sm:$0xff]
    %v4088 = vld [vmem:[#allocation8 + $0x230] sm:$0xff]
    %v4089 = vld [vmem:[#allocation8 + $0x238] sm:$0xff]
    %v4090 = vld [vmem:[#allocation8 + $0x240] sm:$0xff]
    %v4091 = vld [vmem:[#allocation8 + $0x248] sm:$0xff]
    %v4092 = vld [vmem:[#allocation8 + $0x250] sm:$0xff]
    %v4093 = vld [vmem:[#allocation8 + $0x258] sm:$0xff]
    %v4094 = vld [vmem:[#allocation8 + $0x260] sm:$0xff]
    %v4095 = vld [vmem:[#allocation8 + $0x268] sm:$0xff]
    %v4096 = vld [vmem:[#allocation8 + $0x270] sm:$0xff]
    %v4097 = vld [vmem:[#allocation8 + $0x278] sm:$0xff]
    %v4098 = vld [vmem:[#allocation8 + $0x280] sm:$0xff]
    %v4099 = vld [vmem:[#allocation8 + $0x288] sm:$0xff]
    %v4100 = vld [vmem:[#allocation8 + $0x290] sm:$0xff]
    %v4101 = vld [vmem:[#allocation8 + $0x298] sm:$0xff]
    %v4102 = vld [vmem:[#allocation8 + $0x2a0] sm:$0xff]
    %v4103 = vld [vmem:[#allocation8 + $0x2a8] sm:$0xff]
    %v4104 = vld [vmem:[#allocation8 + $0x2b0] sm:$0xff]
    %v4105 = vld [vmem:[#allocation8 + $0x2b8] sm:$0xff]
    %v4106 = vld [vmem:[#allocation8 + $0x2c0] sm:$0xff]
    %v4107 = vld [vmem:[#allocation8 + $0x2c8] sm:$0xff]
    %v4108 = vld [vmem:[#allocation8 + $0x2d0] sm:$0xff]
    %v4109 = vld [vmem:[#allocation8 + $0x2d8] sm:$0xff]
    %v4110 = vld [vmem:[#allocation8 + $0x2e0] sm:$0xff]
    %v4111 = vld [vmem:[#allocation8 + $0x2e8] sm:$0xff]
    %v4112 = vld [vmem:[#allocation8 + $0x2f0] sm:$0xff]
    %v4113 = vld [vmem:[#allocation8 + $0x2f8] sm:$0xff]
    %v4210 = vunpack.c.l.b16 %v4018
    %v4211 = vunpack.c.h.b16 %v4018
    %v4212 = vunpack.c.l.b16 %v4019
    %v4213 = vunpack.c.h.b16 %v4019
    %v4214 = vunpack.c.l.b16 %v4020
    %v4215 = vunpack.c.h.b16 %v4020
    %v4216 = vunpack.c.l.b16 %v4021
    %v4217 = vunpack.c.h.b16 %v4021
    %v4218 = vunpack.c.l.b16 %v4022
    %v4219 = vunpack.c.h.b16 %v4022
    %v4220 = vunpack.c.l.b16 %v4023
    %v4221 = vunpack.c.h.b16 %v4023
    %v4222 = vunpack.c.l.b16 %v4024
    %v4223 = vunpack.c.h.b16 %v4024
    %v4224 = vunpack.c.l.b16 %v4025
    %v4225 = vunpack.c.h.b16 %v4025
    %v4226 = vunpack.c.l.b16 %v4026
    %v4227 = vunpack.c.h.b16 %v4026
    %v4228 = vunpack.c.l.b16 %v4027
    %v4229 = vunpack.c.h.b16 %v4027
    %v4230 = vunpack.c.l.b16 %v4028
    %v4231 = vunpack.c.h.b16 %v4028
    %v4232 = vunpack.c.l.b16 %v4029
    %v4233 = vunpack.c.h.b16 %v4029
    %v4234 = vunpack.c.l.b16 %v4030
    %v4235 = vunpack.c.h.b16 %v4030
    %v4236 = vunpack.c.l.b16 %v4031
    %v4237 = vunpack.c.h.b16 %v4031
    %v4238 = vunpack.c.l.b16 %v4032
    %v4239 = vunpack.c.h.b16 %v4032
    %v4240 = vunpack.c.l.b16 %v4033
    %v4241 = vunpack.c.h.b16 %v4033
    %v4242 = vunpack.c.l.b16 %v4034
    %v4243 = vunpack.c.h.b16 %v4034
    %v4244 = vunpack.c.l.b16 %v4035
    %v4245 = vunpack.c.h.b16 %v4035
    %v4246 = vunpack.c.l.b16 %v4036
    %v4247 = vunpack.c.h.b16 %v4036
    %v4248 = vunpack.c.l.b16 %v4037
    %v4249 = vunpack.c.h.b16 %v4037
    %v4250 = vunpack.c.l.b16 %v4038
    %v4251 = vunpack.c.h.b16 %v4038
    %v4252 = vunpack.c.l.b16 %v4039
    %v4253 = vunpack.c.h.b16 %v4039
    %v4254 = vunpack.c.l.b16 %v4040
    %v4255 = vunpack.c.h.b16 %v4040
    %v4256 = vunpack.c.l.b16 %v4041
    %v4257 = vunpack.c.h.b16 %v4041
    %v4258 = vunpack.c.l.b16 %v4042
    %v4259 = vunpack.c.h.b16 %v4042
    %v4260 = vunpack.c.l.b16 %v4043
    %v4261 = vunpack.c.h.b16 %v4043
    %v4262 = vunpack.c.l.b16 %v4044
    %v4263 = vunpack.c.h.b16 %v4044
    %v4264 = vunpack.c.l.b16 %v4045
    %v4265 = vunpack.c.h.b16 %v4045
    %v4266 = vunpack.c.l.b16 %v4046
    %v4267 = vunpack.c.h.b16 %v4046
    %v4268 = vunpack.c.l.b16 %v4047
    %v4269 = vunpack.c.h.b16 %v4047
    %v4270 = vunpack.c.l.b16 %v4048
    %v4271 = vunpack.c.h.b16 %v4048
    %v4272 = vunpack.c.l.b16 %v4049
    %v4273 = vunpack.c.h.b16 %v4049
    %v4274 = vunpack.c.l.b16 %v4050
    %v4275 = vunpack.c.h.b16 %v4050
    %v4276 = vunpack.c.l.b16 %v4051
    %v4277 = vunpack.c.h.b16 %v4051
    %v4278 = vunpack.c.l.b16 %v4052
    %v4279 = vunpack.c.h.b16 %v4052
    %v4280 = vunpack.c.l.b16 %v4053
    %v4281 = vunpack.c.h.b16 %v4053
    %v4282 = vunpack.c.l.b16 %v4054
    %v4283 = vunpack.c.h.b16 %v4054
    %v4284 = vunpack.c.l.b16 %v4055
    %v4285 = vunpack.c.h.b16 %v4055
    %v4286 = vunpack.c.l.b16 %v4056
    %v4287 = vunpack.c.h.b16 %v4056
    %v4288 = vunpack.c.l.b16 %v4057
    %v4289 = vunpack.c.h.b16 %v4057
    %v4290 = vunpack.c.l.b16 %v4058
    %v4291 = vunpack.c.h.b16 %v4058
    %v4292 = vunpack.c.l.b16 %v4059
    %v4293 = vunpack.c.h.b16 %v4059
    %v4294 = vunpack.c.l.b16 %v4060
    %v4295 = vunpack.c.h.b16 %v4060
    %v4296 = vunpack.c.l.b16 %v4061
    %v4297 = vunpack.c.h.b16 %v4061
    %v4298 = vunpack.c.l.b16 %v4062
    %v4299 = vunpack.c.h.b16 %v4062
    %v4300 = vunpack.c.l.b16 %v4063
    %v4301 = vunpack.c.h.b16 %v4063
    %v4302 = vunpack.c.l.b16 %v4064
    %v4303 = vunpack.c.h.b16 %v4064
    %v4304 = vunpack.c.l.b16 %v4065
    %v4305 = vunpack.c.h.b16 %v4065
    %v4306 = vunpack.c.l.b16 %v4066
    %v4307 = vunpack.c.h.b16 %v4066
    %v4308 = vunpack.c.l.b16 %v4067
    %v4309 = vunpack.c.h.b16 %v4067
    %v4310 = vunpack.c.l.b16 %v4068
    %v4311 = vunpack.c.h.b16 %v4068
    %v4312 = vunpack.c.l.b16 %v4069
    %v4313 = vunpack.c.h.b16 %v4069
    %v4314 = vunpack.c.l.b16 %v4070
    %v4315 = vunpack.c.h.b16 %v4070
    %v4316 = vunpack.c.l.b16 %v4071
    %v4317 = vunpack.c.h.b16 %v4071
    %v4318 = vunpack.c.l.b16 %v4072
    %v4319 = vunpack.c.h.b16 %v4072
    %v4320 = vunpack.c.l.b16 %v4073
    %v4321 = vunpack.c.h.b16 %v4073
    %v4322 = vunpack.c.l.b16 %v4074
    %v4323 = vunpack.c.h.b16 %v4074
    %v4324 = vunpack.c.l.b16 %v4075
    %v4325 = vunpack.c.h.b16 %v4075
    %v4326 = vunpack.c.l.b16 %v4076
    %v4327 = vunpack.c.h.b16 %v4076
    %v4328 = vunpack.c.l.b16 %v4077
    %v4329 = vunpack.c.h.b16 %v4077
    %v4330 = vunpack.c.l.b16 %v4078
    %v4331 = vunpack.c.h.b16 %v4078
    %v4332 = vunpack.c.l.b16 %v4079
    %v4333 = vunpack.c.h.b16 %v4079
    %v4334 = vunpack.c.l.b16 %v4080
    %v4335 = vunpack.c.h.b16 %v4080
    %v4336 = vunpack.c.l.b16 %v4081
    %v4337 = vunpack.c.h.b16 %v4081
    %v4338 = vunpack.c.l.b16 %v4082
    %v4339 = vunpack.c.h.b16 %v4082
    %v4340 = vunpack.c.l.b16 %v4083
    %v4341 = vunpack.c.h.b16 %v4083
    %v4342 = vunpack.c.l.b16 %v4084
    %v4343 = vunpack.c.h.b16 %v4084
    %v4344 = vunpack.c.l.b16 %v4085
    %v4345 = vunpack.c.h.b16 %v4085
    %v4346 = vunpack.c.l.b16 %v4086
    %v4347 = vunpack.c.h.b16 %v4086
    %v4348 = vunpack.c.l.b16 %v4087
    %v4349 = vunpack.c.h.b16 %v4087
    %v4350 = vunpack.c.l.b16 %v4088
    %v4351 = vunpack.c.h.b16 %v4088
    %v4352 = vunpack.c.l.b16 %v4089
    %v4353 = vunpack.c.h.b16 %v4089
    %v4354 = vunpack.c.l.b16 %v4090
    %v4355 = vunpack.c.h.b16 %v4090
    %v4356 = vunpack.c.l.b16 %v4091
    %v4357 = vunpack.c.h.b16 %v4091
    %v4358 = vunpack.c.l.b16 %v4092
    %v4359 = vunpack.c.h.b16 %v4092
    %v4360 = vunpack.c.l.b16 %v4093
    %v4361 = vunpack.c.h.b16 %v4093
    %v4362 = vunpack.c.l.b16 %v4094
    %v4363 = vunpack.c.h.b16 %v4094
    %v4364 = vunpack.c.l.b16 %v4095
    %v4365 = vunpack.c.h.b16 %v4095
    %v4366 = vunpack.c.l.b16 %v4096
    %v4367 = vunpack.c.h.b16 %v4096
    %v4368 = vunpack.c.l.b16 %v4097
    %v4369 = vunpack.c.h.b16 %v4097
    %v4370 = vunpack.c.l.b16 %v4098
    %v4371 = vunpack.c.h.b16 %v4098
    %v4372 = vunpack.c.l.b16 %v4099
    %v4373 = vunpack.c.h.b16 %v4099
    %v4374 = vunpack.c.l.b16 %v4100
    %v4375 = vunpack.c.h.b16 %v4100
    %v4376 = vunpack.c.l.b16 %v4101
    %v4377 = vunpack.c.h.b16 %v4101
    %v4378 = vunpack.c.l.b16 %v4102
    %v4379 = vunpack.c.h.b16 %v4102
    %v4380 = vunpack.c.l.b16 %v4103
    %v4381 = vunpack.c.h.b16 %v4103
    %v4382 = vunpack.c.l.b16 %v4104
    %v4383 = vunpack.c.h.b16 %v4104
    %v4384 = vunpack.c.l.b16 %v4105
    %v4385 = vunpack.c.h.b16 %v4105
    %v4386 = vunpack.c.l.b16 %v4106
    %v4387 = vunpack.c.h.b16 %v4106
    %v4388 = vunpack.c.l.b16 %v4107
    %v4389 = vunpack.c.h.b16 %v4107
    %v4390 = vunpack.c.l.b16 %v4108
    %v4391 = vunpack.c.h.b16 %v4108
    %v4392 = vunpack.c.l.b16 %v4109
    %v4393 = vunpack.c.h.b16 %v4109
    %v4394 = vunpack.c.l.b16 %v4110
    %v4395 = vunpack.c.h.b16 %v4110
    %v4396 = vunpack.c.l.b16 %v4111
    %v4397 = vunpack.c.h.b16 %v4111
    %v4398 = vunpack.c.l.b16 %v4112
    %v4399 = vunpack.c.h.b16 %v4112
    %v4400 = vunpack.c.l.b16 %v4113
    %v4401 = vunpack.c.h.b16 %v4113
    %v4402 = vpack.c.b16 %v4216, %v4210
    %v4403 = vpack.c.b16 %v4217, %v4211
    %v4404 = vpack.c.b16 %v4218, %v4212
    %v4405 = vpack.c.b16 %v4219, %v4213
    %v4406 = vpack.c.b16 %v4220, %v4214
    %v4407 = vpack.c.b16 %v4221, %v4215
    %v4408 = vpack.c.b16 %v4228, %v4222
    %v4409 = vpack.c.b16 %v4229, %v4223
    %v4410 = vpack.c.b16 %v4230, %v4224
    %v4411 = vpack.c.b16 %v4231, %v4225
    %v4412 = vpack.c.b16 %v4232, %v4226
    %v4413 = vpack.c.b16 %v4233, %v4227
    %v4414 = vpack.c.b16 %v4240, %v4234
    %v4415 = vpack.c.b16 %v4241, %v4235
    %v4416 = vpack.c.b16 %v4242, %v4236
    %v4417 = vpack.c.b16 %v4243, %v4237
    %v4418 = vpack.c.b16 %v4244, %v4238
    %v4419 = vpack.c.b16 %v4245, %v4239
    %v4420 = vpack.c.b16 %v4252, %v4246
    %v4421 = vpack.c.b16 %v4253, %v4247
    %v4422 = vpack.c.b16 %v4254, %v4248
    %v4423 = vpack.c.b16 %v4255, %v4249
    %v4424 = vpack.c.b16 %v4256, %v4250
    %v4425 = vpack.c.b16 %v4257, %v4251
    %v4426 = vpack.c.b16 %v4264, %v4258
    %v4427 = vpack.c.b16 %v4265, %v4259
    %v4428 = vpack.c.b16 %v4266, %v4260
    %v4429 = vpack.c.b16 %v4267, %v4261
    %v4430 = vpack.c.b16 %v4268, %v4262
    %v4431 = vpack.c.b16 %v4269, %v4263
    %v4432 = vpack.c.b16 %v4276, %v4270
    %v4433 = vpack.c.b16 %v4277, %v4271
    %v4434 = vpack.c.b16 %v4278, %v4272
    %v4435 = vpack.c.b16 %v4279, %v4273
    %v4436 = vpack.c.b16 %v4280, %v4274
    %v4437 = vpack.c.b16 %v4281, %v4275
    %v4438 = vpack.c.b16 %v4288, %v4282
    %v4439 = vpack.c.b16 %v4289, %v4283
    %v4440 = vpack.c.b16 %v4290, %v4284
    %v4441 = vpack.c.b16 %v4291, %v4285
    %v4442 = vpack.c.b16 %v4292, %v4286
    %v4443 = vpack.c.b16 %v4293, %v4287
    %v4444 = vpack.c.b16 %v4300, %v4294
    %v4445 = vpack.c.b16 %v4301, %v4295
    %v4446 = vpack.c.b16 %v4302, %v4296
    %v4447 = vpack.c.b16 %v4303, %v4297
    %v4448 = vpack.c.b16 %v4304, %v4298
    %v4449 = vpack.c.b16 %v4305, %v4299
    %v4450 = vpack.c.b16 %v4312, %v4306
    %v4451 = vpack.c.b16 %v4313, %v4307
    %v4452 = vpack.c.b16 %v4314, %v4308
    %v4453 = vpack.c.b16 %v4315, %v4309
    %v4454 = vpack.c.b16 %v4316, %v4310
    %v4455 = vpack.c.b16 %v4317, %v4311
    %v4456 = vpack.c.b16 %v4324, %v4318
    %v4457 = vpack.c.b16 %v4325, %v4319
    %v4458 = vpack.c.b16 %v4326, %v4320
    %v4459 = vpack.c.b16 %v4327, %v4321
    %v4460 = vpack.c.b16 %v4328, %v4322
    %v4461 = vpack.c.b16 %v4329, %v4323
    %v4462 = vpack.c.b16 %v4336, %v4330
    %v4463 = vpack.c.b16 %v4337, %v4331
    %v4464 = vpack.c.b16 %v4338, %v4332
    %v4465 = vpack.c.b16 %v4339, %v4333
    %v4466 = vpack.c.b16 %v4340, %v4334
    %v4467 = vpack.c.b16 %v4341, %v4335
    %v4468 = vpack.c.b16 %v4348, %v4342
    %v4469 = vpack.c.b16 %v4349, %v4343
    %v4470 = vpack.c.b16 %v4350, %v4344
    %v4471 = vpack.c.b16 %v4351, %v4345
    %v4472 = vpack.c.b16 %v4352, %v4346
    %v4473 = vpack.c.b16 %v4353, %v4347
    %v4474 = vpack.c.b16 %v4360, %v4354
    %v4475 = vpack.c.b16 %v4361, %v4355
    %v4476 = vpack.c.b16 %v4362, %v4356
    %v4477 = vpack.c.b16 %v4363, %v4357
    %v4478 = vpack.c.b16 %v4364, %v4358
    %v4479 = vpack.c.b16 %v4365, %v4359
    %v4480 = vpack.c.b16 %v4372, %v4366
    %v4481 = vpack.c.b16 %v4373, %v4367
    %v4482 = vpack.c.b16 %v4374, %v4368
    %v4483 = vpack.c.b16 %v4375, %v4369
    %v4484 = vpack.c.b16 %v4376, %v4370
    %v4485 = vpack.c.b16 %v4377, %v4371
    %v4486 = vpack.c.b16 %v4384, %v4378
    %v4487 = vpack.c.b16 %v4385, %v4379
    %v4488 = vpack.c.b16 %v4386, %v4380
    %v4489 = vpack.c.b16 %v4387, %v4381
    %v4490 = vpack.c.b16 %v4388, %v4382
    %v4491 = vpack.c.b16 %v4389, %v4383
    %v4492 = vpack.c.b16 %v4396, %v4390
    %v4493 = vpack.c.b16 %v4397, %v4391
    %v4494 = vpack.c.b16 %v4398, %v4392
    %v4495 = vpack.c.b16 %v4399, %v4393
    %v4496 = vpack.c.b16 %v4400, %v4394
    %v4497 = vpack.c.b16 %v4401, %v4395
    %4594 = vmatpush.bf16.msra.mxu0 %v4444
    %4595 = vmatpush.bf16.msra.mxu0 %v4438
    %4596 = vmatpush.bf16.msra.mxu0 %v4432
    %4597 = vmatpush.bf16.msra.mxu0 %v4426
    %4598 = vmatpush.bf16.msra.mxu0 %v4420
    %4599 = vmatpush.bf16.msra.mxu0 %v4414
    %4600 = vmatpush.bf16.msra.mxu0 %v4408
    %4601 = vmatpush.bf16.msra.mxu0 %v4402
    %4602 = vmatmul.bf16.gmra.mxu0 %v4010
    %v4603 = vpop.f32.mrf.mxu0
    %v4604 = vadd.f32 0.0, %v4603
    %v4605 = vpop.f32.mrf.mxu0
    %v4606 = vadd.f32 0.0, %v4605
    %4607 = vdwg.mxu0
    %4608 = vmatpush.bf16.msra.mxu0 %v4492
    %4609 = vmatpush.bf16.msra.mxu0 %v4486
    %4610 = vmatpush.bf16.msra.mxu0 %v4480
    %4611 = vmatpush.bf16.msra.mxu0 %v4474
    %4612 = vmatpush.bf16.msra.mxu0 %v4468
    %4613 = vmatpush.bf16.msra.mxu0 %v4462
    %4614 = vmatpush.bf16.msra.mxu0 %v4456
    %4615 = vmatpush.bf16.msra.mxu0 %v4450
    %4616 = vmatmul.bf16.gmra.mxu0 %v4016
    %v4617 = vpop.f32.mrf.mxu0
    %v4618 = vadd.f32 %v4604, %v4617
    %v4619 = vpop.f32.mrf.mxu0
    %v4620 = vadd.f32 %v4606, %v4619
    %4621 = vdwg.mxu0
    %4622 = vmatpush.bf16.msra.mxu0 %v4445
    %4623 = vmatpush.bf16.msra.mxu0 %v4439
    %4624 = vmatpush.bf16.msra.mxu0 %v4433
    %4625 = vmatpush.bf16.msra.mxu0 %v4427
    %4626 = vmatpush.bf16.msra.mxu0 %v4421
    %4627 = vmatpush.bf16.msra.mxu0 %v4415
    %4628 = vmatpush.bf16.msra.mxu0 %v4409
    %4629 = vmatpush.bf16.msra.mxu0 %v4403
    %4630 = vmatmul.bf16.gmra.mxu0 %v4010
    %v4631 = vpop.f32.mrf.mxu0
    %v4632 = vadd.f32 0.0, %v4631
    %v4633 = vpop.f32.mrf.mxu0
    %v4634 = vadd.f32 0.0, %v4633
    %4635 = vdwg.mxu0
    %4636 = vmatpush.bf16.msra.mxu0 %v4493
    %4637 = vmatpush.bf16.msra.mxu0 %v4487
    %4638 = vmatpush.bf16.msra.mxu0 %v4481
    %4639 = vmatpush.bf16.msra.mxu0 %v4475
    %4640 = vmatpush.bf16.msra.mxu0 %v4469
    %4641 = vmatpush.bf16.msra.mxu0 %v4463
    %4642 = vmatpush.bf16.msra.mxu0 %v4457
    %4643 = vmatpush.bf16.msra.mxu0 %v4451
    %4644 = vmatmul.bf16.gmra.mxu0 %v4016
    %v4645 = vpop.f32.mrf.mxu0
    %v4646 = vadd.f32 %v4632, %v4645
    %v4647 = vpop.f32.mrf.mxu0
    %v4648 = vadd.f32 %v4634, %v4647
    %4649 = vdwg.mxu0
    %4650 = vmatpush.bf16.msra.mxu0 %v4446
    %4651 = vmatpush.bf16.msra.mxu0 %v4440
    %4652 = vmatpush.bf16.msra.mxu0 %v4434
    %4653 = vmatpush.bf16.msra.mxu0 %v4428
    %4654 = vmatpush.bf16.msra.mxu0 %v4422
    %4655 = vmatpush.bf16.msra.mxu0 %v4416
    %4656 = vmatpush.bf16.msra.mxu0 %v4410
    %4657 = vmatpush.bf16.msra.mxu0 %v4404
    %4658 = vmatmul.bf16.gmra.mxu0 %v4010
    %v4659 = vpop.f32.mrf.mxu0
    %v4660 = vadd.f32 0.0, %v4659
    %v4661 = vpop.f32.mrf.mxu0
    %v4662 = vadd.f32 0.0, %v4661
    %4663 = vdwg.mxu0
    %4664 = vmatpush.bf16.msra.mxu0 %v4494
    %4665 = vmatpush.bf16.msra.mxu0 %v4488
    %4666 = vmatpush.bf16.msra.mxu0 %v4482
    %4667 = vmatpush.bf16.msra.mxu0 %v4476
    %4668 = vmatpush.bf16.msra.mxu0 %v4470
    %4669 = vmatpush.bf16.msra.mxu0 %v4464
    %4670 = vmatpush.bf16.msra.mxu0 %v4458
    %4671 = vmatpush.bf16.msra.mxu0 %v4452
    %4672 = vmatmul.bf16.gmra.mxu0 %v4016
    %v4673 = vpop.f32.mrf.mxu0
    %v4674 = vadd.f32 %v4660, %v4673
    %v4675 = vpop.f32.mrf.mxu0
    %v4676 = vadd.f32 %v4662, %v4675
    %4677 = vdwg.mxu0
    %4678 = vmatpush.bf16.msra.mxu0 %v4447
    %4679 = vmatpush.bf16.msra.mxu0 %v4441
    %4680 = vmatpush.bf16.msra.mxu0 %v4435
    %4681 = vmatpush.bf16.msra.mxu0 %v4429
    %4682 = vmatpush.bf16.msra.mxu0 %v4423
    %4683 = vmatpush.bf16.msra.mxu0 %v4417
    %4684 = vmatpush.bf16.msra.mxu0 %v4411
    %4685 = vmatpush.bf16.msra.mxu0 %v4405
    %4686 = vmatmul.bf16.gmra.mxu0 %v4010
    %v4687 = vpop.f32.mrf.mxu0
    %v4688 = vadd.f32 0.0, %v4687
    %v4689 = vpop.f32.mrf.mxu0
    %v4690 = vadd.f32 0.0, %v4689
    %4691 = vdwg.mxu0
    %4692 = vmatpush.bf16.msra.mxu0 %v4495
    %4693 = vmatpush.bf16.msra.mxu0 %v4489
    %4694 = vmatpush.bf16.msra.mxu0 %v4483
    %4695 = vmatpush.bf16.msra.mxu0 %v4477
    %4696 = vmatpush.bf16.msra.mxu0 %v4471
    %4697 = vmatpush.bf16.msra.mxu0 %v4465
    %4698 = vmatpush.bf16.msra.mxu0 %v4459
    %4699 = vmatpush.bf16.msra.mxu0 %v4453
    %4700 = vmatmul.bf16.gmra.mxu0 %v4016
    %v4701 = vpop.f32.mrf.mxu0
    %v4702 = vadd.f32 %v4688, %v4701
    %v4703 = vpop.f32.mrf.mxu0
    %v4704 = vadd.f32 %v4690, %v4703
    %4705 = vdwg.mxu0
    %4706 = vmatpush.bf16.msra.mxu0 %v4448
    %4707 = vmatpush.bf16.msra.mxu0 %v4442
    %4708 = vmatpush.bf16.msra.mxu0 %v4436
    %4709 = vmatpush.bf16.msra.mxu0 %v4430
    %4710 = vmatpush.bf16.msra.mxu0 %v4424
    %4711 = vmatpush.bf16.msra.mxu0 %v4418
    %4712 = vmatpush.bf16.msra.mxu0 %v4412
    %4713 = vmatpush.bf16.msra.mxu0 %v4406
    %4714 = vmatmul.bf16.gmra.mxu0 %v4010
    %v4715 = vpop.f32.mrf.mxu0
    %v4716 = vadd.f32 0.0, %v4715
    %v4717 = vpop.f32.mrf.mxu0
    %v4718 = vadd.f32 0.0, %v4717
    %4719 = vdwg.mxu0
    %4720 = vmatpush.bf16.msra.mxu0 %v4496
    %4721 = vmatpush.bf16.msra.mxu0 %v4490
    %4722 = vmatpush.bf16.msra.mxu0 %v4484
    %4723 = vmatpush.bf16.msra.mxu0 %v4478
    %4724 = vmatpush.bf16.msra.mxu0 %v4472
    %4725 = vmatpush.bf16.msra.mxu0 %v4466
    %4726 = vmatpush.bf16.msra.mxu0 %v4460
    %4727 = vmatpush.bf16.msra.mxu0 %v4454
    %4728 = vmatmul.bf16.gmra.mxu0 %v4016
    %v4729 = vpop.f32.mrf.mxu0
    %v4730 = vadd.f32 %v4716, %v4729
    %v4731 = vpop.f32.mrf.mxu0
    %v4732 = vadd.f32 %v4718, %v4731
    %4733 = vdwg.mxu0
    %4734 = vmatpush.bf16.msra.mxu0 %v4449
    %4735 = vmatpush.bf16.msra.mxu0 %v4443
    %4736 = vmatpush.bf16.msra.mxu0 %v4437
    %4737 = vmatpush.bf16.msra.mxu0 %v4431
    %4738 = vmatpush.bf16.msra.mxu0 %v4425
    %4739 = vmatpush.bf16.msra.mxu0 %v4419
    %4740 = vmatpush.bf16.msra.mxu0 %v4413
    %4741 = vmatpush.bf16.msra.mxu0 %v4407
    %4742 = vmatmul.bf16.gmra.mxu0 %v4010
    %v4743 = vpop.f32.mrf.mxu0
    %v4744 = vadd.f32 0.0, %v4743
    %v4745 = vpop.f32.mrf.mxu0
    %v4746 = vadd.f32 0.0, %v4745
    %4747 = vdwg.mxu0
    %4748 = vmatpush.bf16.msra.mxu0 %v4497
    %4749 = vmatpush.bf16.msra.mxu0 %v4491
    %4750 = vmatpush.bf16.msra.mxu0 %v4485
    %4751 = vmatpush.bf16.msra.mxu0 %v4479
    %4752 = vmatpush.bf16.msra.mxu0 %v4473
    %4753 = vmatpush.bf16.msra.mxu0 %v4467
    %4754 = vmatpush.bf16.msra.mxu0 %v4461
    %4755 = vmatpush.bf16.msra.mxu0 %v4455
    %4756 = vmatmul.bf16.gmra.mxu0 %v4016
    %v4757 = vpop.f32.mrf.mxu0
    %v4758 = vadd.f32 %v4744, %v4757
    %v4759 = vpop.f32.mrf.mxu0
    %v4760 = vadd.f32 %v4746, %v4759
    %4761 = vdwg.mxu0
    %v4762 = vld [vmem:[#allocation4 + $0x90] sm:$0xff]
    %v4763 = vld [vmem:[#allocation4 + $0x98] sm:$0xff]
    %v4764 = vld [vmem:[#allocation4 + $0xa0] sm:$0xff]
    %v4765 = vld [vmem:[#allocation4 + $0xa8] sm:$0xff]
    %v4766 = vld [vmem:[#allocation4 + $0xb0] sm:$0xff]
    %v4767 = vld [vmem:[#allocation4 + $0xb8] sm:$0xff]
    %v4768 = vadd.f32 %v4762, %v4618
    %v4769 = vadd.f32 %v4765, %v4620
    %v4770 = vxor.u32 %v4768, 2147483648
    %v4771 = vxor.u32 %v4769, 2147483648
    %v4772 = vmul.f32 %v4770, 1.442695
    %v4773 = vpow.pop %v4772
    %v4774 = vmul.f32 %v4771, 1.442695
    %v4775 = vpow.pop %v4774
    %v4776 = vadd.f32 %v4773, 1.0
    %v4777 = vadd.f32 %v4775, 1.0
    %v4778 = vrcp.pop %v4776
    %v4779 = vmul.f32 %v4776, %v4778
    %v4780 = vsub.f32 1.0, %v4779
    %v4781 = vmul.f32 %v4778, %v4780
    %v4782 = vadd.f32 %v4778, %v4781
    %vm4783 = vweird.f32 %v4776
    %vm4784 = vweird.f32 %v4778
    %vm4785 = vmor %vm4783, %vm4784
    %v4786 = vsel %vm4785, %v4778, %v4782
    %v4787 = vand.u32 2147483647, %v4776
    %vm4788 = vcmp.eq.f32.partialorder %v4787, 8.507059e+37
    %v4789 = vand.u32 %v4776, 2147483648
    %v4790 = vor.u32 1.1754944e-38, %v4789
    %v4791 = vsel %vm4788, %v4790, %v4786
    %v4792 = vmul.f32 1.0, %v4791
    %v4793 = vrcp.pop %v4777
    %v4794 = vmul.f32 %v4777, %v4793
    %v4795 = vsub.f32 1.0, %v4794
    %v4796 = vmul.f32 %v4793, %v4795
    %v4797 = vadd.f32 %v4793, %v4796
    %vm4798 = vweird.f32 %v4777
    %vm4799 = vweird.f32 %v4793
    %vm4800 = vmor %vm4798, %vm4799
    %v4801 = vsel %vm4800, %v4793, %v4797
    %v4802 = vand.u32 2147483647, %v4777
    %vm4803 = vcmp.eq.f32.partialorder %v4802, 8.507059e+37
    %v4804 = vand.u32 %v4777, 2147483648
    %v4805 = vor.u32 1.1754944e-38, %v4804
    %v4806 = vsel %vm4803, %v4805, %v4801
    %v4807 = vmul.f32 1.0, %v4806
    %v4808 = vadd.f32 %v4763, %v4646
    %v4809 = vadd.f32 %v4766, %v4648
    %v4810 = vxor.u32 %v4808, 2147483648
    %v4811 = vxor.u32 %v4809, 2147483648
    %v4812 = vmul.f32 %v4810, 1.442695
    %v4813 = vpow.pop %v4812
    %v4814 = vmul.f32 %v4811, 1.442695
    %v4815 = vpow.pop %v4814
    %v4816 = vadd.f32 %v4813, 1.0
    %v4817 = vadd.f32 %v4815, 1.0
    %v4818 = vrcp.pop %v4816
    %v4819 = vmul.f32 %v4816, %v4818
    %v4820 = vsub.f32 1.0, %v4819
    %v4821 = vmul.f32 %v4818, %v4820
    %v4822 = vadd.f32 %v4818, %v4821
    %vm4823 = vweird.f32 %v4816
    %vm4824 = vweird.f32 %v4818
    %vm4825 = vmor %vm4823, %vm4824
    %v4826 = vsel %vm4825, %v4818, %v4822
    %v4827 = vand.u32 2147483647, %v4816
    %vm4828 = vcmp.eq.f32.partialorder %v4827, 8.507059e+37
    %v4829 = vand.u32 %v4816, 2147483648
    %v4830 = vor.u32 1.1754944e-38, %v4829
    %v4831 = vsel %vm4828, %v4830, %v4826
    %v4832 = vmul.f32 1.0, %v4831
    %v4833 = vrcp.pop %v4817
    %v4834 = vmul.f32 %v4817, %v4833
    %v4835 = vsub.f32 1.0, %v4834
    %v4836 = vmul.f32 %v4833, %v4835
    %v4837 = vadd.f32 %v4833, %v4836
    %vm4838 = vweird.f32 %v4817
    %vm4839 = vweird.f32 %v4833
    %vm4840 = vmor %vm4838, %vm4839
    %v4841 = vsel %vm4840, %v4833, %v4837
    %v4842 = vand.u32 2147483647, %v4817
    %vm4843 = vcmp.eq.f32.partialorder %v4842, 8.507059e+37
    %v4844 = vand.u32 %v4817, 2147483648
    %v4845 = vor.u32 1.1754944e-38, %v4844
    %v4846 = vsel %vm4843, %v4845, %v4841
    %v4847 = vmul.f32 1.0, %v4846
    %v4848 = vadd.f32 %v4674, %v968
    %v4849 = vadd.f32 %v4676, %v968
    %v4850 = vmul.f32 %v4792, %v4848
    %v4851 = vmul.f32 %v4807, %v4849
    %v4852 = vadd.f32 %v4764, %v4850
    %v4853 = vadd.f32 %v4767, %v4851
    %v4854 = vtanh.pop %v4852
    %v4855 = vtanh.pop %v4853
    %v4856 = vsub.f32 1.0, %v4832
    %v4857 = vsub.f32 1.0, %v4847
    %v4858 = vmul.f32 %v4856, %v4854
    %v4859 = vmul.f32 %v4857, %v4855
    %v4860 = vmul.f32 %v4832, %v3976
    %v4861 = vmul.f32 %v4847, %v3977
    %v4862 = vadd.f32 %v4858, %v4860
    %v4863 = vadd.f32 %v4859, %v4861
    %v4864 = vld [vmem:[#allocation5 + $0xc0] sm:$0xff]
    %v4865 = vld [vmem:[#allocation5 + $0xc8] sm:$0xff]
    %v4866 = vld [vmem:[#allocation5 + $0xd0] sm:$0xff]
    %v4867 = vld [vmem:[#allocation5 + $0xd8] sm:$0xff]
    %v4868 = vld [vmem:[#allocation5 + $0xe0] sm:$0xff]
    %v4869 = vld [vmem:[#allocation5 + $0xe8] sm:$0xff]
    %v4870 = vadd.f32 %v4864, %v4702
    %v4871 = vadd.f32 %v4867, %v4704
    %v4872 = vxor.u32 %v4870, 2147483648
    %v4873 = vxor.u32 %v4871, 2147483648
    %v4874 = vmul.f32 %v4872, 1.442695
    %v4875 = vpow.pop %v4874
    %v4876 = vmul.f32 %v4873, 1.442695
    %v4877 = vpow.pop %v4876
    %v4878 = vadd.f32 %v4875, 1.0
    %v4879 = vadd.f32 %v4877, 1.0
    %v4880 = vrcp.pop %v4878
    %v4881 = vmul.f32 %v4878, %v4880
    %v4882 = vsub.f32 1.0, %v4881
    %v4883 = vmul.f32 %v4880, %v4882
    %v4884 = vadd.f32 %v4880, %v4883
    %vm4885 = vweird.f32 %v4878
    %vm4886 = vweird.f32 %v4880
    %vm4887 = vmor %vm4885, %vm4886
    %v4888 = vsel %vm4887, %v4880, %v4884
    %v4889 = vand.u32 2147483647, %v4878
    %vm4890 = vcmp.eq.f32.partialorder %v4889, 8.507059e+37
    %v4891 = vand.u32 %v4878, 2147483648
    %v4892 = vor.u32 1.1754944e-38, %v4891
    %v4893 = vsel %vm4890, %v4892, %v4888
    %v4894 = vmul.f32 1.0, %v4893
    %v4895 = vrcp.pop %v4879
    %v4896 = vmul.f32 %v4879, %v4895
    %v4897 = vsub.f32 1.0, %v4896
    %v4898 = vmul.f32 %v4895, %v4897
    %v4899 = vadd.f32 %v4895, %v4898
    %vm4900 = vweird.f32 %v4879
    %vm4901 = vweird.f32 %v4895
    %vm4902 = vmor %vm4900, %vm4901
    %v4903 = vsel %vm4902, %v4895, %v4899
    %v4904 = vand.u32 2147483647, %v4879
    %vm4905 = vcmp.eq.f32.partialorder %v4904, 8.507059e+37
    %v4906 = vand.u32 %v4879, 2147483648
    %v4907 = vor.u32 1.1754944e-38, %v4906
    %v4908 = vsel %vm4905, %v4907, %v4903
    %v4909 = vmul.f32 1.0, %v4908
    %v4910 = vadd.f32 %v4865, %v4730
    %v4911 = vadd.f32 %v4868, %v4732
    %v4912 = vxor.u32 %v4910, 2147483648
    %v4913 = vxor.u32 %v4911, 2147483648
    %v4914 = vmul.f32 %v4912, 1.442695
    %v4915 = vpow.pop %v4914
    %v4916 = vmul.f32 %v4913, 1.442695
    %v4917 = vpow.pop %v4916
    %v4918 = vadd.f32 %v4915, 1.0
    %v4919 = vadd.f32 %v4917, 1.0
    %v4920 = vrcp.pop %v4918
    %v4921 = vmul.f32 %v4918, %v4920
    %v4922 = vsub.f32 1.0, %v4921
    %v4923 = vmul.f32 %v4920, %v4922
    %v4924 = vadd.f32 %v4920, %v4923
    %vm4925 = vweird.f32 %v4918
    %vm4926 = vweird.f32 %v4920
    %vm4927 = vmor %vm4925, %vm4926
    %v4928 = vsel %vm4927, %v4920, %v4924
    %v4929 = vand.u32 2147483647, %v4918
    %vm4930 = vcmp.eq.f32.partialorder %v4929, 8.507059e+37
    %v4931 = vand.u32 %v4918, 2147483648
    %v4932 = vor.u32 1.1754944e-38, %v4931
    %v4933 = vsel %vm4930, %v4932, %v4928
    %v4934 = vmul.f32 1.0, %v4933
    %v4935 = vrcp.pop %v4919
    %v4936 = vmul.f32 %v4919, %v4935
    %v4937 = vsub.f32 1.0, %v4936
    %v4938 = vmul.f32 %v4935, %v4937
    %v4939 = vadd.f32 %v4935, %v4938
    %vm4940 = vweird.f32 %v4919
    %vm4941 = vweird.f32 %v4935
    %vm4942 = vmor %vm4940, %vm4941
    %v4943 = vsel %vm4942, %v4935, %v4939
    %v4944 = vand.u32 2147483647, %v4919
    %vm4945 = vcmp.eq.f32.partialorder %v4944, 8.507059e+37
    %v4946 = vand.u32 %v4919, 2147483648
    %v4947 = vor.u32 1.1754944e-38, %v4946
    %v4948 = vsel %vm4945, %v4947, %v4943
    %v4949 = vmul.f32 1.0, %v4948
    %v4950 = vadd.f32 %v4758, %v973
    %v4951 = vadd.f32 %v4760, %v973
    %v4952 = vmul.f32 %v4894, %v4950
    %v4953 = vmul.f32 %v4909, %v4951
    %v4954 = vadd.f32 %v4866, %v4952
    %v4955 = vadd.f32 %v4869, %v4953
    %v4956 = vtanh.pop %v4954
    %v4957 = vtanh.pop %v4955
    %v4958 = vsub.f32 1.0, %v4934
    %v4959 = vsub.f32 1.0, %v4949
    %v4960 = vmul.f32 %v4958, %v4956
    %v4961 = vmul.f32 %v4959, %v4957
    %v4962 = vmul.f32 %v4934, %v3988
    %v4963 = vmul.f32 %v4949, %v3989
    %v4964 = vadd.f32 %v4960, %v4962
    %v4965 = vadd.f32 %v4961, %v4963
    %s4966 = sadd.s32 %s107, 3
    %v4967 = vstv %s4966
    %vm4968 = vcmp.lt.s32.totalorder %v4967, %v105
    %vm4969 = vcmp.lt.s32.totalorder %v4967, %v106
    %s4970 = sadd.s32 %s109, 4
    %v4971 = vstv %s4970
    %vm4972 = vcmp.lt.s32.totalorder %v4971, %v105
    %vm4973 = vcmp.lt.s32.totalorder %v4971, %v106
    %v4974 = vsel %vm4968, 1, 0
    %v4975 = vsel %vm4969, 1, 0
    %4976 = vset.pattern.permute.xlu0 0
    %4977 = vperm.xlu0 %4976, %v4974
    %v4978 = vpop.permute.xlu0 %4977
    %4979 = vset.pattern.permute.xlu0 0
    %4980 = vperm.xlu0 %4979, %v4975
    %v4981 = vpop.permute.xlu0 %4980
    %vm4982 = vcmp.eq.s32.totalorder %v4978, 1
    %vm4983 = vcmp.eq.s32.totalorder %v4981, 1
    %v4984 = vsel %vm4982, %v4862, %v3976
    %v4985 = vsel %vm4983, %v4863, %v3977
    %v4986 = vsel %vm4972, 1, 0
    %v4987 = vsel %vm4973, 1, 0
    %4988 = vset.pattern.permute.xlu0 0
    %4989 = vperm.xlu0 %4988, %v4986
    %v4990 = vpop.permute.xlu0 %4989
    %4991 = vset.pattern.permute.xlu0 0
    %4992 = vperm.xlu0 %4991, %v4987
    %v4993 = vpop.permute.xlu0 %4992
    %vm4994 = vcmp.eq.s32.totalorder %v4990, 1
    %vm4995 = vcmp.eq.s32.totalorder %v4993, 1
    %v4996 = vsel %vm4994, %v4964, %v3988
    %v4997 = vsel %vm4995, %v4965, %v3989
    %v4998 = vsel %vm4982, %v4862, 0.0
    %v4999 = vsel %vm4983, %v4863, 0.0
    %v5000 = vpack.c.bf16 %v4998, %v4998
    %v5001 = vpack.c.bf16 %v4999, %v4999
    %5002 = vst [vmem:[%s7 + $0x18] sm:$0xf] %v5000
    %5003 = vst [vmem:[%s7 + $0x1c] sm:$0xf] %v5001
    %v5004 = vsel %vm4994, %v4964, 0.0
    %v5005 = vsel %vm4995, %v4965, 0.0
    %v5006 = vpack.c.bf16 %v5004, %v5004
    %v5007 = vpack.c.bf16 %v5005, %v5005
    %5008 = vst [vmem:[%s94 + $0x20] sm:$0xf] %v5006
    %5009 = vst [vmem:[%s94 + $0x24] sm:$0xf] %v5007
    %v5010 = vpack.c.bf16 %v4984, %v4984
    %v5011 = vpack.c.bf16 %v4985, %v4985
    %v5012 = vpack.c.bf16 %v4996, %v4996
    %v5013 = vpack.c.bf16 %v4997, %v4997
    %v5016 = vunpack.c.l.b16 %v5010
    %v5017 = vunpack.c.l.b16 %v5011
    %v5018 = vpack.c.b16 %v5017, %v5016
    %v5022 = vunpack.c.l.b16 %v5012
    %v5023 = vunpack.c.l.b16 %v5013
    %v5024 = vpack.c.b16 %v5023, %v5022
    %v5026 = vld [vmem:[#allocation8] sm:$0xff]
    %v5027 = vld [vmem:[#allocation8 + $0x8] sm:$0xff]
    %v5028 = vld [vmem:[#allocation8 + $0x10] sm:$0xff]
    %v5029 = vld [vmem:[#allocation8 + $0x18] sm:$0xff]
    %v5030 = vld [vmem:[#allocation8 + $0x20] sm:$0xff]
    %v5031 = vld [vmem:[#allocation8 + $0x28] sm:$0xff]
    %v5032 = vld [vmem:[#allocation8 + $0x30] sm:$0xff]
    %v5033 = vld [vmem:[#allocation8 + $0x38] sm:$0xff]
    %v5034 = vld [vmem:[#allocation8 + $0x40] sm:$0xff]
    %v5035 = vld [vmem:[#allocation8 + $0x48] sm:$0xff]
    %v5036 = vld [vmem:[#allocation8 + $0x50] sm:$0xff]
    %v5037 = vld [vmem:[#allocation8 + $0x58] sm:$0xff]
    %v5038 = vld [vmem:[#allocation8 + $0x60] sm:$0xff]
    %v5039 = vld [vmem:[#allocation8 + $0x68] sm:$0xff]
    %v5040 = vld [vmem:[#allocation8 + $0x70] sm:$0xff]
    %v5041 = vld [vmem:[#allocation8 + $0x78] sm:$0xff]
    %v5042 = vld [vmem:[#allocation8 + $0x80] sm:$0xff]
    %v5043 = vld [vmem:[#allocation8 + $0x88] sm:$0xff]
    %v5044 = vld [vmem:[#allocation8 + $0x90] sm:$0xff]
    %v5045 = vld [vmem:[#allocation8 + $0x98] sm:$0xff]
    %v5046 = vld [vmem:[#allocation8 + $0xa0] sm:$0xff]
    %v5047 = vld [vmem:[#allocation8 + $0xa8] sm:$0xff]
    %v5048 = vld [vmem:[#allocation8 + $0xb0] sm:$0xff]
    %v5049 = vld [vmem:[#allocation8 + $0xb8] sm:$0xff]
    %v5050 = vld [vmem:[#allocation8 + $0xc0] sm:$0xff]
    %v5051 = vld [vmem:[#allocation8 + $0xc8] sm:$0xff]
    %v5052 = vld [vmem:[#allocation8 + $0xd0] sm:$0xff]
    %v5053 = vld [vmem:[#allocation8 + $0xd8] sm:$0xff]
    %v5054 = vld [vmem:[#allocation8 + $0xe0] sm:$0xff]
    %v5055 = vld [vmem:[#allocation8 + $0xe8] sm:$0xff]
    %v5056 = vld [vmem:[#allocation8 + $0xf0] sm:$0xff]
    %v5057 = vld [vmem:[#allocation8 + $0xf8] sm:$0xff]
    %v5058 = vld [vmem:[#allocation8 + $0x100] sm:$0xff]
    %v5059 = vld [vmem:[#allocation8 + $0x108] sm:$0xff]
    %v5060 = vld [vmem:[#allocation8 + $0x110] sm:$0xff]
    %v5061 = vld [vmem:[#allocation8 + $0x118] sm:$0xff]
    %v5062 = vld [vmem:[#allocation8 + $0x120] sm:$0xff]
    %v5063 = vld [vmem:[#allocation8 + $0x128] sm:$0xff]
    %v5064 = vld [vmem:[#allocation8 + $0x130] sm:$0xff]
    %v5065 = vld [vmem:[#allocation8 + $0x138] sm:$0xff]
    %v5066 = vld [vmem:[#allocation8 + $0x140] sm:$0xff]
    %v5067 = vld [vmem:[#allocation8 + $0x148] sm:$0xff]
    %v5068 = vld [vmem:[#allocation8 + $0x150] sm:$0xff]
    %v5069 = vld [vmem:[#allocation8 + $0x158] sm:$0xff]
    %v5070 = vld [vmem:[#allocation8 + $0x160] sm:$0xff]
    %v5071 = vld [vmem:[#allocation8 + $0x168] sm:$0xff]
    %v5072 = vld [vmem:[#allocation8 + $0x170] sm:$0xff]
    %v5073 = vld [vmem:[#allocation8 + $0x178] sm:$0xff]
    %v5074 = vld [vmem:[#allocation8 + $0x180] sm:$0xff]
    %v5075 = vld [vmem:[#allocation8 + $0x188] sm:$0xff]
    %v5076 = vld [vmem:[#allocation8 + $0x190] sm:$0xff]
    %v5077 = vld [vmem:[#allocation8 + $0x198] sm:$0xff]
    %v5078 = vld [vmem:[#allocation8 + $0x1a0] sm:$0xff]
    %v5079 = vld [vmem:[#allocation8 + $0x1a8] sm:$0xff]
    %v5080 = vld [vmem:[#allocation8 + $0x1b0] sm:$0xff]
    %v5081 = vld [vmem:[#allocation8 + $0x1b8] sm:$0xff]
    %v5082 = vld [vmem:[#allocation8 + $0x1c0] sm:$0xff]
    %v5083 = vld [vmem:[#allocation8 + $0x1c8] sm:$0xff]
    %v5084 = vld [vmem:[#allocation8 + $0x1d0] sm:$0xff]
    %v5085 = vld [vmem:[#allocation8 + $0x1d8] sm:$0xff]
    %v5086 = vld [vmem:[#allocation8 + $0x1e0] sm:$0xff]
    %v5087 = vld [vmem:[#allocation8 + $0x1e8] sm:$0xff]
    %v5088 = vld [vmem:[#allocation8 + $0x1f0] sm:$0xff]
    %v5089 = vld [vmem:[#allocation8 + $0x1f8] sm:$0xff]
    %v5090 = vld [vmem:[#allocation8 + $0x200] sm:$0xff]
    %v5091 = vld [vmem:[#allocation8 + $0x208] sm:$0xff]
    %v5092 = vld [vmem:[#allocation8 + $0x210] sm:$0xff]
    %v5093 = vld [vmem:[#allocation8 + $0x218] sm:$0xff]
    %v5094 = vld [vmem:[#allocation8 + $0x220] sm:$0xff]
    %v5095 = vld [vmem:[#allocation8 + $0x228] sm:$0xff]
    %v5096 = vld [vmem:[#allocation8 + $0x230] sm:$0xff]
    %v5097 = vld [vmem:[#allocation8 + $0x238] sm:$0xff]
    %v5098 = vld [vmem:[#allocation8 + $0x240] sm:$0xff]
    %v5099 = vld [vmem:[#allocation8 + $0x248] sm:$0xff]
    %v5100 = vld [vmem:[#allocation8 + $0x250] sm:$0xff]
    %v5101 = vld [vmem:[#allocation8 + $0x258] sm:$0xff]
    %v5102 = vld [vmem:[#allocation8 + $0x260] sm:$0xff]
    %v5103 = vld [vmem:[#allocation8 + $0x268] sm:$0xff]
    %v5104 = vld [vmem:[#allocation8 + $0x270] sm:$0xff]
    %v5105 = vld [vmem:[#allocation8 + $0x278] sm:$0xff]
    %v5106 = vld [vmem:[#allocation8 + $0x280] sm:$0xff]
    %v5107 = vld [vmem:[#allocation8 + $0x288] sm:$0xff]
    %v5108 = vld [vmem:[#allocation8 + $0x290] sm:$0xff]
    %v5109 = vld [vmem:[#allocation8 + $0x298] sm:$0xff]
    %v5110 = vld [vmem:[#allocation8 + $0x2a0] sm:$0xff]
    %v5111 = vld [vmem:[#allocation8 + $0x2a8] sm:$0xff]
    %v5112 = vld [vmem:[#allocation8 + $0x2b0] sm:$0xff]
    %v5113 = vld [vmem:[#allocation8 + $0x2b8] sm:$0xff]
    %v5114 = vld [vmem:[#allocation8 + $0x2c0] sm:$0xff]
    %v5115 = vld [vmem:[#allocation8 + $0x2c8] sm:$0xff]
    %v5116 = vld [vmem:[#allocation8 + $0x2d0] sm:$0xff]
    %v5117 = vld [vmem:[#allocation8 + $0x2d8] sm:$0xff]
    %v5118 = vld [vmem:[#allocation8 + $0x2e0] sm:$0xff]
    %v5119 = vld [vmem:[#allocation8 + $0x2e8] sm:$0xff]
    %v5120 = vld [vmem:[#allocation8 + $0x2f0] sm:$0xff]
    %v5121 = vld [vmem:[#allocation8 + $0x2f8] sm:$0xff]
    %v5218 = vunpack.c.l.b16 %v5026
    %v5219 = vunpack.c.h.b16 %v5026
    %v5220 = vunpack.c.l.b16 %v5027
    %v5221 = vunpack.c.h.b16 %v5027
    %v5222 = vunpack.c.l.b16 %v5028
    %v5223 = vunpack.c.h.b16 %v5028
    %v5224 = vunpack.c.l.b16 %v5029
    %v5225 = vunpack.c.h.b16 %v5029
    %v5226 = vunpack.c.l.b16 %v5030
    %v5227 = vunpack.c.h.b16 %v5030
    %v5228 = vunpack.c.l.b16 %v5031
    %v5229 = vunpack.c.h.b16 %v5031
    %v5230 = vunpack.c.l.b16 %v5032
    %v5231 = vunpack.c.h.b16 %v5032
    %v5232 = vunpack.c.l.b16 %v5033
    %v5233 = vunpack.c.h.b16 %v5033
    %v5234 = vunpack.c.l.b16 %v5034
    %v5235 = vunpack.c.h.b16 %v5034
    %v5236 = vunpack.c.l.b16 %v5035
    %v5237 = vunpack.c.h.b16 %v5035
    %v5238 = vunpack.c.l.b16 %v5036
    %v5239 = vunpack.c.h.b16 %v5036
    %v5240 = vunpack.c.l.b16 %v5037
    %v5241 = vunpack.c.h.b16 %v5037
    %v5242 = vunpack.c.l.b16 %v5038
    %v5243 = vunpack.c.h.b16 %v5038
    %v5244 = vunpack.c.l.b16 %v5039
    %v5245 = vunpack.c.h.b16 %v5039
    %v5246 = vunpack.c.l.b16 %v5040
    %v5247 = vunpack.c.h.b16 %v5040
    %v5248 = vunpack.c.l.b16 %v5041
    %v5249 = vunpack.c.h.b16 %v5041
    %v5250 = vunpack.c.l.b16 %v5042
    %v5251 = vunpack.c.h.b16 %v5042
    %v5252 = vunpack.c.l.b16 %v5043
    %v5253 = vunpack.c.h.b16 %v5043
    %v5254 = vunpack.c.l.b16 %v5044
    %v5255 = vunpack.c.h.b16 %v5044
    %v5256 = vunpack.c.l.b16 %v5045
    %v5257 = vunpack.c.h.b16 %v5045
    %v5258 = vunpack.c.l.b16 %v5046
    %v5259 = vunpack.c.h.b16 %v5046
    %v5260 = vunpack.c.l.b16 %v5047
    %v5261 = vunpack.c.h.b16 %v5047
    %v5262 = vunpack.c.l.b16 %v5048
    %v5263 = vunpack.c.h.b16 %v5048
    %v5264 = vunpack.c.l.b16 %v5049
    %v5265 = vunpack.c.h.b16 %v5049
    %v5266 = vunpack.c.l.b16 %v5050
    %v5267 = vunpack.c.h.b16 %v5050
    %v5268 = vunpack.c.l.b16 %v5051
    %v5269 = vunpack.c.h.b16 %v5051
    %v5270 = vunpack.c.l.b16 %v5052
    %v5271 = vunpack.c.h.b16 %v5052
    %v5272 = vunpack.c.l.b16 %v5053
    %v5273 = vunpack.c.h.b16 %v5053
    %v5274 = vunpack.c.l.b16 %v5054
    %v5275 = vunpack.c.h.b16 %v5054
    %v5276 = vunpack.c.l.b16 %v5055
    %v5277 = vunpack.c.h.b16 %v5055
    %v5278 = vunpack.c.l.b16 %v5056
    %v5279 = vunpack.c.h.b16 %v5056
    %v5280 = vunpack.c.l.b16 %v5057
    %v5281 = vunpack.c.h.b16 %v5057
    %v5282 = vunpack.c.l.b16 %v5058
    %v5283 = vunpack.c.h.b16 %v5058
    %v5284 = vunpack.c.l.b16 %v5059
    %v5285 = vunpack.c.h.b16 %v5059
    %v5286 = vunpack.c.l.b16 %v5060
    %v5287 = vunpack.c.h.b16 %v5060
    %v5288 = vunpack.c.l.b16 %v5061
    %v5289 = vunpack.c.h.b16 %v5061
    %v5290 = vunpack.c.l.b16 %v5062
    %v5291 = vunpack.c.h.b16 %v5062
    %v5292 = vunpack.c.l.b16 %v5063
    %v5293 = vunpack.c.h.b16 %v5063
    %v5294 = vunpack.c.l.b16 %v5064
    %v5295 = vunpack.c.h.b16 %v5064
    %v5296 = vunpack.c.l.b16 %v5065
    %v5297 = vunpack.c.h.b16 %v5065
    %v5298 = vunpack.c.l.b16 %v5066
    %v5299 = vunpack.c.h.b16 %v5066
    %v5300 = vunpack.c.l.b16 %v5067
    %v5301 = vunpack.c.h.b16 %v5067
    %v5302 = vunpack.c.l.b16 %v5068
    %v5303 = vunpack.c.h.b16 %v5068
    %v5304 = vunpack.c.l.b16 %v5069
    %v5305 = vunpack.c.h.b16 %v5069
    %v5306 = vunpack.c.l.b16 %v5070
    %v5307 = vunpack.c.h.b16 %v5070
    %v5308 = vunpack.c.l.b16 %v5071
    %v5309 = vunpack.c.h.b16 %v5071
    %v5310 = vunpack.c.l.b16 %v5072
    %v5311 = vunpack.c.h.b16 %v5072
    %v5312 = vunpack.c.l.b16 %v5073
    %v5313 = vunpack.c.h.b16 %v5073
    %v5314 = vunpack.c.l.b16 %v5074
    %v5315 = vunpack.c.h.b16 %v5074
    %v5316 = vunpack.c.l.b16 %v5075
    %v5317 = vunpack.c.h.b16 %v5075
    %v5318 = vunpack.c.l.b16 %v5076
    %v5319 = vunpack.c.h.b16 %v5076
    %v5320 = vunpack.c.l.b16 %v5077
    %v5321 = vunpack.c.h.b16 %v5077
    %v5322 = vunpack.c.l.b16 %v5078
    %v5323 = vunpack.c.h.b16 %v5078
    %v5324 = vunpack.c.l.b16 %v5079
    %v5325 = vunpack.c.h.b16 %v5079
    %v5326 = vunpack.c.l.b16 %v5080
    %v5327 = vunpack.c.h.b16 %v5080
    %v5328 = vunpack.c.l.b16 %v5081
    %v5329 = vunpack.c.h.b16 %v5081
    %v5330 = vunpack.c.l.b16 %v5082
    %v5331 = vunpack.c.h.b16 %v5082
    %v5332 = vunpack.c.l.b16 %v5083
    %v5333 = vunpack.c.h.b16 %v5083
    %v5334 = vunpack.c.l.b16 %v5084
    %v5335 = vunpack.c.h.b16 %v5084
    %v5336 = vunpack.c.l.b16 %v5085
    %v5337 = vunpack.c.h.b16 %v5085
    %v5338 = vunpack.c.l.b16 %v5086
    %v5339 = vunpack.c.h.b16 %v5086
    %v5340 = vunpack.c.l.b16 %v5087
    %v5341 = vunpack.c.h.b16 %v5087
    %v5342 = vunpack.c.l.b16 %v5088
    %v5343 = vunpack.c.h.b16 %v5088
    %v5344 = vunpack.c.l.b16 %v5089
    %v5345 = vunpack.c.h.b16 %v5089
    %v5346 = vunpack.c.l.b16 %v5090
    %v5347 = vunpack.c.h.b16 %v5090
    %v5348 = vunpack.c.l.b16 %v5091
    %v5349 = vunpack.c.h.b16 %v5091
    %v5350 = vunpack.c.l.b16 %v5092
    %v5351 = vunpack.c.h.b16 %v5092
    %v5352 = vunpack.c.l.b16 %v5093
    %v5353 = vunpack.c.h.b16 %v5093
    %v5354 = vunpack.c.l.b16 %v5094
    %v5355 = vunpack.c.h.b16 %v5094
    %v5356 = vunpack.c.l.b16 %v5095
    %v5357 = vunpack.c.h.b16 %v5095
    %v5358 = vunpack.c.l.b16 %v5096
    %v5359 = vunpack.c.h.b16 %v5096
    %v5360 = vunpack.c.l.b16 %v5097
    %v5361 = vunpack.c.h.b16 %v5097
    %v5362 = vunpack.c.l.b16 %v5098
    %v5363 = vunpack.c.h.b16 %v5098
    %v5364 = vunpack.c.l.b16 %v5099
    %v5365 = vunpack.c.h.b16 %v5099
    %v5366 = vunpack.c.l.b16 %v5100
    %v5367 = vunpack.c.h.b16 %v5100
    %v5368 = vunpack.c.l.b16 %v5101
    %v5369 = vunpack.c.h.b16 %v5101
    %v5370 = vunpack.c.l.b16 %v5102
    %v5371 = vunpack.c.h.b16 %v5102
    %v5372 = vunpack.c.l.b16 %v5103
    %v5373 = vunpack.c.h.b16 %v5103
    %v5374 = vunpack.c.l.b16 %v5104
    %v5375 = vunpack.c.h.b16 %v5104
    %v5376 = vunpack.c.l.b16 %v5105
    %v5377 = vunpack.c.h.b16 %v5105
    %v5378 = vunpack.c.l.b16 %v5106
    %v5379 = vunpack.c.h.b16 %v5106
    %v5380 = vunpack.c.l.b16 %v5107
    %v5381 = vunpack.c.h.b16 %v5107
    %v5382 = vunpack.c.l.b16 %v5108
    %v5383 = vunpack.c.h.b16 %v5108
    %v5384 = vunpack.c.l.b16 %v5109
    %v5385 = vunpack.c.h.b16 %v5109
    %v5386 = vunpack.c.l.b16 %v5110
    %v5387 = vunpack.c.h.b16 %v5110
    %v5388 = vunpack.c.l.b16 %v5111
    %v5389 = vunpack.c.h.b16 %v5111
    %v5390 = vunpack.c.l.b16 %v5112
    %v5391 = vunpack.c.h.b16 %v5112
    %v5392 = vunpack.c.l.b16 %v5113
    %v5393 = vunpack.c.h.b16 %v5113
    %v5394 = vunpack.c.l.b16 %v5114
    %v5395 = vunpack.c.h.b16 %v5114
    %v5396 = vunpack.c.l.b16 %v5115
    %v5397 = vunpack.c.h.b16 %v5115
    %v5398 = vunpack.c.l.b16 %v5116
    %v5399 = vunpack.c.h.b16 %v5116
    %v5400 = vunpack.c.l.b16 %v5117
    %v5401 = vunpack.c.h.b16 %v5117
    %v5402 = vunpack.c.l.b16 %v5118
    %v5403 = vunpack.c.h.b16 %v5118
    %v5404 = vunpack.c.l.b16 %v5119
    %v5405 = vunpack.c.h.b16 %v5119
    %v5406 = vunpack.c.l.b16 %v5120
    %v5407 = vunpack.c.h.b16 %v5120
    %v5408 = vunpack.c.l.b16 %v5121
    %v5409 = vunpack.c.h.b16 %v5121
    %v5410 = vpack.c.b16 %v5224, %v5218
    %v5411 = vpack.c.b16 %v5225, %v5219
    %v5412 = vpack.c.b16 %v5226, %v5220
    %v5413 = vpack.c.b16 %v5227, %v5221
    %v5414 = vpack.c.b16 %v5228, %v5222
    %v5415 = vpack.c.b16 %v5229, %v5223
    %v5416 = vpack.c.b16 %v5236, %v5230
    %v5417 = vpack.c.b16 %v5237, %v5231
    %v5418 = vpack.c.b16 %v5238, %v5232
    %v5419 = vpack.c.b16 %v5239, %v5233
    %v5420 = vpack.c.b16 %v5240, %v5234
    %v5421 = vpack.c.b16 %v5241, %v5235
    %v5422 = vpack.c.b16 %v5248, %v5242
    %v5423 = vpack.c.b16 %v5249, %v5243
    %v5424 = vpack.c.b16 %v5250, %v5244
    %v5425 = vpack.c.b16 %v5251, %v5245
    %v5426 = vpack.c.b16 %v5252, %v5246
    %v5427 = vpack.c.b16 %v5253, %v5247
    %v5428 = vpack.c.b16 %v5260, %v5254
    %v5429 = vpack.c.b16 %v5261, %v5255
    %v5430 = vpack.c.b16 %v5262, %v5256
    %v5431 = vpack.c.b16 %v5263, %v5257
    %v5432 = vpack.c.b16 %v5264, %v5258
    %v5433 = vpack.c.b16 %v5265, %v5259
    %v5434 = vpack.c.b16 %v5272, %v5266
    %v5435 = vpack.c.b16 %v5273, %v5267
    %v5436 = vpack.c.b16 %v5274, %v5268
    %v5437 = vpack.c.b16 %v5275, %v5269
    %v5438 = vpack.c.b16 %v5276, %v5270
    %v5439 = vpack.c.b16 %v5277, %v5271
    %v5440 = vpack.c.b16 %v5284, %v5278
    %v5441 = vpack.c.b16 %v5285, %v5279
    %v5442 = vpack.c.b16 %v5286, %v5280
    %v5443 = vpack.c.b16 %v5287, %v5281
    %v5444 = vpack.c.b16 %v5288, %v5282
    %v5445 = vpack.c.b16 %v5289, %v5283
    %v5446 = vpack.c.b16 %v5296, %v5290
    %v5447 = vpack.c.b16 %v5297, %v5291
    %v5448 = vpack.c.b16 %v5298, %v5292
    %v5449 = vpack.c.b16 %v5299, %v5293
    %v5450 = vpack.c.b16 %v5300, %v5294
    %v5451 = vpack.c.b16 %v5301, %v5295
    %v5452 = vpack.c.b16 %v5308, %v5302
    %v5453 = vpack.c.b16 %v5309, %v5303
    %v5454 = vpack.c.b16 %v5310, %v5304
    %v5455 = vpack.c.b16 %v5311, %v5305
    %v5456 = vpack.c.b16 %v5312, %v5306
    %v5457 = vpack.c.b16 %v5313, %v5307
    %v5458 = vpack.c.b16 %v5320, %v5314
    %v5459 = vpack.c.b16 %v5321, %v5315
    %v5460 = vpack.c.b16 %v5322, %v5316
    %v5461 = vpack.c.b16 %v5323, %v5317
    %v5462 = vpack.c.b16 %v5324, %v5318
    %v5463 = vpack.c.b16 %v5325, %v5319
    %v5464 = vpack.c.b16 %v5332, %v5326
    %v5465 = vpack.c.b16 %v5333, %v5327
    %v5466 = vpack.c.b16 %v5334, %v5328
    %v5467 = vpack.c.b16 %v5335, %v5329
    %v5468 = vpack.c.b16 %v5336, %v5330
    %v5469 = vpack.c.b16 %v5337, %v5331
    %v5470 = vpack.c.b16 %v5344, %v5338
    %v5471 = vpack.c.b16 %v5345, %v5339
    %v5472 = vpack.c.b16 %v5346, %v5340
    %v5473 = vpack.c.b16 %v5347, %v5341
    %v5474 = vpack.c.b16 %v5348, %v5342
    %v5475 = vpack.c.b16 %v5349, %v5343
    %v5476 = vpack.c.b16 %v5356, %v5350
    %v5477 = vpack.c.b16 %v5357, %v5351
    %v5478 = vpack.c.b16 %v5358, %v5352
    %v5479 = vpack.c.b16 %v5359, %v5353
    %v5480 = vpack.c.b16 %v5360, %v5354
    %v5481 = vpack.c.b16 %v5361, %v5355
    %v5482 = vpack.c.b16 %v5368, %v5362
    %v5483 = vpack.c.b16 %v5369, %v5363
    %v5484 = vpack.c.b16 %v5370, %v5364
    %v5485 = vpack.c.b16 %v5371, %v5365
    %v5486 = vpack.c.b16 %v5372, %v5366
    %v5487 = vpack.c.b16 %v5373, %v5367
    %v5488 = vpack.c.b16 %v5380, %v5374
    %v5489 = vpack.c.b16 %v5381, %v5375
    %v5490 = vpack.c.b16 %v5382, %v5376
    %v5491 = vpack.c.b16 %v5383, %v5377
    %v5492 = vpack.c.b16 %v5384, %v5378
    %v5493 = vpack.c.b16 %v5385, %v5379
    %v5494 = vpack.c.b16 %v5392, %v5386
    %v5495 = vpack.c.b16 %v5393, %v5387
    %v5496 = vpack.c.b16 %v5394, %v5388
    %v5497 = vpack.c.b16 %v5395, %v5389
    %v5498 = vpack.c.b16 %v5396, %v5390
    %v5499 = vpack.c.b16 %v5397, %v5391
    %v5500 = vpack.c.b16 %v5404, %v5398
    %v5501 = vpack.c.b16 %v5405, %v5399
    %v5502 = vpack.c.b16 %v5406, %v5400
    %v5503 = vpack.c.b16 %v5407, %v5401
    %v5504 = vpack.c.b16 %v5408, %v5402
    %v5505 = vpack.c.b16 %v5409, %v5403
    %5602 = vmatpush.bf16.msra.mxu0 %v5452
    %5603 = vmatpush.bf16.msra.mxu0 %v5446
    %5604 = vmatpush.bf16.msra.mxu0 %v5440
    %5605 = vmatpush.bf16.msra.mxu0 %v5434
    %5606 = vmatpush.bf16.msra.mxu0 %v5428
    %5607 = vmatpush.bf16.msra.mxu0 %v5422
    %5608 = vmatpush.bf16.msra.mxu0 %v5416
    %5609 = vmatpush.bf16.msra.mxu0 %v5410
    %5610 = vmatmul.bf16.gmra.mxu0 %v5018
    %v5611 = vpop.f32.mrf.mxu0
    %v5612 = vadd.f32 0.0, %v5611
    %v5613 = vpop.f32.mrf.mxu0
    %v5614 = vadd.f32 0.0, %v5613
    %5615 = vdwg.mxu0
    %5616 = vmatpush.bf16.msra.mxu0 %v5500
    %5617 = vmatpush.bf16.msra.mxu0 %v5494
    %5618 = vmatpush.bf16.msra.mxu0 %v5488
    %5619 = vmatpush.bf16.msra.mxu0 %v5482
    %5620 = vmatpush.bf16.msra.mxu0 %v5476
    %5621 = vmatpush.bf16.msra.mxu0 %v5470
    %5622 = vmatpush.bf16.msra.mxu0 %v5464
    %5623 = vmatpush.bf16.msra.mxu0 %v5458
    %5624 = vmatmul.bf16.gmra.mxu0 %v5024
    %v5625 = vpop.f32.mrf.mxu0
    %v5626 = vadd.f32 %v5612, %v5625
    %v5627 = vpop.f32.mrf.mxu0
    %v5628 = vadd.f32 %v5614, %v5627
    %5629 = vdwg.mxu0
    %5630 = vmatpush.bf16.msra.mxu0 %v5453
    %5631 = vmatpush.bf16.msra.mxu0 %v5447
    %5632 = vmatpush.bf16.msra.mxu0 %v5441
    %5633 = vmatpush.bf16.msra.mxu0 %v5435
    %5634 = vmatpush.bf16.msra.mxu0 %v5429
    %5635 = vmatpush.bf16.msra.mxu0 %v5423
    %5636 = vmatpush.bf16.msra.mxu0 %v5417
    %5637 = vmatpush.bf16.msra.mxu0 %v5411
    %5638 = vmatmul.bf16.gmra.mxu0 %v5018
    %v5639 = vpop.f32.mrf.mxu0
    %v5640 = vadd.f32 0.0, %v5639
    %v5641 = vpop.f32.mrf.mxu0
    %v5642 = vadd.f32 0.0, %v5641
    %5643 = vdwg.mxu0
    %5644 = vmatpush.bf16.msra.mxu0 %v5501
    %5645 = vmatpush.bf16.msra.mxu0 %v5495
    %5646 = vmatpush.bf16.msra.mxu0 %v5489
    %5647 = vmatpush.bf16.msra.mxu0 %v5483
    %5648 = vmatpush.bf16.msra.mxu0 %v5477
    %5649 = vmatpush.bf16.msra.mxu0 %v5471
    %5650 = vmatpush.bf16.msra.mxu0 %v5465
    %5651 = vmatpush.bf16.msra.mxu0 %v5459
    %5652 = vmatmul.bf16.gmra.mxu0 %v5024
    %v5653 = vpop.f32.mrf.mxu0
    %v5654 = vadd.f32 %v5640, %v5653
    %v5655 = vpop.f32.mrf.mxu0
    %v5656 = vadd.f32 %v5642, %v5655
    %5657 = vdwg.mxu0
    %5658 = vmatpush.bf16.msra.mxu0 %v5454
    %5659 = vmatpush.bf16.msra.mxu0 %v5448
    %5660 = vmatpush.bf16.msra.mxu0 %v5442
    %5661 = vmatpush.bf16.msra.mxu0 %v5436
    %5662 = vmatpush.bf16.msra.mxu0 %v5430
    %5663 = vmatpush.bf16.msra.mxu0 %v5424
    %5664 = vmatpush.bf16.msra.mxu0 %v5418
    %5665 = vmatpush.bf16.msra.mxu0 %v5412
    %5666 = vmatmul.bf16.gmra.mxu0 %v5018
    %v5667 = vpop.f32.mrf.mxu0
    %v5668 = vadd.f32 0.0, %v5667
    %v5669 = vpop.f32.mrf.mxu0
    %v5670 = vadd.f32 0.0, %v5669
    %5671 = vdwg.mxu0
    %5672 = vmatpush.bf16.msra.mxu0 %v5502
    %5673 = vmatpush.bf16.msra.mxu0 %v5496
    %5674 = vmatpush.bf16.msra.mxu0 %v5490
    %5675 = vmatpush.bf16.msra.mxu0 %v5484
    %5676 = vmatpush.bf16.msra.mxu0 %v5478
    %5677 = vmatpush.bf16.msra.mxu0 %v5472
    %5678 = vmatpush.bf16.msra.mxu0 %v5466
    %5679 = vmatpush.bf16.msra.mxu0 %v5460
    %5680 = vmatmul.bf16.gmra.mxu0 %v5024
    %v5681 = vpop.f32.mrf.mxu0
    %v5682 = vadd.f32 %v5668, %v5681
    %v5683 = vpop.f32.mrf.mxu0
    %v5684 = vadd.f32 %v5670, %v5683
    %5685 = vdwg.mxu0
    %5686 = vmatpush.bf16.msra.mxu0 %v5455
    %5687 = vmatpush.bf16.msra.mxu0 %v5449
    %5688 = vmatpush.bf16.msra.mxu0 %v5443
    %5689 = vmatpush.bf16.msra.mxu0 %v5437
    %5690 = vmatpush.bf16.msra.mxu0 %v5431
    %5691 = vmatpush.bf16.msra.mxu0 %v5425
    %5692 = vmatpush.bf16.msra.mxu0 %v5419
    %5693 = vmatpush.bf16.msra.mxu0 %v5413
    %5694 = vmatmul.bf16.gmra.mxu0 %v5018
    %v5695 = vpop.f32.mrf.mxu0
    %v5696 = vadd.f32 0.0, %v5695
    %v5697 = vpop.f32.mrf.mxu0
    %v5698 = vadd.f32 0.0, %v5697
    %5699 = vdwg.mxu0
    %5700 = vmatpush.bf16.msra.mxu0 %v5503
    %5701 = vmatpush.bf16.msra.mxu0 %v5497
    %5702 = vmatpush.bf16.msra.mxu0 %v5491
    %5703 = vmatpush.bf16.msra.mxu0 %v5485
    %5704 = vmatpush.bf16.msra.mxu0 %v5479
    %5705 = vmatpush.bf16.msra.mxu0 %v5473
    %5706 = vmatpush.bf16.msra.mxu0 %v5467
    %5707 = vmatpush.bf16.msra.mxu0 %v5461
    %5708 = vmatmul.bf16.gmra.mxu0 %v5024
    %v5709 = vpop.f32.mrf.mxu0
    %v5710 = vadd.f32 %v5696, %v5709
    %v5711 = vpop.f32.mrf.mxu0
    %v5712 = vadd.f32 %v5698, %v5711
    %5713 = vdwg.mxu0
    %5714 = vmatpush.bf16.msra.mxu0 %v5456
    %5715 = vmatpush.bf16.msra.mxu0 %v5450
    %5716 = vmatpush.bf16.msra.mxu0 %v5444
    %5717 = vmatpush.bf16.msra.mxu0 %v5438
    %5718 = vmatpush.bf16.msra.mxu0 %v5432
    %5719 = vmatpush.bf16.msra.mxu0 %v5426
    %5720 = vmatpush.bf16.msra.mxu0 %v5420
    %5721 = vmatpush.bf16.msra.mxu0 %v5414
    %5722 = vmatmul.bf16.gmra.mxu0 %v5018
    %v5723 = vpop.f32.mrf.mxu0
    %v5724 = vadd.f32 0.0, %v5723
    %v5725 = vpop.f32.mrf.mxu0
    %v5726 = vadd.f32 0.0, %v5725
    %5727 = vdwg.mxu0
    %5728 = vmatpush.bf16.msra.mxu0 %v5504
    %5729 = vmatpush.bf16.msra.mxu0 %v5498
    %5730 = vmatpush.bf16.msra.mxu0 %v5492
    %5731 = vmatpush.bf16.msra.mxu0 %v5486
    %5732 = vmatpush.bf16.msra.mxu0 %v5480
    %5733 = vmatpush.bf16.msra.mxu0 %v5474
    %5734 = vmatpush.bf16.msra.mxu0 %v5468
    %5735 = vmatpush.bf16.msra.mxu0 %v5462
    %5736 = vmatmul.bf16.gmra.mxu0 %v5024
    %v5737 = vpop.f32.mrf.mxu0
    %v5738 = vadd.f32 %v5724, %v5737
    %v5739 = vpop.f32.mrf.mxu0
    %v5740 = vadd.f32 %v5726, %v5739
    %5741 = vdwg.mxu0
    %5742 = vmatpush.bf16.msra.mxu0 %v5457
    %5743 = vmatpush.bf16.msra.mxu0 %v5451
    %5744 = vmatpush.bf16.msra.mxu0 %v5445
    %5745 = vmatpush.bf16.msra.mxu0 %v5439
    %5746 = vmatpush.bf16.msra.mxu0 %v5433
    %5747 = vmatpush.bf16.msra.mxu0 %v5427
    %5748 = vmatpush.bf16.msra.mxu0 %v5421
    %5749 = vmatpush.bf16.msra.mxu0 %v5415
    %5750 = vmatmul.bf16.gmra.mxu0 %v5018
    %v5751 = vpop.f32.mrf.mxu0
    %v5752 = vadd.f32 0.0, %v5751
    %v5753 = vpop.f32.mrf.mxu0
    %v5754 = vadd.f32 0.0, %v5753
    %5755 = vdwg.mxu0
    %5756 = vmatpush.bf16.msra.mxu0 %v5505
    %5757 = vmatpush.bf16.msra.mxu0 %v5499
    %5758 = vmatpush.bf16.msra.mxu0 %v5493
    %5759 = vmatpush.bf16.msra.mxu0 %v5487
    %5760 = vmatpush.bf16.msra.mxu0 %v5481
    %5761 = vmatpush.bf16.msra.mxu0 %v5475
    %5762 = vmatpush.bf16.msra.mxu0 %v5469
    %5763 = vmatpush.bf16.msra.mxu0 %v5463
    %5764 = vmatmul.bf16.gmra.mxu0 %v5024
    %v5765 = vpop.f32.mrf.mxu0
    %v5766 = vadd.f32 %v5752, %v5765
    %v5767 = vpop.f32.mrf.mxu0
    %v5768 = vadd.f32 %v5754, %v5767
    %5769 = vdwg.mxu0
    %v5770 = vld [vmem:[#allocation4 + $0xc0] sm:$0xff]
    %v5771 = vld [vmem:[#allocation4 + $0xc8] sm:$0xff]
    %v5772 = vld [vmem:[#allocation4 + $0xd0] sm:$0xff]
    %v5773 = vld [vmem:[#allocation4 + $0xd8] sm:$0xff]
    %v5774 = vld [vmem:[#allocation4 + $0xe0] sm:$0xff]
    %v5775 = vld [vmem:[#allocation4 + $0xe8] sm:$0xff]
    %v5776 = vadd.f32 %v5770, %v5626
    %v5777 = vadd.f32 %v5773, %v5628
    %v5778 = vxor.u32 %v5776, 2147483648
    %v5779 = vxor.u32 %v5777, 2147483648
    %v5780 = vmul.f32 %v5778, 1.442695
    %v5781 = vpow.pop %v5780
    %v5782 = vmul.f32 %v5779, 1.442695
    %v5783 = vpow.pop %v5782
    %v5784 = vadd.f32 %v5781, 1.0
    %v5785 = vadd.f32 %v5783, 1.0
    %v5786 = vrcp.pop %v5784
    %v5787 = vmul.f32 %v5784, %v5786
    %v5788 = vsub.f32 1.0, %v5787
    %v5789 = vmul.f32 %v5786, %v5788
    %v5790 = vadd.f32 %v5786, %v5789
    %vm5791 = vweird.f32 %v5784
    %vm5792 = vweird.f32 %v5786
    %vm5793 = vmor %vm5791, %vm5792
    %v5794 = vsel %vm5793, %v5786, %v5790
    %v5795 = vand.u32 2147483647, %v5784
    %vm5796 = vcmp.eq.f32.partialorder %v5795, 8.507059e+37
    %v5797 = vand.u32 %v5784, 2147483648
    %v5798 = vor.u32 1.1754944e-38, %v5797
    %v5799 = vsel %vm5796, %v5798, %v5794
    %v5800 = vmul.f32 1.0, %v5799
    %v5801 = vrcp.pop %v5785
    %v5802 = vmul.f32 %v5785, %v5801
    %v5803 = vsub.f32 1.0, %v5802
    %v5804 = vmul.f32 %v5801, %v5803
    %v5805 = vadd.f32 %v5801, %v5804
    %vm5806 = vweird.f32 %v5785
    %vm5807 = vweird.f32 %v5801
    %vm5808 = vmor %vm5806, %vm5807
    %v5809 = vsel %vm5808, %v5801, %v5805
    %v5810 = vand.u32 2147483647, %v5785
    %vm5811 = vcmp.eq.f32.partialorder %v5810, 8.507059e+37
    %v5812 = vand.u32 %v5785, 2147483648
    %v5813 = vor.u32 1.1754944e-38, %v5812
    %v5814 = vsel %vm5811, %v5813, %v5809
    %v5815 = vmul.f32 1.0, %v5814
    %v5816 = vadd.f32 %v5771, %v5654
    %v5817 = vadd.f32 %v5774, %v5656
    %v5818 = vxor.u32 %v5816, 2147483648
    %v5819 = vxor.u32 %v5817, 2147483648
    %v5820 = vmul.f32 %v5818, 1.442695
    %v5821 = vpow.pop %v5820
    %v5822 = vmul.f32 %v5819, 1.442695
    %v5823 = vpow.pop %v5822
    %v5824 = vadd.f32 %v5821, 1.0
    %v5825 = vadd.f32 %v5823, 1.0
    %v5826 = vrcp.pop %v5824
    %v5827 = vmul.f32 %v5824, %v5826
    %v5828 = vsub.f32 1.0, %v5827
    %v5829 = vmul.f32 %v5826, %v5828
    %v5830 = vadd.f32 %v5826, %v5829
    %vm5831 = vweird.f32 %v5824
    %vm5832 = vweird.f32 %v5826
    %vm5833 = vmor %vm5831, %vm5832
    %v5834 = vsel %vm5833, %v5826, %v5830
    %v5835 = vand.u32 2147483647, %v5824
    %vm5836 = vcmp.eq.f32.partialorder %v5835, 8.507059e+37
    %v5837 = vand.u32 %v5824, 2147483648
    %v5838 = vor.u32 1.1754944e-38, %v5837
    %v5839 = vsel %vm5836, %v5838, %v5834
    %v5840 = vmul.f32 1.0, %v5839
    %v5841 = vrcp.pop %v5825
    %v5842 = vmul.f32 %v5825, %v5841
    %v5843 = vsub.f32 1.0, %v5842
    %v5844 = vmul.f32 %v5841, %v5843
    %v5845 = vadd.f32 %v5841, %v5844
    %vm5846 = vweird.f32 %v5825
    %vm5847 = vweird.f32 %v5841
    %vm5848 = vmor %vm5846, %vm5847
    %v5849 = vsel %vm5848, %v5841, %v5845
    %v5850 = vand.u32 2147483647, %v5825
    %vm5851 = vcmp.eq.f32.partialorder %v5850, 8.507059e+37
    %v5852 = vand.u32 %v5825, 2147483648
    %v5853 = vor.u32 1.1754944e-38, %v5852
    %v5854 = vsel %vm5851, %v5853, %v5849
    %v5855 = vmul.f32 1.0, %v5854
    %v5856 = vadd.f32 %v5682, %v968
    %v5857 = vadd.f32 %v5684, %v968
    %v5858 = vmul.f32 %v5800, %v5856
    %v5859 = vmul.f32 %v5815, %v5857
    %v5860 = vadd.f32 %v5772, %v5858
    %v5861 = vadd.f32 %v5775, %v5859
    %v5862 = vtanh.pop %v5860
    %v5863 = vtanh.pop %v5861
    %v5864 = vsub.f32 1.0, %v5840
    %v5865 = vsub.f32 1.0, %v5855
    %v5866 = vmul.f32 %v5864, %v5862
    %v5867 = vmul.f32 %v5865, %v5863
    %v5868 = vmul.f32 %v5840, %v4984
    %v5869 = vmul.f32 %v5855, %v4985
    %v5870 = vadd.f32 %v5866, %v5868
    %v5871 = vadd.f32 %v5867, %v5869
    %v5872 = vld [vmem:[#allocation5 + $0x90] sm:$0xff]
    %v5873 = vld [vmem:[#allocation5 + $0x98] sm:$0xff]
    %v5874 = vld [vmem:[#allocation5 + $0xa0] sm:$0xff]
    %v5875 = vld [vmem:[#allocation5 + $0xa8] sm:$0xff]
    %v5876 = vld [vmem:[#allocation5 + $0xb0] sm:$0xff]
    %v5877 = vld [vmem:[#allocation5 + $0xb8] sm:$0xff]
    %v5878 = vadd.f32 %v5872, %v5710
    %v5879 = vadd.f32 %v5875, %v5712
    %v5880 = vxor.u32 %v5878, 2147483648
    %v5881 = vxor.u32 %v5879, 2147483648
    %v5882 = vmul.f32 %v5880, 1.442695
    %v5883 = vpow.pop %v5882
    %v5884 = vmul.f32 %v5881, 1.442695
    %v5885 = vpow.pop %v5884
    %v5886 = vadd.f32 %v5883, 1.0
    %v5887 = vadd.f32 %v5885, 1.0
    %v5888 = vrcp.pop %v5886
    %v5889 = vmul.f32 %v5886, %v5888
    %v5890 = vsub.f32 1.0, %v5889
    %v5891 = vmul.f32 %v5888, %v5890
    %v5892 = vadd.f32 %v5888, %v5891
    %vm5893 = vweird.f32 %v5886
    %vm5894 = vweird.f32 %v5888
    %vm5895 = vmor %vm5893, %vm5894
    %v5896 = vsel %vm5895, %v5888, %v5892
    %v5897 = vand.u32 2147483647, %v5886
    %vm5898 = vcmp.eq.f32.partialorder %v5897, 8.507059e+37
    %v5899 = vand.u32 %v5886, 2147483648
    %v5900 = vor.u32 1.1754944e-38, %v5899
    %v5901 = vsel %vm5898, %v5900, %v5896
    %v5902 = vmul.f32 1.0, %v5901
    %v5903 = vrcp.pop %v5887
    %v5904 = vmul.f32 %v5887, %v5903
    %v5905 = vsub.f32 1.0, %v5904
    %v5906 = vmul.f32 %v5903, %v5905
    %v5907 = vadd.f32 %v5903, %v5906
    %vm5908 = vweird.f32 %v5887
    %vm5909 = vweird.f32 %v5903
    %vm5910 = vmor %vm5908, %vm5909
    %v5911 = vsel %vm5910, %v5903, %v5907
    %v5912 = vand.u32 2147483647, %v5887
    %vm5913 = vcmp.eq.f32.partialorder %v5912, 8.507059e+37
    %v5914 = vand.u32 %v5887, 2147483648
    %v5915 = vor.u32 1.1754944e-38, %v5914
    %v5916 = vsel %vm5913, %v5915, %v5911
    %v5917 = vmul.f32 1.0, %v5916
    %v5918 = vadd.f32 %v5873, %v5738
    %v5919 = vadd.f32 %v5876, %v5740
    %v5920 = vxor.u32 %v5918, 2147483648
    %v5921 = vxor.u32 %v5919, 2147483648
    %v5922 = vmul.f32 %v5920, 1.442695
    %v5923 = vpow.pop %v5922
    %v5924 = vmul.f32 %v5921, 1.442695
    %v5925 = vpow.pop %v5924
    %v5926 = vadd.f32 %v5923, 1.0
    %v5927 = vadd.f32 %v5925, 1.0
    %v5928 = vrcp.pop %v5926
    %v5929 = vmul.f32 %v5926, %v5928
    %v5930 = vsub.f32 1.0, %v5929
    %v5931 = vmul.f32 %v5928, %v5930
    %v5932 = vadd.f32 %v5928, %v5931
    %vm5933 = vweird.f32 %v5926
    %vm5934 = vweird.f32 %v5928
    %vm5935 = vmor %vm5933, %vm5934
    %v5936 = vsel %vm5935, %v5928, %v5932
    %v5937 = vand.u32 2147483647, %v5926
    %vm5938 = vcmp.eq.f32.partialorder %v5937, 8.507059e+37
    %v5939 = vand.u32 %v5926, 2147483648
    %v5940 = vor.u32 1.1754944e-38, %v5939
    %v5941 = vsel %vm5938, %v5940, %v5936
    %v5942 = vmul.f32 1.0, %v5941
    %v5943 = vrcp.pop %v5927
    %v5944 = vmul.f32 %v5927, %v5943
    %v5945 = vsub.f32 1.0, %v5944
    %v5946 = vmul.f32 %v5943, %v5945
    %v5947 = vadd.f32 %v5943, %v5946
    %vm5948 = vweird.f32 %v5927
    %vm5949 = vweird.f32 %v5943
    %vm5950 = vmor %vm5948, %vm5949
    %v5951 = vsel %vm5950, %v5943, %v5947
    %v5952 = vand.u32 2147483647, %v5927
    %vm5953 = vcmp.eq.f32.partialorder %v5952, 8.507059e+37
    %v5954 = vand.u32 %v5927, 2147483648
    %v5955 = vor.u32 1.1754944e-38, %v5954
    %v5956 = vsel %vm5953, %v5955, %v5951
    %v5957 = vmul.f32 1.0, %v5956
    %v5958 = vadd.f32 %v5766, %v973
    %v5959 = vadd.f32 %v5768, %v973
    %v5960 = vmul.f32 %v5902, %v5958
    %v5961 = vmul.f32 %v5917, %v5959
    %v5962 = vadd.f32 %v5874, %v5960
    %v5963 = vadd.f32 %v5877, %v5961
    %v5964 = vtanh.pop %v5962
    %v5965 = vtanh.pop %v5963
    %v5966 = vsub.f32 1.0, %v5942
    %v5967 = vsub.f32 1.0, %v5957
    %v5968 = vmul.f32 %v5966, %v5964
    %v5969 = vmul.f32 %v5967, %v5965
    %v5970 = vmul.f32 %v5942, %v4996
    %v5971 = vmul.f32 %v5957, %v4997
    %v5972 = vadd.f32 %v5968, %v5970
    %v5973 = vadd.f32 %v5969, %v5971
    %s5974 = sadd.s32 %s107, 4
    %v5975 = vstv %s5974
    %vm5976 = vcmp.lt.s32.totalorder %v5975, %v105
    %vm5977 = vcmp.lt.s32.totalorder %v5975, %v106
    %s5978 = sadd.s32 %s109, 3
    %v5979 = vstv %s5978
    %vm5980 = vcmp.lt.s32.totalorder %v5979, %v105
    %vm5981 = vcmp.lt.s32.totalorder %v5979, %v106
    %v5982 = vsel %vm5976, 1, 0
    %v5983 = vsel %vm5977, 1, 0
    %5984 = vset.pattern.permute.xlu0 0
    %5985 = vperm.xlu0 %5984, %v5982
    %v5986 = vpop.permute.xlu0 %5985
    %5987 = vset.pattern.permute.xlu0 0
    %5988 = vperm.xlu0 %5987, %v5983
    %v5989 = vpop.permute.xlu0 %5988
    %vm5990 = vcmp.eq.s32.totalorder %v5986, 1
    %vm5991 = vcmp.eq.s32.totalorder %v5989, 1
    %v5992 = vsel %vm5990, %v5870, %v4984
    %v5993 = vsel %vm5991, %v5871, %v4985
    %v5994 = vsel %vm5980, 1, 0
    %v5995 = vsel %vm5981, 1, 0
    %5996 = vset.pattern.permute.xlu0 0
    %5997 = vperm.xlu0 %5996, %v5994
    %v5998 = vpop.permute.xlu0 %5997
    %5999 = vset.pattern.permute.xlu0 0
    %6000 = vperm.xlu0 %5999, %v5995
    %v6001 = vpop.permute.xlu0 %6000
    %vm6002 = vcmp.eq.s32.totalorder %v5998, 1
    %vm6003 = vcmp.eq.s32.totalorder %v6001, 1
    %v6004 = vsel %vm6002, %v5972, %v4996
    %v6005 = vsel %vm6003, %v5973, %v4997
    %v6006 = vsel %vm5990, %v5870, 0.0
    %v6007 = vsel %vm5991, %v5871, 0.0
    %v6008 = vpack.c.bf16 %v6006, %v6006
    %v6009 = vpack.c.bf16 %v6007, %v6007
    %6010 = vst [vmem:[%s7 + $0x20] sm:$0xf] %v6008
    %6011 = vst [vmem:[%s7 + $0x24] sm:$0xf] %v6009
    %v6012 = vsel %vm6002, %v5972, 0.0
    %v6013 = vsel %vm6003, %v5973, 0.0
    %v6014 = vpack.c.bf16 %v6012, %v6012
    %v6015 = vpack.c.bf16 %v6013, %v6013
    %6016 = vst [vmem:[%s94 + $0x18] sm:$0xf] %v6014
    %6017 = vst [vmem:[%s94 + $0x1c] sm:$0xf] %v6015
    %v6018 = vpack.c.bf16 %v5992, %v5992
    %v6019 = vpack.c.bf16 %v5993, %v5993
    %v6020 = vpack.c.bf16 %v6004, %v6004
    %v6021 = vpack.c.bf16 %v6005, %v6005
    %v6024 = vunpack.c.l.b16 %v6018
    %v6025 = vunpack.c.l.b16 %v6019
    %v6026 = vpack.c.b16 %v6025, %v6024
    %v6030 = vunpack.c.l.b16 %v6020
    %v6031 = vunpack.c.l.b16 %v6021
    %v6032 = vpack.c.b16 %v6031, %v6030
    %v6034 = vld [vmem:[#allocation8] sm:$0xff]
    %v6035 = vld [vmem:[#allocation8 + $0x8] sm:$0xff]
    %v6036 = vld [vmem:[#allocation8 + $0x10] sm:$0xff]
    %v6037 = vld [vmem:[#allocation8 + $0x18] sm:$0xff]
    %v6038 = vld [vmem:[#allocation8 + $0x20] sm:$0xff]
    %v6039 = vld [vmem:[#allocation8 + $0x28] sm:$0xff]
    %v6040 = vld [vmem:[#allocation8 + $0x30] sm:$0xff]
    %v6041 = vld [vmem:[#allocation8 + $0x38] sm:$0xff]
    %v6042 = vld [vmem:[#allocation8 + $0x40] sm:$0xff]
    %v6043 = vld [vmem:[#allocation8 + $0x48] sm:$0xff]
    %v6044 = vld [vmem:[#allocation8 + $0x50] sm:$0xff]
    %v6045 = vld [vmem:[#allocation8 + $0x58] sm:$0xff]
    %v6046 = vld [vmem:[#allocation8 + $0x60] sm:$0xff]
    %v6047 = vld [vmem:[#allocation8 + $0x68] sm:$0xff]
    %v6048 = vld [vmem:[#allocation8 + $0x70] sm:$0xff]
    %v6049 = vld [vmem:[#allocation8 + $0x78] sm:$0xff]
    %v6050 = vld [vmem:[#allocation8 + $0x80] sm:$0xff]
    %v6051 = vld [vmem:[#allocation8 + $0x88] sm:$0xff]
    %v6052 = vld [vmem:[#allocation8 + $0x90] sm:$0xff]
    %v6053 = vld [vmem:[#allocation8 + $0x98] sm:$0xff]
    %v6054 = vld [vmem:[#allocation8 + $0xa0] sm:$0xff]
    %v6055 = vld [vmem:[#allocation8 + $0xa8] sm:$0xff]
    %v6056 = vld [vmem:[#allocation8 + $0xb0] sm:$0xff]
    %v6057 = vld [vmem:[#allocation8 + $0xb8] sm:$0xff]
    %v6058 = vld [vmem:[#allocation8 + $0xc0] sm:$0xff]
    %v6059 = vld [vmem:[#allocation8 + $0xc8] sm:$0xff]
    %v6060 = vld [vmem:[#allocation8 + $0xd0] sm:$0xff]
    %v6061 = vld [vmem:[#allocation8 + $0xd8] sm:$0xff]
    %v6062 = vld [vmem:[#allocation8 + $0xe0] sm:$0xff]
    %v6063 = vld [vmem:[#allocation8 + $0xe8] sm:$0xff]
    %v6064 = vld [vmem:[#allocation8 + $0xf0] sm:$0xff]
    %v6065 = vld [vmem:[#allocation8 + $0xf8] sm:$0xff]
    %v6066 = vld [vmem:[#allocation8 + $0x100] sm:$0xff]
    %v6067 = vld [vmem:[#allocation8 + $0x108] sm:$0xff]
    %v6068 = vld [vmem:[#allocation8 + $0x110] sm:$0xff]
    %v6069 = vld [vmem:[#allocation8 + $0x118] sm:$0xff]
    %v6070 = vld [vmem:[#allocation8 + $0x120] sm:$0xff]
    %v6071 = vld [vmem:[#allocation8 + $0x128] sm:$0xff]
    %v6072 = vld [vmem:[#allocation8 + $0x130] sm:$0xff]
    %v6073 = vld [vmem:[#allocation8 + $0x138] sm:$0xff]
    %v6074 = vld [vmem:[#allocation8 + $0x140] sm:$0xff]
    %v6075 = vld [vmem:[#allocation8 + $0x148] sm:$0xff]
    %v6076 = vld [vmem:[#allocation8 + $0x150] sm:$0xff]
    %v6077 = vld [vmem:[#allocation8 + $0x158] sm:$0xff]
    %v6078 = vld [vmem:[#allocation8 + $0x160] sm:$0xff]
    %v6079 = vld [vmem:[#allocation8 + $0x168] sm:$0xff]
    %v6080 = vld [vmem:[#allocation8 + $0x170] sm:$0xff]
    %v6081 = vld [vmem:[#allocation8 + $0x178] sm:$0xff]
    %v6082 = vld [vmem:[#allocation8 + $0x180] sm:$0xff]
    %v6083 = vld [vmem:[#allocation8 + $0x188] sm:$0xff]
    %v6084 = vld [vmem:[#allocation8 + $0x190] sm:$0xff]
    %v6085 = vld [vmem:[#allocation8 + $0x198] sm:$0xff]
    %v6086 = vld [vmem:[#allocation8 + $0x1a0] sm:$0xff]
    %v6087 = vld [vmem:[#allocation8 + $0x1a8] sm:$0xff]
    %v6088 = vld [vmem:[#allocation8 + $0x1b0] sm:$0xff]
    %v6089 = vld [vmem:[#allocation8 + $0x1b8] sm:$0xff]
    %v6090 = vld [vmem:[#allocation8 + $0x1c0] sm:$0xff]
    %v6091 = vld [vmem:[#allocation8 + $0x1c8] sm:$0xff]
    %v6092 = vld [vmem:[#allocation8 + $0x1d0] sm:$0xff]
    %v6093 = vld [vmem:[#allocation8 + $0x1d8] sm:$0xff]
    %v6094 = vld [vmem:[#allocation8 + $0x1e0] sm:$0xff]
    %v6095 = vld [vmem:[#allocation8 + $0x1e8] sm:$0xff]
    %v6096 = vld [vmem:[#allocation8 + $0x1f0] sm:$0xff]
    %v6097 = vld [vmem:[#allocation8 + $0x1f8] sm:$0xff]
    %v6098 = vld [vmem:[#allocation8 + $0x200] sm:$0xff]
    %v6099 = vld [vmem:[#allocation8 + $0x208] sm:$0xff]
    %v6100 = vld [vmem:[#allocation8 + $0x210] sm:$0xff]
    %v6101 = vld [vmem:[#allocation8 + $0x218] sm:$0xff]
    %v6102 = vld [vmem:[#allocation8 + $0x220] sm:$0xff]
    %v6103 = vld [vmem:[#allocation8 + $0x228] sm:$0xff]
    %v6104 = vld [vmem:[#allocation8 + $0x230] sm:$0xff]
    %v6105 = vld [vmem:[#allocation8 + $0x238] sm:$0xff]
    %v6106 = vld [vmem:[#allocation8 + $0x240] sm:$0xff]
    %v6107 = vld [vmem:[#allocation8 + $0x248] sm:$0xff]
    %v6108 = vld [vmem:[#allocation8 + $0x250] sm:$0xff]
    %v6109 = vld [vmem:[#allocation8 + $0x258] sm:$0xff]
    %v6110 = vld [vmem:[#allocation8 + $0x260] sm:$0xff]
    %v6111 = vld [vmem:[#allocation8 + $0x268] sm:$0xff]
    %v6112 = vld [vmem:[#allocation8 + $0x270] sm:$0xff]
    %v6113 = vld [vmem:[#allocation8 + $0x278] sm:$0xff]
    %v6114 = vld [vmem:[#allocation8 + $0x280] sm:$0xff]
    %v6115 = vld [vmem:[#allocation8 + $0x288] sm:$0xff]
    %v6116 = vld [vmem:[#allocation8 + $0x290] sm:$0xff]
    %v6117 = vld [vmem:[#allocation8 + $0x298] sm:$0xff]
    %v6118 = vld [vmem:[#allocation8 + $0x2a0] sm:$0xff]
    %v6119 = vld [vmem:[#allocation8 + $0x2a8] sm:$0xff]
    %v6120 = vld [vmem:[#allocation8 + $0x2b0] sm:$0xff]
    %v6121 = vld [vmem:[#allocation8 + $0x2b8] sm:$0xff]
    %v6122 = vld [vmem:[#allocation8 + $0x2c0] sm:$0xff]
    %v6123 = vld [vmem:[#allocation8 + $0x2c8] sm:$0xff]
    %v6124 = vld [vmem:[#allocation8 + $0x2d0] sm:$0xff]
    %v6125 = vld [vmem:[#allocation8 + $0x2d8] sm:$0xff]
    %v6126 = vld [vmem:[#allocation8 + $0x2e0] sm:$0xff]
    %v6127 = vld [vmem:[#allocation8 + $0x2e8] sm:$0xff]
    %v6128 = vld [vmem:[#allocation8 + $0x2f0] sm:$0xff]
    %v6129 = vld [vmem:[#allocation8 + $0x2f8] sm:$0xff]
    %v6226 = vunpack.c.l.b16 %v6034
    %v6227 = vunpack.c.h.b16 %v6034
    %v6228 = vunpack.c.l.b16 %v6035
    %v6229 = vunpack.c.h.b16 %v6035
    %v6230 = vunpack.c.l.b16 %v6036
    %v6231 = vunpack.c.h.b16 %v6036
    %v6232 = vunpack.c.l.b16 %v6037
    %v6233 = vunpack.c.h.b16 %v6037
    %v6234 = vunpack.c.l.b16 %v6038
    %v6235 = vunpack.c.h.b16 %v6038
    %v6236 = vunpack.c.l.b16 %v6039
    %v6237 = vunpack.c.h.b16 %v6039
    %v6238 = vunpack.c.l.b16 %v6040
    %v6239 = vunpack.c.h.b16 %v6040
    %v6240 = vunpack.c.l.b16 %v6041
    %v6241 = vunpack.c.h.b16 %v6041
    %v6242 = vunpack.c.l.b16 %v6042
    %v6243 = vunpack.c.h.b16 %v6042
    %v6244 = vunpack.c.l.b16 %v6043
    %v6245 = vunpack.c.h.b16 %v6043
    %v6246 = vunpack.c.l.b16 %v6044
    %v6247 = vunpack.c.h.b16 %v6044
    %v6248 = vunpack.c.l.b16 %v6045
    %v6249 = vunpack.c.h.b16 %v6045
    %v6250 = vunpack.c.l.b16 %v6046
    %v6251 = vunpack.c.h.b16 %v6046
    %v6252 = vunpack.c.l.b16 %v6047
    %v6253 = vunpack.c.h.b16 %v6047
    %v6254 = vunpack.c.l.b16 %v6048
    %v6255 = vunpack.c.h.b16 %v6048
    %v6256 = vunpack.c.l.b16 %v6049
    %v6257 = vunpack.c.h.b16 %v6049
    %v6258 = vunpack.c.l.b16 %v6050
    %v6259 = vunpack.c.h.b16 %v6050
    %v6260 = vunpack.c.l.b16 %v6051
    %v6261 = vunpack.c.h.b16 %v6051
    %v6262 = vunpack.c.l.b16 %v6052
    %v6263 = vunpack.c.h.b16 %v6052
    %v6264 = vunpack.c.l.b16 %v6053
    %v6265 = vunpack.c.h.b16 %v6053
    %v6266 = vunpack.c.l.b16 %v6054
    %v6267 = vunpack.c.h.b16 %v6054
    %v6268 = vunpack.c.l.b16 %v6055
    %v6269 = vunpack.c.h.b16 %v6055
    %v6270 = vunpack.c.l.b16 %v6056
    %v6271 = vunpack.c.h.b16 %v6056
    %v6272 = vunpack.c.l.b16 %v6057
    %v6273 = vunpack.c.h.b16 %v6057
    %v6274 = vunpack.c.l.b16 %v6058
    %v6275 = vunpack.c.h.b16 %v6058
    %v6276 = vunpack.c.l.b16 %v6059
    %v6277 = vunpack.c.h.b16 %v6059
    %v6278 = vunpack.c.l.b16 %v6060
    %v6279 = vunpack.c.h.b16 %v6060
    %v6280 = vunpack.c.l.b16 %v6061
    %v6281 = vunpack.c.h.b16 %v6061
    %v6282 = vunpack.c.l.b16 %v6062
    %v6283 = vunpack.c.h.b16 %v6062
    %v6284 = vunpack.c.l.b16 %v6063
    %v6285 = vunpack.c.h.b16 %v6063
    %v6286 = vunpack.c.l.b16 %v6064
    %v6287 = vunpack.c.h.b16 %v6064
    %v6288 = vunpack.c.l.b16 %v6065
    %v6289 = vunpack.c.h.b16 %v6065
    %v6290 = vunpack.c.l.b16 %v6066
    %v6291 = vunpack.c.h.b16 %v6066
    %v6292 = vunpack.c.l.b16 %v6067
    %v6293 = vunpack.c.h.b16 %v6067
    %v6294 = vunpack.c.l.b16 %v6068
    %v6295 = vunpack.c.h.b16 %v6068
    %v6296 = vunpack.c.l.b16 %v6069
    %v6297 = vunpack.c.h.b16 %v6069
    %v6298 = vunpack.c.l.b16 %v6070
    %v6299 = vunpack.c.h.b16 %v6070
    %v6300 = vunpack.c.l.b16 %v6071
    %v6301 = vunpack.c.h.b16 %v6071
    %v6302 = vunpack.c.l.b16 %v6072
    %v6303 = vunpack.c.h.b16 %v6072
    %v6304 = vunpack.c.l.b16 %v6073
    %v6305 = vunpack.c.h.b16 %v6073
    %v6306 = vunpack.c.l.b16 %v6074
    %v6307 = vunpack.c.h.b16 %v6074
    %v6308 = vunpack.c.l.b16 %v6075
    %v6309 = vunpack.c.h.b16 %v6075
    %v6310 = vunpack.c.l.b16 %v6076
    %v6311 = vunpack.c.h.b16 %v6076
    %v6312 = vunpack.c.l.b16 %v6077
    %v6313 = vunpack.c.h.b16 %v6077
    %v6314 = vunpack.c.l.b16 %v6078
    %v6315 = vunpack.c.h.b16 %v6078
    %v6316 = vunpack.c.l.b16 %v6079
    %v6317 = vunpack.c.h.b16 %v6079
    %v6318 = vunpack.c.l.b16 %v6080
    %v6319 = vunpack.c.h.b16 %v6080
    %v6320 = vunpack.c.l.b16 %v6081
    %v6321 = vunpack.c.h.b16 %v6081
    %v6322 = vunpack.c.l.b16 %v6082
    %v6323 = vunpack.c.h.b16 %v6082
    %v6324 = vunpack.c.l.b16 %v6083
    %v6325 = vunpack.c.h.b16 %v6083
    %v6326 = vunpack.c.l.b16 %v6084
    %v6327 = vunpack.c.h.b16 %v6084
    %v6328 = vunpack.c.l.b16 %v6085
    %v6329 = vunpack.c.h.b16 %v6085
    %v6330 = vunpack.c.l.b16 %v6086
    %v6331 = vunpack.c.h.b16 %v6086
    %v6332 = vunpack.c.l.b16 %v6087
    %v6333 = vunpack.c.h.b16 %v6087
    %v6334 = vunpack.c.l.b16 %v6088
    %v6335 = vunpack.c.h.b16 %v6088
    %v6336 = vunpack.c.l.b16 %v6089
    %v6337 = vunpack.c.h.b16 %v6089
    %v6338 = vunpack.c.l.b16 %v6090
    %v6339 = vunpack.c.h.b16 %v6090
    %v6340 = vunpack.c.l.b16 %v6091
    %v6341 = vunpack.c.h.b16 %v6091
    %v6342 = vunpack.c.l.b16 %v6092
    %v6343 = vunpack.c.h.b16 %v6092
    %v6344 = vunpack.c.l.b16 %v6093
    %v6345 = vunpack.c.h.b16 %v6093
    %v6346 = vunpack.c.l.b16 %v6094
    %v6347 = vunpack.c.h.b16 %v6094
    %v6348 = vunpack.c.l.b16 %v6095
    %v6349 = vunpack.c.h.b16 %v6095
    %v6350 = vunpack.c.l.b16 %v6096
    %v6351 = vunpack.c.h.b16 %v6096
    %v6352 = vunpack.c.l.b16 %v6097
    %v6353 = vunpack.c.h.b16 %v6097
    %v6354 = vunpack.c.l.b16 %v6098
    %v6355 = vunpack.c.h.b16 %v6098
    %v6356 = vunpack.c.l.b16 %v6099
    %v6357 = vunpack.c.h.b16 %v6099
    %v6358 = vunpack.c.l.b16 %v6100
    %v6359 = vunpack.c.h.b16 %v6100
    %v6360 = vunpack.c.l.b16 %v6101
    %v6361 = vunpack.c.h.b16 %v6101
    %v6362 = vunpack.c.l.b16 %v6102
    %v6363 = vunpack.c.h.b16 %v6102
    %v6364 = vunpack.c.l.b16 %v6103
    %v6365 = vunpack.c.h.b16 %v6103
    %v6366 = vunpack.c.l.b16 %v6104
    %v6367 = vunpack.c.h.b16 %v6104
    %v6368 = vunpack.c.l.b16 %v6105
    %v6369 = vunpack.c.h.b16 %v6105
    %v6370 = vunpack.c.l.b16 %v6106
    %v6371 = vunpack.c.h.b16 %v6106
    %v6372 = vunpack.c.l.b16 %v6107
    %v6373 = vunpack.c.h.b16 %v6107
    %v6374 = vunpack.c.l.b16 %v6108
    %v6375 = vunpack.c.h.b16 %v6108
    %v6376 = vunpack.c.l.b16 %v6109
    %v6377 = vunpack.c.h.b16 %v6109
    %v6378 = vunpack.c.l.b16 %v6110
    %v6379 = vunpack.c.h.b16 %v6110
    %v6380 = vunpack.c.l.b16 %v6111
    %v6381 = vunpack.c.h.b16 %v6111
    %v6382 = vunpack.c.l.b16 %v6112
    %v6383 = vunpack.c.h.b16 %v6112
    %v6384 = vunpack.c.l.b16 %v6113
    %v6385 = vunpack.c.h.b16 %v6113
    %v6386 = vunpack.c.l.b16 %v6114
    %v6387 = vunpack.c.h.b16 %v6114
    %v6388 = vunpack.c.l.b16 %v6115
    %v6389 = vunpack.c.h.b16 %v6115
    %v6390 = vunpack.c.l.b16 %v6116
    %v6391 = vunpack.c.h.b16 %v6116
    %v6392 = vunpack.c.l.b16 %v6117
    %v6393 = vunpack.c.h.b16 %v6117
    %v6394 = vunpack.c.l.b16 %v6118
    %v6395 = vunpack.c.h.b16 %v6118
    %v6396 = vunpack.c.l.b16 %v6119
    %v6397 = vunpack.c.h.b16 %v6119
    %v6398 = vunpack.c.l.b16 %v6120
    %v6399 = vunpack.c.h.b16 %v6120
    %v6400 = vunpack.c.l.b16 %v6121
    %v6401 = vunpack.c.h.b16 %v6121
    %v6402 = vunpack.c.l.b16 %v6122
    %v6403 = vunpack.c.h.b16 %v6122
    %v6404 = vunpack.c.l.b16 %v6123
    %v6405 = vunpack.c.h.b16 %v6123
    %v6406 = vunpack.c.l.b16 %v6124
    %v6407 = vunpack.c.h.b16 %v6124
    %v6408 = vunpack.c.l.b16 %v6125
    %v6409 = vunpack.c.h.b16 %v6125
    %v6410 = vunpack.c.l.b16 %v6126
    %v6411 = vunpack.c.h.b16 %v6126
    %v6412 = vunpack.c.l.b16 %v6127
    %v6413 = vunpack.c.h.b16 %v6127
    %v6414 = vunpack.c.l.b16 %v6128
    %v6415 = vunpack.c.h.b16 %v6128
    %v6416 = vunpack.c.l.b16 %v6129
    %v6417 = vunpack.c.h.b16 %v6129
    %v6418 = vpack.c.b16 %v6232, %v6226
    %v6419 = vpack.c.b16 %v6233, %v6227
    %v6420 = vpack.c.b16 %v6234, %v6228
    %v6421 = vpack.c.b16 %v6235, %v6229
    %v6422 = vpack.c.b16 %v6236, %v6230
    %v6423 = vpack.c.b16 %v6237, %v6231
    %v6424 = vpack.c.b16 %v6244, %v6238
    %v6425 = vpack.c.b16 %v6245, %v6239
    %v6426 = vpack.c.b16 %v6246, %v6240
    %v6427 = vpack.c.b16 %v6247, %v6241
    %v6428 = vpack.c.b16 %v6248, %v6242
    %v6429 = vpack.c.b16 %v6249, %v6243
    %v6430 = vpack.c.b16 %v6256, %v6250
    %v6431 = vpack.c.b16 %v6257, %v6251
    %v6432 = vpack.c.b16 %v6258, %v6252
    %v6433 = vpack.c.b16 %v6259, %v6253
    %v6434 = vpack.c.b16 %v6260, %v6254
    %v6435 = vpack.c.b16 %v6261, %v6255
    %v6436 = vpack.c.b16 %v6268, %v6262
    %v6437 = vpack.c.b16 %v6269, %v6263
    %v6438 = vpack.c.b16 %v6270, %v6264
    %v6439 = vpack.c.b16 %v6271, %v6265
    %v6440 = vpack.c.b16 %v6272, %v6266
    %v6441 = vpack.c.b16 %v6273, %v6267
    %v6442 = vpack.c.b16 %v6280, %v6274
    %v6443 = vpack.c.b16 %v6281, %v6275
    %v6444 = vpack.c.b16 %v6282, %v6276
    %v6445 = vpack.c.b16 %v6283, %v6277
    %v6446 = vpack.c.b16 %v6284, %v6278
    %v6447 = vpack.c.b16 %v6285, %v6279
    %v6448 = vpack.c.b16 %v6292, %v6286
    %v6449 = vpack.c.b16 %v6293, %v6287
    %v6450 = vpack.c.b16 %v6294, %v6288
    %v6451 = vpack.c.b16 %v6295, %v6289
    %v6452 = vpack.c.b16 %v6296, %v6290
    %v6453 = vpack.c.b16 %v6297, %v6291
    %v6454 = vpack.c.b16 %v6304, %v6298
    %v6455 = vpack.c.b16 %v6305, %v6299
    %v6456 = vpack.c.b16 %v6306, %v6300
    %v6457 = vpack.c.b16 %v6307, %v6301
    %v6458 = vpack.c.b16 %v6308, %v6302
    %v6459 = vpack.c.b16 %v6309, %v6303
    %v6460 = vpack.c.b16 %v6316, %v6310
    %v6461 = vpack.c.b16 %v6317, %v6311
    %v6462 = vpack.c.b16 %v6318, %v6312
    %v6463 = vpack.c.b16 %v6319, %v6313
    %v6464 = vpack.c.b16 %v6320, %v6314
    %v6465 = vpack.c.b16 %v6321, %v6315
    %v6466 = vpack.c.b16 %v6328, %v6322
    %v6467 = vpack.c.b16 %v6329, %v6323
    %v6468 = vpack.c.b16 %v6330, %v6324
    %v6469 = vpack.c.b16 %v6331, %v6325
    %v6470 = vpack.c.b16 %v6332, %v6326
    %v6471 = vpack.c.b16 %v6333, %v6327
    %v6472 = vpack.c.b16 %v6340, %v6334
    %v6473 = vpack.c.b16 %v6341, %v6335
    %v6474 = vpack.c.b16 %v6342, %v6336
    %v6475 = vpack.c.b16 %v6343, %v6337
    %v6476 = vpack.c.b16 %v6344, %v6338
    %v6477 = vpack.c.b16 %v6345, %v6339
    %v6478 = vpack.c.b16 %v6352, %v6346
    %v6479 = vpack.c.b16 %v6353, %v6347
    %v6480 = vpack.c.b16 %v6354, %v6348
    %v6481 = vpack.c.b16 %v6355, %v6349
    %v6482 = vpack.c.b16 %v6356, %v6350
    %v6483 = vpack.c.b16 %v6357, %v6351
    %v6484 = vpack.c.b16 %v6364, %v6358
    %v6485 = vpack.c.b16 %v6365, %v6359
    %v6486 = vpack.c.b16 %v6366, %v6360
    %v6487 = vpack.c.b16 %v6367, %v6361
    %v6488 = vpack.c.b16 %v6368, %v6362
    %v6489 = vpack.c.b16 %v6369, %v6363
    %v6490 = vpack.c.b16 %v6376, %v6370
    %v6491 = vpack.c.b16 %v6377, %v6371
    %v6492 = vpack.c.b16 %v6378, %v6372
    %v6493 = vpack.c.b16 %v6379, %v6373
    %v6494 = vpack.c.b16 %v6380, %v6374
    %v6495 = vpack.c.b16 %v6381, %v6375
    %v6496 = vpack.c.b16 %v6388, %v6382
    %v6497 = vpack.c.b16 %v6389, %v6383
    %v6498 = vpack.c.b16 %v6390, %v6384
    %v6499 = vpack.c.b16 %v6391, %v6385
    %v6500 = vpack.c.b16 %v6392, %v6386
    %v6501 = vpack.c.b16 %v6393, %v6387
    %v6502 = vpack.c.b16 %v6400, %v6394
    %v6503 = vpack.c.b16 %v6401, %v6395
    %v6504 = vpack.c.b16 %v6402, %v6396
    %v6505 = vpack.c.b16 %v6403, %v6397
    %v6506 = vpack.c.b16 %v6404, %v6398
    %v6507 = vpack.c.b16 %v6405, %v6399
    %v6508 = vpack.c.b16 %v6412, %v6406
    %v6509 = vpack.c.b16 %v6413, %v6407
    %v6510 = vpack.c.b16 %v6414, %v6408
    %v6511 = vpack.c.b16 %v6415, %v6409
    %v6512 = vpack.c.b16 %v6416, %v6410
    %v6513 = vpack.c.b16 %v6417, %v6411
    %6610 = vmatpush.bf16.msra.mxu0 %v6460
    %6611 = vmatpush.bf16.msra.mxu0 %v6454
    %6612 = vmatpush.bf16.msra.mxu0 %v6448
    %6613 = vmatpush.bf16.msra.mxu0 %v6442
    %6614 = vmatpush.bf16.msra.mxu0 %v6436
    %6615 = vmatpush.bf16.msra.mxu0 %v6430
    %6616 = vmatpush.bf16.msra.mxu0 %v6424
    %6617 = vmatpush.bf16.msra.mxu0 %v6418
    %6618 = vmatmul.bf16.gmra.mxu0 %v6026
    %v6619 = vpop.f32.mrf.mxu0
    %v6620 = vadd.f32 0.0, %v6619
    %v6621 = vpop.f32.mrf.mxu0
    %v6622 = vadd.f32 0.0, %v6621
    %6623 = vdwg.mxu0
    %6624 = vmatpush.bf16.msra.mxu0 %v6508
    %6625 = vmatpush.bf16.msra.mxu0 %v6502
    %6626 = vmatpush.bf16.msra.mxu0 %v6496
    %6627 = vmatpush.bf16.msra.mxu0 %v6490
    %6628 = vmatpush.bf16.msra.mxu0 %v6484
    %6629 = vmatpush.bf16.msra.mxu0 %v6478
    %6630 = vmatpush.bf16.msra.mxu0 %v6472
    %6631 = vmatpush.bf16.msra.mxu0 %v6466
    %6632 = vmatmul.bf16.gmra.mxu0 %v6032
    %v6633 = vpop.f32.mrf.mxu0
    %v6634 = vadd.f32 %v6620, %v6633
    %v6635 = vpop.f32.mrf.mxu0
    %v6636 = vadd.f32 %v6622, %v6635
    %6637 = vdwg.mxu0
    %6638 = vmatpush.bf16.msra.mxu0 %v6461
    %6639 = vmatpush.bf16.msra.mxu0 %v6455
    %6640 = vmatpush.bf16.msra.mxu0 %v6449
    %6641 = vmatpush.bf16.msra.mxu0 %v6443
    %6642 = vmatpush.bf16.msra.mxu0 %v6437
    %6643 = vmatpush.bf16.msra.mxu0 %v6431
    %6644 = vmatpush.bf16.msra.mxu0 %v6425
    %6645 = vmatpush.bf16.msra.mxu0 %v6419
    %6646 = vmatmul.bf16.gmra.mxu0 %v6026
    %v6647 = vpop.f32.mrf.mxu0
    %v6648 = vadd.f32 0.0, %v6647
    %v6649 = vpop.f32.mrf.mxu0
    %v6650 = vadd.f32 0.0, %v6649
    %6651 = vdwg.mxu0
    %6652 = vmatpush.bf16.msra.mxu0 %v6509
    %6653 = vmatpush.bf16.msra.mxu0 %v6503
    %6654 = vmatpush.bf16.msra.mxu0 %v6497
    %6655 = vmatpush.bf16.msra.mxu0 %v6491
    %6656 = vmatpush.bf16.msra.mxu0 %v6485
    %6657 = vmatpush.bf16.msra.mxu0 %v6479
    %6658 = vmatpush.bf16.msra.mxu0 %v6473
    %6659 = vmatpush.bf16.msra.mxu0 %v6467
    %6660 = vmatmul.bf16.gmra.mxu0 %v6032
    %v6661 = vpop.f32.mrf.mxu0
    %v6662 = vadd.f32 %v6648, %v6661
    %v6663 = vpop.f32.mrf.mxu0
    %v6664 = vadd.f32 %v6650, %v6663
    %6665 = vdwg.mxu0
    %6666 = vmatpush.bf16.msra.mxu0 %v6462
    %6667 = vmatpush.bf16.msra.mxu0 %v6456
    %6668 = vmatpush.bf16.msra.mxu0 %v6450
    %6669 = vmatpush.bf16.msra.mxu0 %v6444
    %6670 = vmatpush.bf16.msra.mxu0 %v6438
    %6671 = vmatpush.bf16.msra.mxu0 %v6432
    %6672 = vmatpush.bf16.msra.mxu0 %v6426
    %6673 = vmatpush.bf16.msra.mxu0 %v6420
    %6674 = vmatmul.bf16.gmra.mxu0 %v6026
    %v6675 = vpop.f32.mrf.mxu0
    %v6676 = vadd.f32 0.0, %v6675
    %v6677 = vpop.f32.mrf.mxu0
    %v6678 = vadd.f32 0.0, %v6677
    %6679 = vdwg.mxu0
    %6680 = vmatpush.bf16.msra.mxu0 %v6510
    %6681 = vmatpush.bf16.msra.mxu0 %v6504
    %6682 = vmatpush.bf16.msra.mxu0 %v6498
    %6683 = vmatpush.bf16.msra.mxu0 %v6492
    %6684 = vmatpush.bf16.msra.mxu0 %v6486
    %6685 = vmatpush.bf16.msra.mxu0 %v6480
    %6686 = vmatpush.bf16.msra.mxu0 %v6474
    %6687 = vmatpush.bf16.msra.mxu0 %v6468
    %6688 = vmatmul.bf16.gmra.mxu0 %v6032
    %v6689 = vpop.f32.mrf.mxu0
    %v6690 = vadd.f32 %v6676, %v6689
    %v6691 = vpop.f32.mrf.mxu0
    %v6692 = vadd.f32 %v6678, %v6691
    %6693 = vdwg.mxu0
    %6694 = vmatpush.bf16.msra.mxu0 %v6463
    %6695 = vmatpush.bf16.msra.mxu0 %v6457
    %6696 = vmatpush.bf16.msra.mxu0 %v6451
    %6697 = vmatpush.bf16.msra.mxu0 %v6445
    %6698 = vmatpush.bf16.msra.mxu0 %v6439
    %6699 = vmatpush.bf16.msra.mxu0 %v6433
    %6700 = vmatpush.bf16.msra.mxu0 %v6427
    %6701 = vmatpush.bf16.msra.mxu0 %v6421
    %6702 = vmatmul.bf16.gmra.mxu0 %v6026
    %v6703 = vpop.f32.mrf.mxu0
    %v6704 = vadd.f32 0.0, %v6703
    %v6705 = vpop.f32.mrf.mxu0
    %v6706 = vadd.f32 0.0, %v6705
    %6707 = vdwg.mxu0
    %6708 = vmatpush.bf16.msra.mxu0 %v6511
    %6709 = vmatpush.bf16.msra.mxu0 %v6505
    %6710 = vmatpush.bf16.msra.mxu0 %v6499
    %6711 = vmatpush.bf16.msra.mxu0 %v6493
    %6712 = vmatpush.bf16.msra.mxu0 %v6487
    %6713 = vmatpush.bf16.msra.mxu0 %v6481
    %6714 = vmatpush.bf16.msra.mxu0 %v6475
    %6715 = vmatpush.bf16.msra.mxu0 %v6469
    %6716 = vmatmul.bf16.gmra.mxu0 %v6032
    %v6717 = vpop.f32.mrf.mxu0
    %v6718 = vadd.f32 %v6704, %v6717
    %v6719 = vpop.f32.mrf.mxu0
    %v6720 = vadd.f32 %v6706, %v6719
    %6721 = vdwg.mxu0
    %6722 = vmatpush.bf16.msra.mxu0 %v6464
    %6723 = vmatpush.bf16.msra.mxu0 %v6458
    %6724 = vmatpush.bf16.msra.mxu0 %v6452
    %6725 = vmatpush.bf16.msra.mxu0 %v6446
    %6726 = vmatpush.bf16.msra.mxu0 %v6440
    %6727 = vmatpush.bf16.msra.mxu0 %v6434
    %6728 = vmatpush.bf16.msra.mxu0 %v6428
    %6729 = vmatpush.bf16.msra.mxu0 %v6422
    %6730 = vmatmul.bf16.gmra.mxu0 %v6026
    %v6731 = vpop.f32.mrf.mxu0
    %v6732 = vadd.f32 0.0, %v6731
    %v6733 = vpop.f32.mrf.mxu0
    %v6734 = vadd.f32 0.0, %v6733
    %6735 = vdwg.mxu0
    %6736 = vmatpush.bf16.msra.mxu0 %v6512
    %6737 = vmatpush.bf16.msra.mxu0 %v6506
    %6738 = vmatpush.bf16.msra.mxu0 %v6500
    %6739 = vmatpush.bf16.msra.mxu0 %v6494
    %6740 = vmatpush.bf16.msra.mxu0 %v6488
    %6741 = vmatpush.bf16.msra.mxu0 %v6482
    %6742 = vmatpush.bf16.msra.mxu0 %v6476
    %6743 = vmatpush.bf16.msra.mxu0 %v6470
    %6744 = vmatmul.bf16.gmra.mxu0 %v6032
    %v6745 = vpop.f32.mrf.mxu0
    %v6746 = vadd.f32 %v6732, %v6745
    %v6747 = vpop.f32.mrf.mxu0
    %v6748 = vadd.f32 %v6734, %v6747
    %6749 = vdwg.mxu0
    %6750 = vmatpush.bf16.msra.mxu0 %v6465
    %6751 = vmatpush.bf16.msra.mxu0 %v6459
    %6752 = vmatpush.bf16.msra.mxu0 %v6453
    %6753 = vmatpush.bf16.msra.mxu0 %v6447
    %6754 = vmatpush.bf16.msra.mxu0 %v6441
    %6755 = vmatpush.bf16.msra.mxu0 %v6435
    %6756 = vmatpush.bf16.msra.mxu0 %v6429
    %6757 = vmatpush.bf16.msra.mxu0 %v6423
    %6758 = vmatmul.bf16.gmra.mxu0 %v6026
    %v6759 = vpop.f32.mrf.mxu0
    %v6760 = vadd.f32 0.0, %v6759
    %v6761 = vpop.f32.mrf.mxu0
    %v6762 = vadd.f32 0.0, %v6761
    %6763 = vdwg.mxu0
    %6764 = vmatpush.bf16.msra.mxu0 %v6513
    %6765 = vmatpush.bf16.msra.mxu0 %v6507
    %6766 = vmatpush.bf16.msra.mxu0 %v6501
    %6767 = vmatpush.bf16.msra.mxu0 %v6495
    %6768 = vmatpush.bf16.msra.mxu0 %v6489
    %6769 = vmatpush.bf16.msra.mxu0 %v6483
    %6770 = vmatpush.bf16.msra.mxu0 %v6477
    %6771 = vmatpush.bf16.msra.mxu0 %v6471
    %6772 = vmatmul.bf16.gmra.mxu0 %v6032
    %v6773 = vpop.f32.mrf.mxu0
    %v6774 = vadd.f32 %v6760, %v6773
    %v6775 = vpop.f32.mrf.mxu0
    %v6776 = vadd.f32 %v6762, %v6775
    %6777 = vdwg.mxu0
    %v6778 = vld [vmem:[#allocation4 + $0xf0] sm:$0xff]
    %v6779 = vld [vmem:[#allocation4 + $0xf8] sm:$0xff]
    %v6780 = vld [vmem:[#allocation4 + $0x100] sm:$0xff]
    %v6781 = vld [vmem:[#allocation4 + $0x108] sm:$0xff]
    %v6782 = vld [vmem:[#allocation4 + $0x110] sm:$0xff]
    %v6783 = vld [vmem:[#allocation4 + $0x118] sm:$0xff]
    %v6784 = vadd.f32 %v6778, %v6634
    %v6785 = vadd.f32 %v6781, %v6636
    %v6786 = vxor.u32 %v6784, 2147483648
    %v6787 = vxor.u32 %v6785, 2147483648
    %v6788 = vmul.f32 %v6786, 1.442695
    %v6789 = vpow.pop %v6788
    %v6790 = vmul.f32 %v6787, 1.442695
    %v6791 = vpow.pop %v6790
    %v6792 = vadd.f32 %v6789, 1.0
    %v6793 = vadd.f32 %v6791, 1.0
    %v6794 = vrcp.pop %v6792
    %v6795 = vmul.f32 %v6792, %v6794
    %v6796 = vsub.f32 1.0, %v6795
    %v6797 = vmul.f32 %v6794, %v6796
    %v6798 = vadd.f32 %v6794, %v6797
    %vm6799 = vweird.f32 %v6792
    %vm6800 = vweird.f32 %v6794
    %vm6801 = vmor %vm6799, %vm6800
    %v6802 = vsel %vm6801, %v6794, %v6798
    %v6803 = vand.u32 2147483647, %v6792
    %vm6804 = vcmp.eq.f32.partialorder %v6803, 8.507059e+37
    %v6805 = vand.u32 %v6792, 2147483648
    %v6806 = vor.u32 1.1754944e-38, %v6805
    %v6807 = vsel %vm6804, %v6806, %v6802
    %v6808 = vmul.f32 1.0, %v6807
    %v6809 = vrcp.pop %v6793
    %v6810 = vmul.f32 %v6793, %v6809
    %v6811 = vsub.f32 1.0, %v6810
    %v6812 = vmul.f32 %v6809, %v6811
    %v6813 = vadd.f32 %v6809, %v6812
    %vm6814 = vweird.f32 %v6793
    %vm6815 = vweird.f32 %v6809
    %vm6816 = vmor %vm6814, %vm6815
    %v6817 = vsel %vm6816, %v6809, %v6813
    %v6818 = vand.u32 2147483647, %v6793
    %vm6819 = vcmp.eq.f32.partialorder %v6818, 8.507059e+37
    %v6820 = vand.u32 %v6793, 2147483648
    %v6821 = vor.u32 1.1754944e-38, %v6820
    %v6822 = vsel %vm6819, %v6821, %v6817
    %v6823 = vmul.f32 1.0, %v6822
    %v6824 = vadd.f32 %v6779, %v6662
    %v6825 = vadd.f32 %v6782, %v6664
    %v6826 = vxor.u32 %v6824, 2147483648
    %v6827 = vxor.u32 %v6825, 2147483648
    %v6828 = vmul.f32 %v6826, 1.442695
    %v6829 = vpow.pop %v6828
    %v6830 = vmul.f32 %v6827, 1.442695
    %v6831 = vpow.pop %v6830
    %v6832 = vadd.f32 %v6829, 1.0
    %v6833 = vadd.f32 %v6831, 1.0
    %v6834 = vrcp.pop %v6832
    %v6835 = vmul.f32 %v6832, %v6834
    %v6836 = vsub.f32 1.0, %v6835
    %v6837 = vmul.f32 %v6834, %v6836
    %v6838 = vadd.f32 %v6834, %v6837
    %vm6839 = vweird.f32 %v6832
    %vm6840 = vweird.f32 %v6834
    %vm6841 = vmor %vm6839, %vm6840
    %v6842 = vsel %vm6841, %v6834, %v6838
    %v6843 = vand.u32 2147483647, %v6832
    %vm6844 = vcmp.eq.f32.partialorder %v6843, 8.507059e+37
    %v6845 = vand.u32 %v6832, 2147483648
    %v6846 = vor.u32 1.1754944e-38, %v6845
    %v6847 = vsel %vm6844, %v6846, %v6842
    %v6848 = vmul.f32 1.0, %v6847
    %v6849 = vrcp.pop %v6833
    %v6850 = vmul.f32 %v6833, %v6849
    %v6851 = vsub.f32 1.0, %v6850
    %v6852 = vmul.f32 %v6849, %v6851
    %v6853 = vadd.f32 %v6849, %v6852
    %vm6854 = vweird.f32 %v6833
    %vm6855 = vweird.f32 %v6849
    %vm6856 = vmor %vm6854, %vm6855
    %v6857 = vsel %vm6856, %v6849, %v6853
    %v6858 = vand.u32 2147483647, %v6833
    %vm6859 = vcmp.eq.f32.partialorder %v6858, 8.507059e+37
    %v6860 = vand.u32 %v6833, 2147483648
    %v6861 = vor.u32 1.1754944e-38, %v6860
    %v6862 = vsel %vm6859, %v6861, %v6857
    %v6863 = vmul.f32 1.0, %v6862
    %v6864 = vadd.f32 %v6690, %v968
    %v6865 = vadd.f32 %v6692, %v968
    %v6866 = vmul.f32 %v6808, %v6864
    %v6867 = vmul.f32 %v6823, %v6865
    %v6868 = vadd.f32 %v6780, %v6866
    %v6869 = vadd.f32 %v6783, %v6867
    %v6870 = vtanh.pop %v6868
    %v6871 = vtanh.pop %v6869
    %v6872 = vsub.f32 1.0, %v6848
    %v6873 = vsub.f32 1.0, %v6863
    %v6874 = vmul.f32 %v6872, %v6870
    %v6875 = vmul.f32 %v6873, %v6871
    %v6876 = vmul.f32 %v6848, %v5992
    %v6877 = vmul.f32 %v6863, %v5993
    %v6878 = vadd.f32 %v6874, %v6876
    %v6879 = vadd.f32 %v6875, %v6877
    %v6880 = vld [vmem:[#allocation5 + $0x60] sm:$0xff]
    %v6881 = vld [vmem:[#allocation5 + $0x68] sm:$0xff]
    %v6882 = vld [vmem:[#allocation5 + $0x70] sm:$0xff]
    %v6883 = vld [vmem:[#allocation5 + $0x78] sm:$0xff]
    %v6884 = vld [vmem:[#allocation5 + $0x80] sm:$0xff]
    %v6885 = vld [vmem:[#allocation5 + $0x88] sm:$0xff]
    %v6886 = vadd.f32 %v6880, %v6718
    %v6887 = vadd.f32 %v6883, %v6720
    %v6888 = vxor.u32 %v6886, 2147483648
    %v6889 = vxor.u32 %v6887, 2147483648
    %v6890 = vmul.f32 %v6888, 1.442695
    %v6891 = vpow.pop %v6890
    %v6892 = vmul.f32 %v6889, 1.442695
    %v6893 = vpow.pop %v6892
    %v6894 = vadd.f32 %v6891, 1.0
    %v6895 = vadd.f32 %v6893, 1.0
    %v6896 = vrcp.pop %v6894
    %v6897 = vmul.f32 %v6894, %v6896
    %v6898 = vsub.f32 1.0, %v6897
    %v6899 = vmul.f32 %v6896, %v6898
    %v6900 = vadd.f32 %v6896, %v6899
    %vm6901 = vweird.f32 %v6894
    %vm6902 = vweird.f32 %v6896
    %vm6903 = vmor %vm6901, %vm6902
    %v6904 = vsel %vm6903, %v6896, %v6900
    %v6905 = vand.u32 2147483647, %v6894
    %vm6906 = vcmp.eq.f32.partialorder %v6905, 8.507059e+37
    %v6907 = vand.u32 %v6894, 2147483648
    %v6908 = vor.u32 1.1754944e-38, %v6907
    %v6909 = vsel %vm6906, %v6908, %v6904
    %v6910 = vmul.f32 1.0, %v6909
    %v6911 = vrcp.pop %v6895
    %v6912 = vmul.f32 %v6895, %v6911
    %v6913 = vsub.f32 1.0, %v6912
    %v6914 = vmul.f32 %v6911, %v6913
    %v6915 = vadd.f32 %v6911, %v6914
    %vm6916 = vweird.f32 %v6895
    %vm6917 = vweird.f32 %v6911
    %vm6918 = vmor %vm6916, %vm6917
    %v6919 = vsel %vm6918, %v6911, %v6915
    %v6920 = vand.u32 2147483647, %v6895
    %vm6921 = vcmp.eq.f32.partialorder %v6920, 8.507059e+37
    %v6922 = vand.u32 %v6895, 2147483648
    %v6923 = vor.u32 1.1754944e-38, %v6922
    %v6924 = vsel %vm6921, %v6923, %v6919
    %v6925 = vmul.f32 1.0, %v6924
    %v6926 = vadd.f32 %v6881, %v6746
    %v6927 = vadd.f32 %v6884, %v6748
    %v6928 = vxor.u32 %v6926, 2147483648
    %v6929 = vxor.u32 %v6927, 2147483648
    %v6930 = vmul.f32 %v6928, 1.442695
    %v6931 = vpow.pop %v6930
    %v6932 = vmul.f32 %v6929, 1.442695
    %v6933 = vpow.pop %v6932
    %v6934 = vadd.f32 %v6931, 1.0
    %v6935 = vadd.f32 %v6933, 1.0
    %v6936 = vrcp.pop %v6934
    %v6937 = vmul.f32 %v6934, %v6936
    %v6938 = vsub.f32 1.0, %v6937
    %v6939 = vmul.f32 %v6936, %v6938
    %v6940 = vadd.f32 %v6936, %v6939
    %vm6941 = vweird.f32 %v6934
    %vm6942 = vweird.f32 %v6936
    %vm6943 = vmor %vm6941, %vm6942
    %v6944 = vsel %vm6943, %v6936, %v6940
    %v6945 = vand.u32 2147483647, %v6934
    %vm6946 = vcmp.eq.f32.partialorder %v6945, 8.507059e+37
    %v6947 = vand.u32 %v6934, 2147483648
    %v6948 = vor.u32 1.1754944e-38, %v6947
    %v6949 = vsel %vm6946, %v6948, %v6944
    %v6950 = vmul.f32 1.0, %v6949
    %v6951 = vrcp.pop %v6935
    %v6952 = vmul.f32 %v6935, %v6951
    %v6953 = vsub.f32 1.0, %v6952
    %v6954 = vmul.f32 %v6951, %v6953
    %v6955 = vadd.f32 %v6951, %v6954
    %vm6956 = vweird.f32 %v6935
    %vm6957 = vweird.f32 %v6951
    %vm6958 = vmor %vm6956, %vm6957
    %v6959 = vsel %vm6958, %v6951, %v6955
    %v6960 = vand.u32 2147483647, %v6935
    %vm6961 = vcmp.eq.f32.partialorder %v6960, 8.507059e+37
    %v6962 = vand.u32 %v6935, 2147483648
    %v6963 = vor.u32 1.1754944e-38, %v6962
    %v6964 = vsel %vm6961, %v6963, %v6959
    %v6965 = vmul.f32 1.0, %v6964
    %v6966 = vadd.f32 %v6774, %v973
    %v6967 = vadd.f32 %v6776, %v973
    %v6968 = vmul.f32 %v6910, %v6966
    %v6969 = vmul.f32 %v6925, %v6967
    %v6970 = vadd.f32 %v6882, %v6968
    %v6971 = vadd.f32 %v6885, %v6969
    %v6972 = vtanh.pop %v6970
    %v6973 = vtanh.pop %v6971
    %v6974 = vsub.f32 1.0, %v6950
    %v6975 = vsub.f32 1.0, %v6965
    %v6976 = vmul.f32 %v6974, %v6972
    %v6977 = vmul.f32 %v6975, %v6973
    %v6978 = vmul.f32 %v6950, %v6004
    %v6979 = vmul.f32 %v6965, %v6005
    %v6980 = vadd.f32 %v6976, %v6978
    %v6981 = vadd.f32 %v6977, %v6979
    %s6982 = sadd.s32 %s107, 5
    %v6983 = vstv %s6982
    %vm6984 = vcmp.lt.s32.totalorder %v6983, %v105
    %vm6985 = vcmp.lt.s32.totalorder %v6983, %v106
    %s6986 = sadd.s32 %s109, 2
    %v6987 = vstv %s6986
    %vm6988 = vcmp.lt.s32.totalorder %v6987, %v105
    %vm6989 = vcmp.lt.s32.totalorder %v6987, %v106
    %v6990 = vsel %vm6984, 1, 0
    %v6991 = vsel %vm6985, 1, 0
    %6992 = vset.pattern.permute.xlu0 0
    %6993 = vperm.xlu0 %6992, %v6990
    %v6994 = vpop.permute.xlu0 %6993
    %6995 = vset.pattern.permute.xlu0 0
    %6996 = vperm.xlu0 %6995, %v6991
    %v6997 = vpop.permute.xlu0 %6996
    %vm6998 = vcmp.eq.s32.totalorder %v6994, 1
    %vm6999 = vcmp.eq.s32.totalorder %v6997, 1
    %v7000 = vsel %vm6998, %v6878, %v5992
    %v7001 = vsel %vm6999, %v6879, %v5993
    %v7002 = vsel %vm6988, 1, 0
    %v7003 = vsel %vm6989, 1, 0
    %7004 = vset.pattern.permute.xlu0 0
    %7005 = vperm.xlu0 %7004, %v7002
    %v7006 = vpop.permute.xlu0 %7005
    %7007 = vset.pattern.permute.xlu0 0
    %7008 = vperm.xlu0 %7007, %v7003
    %v7009 = vpop.permute.xlu0 %7008
    %vm7010 = vcmp.eq.s32.totalorder %v7006, 1
    %vm7011 = vcmp.eq.s32.totalorder %v7009, 1
    %v7012 = vsel %vm7010, %v6980, %v6004
    %v7013 = vsel %vm7011, %v6981, %v6005
    %v7014 = vsel %vm6998, %v6878, 0.0
    %v7015 = vsel %vm6999, %v6879, 0.0
    %v7016 = vpack.c.bf16 %v7014, %v7014
    %v7017 = vpack.c.bf16 %v7015, %v7015
    %7018 = vst [vmem:[%s7 + $0x28] sm:$0xf] %v7016
    %7019 = vst [vmem:[%s7 + $0x2c] sm:$0xf] %v7017
    %v7020 = vsel %vm7010, %v6980, 0.0
    %v7021 = vsel %vm7011, %v6981, 0.0
    %v7022 = vpack.c.bf16 %v7020, %v7020
    %v7023 = vpack.c.bf16 %v7021, %v7021
    %7024 = vst [vmem:[%s94 + $0x10] sm:$0xf] %v7022
    %7025 = vst [vmem:[%s94 + $0x14] sm:$0xf] %v7023
    %v7026 = vpack.c.bf16 %v7000, %v7000
    %v7027 = vpack.c.bf16 %v7001, %v7001
    %v7028 = vpack.c.bf16 %v7012, %v7012
    %v7029 = vpack.c.bf16 %v7013, %v7013
    %v7032 = vunpack.c.l.b16 %v7026
    %v7033 = vunpack.c.l.b16 %v7027
    %v7034 = vpack.c.b16 %v7033, %v7032
    %v7038 = vunpack.c.l.b16 %v7028
    %v7039 = vunpack.c.l.b16 %v7029
    %v7040 = vpack.c.b16 %v7039, %v7038
    %v7042 = vld [vmem:[#allocation8] sm:$0xff]
    %v7043 = vld [vmem:[#allocation8 + $0x8] sm:$0xff]
    %v7044 = vld [vmem:[#allocation8 + $0x10] sm:$0xff]
    %v7045 = vld [vmem:[#allocation8 + $0x18] sm:$0xff]
    %v7046 = vld [vmem:[#allocation8 + $0x20] sm:$0xff]
    %v7047 = vld [vmem:[#allocation8 + $0x28] sm:$0xff]
    %v7048 = vld [vmem:[#allocation8 + $0x30] sm:$0xff]
    %v7049 = vld [vmem:[#allocation8 + $0x38] sm:$0xff]
    %v7050 = vld [vmem:[#allocation8 + $0x40] sm:$0xff]
    %v7051 = vld [vmem:[#allocation8 + $0x48] sm:$0xff]
    %v7052 = vld [vmem:[#allocation8 + $0x50] sm:$0xff]
    %v7053 = vld [vmem:[#allocation8 + $0x58] sm:$0xff]
    %v7054 = vld [vmem:[#allocation8 + $0x60] sm:$0xff]
    %v7055 = vld [vmem:[#allocation8 + $0x68] sm:$0xff]
    %v7056 = vld [vmem:[#allocation8 + $0x70] sm:$0xff]
    %v7057 = vld [vmem:[#allocation8 + $0x78] sm:$0xff]
    %v7058 = vld [vmem:[#allocation8 + $0x80] sm:$0xff]
    %v7059 = vld [vmem:[#allocation8 + $0x88] sm:$0xff]
    %v7060 = vld [vmem:[#allocation8 + $0x90] sm:$0xff]
    %v7061 = vld [vmem:[#allocation8 + $0x98] sm:$0xff]
    %v7062 = vld [vmem:[#allocation8 + $0xa0] sm:$0xff]
    %v7063 = vld [vmem:[#allocation8 + $0xa8] sm:$0xff]
    %v7064 = vld [vmem:[#allocation8 + $0xb0] sm:$0xff]
    %v7065 = vld [vmem:[#allocation8 + $0xb8] sm:$0xff]
    %v7066 = vld [vmem:[#allocation8 + $0xc0] sm:$0xff]
    %v7067 = vld [vmem:[#allocation8 + $0xc8] sm:$0xff]
    %v7068 = vld [vmem:[#allocation8 + $0xd0] sm:$0xff]
    %v7069 = vld [vmem:[#allocation8 + $0xd8] sm:$0xff]
    %v7070 = vld [vmem:[#allocation8 + $0xe0] sm:$0xff]
    %v7071 = vld [vmem:[#allocation8 + $0xe8] sm:$0xff]
    %v7072 = vld [vmem:[#allocation8 + $0xf0] sm:$0xff]
    %v7073 = vld [vmem:[#allocation8 + $0xf8] sm:$0xff]
    %v7074 = vld [vmem:[#allocation8 + $0x100] sm:$0xff]
    %v7075 = vld [vmem:[#allocation8 + $0x108] sm:$0xff]
    %v7076 = vld [vmem:[#allocation8 + $0x110] sm:$0xff]
    %v7077 = vld [vmem:[#allocation8 + $0x118] sm:$0xff]
    %v7078 = vld [vmem:[#allocation8 + $0x120] sm:$0xff]
    %v7079 = vld [vmem:[#allocation8 + $0x128] sm:$0xff]
    %v7080 = vld [vmem:[#allocation8 + $0x130] sm:$0xff]
    %v7081 = vld [vmem:[#allocation8 + $0x138] sm:$0xff]
    %v7082 = vld [vmem:[#allocation8 + $0x140] sm:$0xff]
    %v7083 = vld [vmem:[#allocation8 + $0x148] sm:$0xff]
    %v7084 = vld [vmem:[#allocation8 + $0x150] sm:$0xff]
    %v7085 = vld [vmem:[#allocation8 + $0x158] sm:$0xff]
    %v7086 = vld [vmem:[#allocation8 + $0x160] sm:$0xff]
    %v7087 = vld [vmem:[#allocation8 + $0x168] sm:$0xff]
    %v7088 = vld [vmem:[#allocation8 + $0x170] sm:$0xff]
    %v7089 = vld [vmem:[#allocation8 + $0x178] sm:$0xff]
    %v7090 = vld [vmem:[#allocation8 + $0x180] sm:$0xff]
    %v7091 = vld [vmem:[#allocation8 + $0x188] sm:$0xff]
    %v7092 = vld [vmem:[#allocation8 + $0x190] sm:$0xff]
    %v7093 = vld [vmem:[#allocation8 + $0x198] sm:$0xff]
    %v7094 = vld [vmem:[#allocation8 + $0x1a0] sm:$0xff]
    %v7095 = vld [vmem:[#allocation8 + $0x1a8] sm:$0xff]
    %v7096 = vld [vmem:[#allocation8 + $0x1b0] sm:$0xff]
    %v7097 = vld [vmem:[#allocation8 + $0x1b8] sm:$0xff]
    %v7098 = vld [vmem:[#allocation8 + $0x1c0] sm:$0xff]
    %v7099 = vld [vmem:[#allocation8 + $0x1c8] sm:$0xff]
    %v7100 = vld [vmem:[#allocation8 + $0x1d0] sm:$0xff]
    %v7101 = vld [vmem:[#allocation8 + $0x1d8] sm:$0xff]
    %v7102 = vld [vmem:[#allocation8 + $0x1e0] sm:$0xff]
    %v7103 = vld [vmem:[#allocation8 + $0x1e8] sm:$0xff]
    %v7104 = vld [vmem:[#allocation8 + $0x1f0] sm:$0xff]
    %v7105 = vld [vmem:[#allocation8 + $0x1f8] sm:$0xff]
    %v7106 = vld [vmem:[#allocation8 + $0x200] sm:$0xff]
    %v7107 = vld [vmem:[#allocation8 + $0x208] sm:$0xff]
    %v7108 = vld [vmem:[#allocation8 + $0x210] sm:$0xff]
    %v7109 = vld [vmem:[#allocation8 + $0x218] sm:$0xff]
    %v7110 = vld [vmem:[#allocation8 + $0x220] sm:$0xff]
    %v7111 = vld [vmem:[#allocation8 + $0x228] sm:$0xff]
    %v7112 = vld [vmem:[#allocation8 + $0x230] sm:$0xff]
    %v7113 = vld [vmem:[#allocation8 + $0x238] sm:$0xff]
    %v7114 = vld [vmem:[#allocation8 + $0x240] sm:$0xff]
    %v7115 = vld [vmem:[#allocation8 + $0x248] sm:$0xff]
    %v7116 = vld [vmem:[#allocation8 + $0x250] sm:$0xff]
    %v7117 = vld [vmem:[#allocation8 + $0x258] sm:$0xff]
    %v7118 = vld [vmem:[#allocation8 + $0x260] sm:$0xff]
    %v7119 = vld [vmem:[#allocation8 + $0x268] sm:$0xff]
    %v7120 = vld [vmem:[#allocation8 + $0x270] sm:$0xff]
    %v7121 = vld [vmem:[#allocation8 + $0x278] sm:$0xff]
    %v7122 = vld [vmem:[#allocation8 + $0x280] sm:$0xff]
    %v7123 = vld [vmem:[#allocation8 + $0x288] sm:$0xff]
    %v7124 = vld [vmem:[#allocation8 + $0x290] sm:$0xff]
    %v7125 = vld [vmem:[#allocation8 + $0x298] sm:$0xff]
    %v7126 = vld [vmem:[#allocation8 + $0x2a0] sm:$0xff]
    %v7127 = vld [vmem:[#allocation8 + $0x2a8] sm:$0xff]
    %v7128 = vld [vmem:[#allocation8 + $0x2b0] sm:$0xff]
    %v7129 = vld [vmem:[#allocation8 + $0x2b8] sm:$0xff]
    %v7130 = vld [vmem:[#allocation8 + $0x2c0] sm:$0xff]
    %v7131 = vld [vmem:[#allocation8 + $0x2c8] sm:$0xff]
    %v7132 = vld [vmem:[#allocation8 + $0x2d0] sm:$0xff]
    %v7133 = vld [vmem:[#allocation8 + $0x2d8] sm:$0xff]
    %v7134 = vld [vmem:[#allocation8 + $0x2e0] sm:$0xff]
    %v7135 = vld [vmem:[#allocation8 + $0x2e8] sm:$0xff]
    %v7136 = vld [vmem:[#allocation8 + $0x2f0] sm:$0xff]
    %v7137 = vld [vmem:[#allocation8 + $0x2f8] sm:$0xff]
    %v7234 = vunpack.c.l.b16 %v7042
    %v7235 = vunpack.c.h.b16 %v7042
    %v7236 = vunpack.c.l.b16 %v7043
    %v7237 = vunpack.c.h.b16 %v7043
    %v7238 = vunpack.c.l.b16 %v7044
    %v7239 = vunpack.c.h.b16 %v7044
    %v7240 = vunpack.c.l.b16 %v7045
    %v7241 = vunpack.c.h.b16 %v7045
    %v7242 = vunpack.c.l.b16 %v7046
    %v7243 = vunpack.c.h.b16 %v7046
    %v7244 = vunpack.c.l.b16 %v7047
    %v7245 = vunpack.c.h.b16 %v7047
    %v7246 = vunpack.c.l.b16 %v7048
    %v7247 = vunpack.c.h.b16 %v7048
    %v7248 = vunpack.c.l.b16 %v7049
    %v7249 = vunpack.c.h.b16 %v7049
    %v7250 = vunpack.c.l.b16 %v7050
    %v7251 = vunpack.c.h.b16 %v7050
    %v7252 = vunpack.c.l.b16 %v7051
    %v7253 = vunpack.c.h.b16 %v7051
    %v7254 = vunpack.c.l.b16 %v7052
    %v7255 = vunpack.c.h.b16 %v7052
    %v7256 = vunpack.c.l.b16 %v7053
    %v7257 = vunpack.c.h.b16 %v7053
    %v7258 = vunpack.c.l.b16 %v7054
    %v7259 = vunpack.c.h.b16 %v7054
    %v7260 = vunpack.c.l.b16 %v7055
    %v7261 = vunpack.c.h.b16 %v7055
    %v7262 = vunpack.c.l.b16 %v7056
    %v7263 = vunpack.c.h.b16 %v7056
    %v7264 = vunpack.c.l.b16 %v7057
    %v7265 = vunpack.c.h.b16 %v7057
    %v7266 = vunpack.c.l.b16 %v7058
    %v7267 = vunpack.c.h.b16 %v7058
    %v7268 = vunpack.c.l.b16 %v7059
    %v7269 = vunpack.c.h.b16 %v7059
    %v7270 = vunpack.c.l.b16 %v7060
    %v7271 = vunpack.c.h.b16 %v7060
    %v7272 = vunpack.c.l.b16 %v7061
    %v7273 = vunpack.c.h.b16 %v7061
    %v7274 = vunpack.c.l.b16 %v7062
    %v7275 = vunpack.c.h.b16 %v7062
    %v7276 = vunpack.c.l.b16 %v7063
    %v7277 = vunpack.c.h.b16 %v7063
    %v7278 = vunpack.c.l.b16 %v7064
    %v7279 = vunpack.c.h.b16 %v7064
    %v7280 = vunpack.c.l.b16 %v7065
    %v7281 = vunpack.c.h.b16 %v7065
    %v7282 = vunpack.c.l.b16 %v7066
    %v7283 = vunpack.c.h.b16 %v7066
    %v7284 = vunpack.c.l.b16 %v7067
    %v7285 = vunpack.c.h.b16 %v7067
    %v7286 = vunpack.c.l.b16 %v7068
    %v7287 = vunpack.c.h.b16 %v7068
    %v7288 = vunpack.c.l.b16 %v7069
    %v7289 = vunpack.c.h.b16 %v7069
    %v7290 = vunpack.c.l.b16 %v7070
    %v7291 = vunpack.c.h.b16 %v7070
    %v7292 = vunpack.c.l.b16 %v7071
    %v7293 = vunpack.c.h.b16 %v7071
    %v7294 = vunpack.c.l.b16 %v7072
    %v7295 = vunpack.c.h.b16 %v7072
    %v7296 = vunpack.c.l.b16 %v7073
    %v7297 = vunpack.c.h.b16 %v7073
    %v7298 = vunpack.c.l.b16 %v7074
    %v7299 = vunpack.c.h.b16 %v7074
    %v7300 = vunpack.c.l.b16 %v7075
    %v7301 = vunpack.c.h.b16 %v7075
    %v7302 = vunpack.c.l.b16 %v7076
    %v7303 = vunpack.c.h.b16 %v7076
    %v7304 = vunpack.c.l.b16 %v7077
    %v7305 = vunpack.c.h.b16 %v7077
    %v7306 = vunpack.c.l.b16 %v7078
    %v7307 = vunpack.c.h.b16 %v7078
    %v7308 = vunpack.c.l.b16 %v7079
    %v7309 = vunpack.c.h.b16 %v7079
    %v7310 = vunpack.c.l.b16 %v7080
    %v7311 = vunpack.c.h.b16 %v7080
    %v7312 = vunpack.c.l.b16 %v7081
    %v7313 = vunpack.c.h.b16 %v7081
    %v7314 = vunpack.c.l.b16 %v7082
    %v7315 = vunpack.c.h.b16 %v7082
    %v7316 = vunpack.c.l.b16 %v7083
    %v7317 = vunpack.c.h.b16 %v7083
    %v7318 = vunpack.c.l.b16 %v7084
    %v7319 = vunpack.c.h.b16 %v7084
    %v7320 = vunpack.c.l.b16 %v7085
    %v7321 = vunpack.c.h.b16 %v7085
    %v7322 = vunpack.c.l.b16 %v7086
    %v7323 = vunpack.c.h.b16 %v7086
    %v7324 = vunpack.c.l.b16 %v7087
    %v7325 = vunpack.c.h.b16 %v7087
    %v7326 = vunpack.c.l.b16 %v7088
    %v7327 = vunpack.c.h.b16 %v7088
    %v7328 = vunpack.c.l.b16 %v7089
    %v7329 = vunpack.c.h.b16 %v7089
    %v7330 = vunpack.c.l.b16 %v7090
    %v7331 = vunpack.c.h.b16 %v7090
    %v7332 = vunpack.c.l.b16 %v7091
    %v7333 = vunpack.c.h.b16 %v7091
    %v7334 = vunpack.c.l.b16 %v7092
    %v7335 = vunpack.c.h.b16 %v7092
    %v7336 = vunpack.c.l.b16 %v7093
    %v7337 = vunpack.c.h.b16 %v7093
    %v7338 = vunpack.c.l.b16 %v7094
    %v7339 = vunpack.c.h.b16 %v7094
    %v7340 = vunpack.c.l.b16 %v7095
    %v7341 = vunpack.c.h.b16 %v7095
    %v7342 = vunpack.c.l.b16 %v7096
    %v7343 = vunpack.c.h.b16 %v7096
    %v7344 = vunpack.c.l.b16 %v7097
    %v7345 = vunpack.c.h.b16 %v7097
    %v7346 = vunpack.c.l.b16 %v7098
    %v7347 = vunpack.c.h.b16 %v7098
    %v7348 = vunpack.c.l.b16 %v7099
    %v7349 = vunpack.c.h.b16 %v7099
    %v7350 = vunpack.c.l.b16 %v7100
    %v7351 = vunpack.c.h.b16 %v7100
    %v7352 = vunpack.c.l.b16 %v7101
    %v7353 = vunpack.c.h.b16 %v7101
    %v7354 = vunpack.c.l.b16 %v7102
    %v7355 = vunpack.c.h.b16 %v7102
    %v7356 = vunpack.c.l.b16 %v7103
    %v7357 = vunpack.c.h.b16 %v7103
    %v7358 = vunpack.c.l.b16 %v7104
    %v7359 = vunpack.c.h.b16 %v7104
    %v7360 = vunpack.c.l.b16 %v7105
    %v7361 = vunpack.c.h.b16 %v7105
    %v7362 = vunpack.c.l.b16 %v7106
    %v7363 = vunpack.c.h.b16 %v7106
    %v7364 = vunpack.c.l.b16 %v7107
    %v7365 = vunpack.c.h.b16 %v7107
    %v7366 = vunpack.c.l.b16 %v7108
    %v7367 = vunpack.c.h.b16 %v7108
    %v7368 = vunpack.c.l.b16 %v7109
    %v7369 = vunpack.c.h.b16 %v7109
    %v7370 = vunpack.c.l.b16 %v7110
    %v7371 = vunpack.c.h.b16 %v7110
    %v7372 = vunpack.c.l.b16 %v7111
    %v7373 = vunpack.c.h.b16 %v7111
    %v7374 = vunpack.c.l.b16 %v7112
    %v7375 = vunpack.c.h.b16 %v7112
    %v7376 = vunpack.c.l.b16 %v7113
    %v7377 = vunpack.c.h.b16 %v7113
    %v7378 = vunpack.c.l.b16 %v7114
    %v7379 = vunpack.c.h.b16 %v7114
    %v7380 = vunpack.c.l.b16 %v7115
    %v7381 = vunpack.c.h.b16 %v7115
    %v7382 = vunpack.c.l.b16 %v7116
    %v7383 = vunpack.c.h.b16 %v7116
    %v7384 = vunpack.c.l.b16 %v7117
    %v7385 = vunpack.c.h.b16 %v7117
    %v7386 = vunpack.c.l.b16 %v7118
    %v7387 = vunpack.c.h.b16 %v7118
    %v7388 = vunpack.c.l.b16 %v7119
    %v7389 = vunpack.c.h.b16 %v7119
    %v7390 = vunpack.c.l.b16 %v7120
    %v7391 = vunpack.c.h.b16 %v7120
    %v7392 = vunpack.c.l.b16 %v7121
    %v7393 = vunpack.c.h.b16 %v7121
    %v7394 = vunpack.c.l.b16 %v7122
    %v7395 = vunpack.c.h.b16 %v7122
    %v7396 = vunpack.c.l.b16 %v7123
    %v7397 = vunpack.c.h.b16 %v7123
    %v7398 = vunpack.c.l.b16 %v7124
    %v7399 = vunpack.c.h.b16 %v7124
    %v7400 = vunpack.c.l.b16 %v7125
    %v7401 = vunpack.c.h.b16 %v7125
    %v7402 = vunpack.c.l.b16 %v7126
    %v7403 = vunpack.c.h.b16 %v7126
    %v7404 = vunpack.c.l.b16 %v7127
    %v7405 = vunpack.c.h.b16 %v7127
    %v7406 = vunpack.c.l.b16 %v7128
    %v7407 = vunpack.c.h.b16 %v7128
    %v7408 = vunpack.c.l.b16 %v7129
    %v7409 = vunpack.c.h.b16 %v7129
    %v7410 = vunpack.c.l.b16 %v7130
    %v7411 = vunpack.c.h.b16 %v7130
    %v7412 = vunpack.c.l.b16 %v7131
    %v7413 = vunpack.c.h.b16 %v7131
    %v7414 = vunpack.c.l.b16 %v7132
    %v7415 = vunpack.c.h.b16 %v7132
    %v7416 = vunpack.c.l.b16 %v7133
    %v7417 = vunpack.c.h.b16 %v7133
    %v7418 = vunpack.c.l.b16 %v7134
    %v7419 = vunpack.c.h.b16 %v7134
    %v7420 = vunpack.c.l.b16 %v7135
    %v7421 = vunpack.c.h.b16 %v7135
    %v7422 = vunpack.c.l.b16 %v7136
    %v7423 = vunpack.c.h.b16 %v7136
    %v7424 = vunpack.c.l.b16 %v7137
    %v7425 = vunpack.c.h.b16 %v7137
    %v7426 = vpack.c.b16 %v7240, %v7234
    %v7427 = vpack.c.b16 %v7241, %v7235
    %v7428 = vpack.c.b16 %v7242, %v7236
    %v7429 = vpack.c.b16 %v7243, %v7237
    %v7430 = vpack.c.b16 %v7244, %v7238
    %v7431 = vpack.c.b16 %v7245, %v7239
    %v7432 = vpack.c.b16 %v7252, %v7246
    %v7433 = vpack.c.b16 %v7253, %v7247
    %v7434 = vpack.c.b16 %v7254, %v7248
    %v7435 = vpack.c.b16 %v7255, %v7249
    %v7436 = vpack.c.b16 %v7256, %v7250
    %v7437 = vpack.c.b16 %v7257, %v7251
    %v7438 = vpack.c.b16 %v7264, %v7258
    %v7439 = vpack.c.b16 %v7265, %v7259
    %v7440 = vpack.c.b16 %v7266, %v7260
    %v7441 = vpack.c.b16 %v7267, %v7261
    %v7442 = vpack.c.b16 %v7268, %v7262
    %v7443 = vpack.c.b16 %v7269, %v7263
    %v7444 = vpack.c.b16 %v7276, %v7270
    %v7445 = vpack.c.b16 %v7277, %v7271
    %v7446 = vpack.c.b16 %v7278, %v7272
    %v7447 = vpack.c.b16 %v7279, %v7273
    %v7448 = vpack.c.b16 %v7280, %v7274
    %v7449 = vpack.c.b16 %v7281, %v7275
    %v7450 = vpack.c.b16 %v7288, %v7282
    %v7451 = vpack.c.b16 %v7289, %v7283
    %v7452 = vpack.c.b16 %v7290, %v7284
    %v7453 = vpack.c.b16 %v7291, %v7285
    %v7454 = vpack.c.b16 %v7292, %v7286
    %v7455 = vpack.c.b16 %v7293, %v7287
    %v7456 = vpack.c.b16 %v7300, %v7294
    %v7457 = vpack.c.b16 %v7301, %v7295
    %v7458 = vpack.c.b16 %v7302, %v7296
    %v7459 = vpack.c.b16 %v7303, %v7297
    %v7460 = vpack.c.b16 %v7304, %v7298
    %v7461 = vpack.c.b16 %v7305, %v7299
    %v7462 = vpack.c.b16 %v7312, %v7306
    %v7463 = vpack.c.b16 %v7313, %v7307
    %v7464 = vpack.c.b16 %v7314, %v7308
    %v7465 = vpack.c.b16 %v7315, %v7309
    %v7466 = vpack.c.b16 %v7316, %v7310
    %v7467 = vpack.c.b16 %v7317, %v7311
    %v7468 = vpack.c.b16 %v7324, %v7318
    %v7469 = vpack.c.b16 %v7325, %v7319
    %v7470 = vpack.c.b16 %v7326, %v7320
    %v7471 = vpack.c.b16 %v7327, %v7321
    %v7472 = vpack.c.b16 %v7328, %v7322
    %v7473 = vpack.c.b16 %v7329, %v7323
    %v7474 = vpack.c.b16 %v7336, %v7330
    %v7475 = vpack.c.b16 %v7337, %v7331
    %v7476 = vpack.c.b16 %v7338, %v7332
    %v7477 = vpack.c.b16 %v7339, %v7333
    %v7478 = vpack.c.b16 %v7340, %v7334
    %v7479 = vpack.c.b16 %v7341, %v7335
    %v7480 = vpack.c.b16 %v7348, %v7342
    %v7481 = vpack.c.b16 %v7349, %v7343
    %v7482 = vpack.c.b16 %v7350, %v7344
    %v7483 = vpack.c.b16 %v7351, %v7345
    %v7484 = vpack.c.b16 %v7352, %v7346
    %v7485 = vpack.c.b16 %v7353, %v7347
    %v7486 = vpack.c.b16 %v7360, %v7354
    %v7487 = vpack.c.b16 %v7361, %v7355
    %v7488 = vpack.c.b16 %v7362, %v7356
    %v7489 = vpack.c.b16 %v7363, %v7357
    %v7490 = vpack.c.b16 %v7364, %v7358
    %v7491 = vpack.c.b16 %v7365, %v7359
    %v7492 = vpack.c.b16 %v7372, %v7366
    %v7493 = vpack.c.b16 %v7373, %v7367
    %v7494 = vpack.c.b16 %v7374, %v7368
    %v7495 = vpack.c.b16 %v7375, %v7369
    %v7496 = vpack.c.b16 %v7376, %v7370
    %v7497 = vpack.c.b16 %v7377, %v7371
    %v7498 = vpack.c.b16 %v7384, %v7378
    %v7499 = vpack.c.b16 %v7385, %v7379
    %v7500 = vpack.c.b16 %v7386, %v7380
    %v7501 = vpack.c.b16 %v7387, %v7381
    %v7502 = vpack.c.b16 %v7388, %v7382
    %v7503 = vpack.c.b16 %v7389, %v7383
    %v7504 = vpack.c.b16 %v7396, %v7390
    %v7505 = vpack.c.b16 %v7397, %v7391
    %v7506 = vpack.c.b16 %v7398, %v7392
    %v7507 = vpack.c.b16 %v7399, %v7393
    %v7508 = vpack.c.b16 %v7400, %v7394
    %v7509 = vpack.c.b16 %v7401, %v7395
    %v7510 = vpack.c.b16 %v7408, %v7402
    %v7511 = vpack.c.b16 %v7409, %v7403
    %v7512 = vpack.c.b16 %v7410, %v7404
    %v7513 = vpack.c.b16 %v7411, %v7405
    %v7514 = vpack.c.b16 %v7412, %v7406
    %v7515 = vpack.c.b16 %v7413, %v7407
    %v7516 = vpack.c.b16 %v7420, %v7414
    %v7517 = vpack.c.b16 %v7421, %v7415
    %v7518 = vpack.c.b16 %v7422, %v7416
    %v7519 = vpack.c.b16 %v7423, %v7417
    %v7520 = vpack.c.b16 %v7424, %v7418
    %v7521 = vpack.c.b16 %v7425, %v7419
    %7618 = vmatpush.bf16.msra.mxu0 %v7468
    %7619 = vmatpush.bf16.msra.mxu0 %v7462
    %7620 = vmatpush.bf16.msra.mxu0 %v7456
    %7621 = vmatpush.bf16.msra.mxu0 %v7450
    %7622 = vmatpush.bf16.msra.mxu0 %v7444
    %7623 = vmatpush.bf16.msra.mxu0 %v7438
    %7624 = vmatpush.bf16.msra.mxu0 %v7432
    %7625 = vmatpush.bf16.msra.mxu0 %v7426
    %7626 = vmatmul.bf16.gmra.mxu0 %v7034
    %v7627 = vpop.f32.mrf.mxu0
    %v7628 = vadd.f32 0.0, %v7627
    %v7629 = vpop.f32.mrf.mxu0
    %v7630 = vadd.f32 0.0, %v7629
    %7631 = vdwg.mxu0
    %7632 = vmatpush.bf16.msra.mxu0 %v7516
    %7633 = vmatpush.bf16.msra.mxu0 %v7510
    %7634 = vmatpush.bf16.msra.mxu0 %v7504
    %7635 = vmatpush.bf16.msra.mxu0 %v7498
    %7636 = vmatpush.bf16.msra.mxu0 %v7492
    %7637 = vmatpush.bf16.msra.mxu0 %v7486
    %7638 = vmatpush.bf16.msra.mxu0 %v7480
    %7639 = vmatpush.bf16.msra.mxu0 %v7474
    %7640 = vmatmul.bf16.gmra.mxu0 %v7040
    %v7641 = vpop.f32.mrf.mxu0
    %v7642 = vadd.f32 %v7628, %v7641
    %v7643 = vpop.f32.mrf.mxu0
    %v7644 = vadd.f32 %v7630, %v7643
    %7645 = vdwg.mxu0
    %7646 = vmatpush.bf16.msra.mxu0 %v7469
    %7647 = vmatpush.bf16.msra.mxu0 %v7463
    %7648 = vmatpush.bf16.msra.mxu0 %v7457
    %7649 = vmatpush.bf16.msra.mxu0 %v7451
    %7650 = vmatpush.bf16.msra.mxu0 %v7445
    %7651 = vmatpush.bf16.msra.mxu0 %v7439
    %7652 = vmatpush.bf16.msra.mxu0 %v7433
    %7653 = vmatpush.bf16.msra.mxu0 %v7427
    %7654 = vmatmul.bf16.gmra.mxu0 %v7034
    %v7655 = vpop.f32.mrf.mxu0
    %v7656 = vadd.f32 0.0, %v7655
    %v7657 = vpop.f32.mrf.mxu0
    %v7658 = vadd.f32 0.0, %v7657
    %7659 = vdwg.mxu0
    %7660 = vmatpush.bf16.msra.mxu0 %v7517
    %7661 = vmatpush.bf16.msra.mxu0 %v7511
    %7662 = vmatpush.bf16.msra.mxu0 %v7505
    %7663 = vmatpush.bf16.msra.mxu0 %v7499
    %7664 = vmatpush.bf16.msra.mxu0 %v7493
    %7665 = vmatpush.bf16.msra.mxu0 %v7487
    %7666 = vmatpush.bf16.msra.mxu0 %v7481
    %7667 = vmatpush.bf16.msra.mxu0 %v7475
    %7668 = vmatmul.bf16.gmra.mxu0 %v7040
    %v7669 = vpop.f32.mrf.mxu0
    %v7670 = vadd.f32 %v7656, %v7669
    %v7671 = vpop.f32.mrf.mxu0
    %v7672 = vadd.f32 %v7658, %v7671
    %7673 = vdwg.mxu0
    %7674 = vmatpush.bf16.msra.mxu0 %v7470
    %7675 = vmatpush.bf16.msra.mxu0 %v7464
    %7676 = vmatpush.bf16.msra.mxu0 %v7458
    %7677 = vmatpush.bf16.msra.mxu0 %v7452
    %7678 = vmatpush.bf16.msra.mxu0 %v7446
    %7679 = vmatpush.bf16.msra.mxu0 %v7440
    %7680 = vmatpush.bf16.msra.mxu0 %v7434
    %7681 = vmatpush.bf16.msra.mxu0 %v7428
    %7682 = vmatmul.bf16.gmra.mxu0 %v7034
    %v7683 = vpop.f32.mrf.mxu0
    %v7684 = vadd.f32 0.0, %v7683
    %v7685 = vpop.f32.mrf.mxu0
    %v7686 = vadd.f32 0.0, %v7685
    %7687 = vdwg.mxu0
    %7688 = vmatpush.bf16.msra.mxu0 %v7518
    %7689 = vmatpush.bf16.msra.mxu0 %v7512
    %7690 = vmatpush.bf16.msra.mxu0 %v7506
    %7691 = vmatpush.bf16.msra.mxu0 %v7500
    %7692 = vmatpush.bf16.msra.mxu0 %v7494
    %7693 = vmatpush.bf16.msra.mxu0 %v7488
    %7694 = vmatpush.bf16.msra.mxu0 %v7482
    %7695 = vmatpush.bf16.msra.mxu0 %v7476
    %7696 = vmatmul.bf16.gmra.mxu0 %v7040
    %v7697 = vpop.f32.mrf.mxu0
    %v7698 = vadd.f32 %v7684, %v7697
    %v7699 = vpop.f32.mrf.mxu0
    %v7700 = vadd.f32 %v7686, %v7699
    %7701 = vdwg.mxu0
    %7702 = vmatpush.bf16.msra.mxu0 %v7471
    %7703 = vmatpush.bf16.msra.mxu0 %v7465
    %7704 = vmatpush.bf16.msra.mxu0 %v7459
    %7705 = vmatpush.bf16.msra.mxu0 %v7453
    %7706 = vmatpush.bf16.msra.mxu0 %v7447
    %7707 = vmatpush.bf16.msra.mxu0 %v7441
    %7708 = vmatpush.bf16.msra.mxu0 %v7435
    %7709 = vmatpush.bf16.msra.mxu0 %v7429
    %7710 = vmatmul.bf16.gmra.mxu0 %v7034
    %v7711 = vpop.f32.mrf.mxu0
    %v7712 = vadd.f32 0.0, %v7711
    %v7713 = vpop.f32.mrf.mxu0
    %v7714 = vadd.f32 0.0, %v7713
    %7715 = vdwg.mxu0
    %7716 = vmatpush.bf16.msra.mxu0 %v7519
    %7717 = vmatpush.bf16.msra.mxu0 %v7513
    %7718 = vmatpush.bf16.msra.mxu0 %v7507
    %7719 = vmatpush.bf16.msra.mxu0 %v7501
    %7720 = vmatpush.bf16.msra.mxu0 %v7495
    %7721 = vmatpush.bf16.msra.mxu0 %v7489
    %7722 = vmatpush.bf16.msra.mxu0 %v7483
    %7723 = vmatpush.bf16.msra.mxu0 %v7477
    %7724 = vmatmul.bf16.gmra.mxu0 %v7040
    %v7725 = vpop.f32.mrf.mxu0
    %v7726 = vadd.f32 %v7712, %v7725
    %v7727 = vpop.f32.mrf.mxu0
    %v7728 = vadd.f32 %v7714, %v7727
    %7729 = vdwg.mxu0
    %7730 = vmatpush.bf16.msra.mxu0 %v7472
    %7731 = vmatpush.bf16.msra.mxu0 %v7466
    %7732 = vmatpush.bf16.msra.mxu0 %v7460
    %7733 = vmatpush.bf16.msra.mxu0 %v7454
    %7734 = vmatpush.bf16.msra.mxu0 %v7448
    %7735 = vmatpush.bf16.msra.mxu0 %v7442
    %7736 = vmatpush.bf16.msra.mxu0 %v7436
    %7737 = vmatpush.bf16.msra.mxu0 %v7430
    %7738 = vmatmul.bf16.gmra.mxu0 %v7034
    %v7739 = vpop.f32.mrf.mxu0
    %v7740 = vadd.f32 0.0, %v7739
    %v7741 = vpop.f32.mrf.mxu0
    %v7742 = vadd.f32 0.0, %v7741
    %7743 = vdwg.mxu0
    %7744 = vmatpush.bf16.msra.mxu0 %v7520
    %7745 = vmatpush.bf16.msra.mxu0 %v7514
    %7746 = vmatpush.bf16.msra.mxu0 %v7508
    %7747 = vmatpush.bf16.msra.mxu0 %v7502
    %7748 = vmatpush.bf16.msra.mxu0 %v7496
    %7749 = vmatpush.bf16.msra.mxu0 %v7490
    %7750 = vmatpush.bf16.msra.mxu0 %v7484
    %7751 = vmatpush.bf16.msra.mxu0 %v7478
    %7752 = vmatmul.bf16.gmra.mxu0 %v7040
    %v7753 = vpop.f32.mrf.mxu0
    %v7754 = vadd.f32 %v7740, %v7753
    %v7755 = vpop.f32.mrf.mxu0
    %v7756 = vadd.f32 %v7742, %v7755
    %7757 = vdwg.mxu0
    %7758 = vmatpush.bf16.msra.mxu0 %v7473
    %7759 = vmatpush.bf16.msra.mxu0 %v7467
    %7760 = vmatpush.bf16.msra.mxu0 %v7461
    %7761 = vmatpush.bf16.msra.mxu0 %v7455
    %7762 = vmatpush.bf16.msra.mxu0 %v7449
    %7763 = vmatpush.bf16.msra.mxu0 %v7443
    %7764 = vmatpush.bf16.msra.mxu0 %v7437
    %7765 = vmatpush.bf16.msra.mxu0 %v7431
    %7766 = vmatmul.bf16.gmra.mxu0 %v7034
    %v7767 = vpop.f32.mrf.mxu0
    %v7768 = vadd.f32 0.0, %v7767
    %v7769 = vpop.f32.mrf.mxu0
    %v7770 = vadd.f32 0.0, %v7769
    %7771 = vdwg.mxu0
    %7772 = vmatpush.bf16.msra.mxu0 %v7521
    %7773 = vmatpush.bf16.msra.mxu0 %v7515
    %7774 = vmatpush.bf16.msra.mxu0 %v7509
    %7775 = vmatpush.bf16.msra.mxu0 %v7503
    %7776 = vmatpush.bf16.msra.mxu0 %v7497
    %7777 = vmatpush.bf16.msra.mxu0 %v7491
    %7778 = vmatpush.bf16.msra.mxu0 %v7485
    %7779 = vmatpush.bf16.msra.mxu0 %v7479
    %7780 = vmatmul.bf16.gmra.mxu0 %v7040
    %v7781 = vpop.f32.mrf.mxu0
    %v7782 = vadd.f32 %v7768, %v7781
    %v7783 = vpop.f32.mrf.mxu0
    %v7784 = vadd.f32 %v7770, %v7783
    %7785 = vdwg.mxu0
    %v7786 = vld [vmem:[#allocation4 + $0x120] sm:$0xff]
    %v7787 = vld [vmem:[#allocation4 + $0x128] sm:$0xff]
    %v7788 = vld [vmem:[#allocation4 + $0x130] sm:$0xff]
    %v7789 = vld [vmem:[#allocation4 + $0x138] sm:$0xff]
    %v7790 = vld [vmem:[#allocation4 + $0x140] sm:$0xff]
    %v7791 = vld [vmem:[#allocation4 + $0x148] sm:$0xff]
    %v7792 = vadd.f32 %v7786, %v7642
    %v7793 = vadd.f32 %v7789, %v7644
    %v7794 = vxor.u32 %v7792, 2147483648
    %v7795 = vxor.u32 %v7793, 2147483648
    %v7796 = vmul.f32 %v7794, 1.442695
    %v7797 = vpow.pop %v7796
    %v7798 = vmul.f32 %v7795, 1.442695
    %v7799 = vpow.pop %v7798
    %v7800 = vadd.f32 %v7797, 1.0
    %v7801 = vadd.f32 %v7799, 1.0
    %v7802 = vrcp.pop %v7800
    %v7803 = vmul.f32 %v7800, %v7802
    %v7804 = vsub.f32 1.0, %v7803
    %v7805 = vmul.f32 %v7802, %v7804
    %v7806 = vadd.f32 %v7802, %v7805
    %vm7807 = vweird.f32 %v7800
    %vm7808 = vweird.f32 %v7802
    %vm7809 = vmor %vm7807, %vm7808
    %v7810 = vsel %vm7809, %v7802, %v7806
    %v7811 = vand.u32 2147483647, %v7800
    %vm7812 = vcmp.eq.f32.partialorder %v7811, 8.507059e+37
    %v7813 = vand.u32 %v7800, 2147483648
    %v7814 = vor.u32 1.1754944e-38, %v7813
    %v7815 = vsel %vm7812, %v7814, %v7810
    %v7816 = vmul.f32 1.0, %v7815
    %v7817 = vrcp.pop %v7801
    %v7818 = vmul.f32 %v7801, %v7817
    %v7819 = vsub.f32 1.0, %v7818
    %v7820 = vmul.f32 %v7817, %v7819
    %v7821 = vadd.f32 %v7817, %v7820
    %vm7822 = vweird.f32 %v7801
    %vm7823 = vweird.f32 %v7817
    %vm7824 = vmor %vm7822, %vm7823
    %v7825 = vsel %vm7824, %v7817, %v7821
    %v7826 = vand.u32 2147483647, %v7801
    %vm7827 = vcmp.eq.f32.partialorder %v7826, 8.507059e+37
    %v7828 = vand.u32 %v7801, 2147483648
    %v7829 = vor.u32 1.1754944e-38, %v7828
    %v7830 = vsel %vm7827, %v7829, %v7825
    %v7831 = vmul.f32 1.0, %v7830
    %v7832 = vadd.f32 %v7787, %v7670
    %v7833 = vadd.f32 %v7790, %v7672
    %v7834 = vxor.u32 %v7832, 2147483648
    %v7835 = vxor.u32 %v7833, 2147483648
    %v7836 = vmul.f32 %v7834, 1.442695
    %v7837 = vpow.pop %v7836
    %v7838 = vmul.f32 %v7835, 1.442695
    %v7839 = vpow.pop %v7838
    %v7840 = vadd.f32 %v7837, 1.0
    %v7841 = vadd.f32 %v7839, 1.0
    %v7842 = vrcp.pop %v7840
    %v7843 = vmul.f32 %v7840, %v7842
    %v7844 = vsub.f32 1.0, %v7843
    %v7845 = vmul.f32 %v7842, %v7844
    %v7846 = vadd.f32 %v7842, %v7845
    %vm7847 = vweird.f32 %v7840
    %vm7848 = vweird.f32 %v7842
    %vm7849 = vmor %vm7847, %vm7848
    %v7850 = vsel %vm7849, %v7842, %v7846
    %v7851 = vand.u32 2147483647, %v7840
    %vm7852 = vcmp.eq.f32.partialorder %v7851, 8.507059e+37
    %v7853 = vand.u32 %v7840, 2147483648
    %v7854 = vor.u32 1.1754944e-38, %v7853
    %v7855 = vsel %vm7852, %v7854, %v7850
    %v7856 = vmul.f32 1.0, %v7855
    %v7857 = vrcp.pop %v7841
    %v7858 = vmul.f32 %v7841, %v7857
    %v7859 = vsub.f32 1.0, %v7858
    %v7860 = vmul.f32 %v7857, %v7859
    %v7861 = vadd.f32 %v7857, %v7860
    %vm7862 = vweird.f32 %v7841
    %vm7863 = vweird.f32 %v7857
    %vm7864 = vmor %vm7862, %vm7863
    %v7865 = vsel %vm7864, %v7857, %v7861
    %v7866 = vand.u32 2147483647, %v7841
    %vm7867 = vcmp.eq.f32.partialorder %v7866, 8.507059e+37
    %v7868 = vand.u32 %v7841, 2147483648
    %v7869 = vor.u32 1.1754944e-38, %v7868
    %v7870 = vsel %vm7867, %v7869, %v7865
    %v7871 = vmul.f32 1.0, %v7870
    %v7872 = vadd.f32 %v7698, %v968
    %v7873 = vadd.f32 %v7700, %v968
    %v7874 = vmul.f32 %v7816, %v7872
    %v7875 = vmul.f32 %v7831, %v7873
    %v7876 = vadd.f32 %v7788, %v7874
    %v7877 = vadd.f32 %v7791, %v7875
    %v7878 = vtanh.pop %v7876
    %v7879 = vtanh.pop %v7877
    %v7880 = vsub.f32 1.0, %v7856
    %v7881 = vsub.f32 1.0, %v7871
    %v7882 = vmul.f32 %v7880, %v7878
    %v7883 = vmul.f32 %v7881, %v7879
    %v7884 = vmul.f32 %v7856, %v7000
    %v7885 = vmul.f32 %v7871, %v7001
    %v7886 = vadd.f32 %v7882, %v7884
    %v7887 = vadd.f32 %v7883, %v7885
    %v7888 = vld [vmem:[#allocation5 + $0x30] sm:$0xff]
    %v7889 = vld [vmem:[#allocation5 + $0x38] sm:$0xff]
    %v7890 = vld [vmem:[#allocation5 + $0x40] sm:$0xff]
    %v7891 = vld [vmem:[#allocation5 + $0x48] sm:$0xff]
    %v7892 = vld [vmem:[#allocation5 + $0x50] sm:$0xff]
    %v7893 = vld [vmem:[#allocation5 + $0x58] sm:$0xff]
    %v7894 = vadd.f32 %v7888, %v7726
    %v7895 = vadd.f32 %v7891, %v7728
    %v7896 = vxor.u32 %v7894, 2147483648
    %v7897 = vxor.u32 %v7895, 2147483648
    %v7898 = vmul.f32 %v7896, 1.442695
    %v7899 = vpow.pop %v7898
    %v7900 = vmul.f32 %v7897, 1.442695
    %v7901 = vpow.pop %v7900
    %v7902 = vadd.f32 %v7899, 1.0
    %v7903 = vadd.f32 %v7901, 1.0
    %v7904 = vrcp.pop %v7902
    %v7905 = vmul.f32 %v7902, %v7904
    %v7906 = vsub.f32 1.0, %v7905
    %v7907 = vmul.f32 %v7904, %v7906
    %v7908 = vadd.f32 %v7904, %v7907
    %vm7909 = vweird.f32 %v7902
    %vm7910 = vweird.f32 %v7904
    %vm7911 = vmor %vm7909, %vm7910
    %v7912 = vsel %vm7911, %v7904, %v7908
    %v7913 = vand.u32 2147483647, %v7902
    %vm7914 = vcmp.eq.f32.partialorder %v7913, 8.507059e+37
    %v7915 = vand.u32 %v7902, 2147483648
    %v7916 = vor.u32 1.1754944e-38, %v7915
    %v7917 = vsel %vm7914, %v7916, %v7912
    %v7918 = vmul.f32 1.0, %v7917
    %v7919 = vrcp.pop %v7903
    %v7920 = vmul.f32 %v7903, %v7919
    %v7921 = vsub.f32 1.0, %v7920
    %v7922 = vmul.f32 %v7919, %v7921
    %v7923 = vadd.f32 %v7919, %v7922
    %vm7924 = vweird.f32 %v7903
    %vm7925 = vweird.f32 %v7919
    %vm7926 = vmor %vm7924, %vm7925
    %v7927 = vsel %vm7926, %v7919, %v7923
    %v7928 = vand.u32 2147483647, %v7903
    %vm7929 = vcmp.eq.f32.partialorder %v7928, 8.507059e+37
    %v7930 = vand.u32 %v7903, 2147483648
    %v7931 = vor.u32 1.1754944e-38, %v7930
    %v7932 = vsel %vm7929, %v7931, %v7927
    %v7933 = vmul.f32 1.0, %v7932
    %v7934 = vadd.f32 %v7889, %v7754
    %v7935 = vadd.f32 %v7892, %v7756
    %v7936 = vxor.u32 %v7934, 2147483648
    %v7937 = vxor.u32 %v7935, 2147483648
    %v7938 = vmul.f32 %v7936, 1.442695
    %v7939 = vpow.pop %v7938
    %v7940 = vmul.f32 %v7937, 1.442695
    %v7941 = vpow.pop %v7940
    %v7942 = vadd.f32 %v7939, 1.0
    %v7943 = vadd.f32 %v7941, 1.0
    %v7944 = vrcp.pop %v7942
    %v7945 = vmul.f32 %v7942, %v7944
    %v7946 = vsub.f32 1.0, %v7945
    %v7947 = vmul.f32 %v7944, %v7946
    %v7948 = vadd.f32 %v7944, %v7947
    %vm7949 = vweird.f32 %v7942
    %vm7950 = vweird.f32 %v7944
    %vm7951 = vmor %vm7949, %vm7950
    %v7952 = vsel %vm7951, %v7944, %v7948
    %v7953 = vand.u32 2147483647, %v7942
    %vm7954 = vcmp.eq.f32.partialorder %v7953, 8.507059e+37
    %v7955 = vand.u32 %v7942, 2147483648
    %v7956 = vor.u32 1.1754944e-38, %v7955
    %v7957 = vsel %vm7954, %v7956, %v7952
    %v7958 = vmul.f32 1.0, %v7957
    %v7959 = vrcp.pop %v7943
    %v7960 = vmul.f32 %v7943, %v7959
    %v7961 = vsub.f32 1.0, %v7960
    %v7962 = vmul.f32 %v7959, %v7961
    %v7963 = vadd.f32 %v7959, %v7962
    %vm7964 = vweird.f32 %v7943
    %vm7965 = vweird.f32 %v7959
    %vm7966 = vmor %vm7964, %vm7965
    %v7967 = vsel %vm7966, %v7959, %v7963
    %v7968 = vand.u32 2147483647, %v7943
    %vm7969 = vcmp.eq.f32.partialorder %v7968, 8.507059e+37
    %v7970 = vand.u32 %v7943, 2147483648
    %v7971 = vor.u32 1.1754944e-38, %v7970
    %v7972 = vsel %vm7969, %v7971, %v7967
    %v7973 = vmul.f32 1.0, %v7972
    %v7974 = vadd.f32 %v7782, %v973
    %v7975 = vadd.f32 %v7784, %v973
    %v7976 = vmul.f32 %v7918, %v7974
    %v7977 = vmul.f32 %v7933, %v7975
    %v7978 = vadd.f32 %v7890, %v7976
    %v7979 = vadd.f32 %v7893, %v7977
    %v7980 = vtanh.pop %v7978
    %v7981 = vtanh.pop %v7979
    %v7982 = vsub.f32 1.0, %v7958
    %v7983 = vsub.f32 1.0, %v7973
    %v7984 = vmul.f32 %v7982, %v7980
    %v7985 = vmul.f32 %v7983, %v7981
    %v7986 = vmul.f32 %v7958, %v7012
    %v7987 = vmul.f32 %v7973, %v7013
    %v7988 = vadd.f32 %v7984, %v7986
    %v7989 = vadd.f32 %v7985, %v7987
    %s7990 = sadd.s32 %s107, 6
    %v7991 = vstv %s7990
    %vm7992 = vcmp.lt.s32.totalorder %v7991, %v105
    %vm7993 = vcmp.lt.s32.totalorder %v7991, %v106
    %s7994 = sadd.s32 %s109, 1
    %v7995 = vstv %s7994
    %vm7996 = vcmp.lt.s32.totalorder %v7995, %v105
    %vm7997 = vcmp.lt.s32.totalorder %v7995, %v106
    %v7998 = vsel %vm7992, 1, 0
    %v7999 = vsel %vm7993, 1, 0
    %8000 = vset.pattern.permute.xlu0 0
    %8001 = vperm.xlu0 %8000, %v7998
    %v8002 = vpop.permute.xlu0 %8001
    %8003 = vset.pattern.permute.xlu0 0
    %8004 = vperm.xlu0 %8003, %v7999
    %v8005 = vpop.permute.xlu0 %8004
    %vm8006 = vcmp.eq.s32.totalorder %v8002, 1
    %vm8007 = vcmp.eq.s32.totalorder %v8005, 1
    %v8008 = vsel %vm8006, %v7886, %v7000
    %v8009 = vsel %vm8007, %v7887, %v7001
    %v8010 = vsel %vm7996, 1, 0
    %v8011 = vsel %vm7997, 1, 0
    %8012 = vset.pattern.permute.xlu0 0
    %8013 = vperm.xlu0 %8012, %v8010
    %v8014 = vpop.permute.xlu0 %8013
    %8015 = vset.pattern.permute.xlu0 0
    %8016 = vperm.xlu0 %8015, %v8011
    %v8017 = vpop.permute.xlu0 %8016
    %vm8018 = vcmp.eq.s32.totalorder %v8014, 1
    %vm8019 = vcmp.eq.s32.totalorder %v8017, 1
    %v8020 = vsel %vm8018, %v7988, %v7012
    %v8021 = vsel %vm8019, %v7989, %v7013
    %v8022 = vsel %vm8006, %v7886, 0.0
    %v8023 = vsel %vm8007, %v7887, 0.0
    %v8024 = vpack.c.bf16 %v8022, %v8022
    %v8025 = vpack.c.bf16 %v8023, %v8023
    %8026 = vst [vmem:[%s7 + $0x30] sm:$0xf] %v8024
    %8027 = vst [vmem:[%s7 + $0x34] sm:$0xf] %v8025
    %v8028 = vsel %vm8018, %v7988, 0.0
    %v8029 = vsel %vm8019, %v7989, 0.0
    %v8030 = vpack.c.bf16 %v8028, %v8028
    %v8031 = vpack.c.bf16 %v8029, %v8029
    %8032 = vst [vmem:[%s94 + $0x8] sm:$0xf] %v8030
    %8033 = vst [vmem:[%s94 + $0xc] sm:$0xf] %v8031
    %v8034 = vpack.c.bf16 %v8008, %v8008
    %v8035 = vpack.c.bf16 %v8009, %v8009
    %v8036 = vpack.c.bf16 %v8020, %v8020
    %v8037 = vpack.c.bf16 %v8021, %v8021
    %v8040 = vunpack.c.l.b16 %v8034
    %v8041 = vunpack.c.l.b16 %v8035
    %v8042 = vpack.c.b16 %v8041, %v8040
    %v8046 = vunpack.c.l.b16 %v8036
    %v8047 = vunpack.c.l.b16 %v8037
    %v8048 = vpack.c.b16 %v8047, %v8046
    %v8050 = vld [vmem:[#allocation8] sm:$0xff]
    %v8051 = vld [vmem:[#allocation8 + $0x8] sm:$0xff]
    %v8052 = vld [vmem:[#allocation8 + $0x10] sm:$0xff]
    %v8053 = vld [vmem:[#allocation8 + $0x18] sm:$0xff]
    %v8054 = vld [vmem:[#allocation8 + $0x20] sm:$0xff]
    %v8055 = vld [vmem:[#allocation8 + $0x28] sm:$0xff]
    %v8056 = vld [vmem:[#allocation8 + $0x30] sm:$0xff]
    %v8057 = vld [vmem:[#allocation8 + $0x38] sm:$0xff]
    %v8058 = vld [vmem:[#allocation8 + $0x40] sm:$0xff]
    %v8059 = vld [vmem:[#allocation8 + $0x48] sm:$0xff]
    %v8060 = vld [vmem:[#allocation8 + $0x50] sm:$0xff]
    %v8061 = vld [vmem:[#allocation8 + $0x58] sm:$0xff]
    %v8062 = vld [vmem:[#allocation8 + $0x60] sm:$0xff]
    %v8063 = vld [vmem:[#allocation8 + $0x68] sm:$0xff]
    %v8064 = vld [vmem:[#allocation8 + $0x70] sm:$0xff]
    %v8065 = vld [vmem:[#allocation8 + $0x78] sm:$0xff]
    %v8066 = vld [vmem:[#allocation8 + $0x80] sm:$0xff]
    %v8067 = vld [vmem:[#allocation8 + $0x88] sm:$0xff]
    %v8068 = vld [vmem:[#allocation8 + $0x90] sm:$0xff]
    %v8069 = vld [vmem:[#allocation8 + $0x98] sm:$0xff]
    %v8070 = vld [vmem:[#allocation8 + $0xa0] sm:$0xff]
    %v8071 = vld [vmem:[#allocation8 + $0xa8] sm:$0xff]
    %v8072 = vld [vmem:[#allocation8 + $0xb0] sm:$0xff]
    %v8073 = vld [vmem:[#allocation8 + $0xb8] sm:$0xff]
    %v8074 = vld [vmem:[#allocation8 + $0xc0] sm:$0xff]
    %v8075 = vld [vmem:[#allocation8 + $0xc8] sm:$0xff]
    %v8076 = vld [vmem:[#allocation8 + $0xd0] sm:$0xff]
    %v8077 = vld [vmem:[#allocation8 + $0xd8] sm:$0xff]
    %v8078 = vld [vmem:[#allocation8 + $0xe0] sm:$0xff]
    %v8079 = vld [vmem:[#allocation8 + $0xe8] sm:$0xff]
    %v8080 = vld [vmem:[#allocation8 + $0xf0] sm:$0xff]
    %v8081 = vld [vmem:[#allocation8 + $0xf8] sm:$0xff]
    %v8082 = vld [vmem:[#allocation8 + $0x100] sm:$0xff]
    %v8083 = vld [vmem:[#allocation8 + $0x108] sm:$0xff]
    %v8084 = vld [vmem:[#allocation8 + $0x110] sm:$0xff]
    %v8085 = vld [vmem:[#allocation8 + $0x118] sm:$0xff]
    %v8086 = vld [vmem:[#allocation8 + $0x120] sm:$0xff]
    %v8087 = vld [vmem:[#allocation8 + $0x128] sm:$0xff]
    %v8088 = vld [vmem:[#allocation8 + $0x130] sm:$0xff]
    %v8089 = vld [vmem:[#allocation8 + $0x138] sm:$0xff]
    %v8090 = vld [vmem:[#allocation8 + $0x140] sm:$0xff]
    %v8091 = vld [vmem:[#allocation8 + $0x148] sm:$0xff]
    %v8092 = vld [vmem:[#allocation8 + $0x150] sm:$0xff]
    %v8093 = vld [vmem:[#allocation8 + $0x158] sm:$0xff]
    %v8094 = vld [vmem:[#allocation8 + $0x160] sm:$0xff]
    %v8095 = vld [vmem:[#allocation8 + $0x168] sm:$0xff]
    %v8096 = vld [vmem:[#allocation8 + $0x170] sm:$0xff]
    %v8097 = vld [vmem:[#allocation8 + $0x178] sm:$0xff]
    %v8098 = vld [vmem:[#allocation8 + $0x180] sm:$0xff]
    %v8099 = vld [vmem:[#allocation8 + $0x188] sm:$0xff]
    %v8100 = vld [vmem:[#allocation8 + $0x190] sm:$0xff]
    %v8101 = vld [vmem:[#allocation8 + $0x198] sm:$0xff]
    %v8102 = vld [vmem:[#allocation8 + $0x1a0] sm:$0xff]
    %v8103 = vld [vmem:[#allocation8 + $0x1a8] sm:$0xff]
    %v8104 = vld [vmem:[#allocation8 + $0x1b0] sm:$0xff]
    %v8105 = vld [vmem:[#allocation8 + $0x1b8] sm:$0xff]
    %v8106 = vld [vmem:[#allocation8 + $0x1c0] sm:$0xff]
    %v8107 = vld [vmem:[#allocation8 + $0x1c8] sm:$0xff]
    %v8108 = vld [vmem:[#allocation8 + $0x1d0] sm:$0xff]
    %v8109 = vld [vmem:[#allocation8 + $0x1d8] sm:$0xff]
    %v8110 = vld [vmem:[#allocation8 + $0x1e0] sm:$0xff]
    %v8111 = vld [vmem:[#allocation8 + $0x1e8] sm:$0xff]
    %v8112 = vld [vmem:[#allocation8 + $0x1f0] sm:$0xff]
    %v8113 = vld [vmem:[#allocation8 + $0x1f8] sm:$0xff]
    %v8114 = vld [vmem:[#allocation8 + $0x200] sm:$0xff]
    %v8115 = vld [vmem:[#allocation8 + $0x208] sm:$0xff]
    %v8116 = vld [vmem:[#allocation8 + $0x210] sm:$0xff]
    %v8117 = vld [vmem:[#allocation8 + $0x218] sm:$0xff]
    %v8118 = vld [vmem:[#allocation8 + $0x220] sm:$0xff]
    %v8119 = vld [vmem:[#allocation8 + $0x228] sm:$0xff]
    %v8120 = vld [vmem:[#allocation8 + $0x230] sm:$0xff]
    %v8121 = vld [vmem:[#allocation8 + $0x238] sm:$0xff]
    %v8122 = vld [vmem:[#allocation8 + $0x240] sm:$0xff]
    %v8123 = vld [vmem:[#allocation8 + $0x248] sm:$0xff]
    %v8124 = vld [vmem:[#allocation8 + $0x250] sm:$0xff]
    %v8125 = vld [vmem:[#allocation8 + $0x258] sm:$0xff]
    %v8126 = vld [vmem:[#allocation8 + $0x260] sm:$0xff]
    %v8127 = vld [vmem:[#allocation8 + $0x268] sm:$0xff]
    %v8128 = vld [vmem:[#allocation8 + $0x270] sm:$0xff]
    %v8129 = vld [vmem:[#allocation8 + $0x278] sm:$0xff]
    %v8130 = vld [vmem:[#allocation8 + $0x280] sm:$0xff]
    %v8131 = vld [vmem:[#allocation8 + $0x288] sm:$0xff]
    %v8132 = vld [vmem:[#allocation8 + $0x290] sm:$0xff]
    %v8133 = vld [vmem:[#allocation8 + $0x298] sm:$0xff]
    %v8134 = vld [vmem:[#allocation8 + $0x2a0] sm:$0xff]
    %v8135 = vld [vmem:[#allocation8 + $0x2a8] sm:$0xff]
    %v8136 = vld [vmem:[#allocation8 + $0x2b0] sm:$0xff]
    %v8137 = vld [vmem:[#allocation8 + $0x2b8] sm:$0xff]
    %v8138 = vld [vmem:[#allocation8 + $0x2c0] sm:$0xff]
    %v8139 = vld [vmem:[#allocation8 + $0x2c8] sm:$0xff]
    %v8140 = vld [vmem:[#allocation8 + $0x2d0] sm:$0xff]
    %v8141 = vld [vmem:[#allocation8 + $0x2d8] sm:$0xff]
    %v8142 = vld [vmem:[#allocation8 + $0x2e0] sm:$0xff]
    %v8143 = vld [vmem:[#allocation8 + $0x2e8] sm:$0xff]
    %v8144 = vld [vmem:[#allocation8 + $0x2f0] sm:$0xff]
    %v8145 = vld [vmem:[#allocation8 + $0x2f8] sm:$0xff]
    %v8242 = vunpack.c.l.b16 %v8050
    %v8243 = vunpack.c.h.b16 %v8050
    %v8244 = vunpack.c.l.b16 %v8051
    %v8245 = vunpack.c.h.b16 %v8051
    %v8246 = vunpack.c.l.b16 %v8052
    %v8247 = vunpack.c.h.b16 %v8052
    %v8248 = vunpack.c.l.b16 %v8053
    %v8249 = vunpack.c.h.b16 %v8053
    %v8250 = vunpack.c.l.b16 %v8054
    %v8251 = vunpack.c.h.b16 %v8054
    %v8252 = vunpack.c.l.b16 %v8055
    %v8253 = vunpack.c.h.b16 %v8055
    %v8254 = vunpack.c.l.b16 %v8056
    %v8255 = vunpack.c.h.b16 %v8056
    %v8256 = vunpack.c.l.b16 %v8057
    %v8257 = vunpack.c.h.b16 %v8057
    %v8258 = vunpack.c.l.b16 %v8058
    %v8259 = vunpack.c.h.b16 %v8058
    %v8260 = vunpack.c.l.b16 %v8059
    %v8261 = vunpack.c.h.b16 %v8059
    %v8262 = vunpack.c.l.b16 %v8060
    %v8263 = vunpack.c.h.b16 %v8060
    %v8264 = vunpack.c.l.b16 %v8061
    %v8265 = vunpack.c.h.b16 %v8061
    %v8266 = vunpack.c.l.b16 %v8062
    %v8267 = vunpack.c.h.b16 %v8062
    %v8268 = vunpack.c.l.b16 %v8063
    %v8269 = vunpack.c.h.b16 %v8063
    %v8270 = vunpack.c.l.b16 %v8064
    %v8271 = vunpack.c.h.b16 %v8064
    %v8272 = vunpack.c.l.b16 %v8065
    %v8273 = vunpack.c.h.b16 %v8065
    %v8274 = vunpack.c.l.b16 %v8066
    %v8275 = vunpack.c.h.b16 %v8066
    %v8276 = vunpack.c.l.b16 %v8067
    %v8277 = vunpack.c.h.b16 %v8067
    %v8278 = vunpack.c.l.b16 %v8068
    %v8279 = vunpack.c.h.b16 %v8068
    %v8280 = vunpack.c.l.b16 %v8069
    %v8281 = vunpack.c.h.b16 %v8069
    %v8282 = vunpack.c.l.b16 %v8070
    %v8283 = vunpack.c.h.b16 %v8070
    %v8284 = vunpack.c.l.b16 %v8071
    %v8285 = vunpack.c.h.b16 %v8071
    %v8286 = vunpack.c.l.b16 %v8072
    %v8287 = vunpack.c.h.b16 %v8072
    %v8288 = vunpack.c.l.b16 %v8073
    %v8289 = vunpack.c.h.b16 %v8073
    %v8290 = vunpack.c.l.b16 %v8074
    %v8291 = vunpack.c.h.b16 %v8074
    %v8292 = vunpack.c.l.b16 %v8075
    %v8293 = vunpack.c.h.b16 %v8075
    %v8294 = vunpack.c.l.b16 %v8076
    %v8295 = vunpack.c.h.b16 %v8076
    %v8296 = vunpack.c.l.b16 %v8077
    %v8297 = vunpack.c.h.b16 %v8077
    %v8298 = vunpack.c.l.b16 %v8078
    %v8299 = vunpack.c.h.b16 %v8078
    %v8300 = vunpack.c.l.b16 %v8079
    %v8301 = vunpack.c.h.b16 %v8079
    %v8302 = vunpack.c.l.b16 %v8080
    %v8303 = vunpack.c.h.b16 %v8080
    %v8304 = vunpack.c.l.b16 %v8081
    %v8305 = vunpack.c.h.b16 %v8081
    %v8306 = vunpack.c.l.b16 %v8082
    %v8307 = vunpack.c.h.b16 %v8082
    %v8308 = vunpack.c.l.b16 %v8083
    %v8309 = vunpack.c.h.b16 %v8083
    %v8310 = vunpack.c.l.b16 %v8084
    %v8311 = vunpack.c.h.b16 %v8084
    %v8312 = vunpack.c.l.b16 %v8085
    %v8313 = vunpack.c.h.b16 %v8085
    %v8314 = vunpack.c.l.b16 %v8086
    %v8315 = vunpack.c.h.b16 %v8086
    %v8316 = vunpack.c.l.b16 %v8087
    %v8317 = vunpack.c.h.b16 %v8087
    %v8318 = vunpack.c.l.b16 %v8088
    %v8319 = vunpack.c.h.b16 %v8088
    %v8320 = vunpack.c.l.b16 %v8089
    %v8321 = vunpack.c.h.b16 %v8089
    %v8322 = vunpack.c.l.b16 %v8090
    %v8323 = vunpack.c.h.b16 %v8090
    %v8324 = vunpack.c.l.b16 %v8091
    %v8325 = vunpack.c.h.b16 %v8091
    %v8326 = vunpack.c.l.b16 %v8092
    %v8327 = vunpack.c.h.b16 %v8092
    %v8328 = vunpack.c.l.b16 %v8093
    %v8329 = vunpack.c.h.b16 %v8093
    %v8330 = vunpack.c.l.b16 %v8094
    %v8331 = vunpack.c.h.b16 %v8094
    %v8332 = vunpack.c.l.b16 %v8095
    %v8333 = vunpack.c.h.b16 %v8095
    %v8334 = vunpack.c.l.b16 %v8096
    %v8335 = vunpack.c.h.b16 %v8096
    %v8336 = vunpack.c.l.b16 %v8097
    %v8337 = vunpack.c.h.b16 %v8097
    %v8338 = vunpack.c.l.b16 %v8098
    %v8339 = vunpack.c.h.b16 %v8098
    %v8340 = vunpack.c.l.b16 %v8099
    %v8341 = vunpack.c.h.b16 %v8099
    %v8342 = vunpack.c.l.b16 %v8100
    %v8343 = vunpack.c.h.b16 %v8100
    %v8344 = vunpack.c.l.b16 %v8101
    %v8345 = vunpack.c.h.b16 %v8101
    %v8346 = vunpack.c.l.b16 %v8102
    %v8347 = vunpack.c.h.b16 %v8102
    %v8348 = vunpack.c.l.b16 %v8103
    %v8349 = vunpack.c.h.b16 %v8103
    %v8350 = vunpack.c.l.b16 %v8104
    %v8351 = vunpack.c.h.b16 %v8104
    %v8352 = vunpack.c.l.b16 %v8105
    %v8353 = vunpack.c.h.b16 %v8105
    %v8354 = vunpack.c.l.b16 %v8106
    %v8355 = vunpack.c.h.b16 %v8106
    %v8356 = vunpack.c.l.b16 %v8107
    %v8357 = vunpack.c.h.b16 %v8107
    %v8358 = vunpack.c.l.b16 %v8108
    %v8359 = vunpack.c.h.b16 %v8108
    %v8360 = vunpack.c.l.b16 %v8109
    %v8361 = vunpack.c.h.b16 %v8109
    %v8362 = vunpack.c.l.b16 %v8110
    %v8363 = vunpack.c.h.b16 %v8110
    %v8364 = vunpack.c.l.b16 %v8111
    %v8365 = vunpack.c.h.b16 %v8111
    %v8366 = vunpack.c.l.b16 %v8112
    %v8367 = vunpack.c.h.b16 %v8112
    %v8368 = vunpack.c.l.b16 %v8113
    %v8369 = vunpack.c.h.b16 %v8113
    %v8370 = vunpack.c.l.b16 %v8114
    %v8371 = vunpack.c.h.b16 %v8114
    %v8372 = vunpack.c.l.b16 %v8115
    %v8373 = vunpack.c.h.b16 %v8115
    %v8374 = vunpack.c.l.b16 %v8116
    %v8375 = vunpack.c.h.b16 %v8116
    %v8376 = vunpack.c.l.b16 %v8117
    %v8377 = vunpack.c.h.b16 %v8117
    %v8378 = vunpack.c.l.b16 %v8118
    %v8379 = vunpack.c.h.b16 %v8118
    %v8380 = vunpack.c.l.b16 %v8119
    %v8381 = vunpack.c.h.b16 %v8119
    %v8382 = vunpack.c.l.b16 %v8120
    %v8383 = vunpack.c.h.b16 %v8120
    %v8384 = vunpack.c.l.b16 %v8121
    %v8385 = vunpack.c.h.b16 %v8121
    %v8386 = vunpack.c.l.b16 %v8122
    %v8387 = vunpack.c.h.b16 %v8122
    %v8388 = vunpack.c.l.b16 %v8123
    %v8389 = vunpack.c.h.b16 %v8123
    %v8390 = vunpack.c.l.b16 %v8124
    %v8391 = vunpack.c.h.b16 %v8124
    %v8392 = vunpack.c.l.b16 %v8125
    %v8393 = vunpack.c.h.b16 %v8125
    %v8394 = vunpack.c.l.b16 %v8126
    %v8395 = vunpack.c.h.b16 %v8126
    %v8396 = vunpack.c.l.b16 %v8127
    %v8397 = vunpack.c.h.b16 %v8127
    %v8398 = vunpack.c.l.b16 %v8128
    %v8399 = vunpack.c.h.b16 %v8128
    %v8400 = vunpack.c.l.b16 %v8129
    %v8401 = vunpack.c.h.b16 %v8129
    %v8402 = vunpack.c.l.b16 %v8130
    %v8403 = vunpack.c.h.b16 %v8130
    %v8404 = vunpack.c.l.b16 %v8131
    %v8405 = vunpack.c.h.b16 %v8131
    %v8406 = vunpack.c.l.b16 %v8132
    %v8407 = vunpack.c.h.b16 %v8132
    %v8408 = vunpack.c.l.b16 %v8133
    %v8409 = vunpack.c.h.b16 %v8133
    %v8410 = vunpack.c.l.b16 %v8134
    %v8411 = vunpack.c.h.b16 %v8134
    %v8412 = vunpack.c.l.b16 %v8135
    %v8413 = vunpack.c.h.b16 %v8135
    %v8414 = vunpack.c.l.b16 %v8136
    %v8415 = vunpack.c.h.b16 %v8136
    %v8416 = vunpack.c.l.b16 %v8137
    %v8417 = vunpack.c.h.b16 %v8137
    %v8418 = vunpack.c.l.b16 %v8138
    %v8419 = vunpack.c.h.b16 %v8138
    %v8420 = vunpack.c.l.b16 %v8139
    %v8421 = vunpack.c.h.b16 %v8139
    %v8422 = vunpack.c.l.b16 %v8140
    %v8423 = vunpack.c.h.b16 %v8140
    %v8424 = vunpack.c.l.b16 %v8141
    %v8425 = vunpack.c.h.b16 %v8141
    %v8426 = vunpack.c.l.b16 %v8142
    %v8427 = vunpack.c.h.b16 %v8142
    %v8428 = vunpack.c.l.b16 %v8143
    %v8429 = vunpack.c.h.b16 %v8143
    %v8430 = vunpack.c.l.b16 %v8144
    %v8431 = vunpack.c.h.b16 %v8144
    %v8432 = vunpack.c.l.b16 %v8145
    %v8433 = vunpack.c.h.b16 %v8145
    %v8434 = vpack.c.b16 %v8248, %v8242
    %v8435 = vpack.c.b16 %v8249, %v8243
    %v8436 = vpack.c.b16 %v8250, %v8244
    %v8437 = vpack.c.b16 %v8251, %v8245
    %v8438 = vpack.c.b16 %v8252, %v8246
    %v8439 = vpack.c.b16 %v8253, %v8247
    %v8440 = vpack.c.b16 %v8260, %v8254
    %v8441 = vpack.c.b16 %v8261, %v8255
    %v8442 = vpack.c.b16 %v8262, %v8256
    %v8443 = vpack.c.b16 %v8263, %v8257
    %v8444 = vpack.c.b16 %v8264, %v8258
    %v8445 = vpack.c.b16 %v8265, %v8259
    %v8446 = vpack.c.b16 %v8272, %v8266
    %v8447 = vpack.c.b16 %v8273, %v8267
    %v8448 = vpack.c.b16 %v8274, %v8268
    %v8449 = vpack.c.b16 %v8275, %v8269
    %v8450 = vpack.c.b16 %v8276, %v8270
    %v8451 = vpack.c.b16 %v8277, %v8271
    %v8452 = vpack.c.b16 %v8284, %v8278
    %v8453 = vpack.c.b16 %v8285, %v8279
    %v8454 = vpack.c.b16 %v8286, %v8280
    %v8455 = vpack.c.b16 %v8287, %v8281
    %v8456 = vpack.c.b16 %v8288, %v8282
    %v8457 = vpack.c.b16 %v8289, %v8283
    %v8458 = vpack.c.b16 %v8296, %v8290
    %v8459 = vpack.c.b16 %v8297, %v8291
    %v8460 = vpack.c.b16 %v8298, %v8292
    %v8461 = vpack.c.b16 %v8299, %v8293
    %v8462 = vpack.c.b16 %v8300, %v8294
    %v8463 = vpack.c.b16 %v8301, %v8295
    %v8464 = vpack.c.b16 %v8308, %v8302
    %v8465 = vpack.c.b16 %v8309, %v8303
    %v8466 = vpack.c.b16 %v8310, %v8304
    %v8467 = vpack.c.b16 %v8311, %v8305
    %v8468 = vpack.c.b16 %v8312, %v8306
    %v8469 = vpack.c.b16 %v8313, %v8307
    %v8470 = vpack.c.b16 %v8320, %v8314
    %v8471 = vpack.c.b16 %v8321, %v8315
    %v8472 = vpack.c.b16 %v8322, %v8316
    %v8473 = vpack.c.b16 %v8323, %v8317
    %v8474 = vpack.c.b16 %v8324, %v8318
    %v8475 = vpack.c.b16 %v8325, %v8319
    %v8476 = vpack.c.b16 %v8332, %v8326
    %v8477 = vpack.c.b16 %v8333, %v8327
    %v8478 = vpack.c.b16 %v8334, %v8328
    %v8479 = vpack.c.b16 %v8335, %v8329
    %v8480 = vpack.c.b16 %v8336, %v8330
    %v8481 = vpack.c.b16 %v8337, %v8331
    %v8482 = vpack.c.b16 %v8344, %v8338
    %v8483 = vpack.c.b16 %v8345, %v8339
    %v8484 = vpack.c.b16 %v8346, %v8340
    %v8485 = vpack.c.b16 %v8347, %v8341
    %v8486 = vpack.c.b16 %v8348, %v8342
    %v8487 = vpack.c.b16 %v8349, %v8343
    %v8488 = vpack.c.b16 %v8356, %v8350
    %v8489 = vpack.c.b16 %v8357, %v8351
    %v8490 = vpack.c.b16 %v8358, %v8352
    %v8491 = vpack.c.b16 %v8359, %v8353
    %v8492 = vpack.c.b16 %v8360, %v8354
    %v8493 = vpack.c.b16 %v8361, %v8355
    %v8494 = vpack.c.b16 %v8368, %v8362
    %v8495 = vpack.c.b16 %v8369, %v8363
    %v8496 = vpack.c.b16 %v8370, %v8364
    %v8497 = vpack.c.b16 %v8371, %v8365
    %v8498 = vpack.c.b16 %v8372, %v8366
    %v8499 = vpack.c.b16 %v8373, %v8367
    %v8500 = vpack.c.b16 %v8380, %v8374
    %v8501 = vpack.c.b16 %v8381, %v8375
    %v8502 = vpack.c.b16 %v8382, %v8376
    %v8503 = vpack.c.b16 %v8383, %v8377
    %v8504 = vpack.c.b16 %v8384, %v8378
    %v8505 = vpack.c.b16 %v8385, %v8379
    %v8506 = vpack.c.b16 %v8392, %v8386
    %v8507 = vpack.c.b16 %v8393, %v8387
    %v8508 = vpack.c.b16 %v8394, %v8388
    %v8509 = vpack.c.b16 %v8395, %v8389
    %v8510 = vpack.c.b16 %v8396, %v8390
    %v8511 = vpack.c.b16 %v8397, %v8391
    %v8512 = vpack.c.b16 %v8404, %v8398
    %v8513 = vpack.c.b16 %v8405, %v8399
    %v8514 = vpack.c.b16 %v8406, %v8400
    %v8515 = vpack.c.b16 %v8407, %v8401
    %v8516 = vpack.c.b16 %v8408, %v8402
    %v8517 = vpack.c.b16 %v8409, %v8403
    %v8518 = vpack.c.b16 %v8416, %v8410
    %v8519 = vpack.c.b16 %v8417, %v8411
    %v8520 = vpack.c.b16 %v8418, %v8412
    %v8521 = vpack.c.b16 %v8419, %v8413
    %v8522 = vpack.c.b16 %v8420, %v8414
    %v8523 = vpack.c.b16 %v8421, %v8415
    %v8524 = vpack.c.b16 %v8428, %v8422
    %v8525 = vpack.c.b16 %v8429, %v8423
    %v8526 = vpack.c.b16 %v8430, %v8424
    %v8527 = vpack.c.b16 %v8431, %v8425
    %v8528 = vpack.c.b16 %v8432, %v8426
    %v8529 = vpack.c.b16 %v8433, %v8427
    %8626 = vmatpush.bf16.msra.mxu0 %v8476
    %8627 = vmatpush.bf16.msra.mxu0 %v8470
    %8628 = vmatpush.bf16.msra.mxu0 %v8464
    %8629 = vmatpush.bf16.msra.mxu0 %v8458
    %8630 = vmatpush.bf16.msra.mxu0 %v8452
    %8631 = vmatpush.bf16.msra.mxu0 %v8446
    %8632 = vmatpush.bf16.msra.mxu0 %v8440
    %8633 = vmatpush.bf16.msra.mxu0 %v8434
    %8634 = vmatmul.bf16.gmra.mxu0 %v8042
    %v8635 = vpop.f32.mrf.mxu0
    %v8636 = vadd.f32 0.0, %v8635
    %v8637 = vpop.f32.mrf.mxu0
    %v8638 = vadd.f32 0.0, %v8637
    %8639 = vdwg.mxu0
    %8640 = vmatpush.bf16.msra.mxu0 %v8524
    %8641 = vmatpush.bf16.msra.mxu0 %v8518
    %8642 = vmatpush.bf16.msra.mxu0 %v8512
    %8643 = vmatpush.bf16.msra.mxu0 %v8506
    %8644 = vmatpush.bf16.msra.mxu0 %v8500
    %8645 = vmatpush.bf16.msra.mxu0 %v8494
    %8646 = vmatpush.bf16.msra.mxu0 %v8488
    %8647 = vmatpush.bf16.msra.mxu0 %v8482
    %8648 = vmatmul.bf16.gmra.mxu0 %v8048
    %v8649 = vpop.f32.mrf.mxu0
    %v8650 = vadd.f32 %v8636, %v8649
    %v8651 = vpop.f32.mrf.mxu0
    %v8652 = vadd.f32 %v8638, %v8651
    %8653 = vdwg.mxu0
    %8654 = vmatpush.bf16.msra.mxu0 %v8477
    %8655 = vmatpush.bf16.msra.mxu0 %v8471
    %8656 = vmatpush.bf16.msra.mxu0 %v8465
    %8657 = vmatpush.bf16.msra.mxu0 %v8459
    %8658 = vmatpush.bf16.msra.mxu0 %v8453
    %8659 = vmatpush.bf16.msra.mxu0 %v8447
    %8660 = vmatpush.bf16.msra.mxu0 %v8441
    %8661 = vmatpush.bf16.msra.mxu0 %v8435
    %8662 = vmatmul.bf16.gmra.mxu0 %v8042
    %v8663 = vpop.f32.mrf.mxu0
    %v8664 = vadd.f32 0.0, %v8663
    %v8665 = vpop.f32.mrf.mxu0
    %v8666 = vadd.f32 0.0, %v8665
    %8667 = vdwg.mxu0
    %8668 = vmatpush.bf16.msra.mxu0 %v8525
    %8669 = vmatpush.bf16.msra.mxu0 %v8519
    %8670 = vmatpush.bf16.msra.mxu0 %v8513
    %8671 = vmatpush.bf16.msra.mxu0 %v8507
    %8672 = vmatpush.bf16.msra.mxu0 %v8501
    %8673 = vmatpush.bf16.msra.mxu0 %v8495
    %8674 = vmatpush.bf16.msra.mxu0 %v8489
    %8675 = vmatpush.bf16.msra.mxu0 %v8483
    %8676 = vmatmul.bf16.gmra.mxu0 %v8048
    %v8677 = vpop.f32.mrf.mxu0
    %v8678 = vadd.f32 %v8664, %v8677
    %v8679 = vpop.f32.mrf.mxu0
    %v8680 = vadd.f32 %v8666, %v8679
    %8681 = vdwg.mxu0
    %8682 = vmatpush.bf16.msra.mxu0 %v8478
    %8683 = vmatpush.bf16.msra.mxu0 %v8472
    %8684 = vmatpush.bf16.msra.mxu0 %v8466
    %8685 = vmatpush.bf16.msra.mxu0 %v8460
    %8686 = vmatpush.bf16.msra.mxu0 %v8454
    %8687 = vmatpush.bf16.msra.mxu0 %v8448
    %8688 = vmatpush.bf16.msra.mxu0 %v8442
    %8689 = vmatpush.bf16.msra.mxu0 %v8436
    %8690 = vmatmul.bf16.gmra.mxu0 %v8042
    %v8691 = vpop.f32.mrf.mxu0
    %v8692 = vadd.f32 0.0, %v8691
    %v8693 = vpop.f32.mrf.mxu0
    %v8694 = vadd.f32 0.0, %v8693
    %8695 = vdwg.mxu0
    %8696 = vmatpush.bf16.msra.mxu0 %v8526
    %8697 = vmatpush.bf16.msra.mxu0 %v8520
    %8698 = vmatpush.bf16.msra.mxu0 %v8514
    %8699 = vmatpush.bf16.msra.mxu0 %v8508
    %8700 = vmatpush.bf16.msra.mxu0 %v8502
    %8701 = vmatpush.bf16.msra.mxu0 %v8496
    %8702 = vmatpush.bf16.msra.mxu0 %v8490
    %8703 = vmatpush.bf16.msra.mxu0 %v8484
    %8704 = vmatmul.bf16.gmra.mxu0 %v8048
    %v8705 = vpop.f32.mrf.mxu0
    %v8706 = vadd.f32 %v8692, %v8705
    %v8707 = vpop.f32.mrf.mxu0
    %v8708 = vadd.f32 %v8694, %v8707
    %8709 = vdwg.mxu0
    %8710 = vmatpush.bf16.msra.mxu0 %v8479
    %8711 = vmatpush.bf16.msra.mxu0 %v8473
    %8712 = vmatpush.bf16.msra.mxu0 %v8467
    %8713 = vmatpush.bf16.msra.mxu0 %v8461
    %8714 = vmatpush.bf16.msra.mxu0 %v8455
    %8715 = vmatpush.bf16.msra.mxu0 %v8449
    %8716 = vmatpush.bf16.msra.mxu0 %v8443
    %8717 = vmatpush.bf16.msra.mxu0 %v8437
    %8718 = vmatmul.bf16.gmra.mxu0 %v8042
    %v8719 = vpop.f32.mrf.mxu0
    %v8720 = vadd.f32 0.0, %v8719
    %v8721 = vpop.f32.mrf.mxu0
    %v8722 = vadd.f32 0.0, %v8721
    %8723 = vdwg.mxu0
    %8724 = vmatpush.bf16.msra.mxu0 %v8527
    %8725 = vmatpush.bf16.msra.mxu0 %v8521
    %8726 = vmatpush.bf16.msra.mxu0 %v8515
    %8727 = vmatpush.bf16.msra.mxu0 %v8509
    %8728 = vmatpush.bf16.msra.mxu0 %v8503
    %8729 = vmatpush.bf16.msra.mxu0 %v8497
    %8730 = vmatpush.bf16.msra.mxu0 %v8491
    %8731 = vmatpush.bf16.msra.mxu0 %v8485
    %8732 = vmatmul.bf16.gmra.mxu0 %v8048
    %v8733 = vpop.f32.mrf.mxu0
    %v8734 = vadd.f32 %v8720, %v8733
    %v8735 = vpop.f32.mrf.mxu0
    %v8736 = vadd.f32 %v8722, %v8735
    %8737 = vdwg.mxu0
    %8738 = vmatpush.bf16.msra.mxu0 %v8480
    %8739 = vmatpush.bf16.msra.mxu0 %v8474
    %8740 = vmatpush.bf16.msra.mxu0 %v8468
    %8741 = vmatpush.bf16.msra.mxu0 %v8462
    %8742 = vmatpush.bf16.msra.mxu0 %v8456
    %8743 = vmatpush.bf16.msra.mxu0 %v8450
    %8744 = vmatpush.bf16.msra.mxu0 %v8444
    %8745 = vmatpush.bf16.msra.mxu0 %v8438
    %8746 = vmatmul.bf16.gmra.mxu0 %v8042
    %v8747 = vpop.f32.mrf.mxu0
    %v8748 = vadd.f32 0.0, %v8747
    %v8749 = vpop.f32.mrf.mxu0
    %v8750 = vadd.f32 0.0, %v8749
    %8751 = vdwg.mxu0
    %8752 = vmatpush.bf16.msra.mxu0 %v8528
    %8753 = vmatpush.bf16.msra.mxu0 %v8522
    %8754 = vmatpush.bf16.msra.mxu0 %v8516
    %8755 = vmatpush.bf16.msra.mxu0 %v8510
    %8756 = vmatpush.bf16.msra.mxu0 %v8504
    %8757 = vmatpush.bf16.msra.mxu0 %v8498
    %8758 = vmatpush.bf16.msra.mxu0 %v8492
    %8759 = vmatpush.bf16.msra.mxu0 %v8486
    %8760 = vmatmul.bf16.gmra.mxu0 %v8048
    %v8761 = vpop.f32.mrf.mxu0
    %v8762 = vadd.f32 %v8748, %v8761
    %v8763 = vpop.f32.mrf.mxu0
    %v8764 = vadd.f32 %v8750, %v8763
    %8765 = vdwg.mxu0
    %8766 = vmatpush.bf16.msra.mxu0 %v8481
    %8767 = vmatpush.bf16.msra.mxu0 %v8475
    %8768 = vmatpush.bf16.msra.mxu0 %v8469
    %8769 = vmatpush.bf16.msra.mxu0 %v8463
    %8770 = vmatpush.bf16.msra.mxu0 %v8457
    %8771 = vmatpush.bf16.msra.mxu0 %v8451
    %8772 = vmatpush.bf16.msra.mxu0 %v8445
    %8773 = vmatpush.bf16.msra.mxu0 %v8439
    %8774 = vmatmul.bf16.gmra.mxu0 %v8042
    %v8775 = vpop.f32.mrf.mxu0
    %v8776 = vadd.f32 0.0, %v8775
    %v8777 = vpop.f32.mrf.mxu0
    %v8778 = vadd.f32 0.0, %v8777
    %8779 = vdwg.mxu0
    %8780 = vmatpush.bf16.msra.mxu0 %v8529
    %8781 = vmatpush.bf16.msra.mxu0 %v8523
    %8782 = vmatpush.bf16.msra.mxu0 %v8517
    %8783 = vmatpush.bf16.msra.mxu0 %v8511
    %8784 = vmatpush.bf16.msra.mxu0 %v8505
    %8785 = vmatpush.bf16.msra.mxu0 %v8499
    %8786 = vmatpush.bf16.msra.mxu0 %v8493
    %8787 = vmatpush.bf16.msra.mxu0 %v8487
    %8788 = vmatmul.bf16.gmra.mxu0 %v8048
    %v8789 = vpop.f32.mrf.mxu0
    %v8790 = vadd.f32 %v8776, %v8789
    %v8791 = vpop.f32.mrf.mxu0
    %v8792 = vadd.f32 %v8778, %v8791
    %8793 = vdwg.mxu0
    %v8794 = vld [vmem:[#allocation4 + $0x150] sm:$0xff]
    %v8795 = vld [vmem:[#allocation4 + $0x158] sm:$0xff]
    %v8796 = vld [vmem:[#allocation4 + $0x160] sm:$0xff]
    %v8797 = vld [vmem:[#allocation4 + $0x168] sm:$0xff]
    %v8798 = vld [vmem:[#allocation4 + $0x170] sm:$0xff]
    %v8799 = vld [vmem:[#allocation4 + $0x178] sm:$0xff]
    %v8800 = vadd.f32 %v8794, %v8650
    %v8801 = vadd.f32 %v8797, %v8652
    %v8802 = vxor.u32 %v8800, 2147483648
    %v8803 = vxor.u32 %v8801, 2147483648
    %v8804 = vmul.f32 %v8802, 1.442695
    %v8805 = vpow.pop %v8804
    %v8806 = vmul.f32 %v8803, 1.442695
    %v8807 = vpow.pop %v8806
    %v8808 = vadd.f32 %v8805, 1.0
    %v8809 = vadd.f32 %v8807, 1.0
    %v8810 = vrcp.pop %v8808
    %v8811 = vmul.f32 %v8808, %v8810
    %v8812 = vsub.f32 1.0, %v8811
    %v8813 = vmul.f32 %v8810, %v8812
    %v8814 = vadd.f32 %v8810, %v8813
    %vm8815 = vweird.f32 %v8808
    %vm8816 = vweird.f32 %v8810
    %vm8817 = vmor %vm8815, %vm8816
    %v8818 = vsel %vm8817, %v8810, %v8814
    %v8819 = vand.u32 2147483647, %v8808
    %vm8820 = vcmp.eq.f32.partialorder %v8819, 8.507059e+37
    %v8821 = vand.u32 %v8808, 2147483648
    %v8822 = vor.u32 1.1754944e-38, %v8821
    %v8823 = vsel %vm8820, %v8822, %v8818
    %v8824 = vmul.f32 1.0, %v8823
    %v8825 = vrcp.pop %v8809
    %v8826 = vmul.f32 %v8809, %v8825
    %v8827 = vsub.f32 1.0, %v8826
    %v8828 = vmul.f32 %v8825, %v8827
    %v8829 = vadd.f32 %v8825, %v8828
    %vm8830 = vweird.f32 %v8809
    %vm8831 = vweird.f32 %v8825
    %vm8832 = vmor %vm8830, %vm8831
    %v8833 = vsel %vm8832, %v8825, %v8829
    %v8834 = vand.u32 2147483647, %v8809
    %vm8835 = vcmp.eq.f32.partialorder %v8834, 8.507059e+37
    %v8836 = vand.u32 %v8809, 2147483648
    %v8837 = vor.u32 1.1754944e-38, %v8836
    %v8838 = vsel %vm8835, %v8837, %v8833
    %v8839 = vmul.f32 1.0, %v8838
    %v8840 = vadd.f32 %v8795, %v8678
    %v8841 = vadd.f32 %v8798, %v8680
    %v8842 = vxor.u32 %v8840, 2147483648
    %v8843 = vxor.u32 %v8841, 2147483648
    %v8844 = vmul.f32 %v8842, 1.442695
    %v8845 = vpow.pop %v8844
    %v8846 = vmul.f32 %v8843, 1.442695
    %v8847 = vpow.pop %v8846
    %v8848 = vadd.f32 %v8845, 1.0
    %v8849 = vadd.f32 %v8847, 1.0
    %v8850 = vrcp.pop %v8848
    %v8851 = vmul.f32 %v8848, %v8850
    %v8852 = vsub.f32 1.0, %v8851
    %v8853 = vmul.f32 %v8850, %v8852
    %v8854 = vadd.f32 %v8850, %v8853
    %vm8855 = vweird.f32 %v8848
    %vm8856 = vweird.f32 %v8850
    %vm8857 = vmor %vm8855, %vm8856
    %v8858 = vsel %vm8857, %v8850, %v8854
    %v8859 = vand.u32 2147483647, %v8848
    %vm8860 = vcmp.eq.f32.partialorder %v8859, 8.507059e+37
    %v8861 = vand.u32 %v8848, 2147483648
    %v8862 = vor.u32 1.1754944e-38, %v8861
    %v8863 = vsel %vm8860, %v8862, %v8858
    %v8864 = vmul.f32 1.0, %v8863
    %v8865 = vrcp.pop %v8849
    %v8866 = vmul.f32 %v8849, %v8865
    %v8867 = vsub.f32 1.0, %v8866
    %v8868 = vmul.f32 %v8865, %v8867
    %v8869 = vadd.f32 %v8865, %v8868
    %vm8870 = vweird.f32 %v8849
    %vm8871 = vweird.f32 %v8865
    %vm8872 = vmor %vm8870, %vm8871
    %v8873 = vsel %vm8872, %v8865, %v8869
    %v8874 = vand.u32 2147483647, %v8849
    %vm8875 = vcmp.eq.f32.partialorder %v8874, 8.507059e+37
    %v8876 = vand.u32 %v8849, 2147483648
    %v8877 = vor.u32 1.1754944e-38, %v8876
    %v8878 = vsel %vm8875, %v8877, %v8873
    %v8879 = vmul.f32 1.0, %v8878
    %v8880 = vadd.f32 %v8706, %v968
    %v8881 = vadd.f32 %v8708, %v968
    %v8882 = vmul.f32 %v8824, %v8880
    %v8883 = vmul.f32 %v8839, %v8881
    %v8884 = vadd.f32 %v8796, %v8882
    %v8885 = vadd.f32 %v8799, %v8883
    %v8886 = vtanh.pop %v8884
    %v8887 = vtanh.pop %v8885
    %v8888 = vsub.f32 1.0, %v8864
    %v8889 = vsub.f32 1.0, %v8879
    %v8890 = vmul.f32 %v8888, %v8886
    %v8891 = vmul.f32 %v8889, %v8887
    %v8892 = vmul.f32 %v8864, %v8008
    %v8893 = vmul.f32 %v8879, %v8009
    %v8894 = vadd.f32 %v8890, %v8892
    %v8895 = vadd.f32 %v8891, %v8893
    %v8896 = vld [vmem:[#allocation5] sm:$0xff]
    %v8897 = vld [vmem:[#allocation5 + $0x8] sm:$0xff]
    %v8898 = vld [vmem:[#allocation5 + $0x10] sm:$0xff]
    %v8899 = vld [vmem:[#allocation5 + $0x18] sm:$0xff]
    %v8900 = vld [vmem:[#allocation5 + $0x20] sm:$0xff]
    %v8901 = vld [vmem:[#allocation5 + $0x28] sm:$0xff]
    %v8902 = vadd.f32 %v8896, %v8734
    %v8903 = vadd.f32 %v8899, %v8736
    %v8904 = vxor.u32 %v8902, 2147483648
    %v8905 = vxor.u32 %v8903, 2147483648
    %v8906 = vmul.f32 %v8904, 1.442695
    %v8907 = vpow.pop %v8906
    %v8908 = vmul.f32 %v8905, 1.442695
    %v8909 = vpow.pop %v8908
    %v8910 = vadd.f32 %v8907, 1.0
    %v8911 = vadd.f32 %v8909, 1.0
    %v8912 = vrcp.pop %v8910
    %v8913 = vmul.f32 %v8910, %v8912
    %v8914 = vsub.f32 1.0, %v8913
    %v8915 = vmul.f32 %v8912, %v8914
    %v8916 = vadd.f32 %v8912, %v8915
    %vm8917 = vweird.f32 %v8910
    %vm8918 = vweird.f32 %v8912
    %vm8919 = vmor %vm8917, %vm8918
    %v8920 = vsel %vm8919, %v8912, %v8916
    %v8921 = vand.u32 2147483647, %v8910
    %vm8922 = vcmp.eq.f32.partialorder %v8921, 8.507059e+37
    %v8923 = vand.u32 %v8910, 2147483648
    %v8924 = vor.u32 1.1754944e-38, %v8923
    %v8925 = vsel %vm8922, %v8924, %v8920
    %v8926 = vmul.f32 1.0, %v8925
    %v8927 = vrcp.pop %v8911
    %v8928 = vmul.f32 %v8911, %v8927
    %v8929 = vsub.f32 1.0, %v8928
    %v8930 = vmul.f32 %v8927, %v8929
    %v8931 = vadd.f32 %v8927, %v8930
    %vm8932 = vweird.f32 %v8911
    %vm8933 = vweird.f32 %v8927
    %vm8934 = vmor %vm8932, %vm8933
    %v8935 = vsel %vm8934, %v8927, %v8931
    %v8936 = vand.u32 2147483647, %v8911
    %vm8937 = vcmp.eq.f32.partialorder %v8936, 8.507059e+37
    %v8938 = vand.u32 %v8911, 2147483648
    %v8939 = vor.u32 1.1754944e-38, %v8938
    %v8940 = vsel %vm8937, %v8939, %v8935
    %v8941 = vmul.f32 1.0, %v8940
    %v8942 = vadd.f32 %v8897, %v8762
    %v8943 = vadd.f32 %v8900, %v8764
    %v8944 = vxor.u32 %v8942, 2147483648
    %v8945 = vxor.u32 %v8943, 2147483648
    %v8946 = vmul.f32 %v8944, 1.442695
    %v8947 = vpow.pop %v8946
    %v8948 = vmul.f32 %v8945, 1.442695
    %v8949 = vpow.pop %v8948
    %v8950 = vadd.f32 %v8947, 1.0
    %v8951 = vadd.f32 %v8949, 1.0
    %v8952 = vrcp.pop %v8950
    %v8953 = vmul.f32 %v8950, %v8952
    %v8954 = vsub.f32 1.0, %v8953
    %v8955 = vmul.f32 %v8952, %v8954
    %v8956 = vadd.f32 %v8952, %v8955
    %vm8957 = vweird.f32 %v8950
    %vm8958 = vweird.f32 %v8952
    %vm8959 = vmor %vm8957, %vm8958
    %v8960 = vsel %vm8959, %v8952, %v8956
    %v8961 = vand.u32 2147483647, %v8950
    %vm8962 = vcmp.eq.f32.partialorder %v8961, 8.507059e+37
    %v8963 = vand.u32 %v8950, 2147483648
    %v8964 = vor.u32 1.1754944e-38, %v8963
    %v8965 = vsel %vm8962, %v8964, %v8960
    %v8966 = vmul.f32 1.0, %v8965
    %v8967 = vrcp.pop %v8951
    %v8968 = vmul.f32 %v8951, %v8967
    %v8969 = vsub.f32 1.0, %v8968
    %v8970 = vmul.f32 %v8967, %v8969
    %v8971 = vadd.f32 %v8967, %v8970
    %vm8972 = vweird.f32 %v8951
    %vm8973 = vweird.f32 %v8967
    %vm8974 = vmor %vm8972, %vm8973
    %v8975 = vsel %vm8974, %v8967, %v8971
    %v8976 = vand.u32 2147483647, %v8951
    %vm8977 = vcmp.eq.f32.partialorder %v8976, 8.507059e+37
    %v8978 = vand.u32 %v8951, 2147483648
    %v8979 = vor.u32 1.1754944e-38, %v8978
    %v8980 = vsel %vm8977, %v8979, %v8975
    %v8981 = vmul.f32 1.0, %v8980
    %v8982 = vadd.f32 %v8790, %v973
    %v8983 = vadd.f32 %v8792, %v973
    %v8984 = vmul.f32 %v8926, %v8982
    %v8985 = vmul.f32 %v8941, %v8983
    %v8986 = vadd.f32 %v8898, %v8984
    %v8987 = vadd.f32 %v8901, %v8985
    %v8988 = vtanh.pop %v8986
    %v8989 = vtanh.pop %v8987
    %v8990 = vsub.f32 1.0, %v8966
    %v8991 = vsub.f32 1.0, %v8981
    %v8992 = vmul.f32 %v8990, %v8988
    %v8993 = vmul.f32 %v8991, %v8989
    %v8994 = vmul.f32 %v8966, %v8020
    %v8995 = vmul.f32 %v8981, %v8021
    %v8996 = vadd.f32 %v8992, %v8994
    %v8997 = vadd.f32 %v8993, %v8995
    %s8998 = sadd.s32 %s107, 7
    %v8999 = vstv %s8998
    %vm9000 = vcmp.lt.s32.totalorder %v8999, %v105
    %vm9001 = vcmp.lt.s32.totalorder %v8999, %v106
    %v9002 = vstv %s109
    %vm9003 = vcmp.lt.s32.totalorder %v9002, %v105
    %vm9004 = vcmp.lt.s32.totalorder %v9002, %v106
    %v9005 = vsel %vm9000, 1, 0
    %v9006 = vsel %vm9001, 1, 0
    %9007 = vset.pattern.permute.xlu0 0
    %9008 = vperm.xlu0 %9007, %v9005
    %v9009 = vpop.permute.xlu0 %9008
    %9010 = vset.pattern.permute.xlu0 0
    %9011 = vperm.xlu0 %9010, %v9006
    %v9012 = vpop.permute.xlu0 %9011
    %vm9013 = vcmp.eq.s32.totalorder %v9009, 1
    %vm9014 = vcmp.eq.s32.totalorder %v9012, 1
    %v9015 = vsel %vm9013, %v8894, %v8008
    %v9016 = vsel %vm9014, %v8895, %v8009
    %v9017 = vsel %vm9003, 1, 0
    %v9018 = vsel %vm9004, 1, 0
    %9019 = vset.pattern.permute.xlu0 0
    %9020 = vperm.xlu0 %9019, %v9017
    %v9021 = vpop.permute.xlu0 %9020
    %9022 = vset.pattern.permute.xlu0 0
    %9023 = vperm.xlu0 %9022, %v9018
    %v9024 = vpop.permute.xlu0 %9023
    %vm9025 = vcmp.eq.s32.totalorder %v9021, 1
    %vm9026 = vcmp.eq.s32.totalorder %v9024, 1
    %v9027 = vsel %vm9025, %v8996, %v8020
    %v9028 = vsel %vm9026, %v8997, %v8021
    %v9029 = vsel %vm9013, %v8894, 0.0
    %v9030 = vsel %vm9014, %v8895, 0.0
    %v9031 = vpack.c.bf16 %v9029, %v9029
    %v9032 = vpack.c.bf16 %v9030, %v9030
    %9033 = vst [vmem:[%s7 + $0x38] sm:$0xf] %v9031
    %9034 = vst [vmem:[%s7 + $0x3c] sm:$0xf] %v9032
    %v9035 = vsel %vm9025, %v8996, 0.0
    %v9036 = vsel %vm9026, %v8997, 0.0
    %v9037 = vpack.c.bf16 %v9035, %v9035
    %v9038 = vpack.c.bf16 %v9036, %v9036
    %9039 = vst [vmem:[%s94] sm:$0xf] %v9037
    %9040 = vst [vmem:[%s94 + $0x4] sm:$0xf] %v9038
    %9041 = vst [vmem:[#allocation2] sm:$0xff] %v9015
    %9042 = vst [vmem:[#allocation2 + $0x8] sm:$0xff] %v9016
    %9043 = vst [vmem:[#allocation3] sm:$0xff] %v9027
    %9044 = vst [vmem:[#allocation3 + $0x8] sm:$0xff] %v9028
    // Predicated region
    $region42: #{encoder_rnn_forward.1} parent=1 // pred_check
      %p9045 = pneg %p97
    $region43: #{encoder_rnn_forward.1} parent=1 // pred_check_branch
      %9047 = sbr.rel (%p9045) target = $region45
    $region44: #{encoder_rnn_forward.1} parent=1 // pred_region
      %v9048 = vadd.f32 %v9015, %v9027
      %v9049 = vadd.f32 %v9016, %v9028
      %9050 = vst [vmem:[%s9] sm:$0xff] %v9048
      %9051 = vst [vmem:[%s9 + $0x8] sm:$0xff] %v9049
    $region45: #{encoder_rnn_forward.1} parent=1 // pred_fallthru
      _
    %s9052 = ssub.s32 0, 0
    %s9053 = smul.u32 16, %s9052
    %p9054 = scmp.lt.s32.totalorder %s9053, 15
    %s9055 = scalar_select %p9054, %s9053, 15
    %s9056 = smul.addr %s9055, 4
    %s9057 = scalar_lea.vmem %s8, %s9056
    // Predicated region
    $region46: #{encoder_rnn_forward.1} parent=1 // pred_check
      _
    $region47: #{encoder_rnn_forward.1} parent=1 // pred_check_branch
      %9059 = sbr.rel (0) target = $region49
    $region48: #{encoder_rnn_forward.1} parent=1 // pred_region
      _
    $region49: #{encoder_rnn_forward.1} parent=1 // pred_fallthru
      _
    // Predicated region
    $region50: #{encoder_rnn_forward.1} parent=1 // pred_check
      _
    $region51: #{encoder_rnn_forward.1} parent=1 // pred_check_branch
      %9061 = sbr.rel (0) target = $region53
    $region52: #{encoder_rnn_forward.1} parent=1 // pred_region
      %s9062 = ssub.s32 0, 0
      %s9063 = smul.u32 16, %s9062
    $region53: #{encoder_rnn_forward.1} parent=1 // pred_fallthru
      _
    // Predicated region
    $region54: #{encoder_rnn_forward.1} parent=1 // pred_check
      _
    $region55: #{encoder_rnn_forward.1} parent=1 // pred_check_branch
      %9065 = sbr.rel (0) target = $region57
    $region56: #{encoder_rnn_forward.1} parent=1 // pred_region
      _
    $region57: #{encoder_rnn_forward.1} parent=1 // pred_fallthru
      _
    // Predicated region
    $region58: #{encoder_rnn_forward.1} parent=1 // pred_check
      _
    $region59: #{encoder_rnn_forward.1} parent=1 // pred_check_branch
      %9067 = sbr.rel (0) target = $region61
    $region60: #{encoder_rnn_forward.1} parent=1 // pred_region
      _
    $region61: #{encoder_rnn_forward.1} parent=1 // pred_fallthru
      _
    // Predicated region
    $region62: #{encoder_rnn_forward.1} parent=1 // pred_check
      _
    $region63: #{encoder_rnn_forward.1} parent=1 // pred_check_branch
      %9069 = sbr.rel (0) target = $region65
    $region64: #{encoder_rnn_forward.1} parent=1 // pred_region
      %s9070 = ssub.s32 0, 0
      %s9071 = smul.u32 16, %s9070
      %p9072 = scmp.lt.s32.totalorder %s9071, 15
      %s9073 = scalar_select %p9072, %s9071, 15
      %s9074 = smul.addr %s9073, 4
      %s9075 = scalar_lea.vmem %s8, %s9074
    $region65: #{encoder_rnn_forward.1} parent=1 // pred_fallthru
      _
    // Predicated region
    $region66: #{encoder_rnn_forward.1} parent=1 // pred_check
      _
    $region67: #{encoder_rnn_forward.1} parent=1 // pred_check_branch
      %9077 = sbr.rel (0) target = $region69
    $region68: #{encoder_rnn_forward.1} parent=1 // pred_region
      _
    $region69: #{encoder_rnn_forward.1} parent=1 // pred_fallthru
      _
    %9078 = vsyncpa [#allocation7], 1
    %9079 = vsyncpa [#allocation9], 1

</llo_original>
